<compile_context>
chip_gen: v7x
topology: tpu7x:2x2x1
jax: 0.10.0
libtpu: 0.0.40
codegen_flags: <defaults>
</compile_context>

<pallas_src>
import functools

import jax
import jax.numpy as jnp
from jax.experimental import pallas as pl
from jax.experimental.pallas import tpu as pltpu

BF16 = jnp.bfloat16
_VMEM_LIMIT = 32 * 1024 * 1024


def _round_up(x, m):
    return ((x + m - 1) // m) * m


def _apply_act(x, act):
    if act == "relu":
        return jnp.maximum(x, 0.0)
    if act == "leaky_relu":
        return jnp.where(x > 0.0, x, 0.01 * x)
    return x


# -----------------------------------------------------------------------------
# "PF" layout helpers: channel-major, zero-padded, flattened spatial grid.
#   dense (N, C, H, W) -> pf (N, C, L):
#     padded grid of (H+4) rows x (W+2) cols (2 zero rows top/bottom, 1 zero col
#     left/right), flattened row-major, zero-padded up to L = round_up(., 128).
#   Interior pixel (h, w) lives at flat index (h+2)*(W+2) + (w+1).
#   The extra top/bottom zero rows guarantee every 3x3 tap read (flat shifts in
#   [-(W+3), W+3]) stays inside the buffer; zero ring/guards give 'same' padding.
# -----------------------------------------------------------------------------
def pf_geom(H, W):
    wp = W + 2
    rows = H + 4
    raw = rows * wp
    return {
        "wp": wp, "rows": rows, "raw": raw,
        "L": _round_up(raw, 128),        # lane-dense (multiple of 128)
        "base": 2 * wp,                  # flat offset of interior row 0
        "npos": H * wp,                  # number of computed output positions
    }


def to_pf(x_dense):
    N, C, H, W = x_dense.shape
    g = pf_geom(H, W)
    xp = jnp.pad(x_dense, ((0, 0), (0, 0), (2, 2), (1, 1)))
    flat = xp.reshape(N, C, g["raw"])
    if g["L"] > g["raw"]:
        flat = jnp.pad(flat, ((0, 0), (0, 0), (0, g["L"] - g["raw"])))
    return flat


def from_pf(x_pf, H, W):
    N, C, _ = x_pf.shape
    g = pf_geom(H, W)
    grid2d = x_pf[:, :, :g["raw"]].reshape(N, C, g["rows"], g["wp"])
    return grid2d[:, :, 2:H + 2, 1:W + 1]


def pf_interior_mask(H, W):
    """(1, L) f32 mask: 1 on interior pixels, 0 on the zero ring / guards."""
    g = pf_geom(H, W)
    m = jnp.zeros((g["rows"], g["wp"]), jnp.float32)
    m = m.at[2:H + 2, 1:W + 1].set(1.0)
    m = m.reshape(1, g["raw"])
    if g["L"] > g["raw"]:
        m = jnp.pad(m, ((0, 0), (0, g["L"] - g["raw"])))
    return m


def taps_s1(W):
    """stride-1 3x3 taps: (channel_block_start, flat_shift), tap order t = dh*3+dw."""
    wp = W + 2
    return tuple((0, (dh - 1) * wp + (dw - 1)) for dh in range(3) for dw in range(3))


def taps_s2_phases(Wo, C):
    """stride-2 3x3 taps over the 4-phase (space-to-depth) input at output resolution."""
    wop = Wo + 2
    taps = []
    for dh in range(3):
        p = (dh + 1) % 2                 # input row 2h+dh-1 -> phase p, row shift sh
        sh = -1 if dh == 0 else 0
        for dw in range(3):
            q = (dw + 1) % 2
            sw = -1 if dw == 0 else 0
            taps.append(((p * 2 + q) * C, sh * wop + sw))
    return tuple(taps)


# -----------------------------------------------------------------------------
# In-kernel helpers
# -----------------------------------------------------------------------------
def _pack_full_row(vals, base, L, dtype):
    """Place (Cout, npos) values at lane offset `base` inside a zero (Cout, L) slab."""
    cout, npos = vals.shape
    pieces = [jnp.zeros((cout, base), dtype), vals.astype(dtype)]
    tail = L - base - npos
    if tail > 0:
        pieces.append(jnp.zeros((cout, tail), dtype))
    return jnp.concatenate(pieces, axis=1)


def _tap_conv(slicer, taps, cin, base, w_val):
    """One 9-tap conv as a single MXU matmul: (Cout, 9*Cin) @ (9*Cin, npos) -> f32."""
    pieces = [slicer(c0, cin, base + s) for (c0, s) in taps]
    patches = pieces[0] if len(pieces) == 1 else jnp.concatenate(pieces, axis=0)
    return jnp.dot(w_val, patches, preferred_element_type=jnp.float32)


# -----------------------------------------------------------------------------
# Kernel 1: generic conv in PF layout (1x1, 3x3 s1, 3x3 s2 via phases),
#           fused bias / optional residual / activation / ring masking.
# -----------------------------------------------------------------------------
def _conv_pf_kernel(x_ref, w_ref, b_ref, m_ref, *rest,
                    taps, cin, base, npos, L, act, has_res):
    if has_res:
        res_ref, o_ref = rest
    else:
        (o_ref,) = rest
    mvec = m_ref[:, base:base + npos]                           # (1, npos) f32

    def xs(c0, cs, st):
        return x_ref[0, c0:c0 + cs, st:st + npos]

    acc = _tap_conv(xs, taps, cin, base, w_ref[...]) + b_ref[...]
    if has_res:
        acc = acc + res_ref[0, :, base:base + npos].astype(jnp.float32)
    acc = _apply_act(acc, act) * mvec                           # zero ring columns
    o_ref[0] = _pack_full_row(acc, base, L, o_ref.dtype)        # full-width store


# -----------------------------------------------------------------------------
# Kernel 2: fused double 3x3 conv (basic block / FPN conv pair); the intermediate
#           activation stays in a VMEM scratch buffer, never touching HBM.
# -----------------------------------------------------------------------------
def _double_conv_pf_kernel(x_ref, w1_ref, b1_ref, w2_ref, b2_ref, m_ref, o_ref, y_ref, *,
                           taps, cin, cmid, base, npos, L, act1, act2, add_input_res):
    mvec = m_ref[:, base:base + npos]

    def xs(c0, cs, st):
        return x_ref[0, c0:c0 + cs, st:st + npos]

    a1 = _tap_conv(xs, taps, cin, base, w1_ref[...]) + b1_ref[...]
    a1 = _apply_act(a1, act1) * mvec
    y_ref[...] = _pack_full_row(a1, base, L, y_ref.dtype)       # VMEM-resident intermediate

    def ys(c0, cs, st):
        return y_ref[c0:c0 + cs, st:st + npos]

    a2 = _tap_conv(ys, taps, cmid, base, w2_ref[...]) + b2_ref[...]
    if add_input_res:
        a2 = a2 + x_ref[0, :, base:base + npos].astype(jnp.float32)
    a2 = _apply_act(a2, act2) * mvec
    o_ref[0] = _pack_full_row(a2, base, L, o_ref.dtype)


# -----------------------------------------------------------------------------
# Wrappers (pallas_call plumbing)
# -----------------------------------------------------------------------------
def conv_pf(x_pf, w_mat, bias, *, taps, cin, H, W, act="none", residual=None,
            out_dtype=BF16):
    g = pf_geom(H, W)
    N, Ctot, L = x_pf.shape
    assert L == g["L"]
    Cout, K = w_mat.shape
    assert K == len(taps) * cin

    args = [x_pf.astype(BF16), w_mat.astype(BF16),
            bias.reshape(Cout, 1).astype(jnp.float32), pf_interior_mask(H, W)]
    in_specs = [
        pl.BlockSpec((1, Ctot, L), lambda n: (n, 0, 0)),
        pl.BlockSpec((Cout, K), lambda n: (0, 0)),       # resident weights
        pl.BlockSpec((Cout, 1), lambda n: (0, 0)),       # resident bias
        pl.BlockSpec((1, L), lambda n: (0, 0)),          # resident interior mask
    ]
    has_res = residual is not None
    if has_res:
        args.append(residual.astype(BF16))
        in_specs.append(pl.BlockSpec((1, Cout, L), lambda n: (n, 0, 0)))

    kern = functools.partial(_conv_pf_kernel, taps=tuple(taps), cin=cin,
                             base=g["base"], npos=g["npos"], L=L,
                             act=act, has_res=has_res)
    return pl.pallas_call(
        kern,
        out_shape=jax.ShapeDtypeStruct((N, Cout, L), out_dtype),
        grid=(N,),
        in_specs=in_specs,
        out_specs=pl.BlockSpec((1, Cout, L), lambda n: (n, 0, 0)),
        compiler_params=pltpu.CompilerParams(
            dimension_semantics=("parallel",),
            vmem_limit_bytes=_VMEM_LIMIT),
    )(*args)


def double_conv3x3_pf(x_pf, wa, ba, wb, bb, *, H, W, act1, act2,
                      add_input_res, out_dtype=BF16):
    g = pf_geom(H, W)
    N, Cin, L = x_pf.shape
    assert L == g["L"]
    Cmid, Cout = wa.shape[3], wb.shape[3]
    if add_input_res:
        assert Cout == Cin

    w1 = wa.transpose(3, 0, 1, 2).reshape(Cmid, 9 * Cin).astype(BF16)
    w2 = wb.transpose(3, 0, 1, 2).reshape(Cout, 9 * Cmid).astype(BF16)
    b1 = ba.reshape(Cmid, 1).astype(jnp.float32)
    b2 = bb.reshape(Cout, 1).astype(jnp.float32)

    kern = functools.partial(_double_conv_pf_kernel, taps=taps_s1(W), cin=Cin,
                             cmid=Cmid, base=g["base"], npos=g["npos"], L=L,
                             act1=act1, act2=act2, add_input_res=add_input_res)
    return pl.pallas_call(
        kern,
        out_shape=jax.ShapeDtypeStruct((N, Cout, L), out_dtype),
        grid=(N,),
        in_specs=[
            pl.BlockSpec((1, Cin, L), lambda n: (n, 0, 0)),
            pl.BlockSpec((Cmid, 9 * Cin), lambda n: (0, 0)),
            pl.BlockSpec((Cmid, 1), lambda n: (0, 0)),
            pl.BlockSpec((Cout, 9 * Cmid), lambda n: (0, 0)),
            pl.BlockSpec((Cout, 1), lambda n: (0, 0)),
            pl.BlockSpec((1, L), lambda n: (0, 0)),
        ],
        out_specs=pl.BlockSpec((1, Cout, L), lambda n: (n, 0, 0)),
        scratch_shapes=[pltpu.VMEM((Cmid, L), BF16)],
        compiler_params=pltpu.CompilerParams(
            dimension_semantics=("parallel",),
            vmem_limit_bytes=_VMEM_LIMIT),
    )(x_pf.astype(BF16), w1, b1, w2, b2, pf_interior_mask(H, W))


def conv3x3_s2_pf(x_dense, w, b, *, act="relu"):
    """3x3 stride-2 'same' conv as a stride-1 conv over the 4-phase decomposition."""
    N, C, H, W = x_dense.shape
    assert H % 2 == 0 and W % 2 == 0
    Ho, Wo = H // 2, W // 2
    phases = jnp.concatenate(
        [x_dense[:, :, p::2, q::2] for p in range(2) for q in range(2)], axis=1)
    ph_pf = to_pf(phases)                                        # (N, 4C, L_out)
    Cout = w.shape[3]
    w_mat = w.transpose(3, 0, 1, 2).reshape(Cout, 9 * C)
    out = conv_pf(ph_pf, w_mat, b, taps=taps_s2_phases(Wo, C), cin=C,
                  H=Ho, W=Wo, act=act)
    return out, (Ho, Wo)


def conv1x1_pf(x_pf, w, b, *, H, W, act="none", residual=None):
    Cin, Cout = w.shape[2], w.shape[3]
    w_mat = jnp.transpose(w.reshape(Cin, Cout))                  # (Cout, Cin)
    return conv_pf(x_pf, w_mat, b, taps=((0, 0),), cin=Cin, H=H, W=W,
                   act=act, residual=residual)


def upsample2x_bilinear_nchw(x):
    """2x bilinear upsample, align_corners=True (matches F.interpolate). JAX glue."""
    N, C, H, W = x.shape
    xf = x.astype(jnp.float32)

    def lin(n_in, n_out):
        if n_in == 1:
            z = jnp.zeros((n_out,), jnp.int32)
            return z, z, jnp.zeros((n_out,), jnp.float32)
        pos = jnp.linspace(0.0, n_in - 1.0, n_out)
        i0 = jnp.clip(jnp.floor(pos).astype(jnp.int32), 0, n_in - 2)
        return i0, i0 + 1, pos - i0.astype(jnp.float32)

    h0, h1, fh = lin(H, 2 * H)
    w0, w1, fw = lin(W, 2 * W)
    xh = (xf[:, :, h0, :] * (1.0 - fh)[None, None, :, None]
          + xf[:, :, h1, :] * fh[None, None, :, None])
    out = xh[:, :, :, w0] * (1.0 - fw) + xh[:, :, :, w1] * fw
    return out.astype(x.dtype)


# -----------------------------------------------------------------------------
# Backbone (ResNet-FPN 8/2 style): returns (coarse 1/8 features, fine 1/2 features)
# -----------------------------------------------------------------------------
def _conv_param(key, kh, kw, cin, cout):
    wkey, bkey = jax.random.split(key)
    fan_in = kh * kw * cin
    w = jax.random.normal(wkey, (kh, kw, cin, cout), jnp.float32) / jnp.sqrt(fan_in)
    b = 0.01 * jax.random.normal(bkey, (cout,), jnp.float32)     # BN folded into bias
    return w, b


def build_params(key, in_ch=1, d1=8, d2=16, d3=32):
    ks = jax.random.split(key, 16)
    return {
        "conv1":    _conv_param(ks[0], 3, 3, in_ch, d1),
        "l1_a":     _conv_param(ks[1], 3, 3, d1, d1),
        "l1_b":     _conv_param(ks[2], 3, 3, d1, d1),
        "l2_down":  _conv_param(ks[3], 3, 3, d1, d2),
        "l2_a":     _conv_param(ks[4], 3, 3, d2, d2),
        "l2_b":     _conv_param(ks[5], 3, 3, d2, d2),
        "l3_down":  _conv_param(ks[6], 3, 3, d2, d3),
        "l3_a":     _conv_param(ks[7], 3, 3, d3, d3),
        "l3_b":     _conv_param(ks[8], 3, 3, d3, d3),
        "out3":     _conv_param(ks[9], 1, 1, d3, d3),
        "out2_1x1": _conv_param(ks[10], 1, 1, d2, d3),
        "out2_a":   _conv_param(ks[11], 3, 3, d3, d3),
        "out2_b":   _conv_param(ks[12], 3, 3, d3, d2),
        "out1_1x1": _conv_param(ks[13], 1, 1, d1, d2),
        "out1_a":   _conv_param(ks[14], 3, 3, d2, d2),
        "out1_b":   _conv_param(ks[15], 3, 3, d2, d1),
    }


def backbone(x_dense, p):
    """x_dense: (N, C, H, W) NCHW -> (coarse 1/8 NCHW, fine 1/2 NCHW)."""
    # ---- encoder -------------------------------------------------------------
    x0, (H1, W1) = conv3x3_s2_pf(x_dense, *p["conv1"], act="relu")            # 1/2, d1
    x1 = double_conv3x3_pf(x0, *p["l1_a"], *p["l1_b"], H=H1, W=W1,
                           act1="relu", act2="relu", add_input_res=True)
    x2, (H2, W2) = conv3x3_s2_pf(from_pf(x1, H1, W1), *p["l2_down"], act="relu")  # 1/4
    x2 = double_conv3x3_pf(x2, *p["l2_a"], *p["l2_b"], H=H2, W=W2,
                           act1="relu", act2="relu", add_input_res=True)
    x3, (H3, W3) = conv3x3_s2_pf(from_pf(x2, H2, W2), *p["l3_down"], act="relu")  # 1/8
    x3 = double_conv3x3_pf(x3, *p["l3_a"], *p["l3_b"], H=H3, W=W3,
                           act1="relu", act2="relu", add_input_res=True)

    # ---- FPN top-down path (merge adds fused into the 1x1 conv epilogue) -----
    x3_out_pf = conv1x1_pf(x3, *p["out3"], H=H3, W=W3, act="none")
    x3_out = from_pf(x3_out_pf, H3, W3)                                        # coarse
    up3 = to_pf(upsample2x_bilinear_nchw(x3_out))
    x2_m = conv1x1_pf(x2, *p["out2_1x1"], H=H2, W=W2, act="none", residual=up3)
    x2_m = double_conv3x3_pf(x2_m, *p["out2_a"], *p["out2_b"], H=H2, W=W2,
                             act1="leaky_relu", act2="none", add_input_res=False)
    up2 = to_pf(upsample2x_bilinear_nchw(from_pf(x2_m, H2, W2)))
    x1_m = conv1x1_pf(x1, *p["out1_1x1"], H=H1, W=W1, act="none", residual=up2)
    x1_m = double_conv3x3_pf(x1_m, *p["out1_a"], *p["out1_b"], H=H1, W=W1,
                             act1="leaky_relu", act2="none", add_input_res=False)
    fine = from_pf(x1_m, H1, W1)                                               # fine
    return x3_out, fine


# -----------------------------------------------------------------------------
# MFE_backbone.forward equivalent
# -----------------------------------------------------------------------------
def mfe_backbone_forward(x1_nchw, x2_nchw, params):
    """Inputs NCHW f32. Returns [feat_c0_8, feat_c1_8, feat_f0_2, feat_f1_2] NCHW f32."""
    B = x1_nchw.shape[0]
    x = jnp.concatenate([x1_nchw, x2_nchw], axis=0).astype(BF16)   # one backbone pass
    feat_c, feat_f = backbone(x, params)
    feat_c = feat_c.astype(jnp.float32)
    feat_f = feat_f.astype(jnp.float32)
    return [feat_c[:B], feat_c[B:], feat_f[:B], feat_f[B:]]


if __name__ == "__main__":
    key = jax.random.PRNGKey(0)
    k_params, k_x1, k_x2 = jax.random.split(key, 3)

    B, C, H, W = 2, 1, 32, 32   # small grayscale pair, divisible by 8
    x1 = jax.random.normal(k_x1, (B, C, H, W), jnp.float32)
    x2 = jax.random.normal(k_x2, (B, C, H, W), jnp.float32)
    params = build_params(k_params, in_ch=C, d1=8, d2=16, d3=32)

    fwd = jax.jit(functools.partial(mfe_backbone_forward, params=params))
    outs = fwd(x1, x2)
    outs = [jax.block_until_ready(o) for o in outs]

    # sanity: coarse 1/8 (d3 channels), fine 1/2 (d1 channels)
    assert outs[0].shape == (B, 32, H // 8, W // 8)
    assert outs[1].shape == (B, 32, H // 8, W // 8)
    assert outs[2].shape == (B, 8, H // 2, W // 2)
    assert outs[3].shape == (B, 8, H // 2, W // 2)
    assert all(bool(jnp.all(jnp.isfinite(o))) for o in outs)

    print("KERNEL_OK")
</pallas_src>

<mosaic_0001>
module attributes {stable_mosaic.version = 11 : i64} {
  func.func @_conv_pf_kernel(%arg0: i32, %arg1: memref<1x4x384xbf16, #tpu.memory_space<vmem>>, %arg2: memref<8x9xbf16, #tpu.memory_space<vmem>>, %arg3: memref<8x1xf32, #tpu.memory_space<vmem>>, %arg4: memref<1x384xf32, #tpu.memory_space<vmem>>, %arg5: memref<1x8x384xbf16, #tpu.memory_space<vmem>>) attributes {dimension_semantics = [#tpu.dimension_semantics<parallel>], iteration_bounds = array<i64: 4>, scalar_prefetch = 0 : i64, scratch_operands = 0 : i64, tpu.core_type = #tpu.core_type<tc>, window_params = [{transform_indices = @transform_0, window_bounds = array<i64: 1, 4, 384>}, {pipeline_mode = #tpu.pipeline_mode<synchronous>, transform_indices = @transform_1, window_bounds = array<i64: 8, 9>}, {pipeline_mode = #tpu.pipeline_mode<synchronous>, transform_indices = @transform_2, window_bounds = array<i64: 8, 1>}, {pipeline_mode = #tpu.pipeline_mode<synchronous>, transform_indices = @transform_3, window_bounds = array<i64: 1, 384>}, {transform_indices = @transform_4, window_bounds = array<i64: 1, 8, 384>}]} {
    %c0 = arith.constant 0 : index
    %c36 = arith.constant 36 : index
    %0 = vector.load %arg4[%c0, %c36] : memref<1x384xf32, #tpu.memory_space<vmem>>, vector<1x288xf32>
    %c0_0 = arith.constant 0 : index
    %c0_1 = arith.constant 0 : index
    %1 = vector.load %arg2[%c0_0, %c0_1] : memref<8x9xbf16, #tpu.memory_space<vmem>>, vector<8x9xbf16>
    %c0_2 = arith.constant 0 : index
    %c3 = arith.constant 3 : index
    %c17 = arith.constant 17 : index
    %2 = vector.load %arg1[%c0_2, %c3, %c17] : memref<1x4x384xbf16, #tpu.memory_space<vmem>>, vector<1x1x288xbf16>
    %3 = vector.shape_cast %2 : vector<1x1x288xbf16> to vector<1x288xbf16>
    %c0_3 = arith.constant 0 : index
    %c2 = arith.constant 2 : index
    %c18 = arith.constant 18 : index
    %4 = vector.load %arg1[%c0_3, %c2, %c18] : memref<1x4x384xbf16, #tpu.memory_space<vmem>>, vector<1x1x288xbf16>
    %5 = vector.shape_cast %4 : vector<1x1x288xbf16> to vector<1x288xbf16>
    %c0_4 = arith.constant 0 : index
    %c3_5 = arith.constant 3 : index
    %c18_6 = arith.constant 18 : index
    %6 = vector.load %arg1[%c0_4, %c3_5, %c18_6] : memref<1x4x384xbf16, #tpu.memory_space<vmem>>, vector<1x1x288xbf16>
    %7 = vector.shape_cast %6 : vector<1x1x288xbf16> to vector<1x288xbf16>
    %c0_7 = arith.constant 0 : index
    %c1 = arith.constant 1 : index
    %c35 = arith.constant 35 : index
    %8 = vector.load %arg1[%c0_7, %c1, %c35] : memref<1x4x384xbf16, #tpu.memory_space<vmem>>, vector<1x1x288xbf16>
    %9 = vector.shape_cast %8 : vector<1x1x288xbf16> to vector<1x288xbf16>
    %c0_8 = arith.constant 0 : index
    %c0_9 = arith.constant 0 : index
    %c36_10 = arith.constant 36 : index
    %10 = vector.load %arg1[%c0_8, %c0_9, %c36_10] : memref<1x4x384xbf16, #tpu.memory_space<vmem>>, vector<1x1x288xbf16>
    %11 = vector.shape_cast %10 : vector<1x1x288xbf16> to vector<1x288xbf16>
    %c0_11 = arith.constant 0 : index
    %c1_12 = arith.constant 1 : index
    %c36_13 = arith.constant 36 : index
    %12 = vector.load %arg1[%c0_11, %c1_12, %c36_13] : memref<1x4x384xbf16, #tpu.memory_space<vmem>>, vector<1x1x288xbf16>
    %13 = vector.shape_cast %12 : vector<1x1x288xbf16> to vector<1x288xbf16>
    %c0_14 = arith.constant 0 : index
    %c3_15 = arith.constant 3 : index
    %c35_16 = arith.constant 35 : index
    %14 = vector.load %arg1[%c0_14, %c3_15, %c35_16] : memref<1x4x384xbf16, #tpu.memory_space<vmem>>, vector<1x1x288xbf16>
    %15 = vector.shape_cast %14 : vector<1x1x288xbf16> to vector<1x288xbf16>
    %c0_17 = arith.constant 0 : index
    %c2_18 = arith.constant 2 : index
    %c36_19 = arith.constant 36 : index
    %16 = vector.load %arg1[%c0_17, %c2_18, %c36_19] : memref<1x4x384xbf16, #tpu.memory_space<vmem>>, vector<1x1x288xbf16>
    %17 = vector.shape_cast %16 : vector<1x1x288xbf16> to vector<1x288xbf16>
    %c0_20 = arith.constant 0 : index
    %c3_21 = arith.constant 3 : index
    %c36_22 = arith.constant 36 : index
    %18 = vector.load %arg1[%c0_20, %c3_21, %c36_22] : memref<1x4x384xbf16, #tpu.memory_space<vmem>>, vector<1x1x288xbf16>
    %19 = vector.shape_cast %18 : vector<1x1x288xbf16> to vector<1x288xbf16>
    %20 = tpu.concatenate %3, %5, %7, %9, %11, %13, %15, %17, %19 in 0 : vector<1x288xbf16>, vector<1x288xbf16>, vector<1x288xbf16>, vector<1x288xbf16>, vector<1x288xbf16>, vector<1x288xbf16>, vector<1x288xbf16>, vector<1x288xbf16>, vector<1x288xbf16> -> vector<9x288xbf16>
    %cst = arith.constant dense<0.000000e+00> : vector<8x288xf32>
    %21 = tpu.matmul %1, %20, %cst {dimension_numbers = #tpu.dot_dimension_numbers<[1], [0], [0], [1], [0, 0, 1, 1], [], []>} : vector<8x9xbf16>, vector<9x288xbf16>, vector<8x288xf32> -> vector<8x288xf32>
    %c0_23 = arith.constant 0 : index
    %c0_24 = arith.constant 0 : index
    %22 = vector.load %arg3[%c0_23, %c0_24] : memref<8x1xf32, #tpu.memory_space<vmem>>, vector<8x1xf32>
    %23 = vector.broadcast %22 : vector<8x1xf32> to vector<8x288xf32>
    %24 = arith.addf %21, %23 : vector<8x288xf32>
    %cst_25 = arith.constant 0.000000e+00 : f32
    %25 = vector.broadcast %cst_25 : f32 to vector<8x288xf32>
    %26 = arith.maximumf %24, %25 : vector<8x288xf32>
    %27 = vector.broadcast %0 : vector<1x288xf32> to vector<8x288xf32>
    %28 = arith.mulf %26, %27 : vector<8x288xf32>
    %cst_26 = arith.constant 0.000000e+00 : bf16
    %29 = vector.broadcast %cst_26 : bf16 to vector<8x36xbf16>
    %30 = arith.truncf %28 : vector<8x288xf32> to vector<8x288xbf16>
    %cst_27 = arith.constant 0.000000e+00 : bf16
    %31 = vector.broadcast %cst_27 : bf16 to vector<8x60xbf16>
    %32 = tpu.concatenate %29, %30, %31 in 1 : vector<8x36xbf16>, vector<8x288xbf16>, vector<8x60xbf16> -> vector<8x384xbf16>
    %c0_28 = arith.constant 0 : index
    %c0_29 = arith.constant 0 : index
    %c0_30 = arith.constant 0 : index
    %33 = vector.load %arg5[%c0_28, %c0_29, %c0_30] : memref<1x8x384xbf16, #tpu.memory_space<vmem>>, vector<1x8x384xbf16>
    %34 = vector.shape_cast %33 : vector<1x8x384xbf16> to vector<8x384xbf16>
    %35 = vector.shape_cast %32 : vector<8x384xbf16> to vector<1x8x384xbf16>
    tpu.vector_store %arg5[%c0_28, %c0_29, %c0_30], %35 {strides = array<i32>} : memref<1x8x384xbf16, #tpu.memory_space<vmem>>, vector<1x8x384xbf16>,
    return
  }
  func.func @transform_0(%arg0: i32) -> (i32, i32, i32) {
    %c0_i32 = arith.constant 0 : i32
    %c0_i32_0 = arith.constant 0 : i32
    %c0_i32_1 = arith.constant 0 : i32
    return %arg0, %c0_i32, %c0_i32_0 : i32, i32, i32
  }
  func.func @transform_1(%arg0: i32) -> (i32, i32) {
    %c0_i32 = arith.constant 0 : i32
    %c0_i32_0 = arith.constant 0 : i32
    %c0_i32_1 = arith.constant 0 : i32
    return %c0_i32, %c0_i32_0 : i32, i32
  }
  func.func @transform_2(%arg0: i32) -> (i32, i32) {
    %c0_i32 = arith.constant 0 : i32
    %c0_i32_0 = arith.constant 0 : i32
    %c0_i32_1 = arith.constant 0 : i32
    return %c0_i32, %c0_i32_0 : i32, i32
  }
  func.func @transform_3(%arg0: i32) -> (i32, i32) {
    %c0_i32 = arith.constant 0 : i32
    %c0_i32_0 = arith.constant 0 : i32
    %c0_i32_1 = arith.constant 0 : i32
    return %c0_i32, %c0_i32_0 : i32, i32
  }
  func.func @transform_4(%arg0: i32) -> (i32, i32, i32) {
    %c0_i32 = arith.constant 0 : i32
    %c0_i32_0 = arith.constant 0 : i32
    %c0_i32_1 = arith.constant 0 : i32
    return %arg0, %c0_i32, %c0_i32_0 : i32, i32, i32
  }
}

module attributes {stable_mosaic.version = 11 : i64} {
  func.func @_double_conv_pf_kernel(%arg0: i32, %arg1: memref<1x8x384xbf16, #tpu.memory_space<vmem>>, %arg2: memref<8x72xbf16, #tpu.memory_space<vmem>>, %arg3: memref<8x1xf32, #tpu.memory_space<vmem>>, %arg4: memref<8x72xbf16, #tpu.memory_space<vmem>>, %arg5: memref<8x1xf32, #tpu.memory_space<vmem>>, %arg6: memref<1x384xf32, #tpu.memory_space<vmem>>, %arg7: memref<1x8x384xbf16, #tpu.memory_space<vmem>>, %arg8: memref<8x384xbf16, #tpu.memory_space<vmem>>) attributes {dimension_semantics = [#tpu.dimension_semantics<parallel>], iteration_bounds = array<i64: 4>, scalar_prefetch = 0 : i64, scratch_operands = 1 : i64, tpu.core_type = #tpu.core_type<tc>, window_params = [{transform_indices = @transform_0, window_bounds = array<i64: 1, 8, 384>}, {pipeline_mode = #tpu.pipeline_mode<synchronous>, transform_indices = @transform_1, window_bounds = array<i64: 8, 72>}, {pipeline_mode = #tpu.pipeline_mode<synchronous>, transform_indices = @transform_2, window_bounds = array<i64: 8, 1>}, {pipeline_mode = #tpu.pipeline_mode<synchronous>, transform_indices = @transform_3, window_bounds = array<i64: 8, 72>}, {pipeline_mode = #tpu.pipeline_mode<synchronous>, transform_indices = @transform_4, window_bounds = array<i64: 8, 1>}, {pipeline_mode = #tpu.pipeline_mode<synchronous>, transform_indices = @transform_5, window_bounds = array<i64: 1, 384>}, {transform_indices = @transform_6, window_bounds = array<i64: 1, 8, 384>}]} {
    %c0 = arith.constant 0 : index
    %c36 = arith.constant 36 : index
    %0 = vector.load %arg6[%c0, %c36] : memref<1x384xf32, #tpu.memory_space<vmem>>, vector<1x288xf32>
    %c0_0 = arith.constant 0 : index
    %c0_1 = arith.constant 0 : index
    %1 = vector.load %arg2[%c0_0, %c0_1] : memref<8x72xbf16, #tpu.memory_space<vmem>>, vector<8x72xbf16>
    %c0_2 = arith.constant 0 : index
    %c0_3 = arith.constant 0 : index
    %c17 = arith.constant 17 : index
    %2 = vector.load %arg1[%c0_2, %c0_3, %c17] : memref<1x8x384xbf16, #tpu.memory_space<vmem>>, vector<1x8x288xbf16>
    %3 = vector.shape_cast %2 : vector<1x8x288xbf16> to vector<8x288xbf16>
    %c0_4 = arith.constant 0 : index
    %c0_5 = arith.constant 0 : index
    %c18 = arith.constant 18 : index
    %4 = vector.load %arg1[%c0_4, %c0_5, %c18] : memref<1x8x384xbf16, #tpu.memory_space<vmem>>, vector<1x8x288xbf16>
    %5 = vector.shape_cast %4 : vector<1x8x288xbf16> to vector<8x288xbf16>
    %c0_6 = arith.constant 0 : index
    %c0_7 = arith.constant 0 : index
    %c19 = arith.constant 19 : index
    %6 = vector.load %arg1[%c0_6, %c0_7, %c19] : memref<1x8x384xbf16, #tpu.memory_space<vmem>>, vector<1x8x288xbf16>
    %7 = vector.shape_cast %6 : vector<1x8x288xbf16> to vector<8x288xbf16>
    %c0_8 = arith.constant 0 : index
    %c0_9 = arith.constant 0 : index
    %c35 = arith.constant 35 : index
    %8 = vector.load %arg1[%c0_8, %c0_9, %c35] : memref<1x8x384xbf16, #tpu.memory_space<vmem>>, vector<1x8x288xbf16>
    %9 = vector.shape_cast %8 : vector<1x8x288xbf16> to vector<8x288xbf16>
    %c0_10 = arith.constant 0 : index
    %c0_11 = arith.constant 0 : index
    %c36_12 = arith.constant 36 : index
    %10 = vector.load %arg1[%c0_10, %c0_11, %c36_12] : memref<1x8x384xbf16, #tpu.memory_space<vmem>>, vector<1x8x288xbf16>
    %11 = vector.shape_cast %10 : vector<1x8x288xbf16> to vector<8x288xbf16>
    %c0_13 = arith.constant 0 : index
    %c0_14 = arith.constant 0 : index
    %c37 = arith.constant 37 : index
    %12 = vector.load %arg1[%c0_13, %c0_14, %c37] : memref<1x8x384xbf16, #tpu.memory_space<vmem>>, vector<1x8x288xbf16>
    %13 = vector.shape_cast %12 : vector<1x8x288xbf16> to vector<8x288xbf16>
    %c0_15 = arith.constant 0 : index
    %c0_16 = arith.constant 0 : index
    %c53 = arith.constant 53 : index
    %14 = vector.load %arg1[%c0_15, %c0_16, %c53] : memref<1x8x384xbf16, #tpu.memory_space<vmem>>, vector<1x8x288xbf16>
    %15 = vector.shape_cast %14 : vector<1x8x288xbf16> to vector<8x288xbf16>
    %c0_17 = arith.constant 0 : index
    %c0_18 = arith.constant 0 : index
    %c54 = arith.constant 54 : index
    %16 = vector.load %arg1[%c0_17, %c0_18, %c54] : memref<1x8x384xbf16, #tpu.memory_space<vmem>>, vector<1x8x288xbf16>
    %17 = vector.shape_cast %16 : vector<1x8x288xbf16> to vector<8x288xbf16>
    %c0_19 = arith.constant 0 : index
    %c0_20 = arith.constant 0 : index
    %c55 = arith.constant 55 : index
    %18 = vector.load %arg1[%c0_19, %c0_20, %c55] : memref<1x8x384xbf16, #tpu.memory_space<vmem>>, vector<1x8x288xbf16>
    %19 = vector.shape_cast %18 : vector<1x8x288xbf16> to vector<8x288xbf16>
    %20 = tpu.concatenate %3, %5, %7, %9, %11, %13, %15, %17, %19 in 0 : vector<8x288xbf16>, vector<8x288xbf16>, vector<8x288xbf16>, vector<8x288xbf16>, vector<8x288xbf16>, vector<8x288xbf16>, vector<8x288xbf16>, vector<8x288xbf16>, vector<8x288xbf16> -> vector<72x288xbf16>
    %cst = arith.constant dense<0.000000e+00> : vector<8x288xf32>
    %21 = tpu.matmul %1, %20, %cst {dimension_numbers = #tpu.dot_dimension_numbers<[1], [0], [0], [1], [0, 0, 1, 1], [], []>} : vector<8x72xbf16>, vector<72x288xbf16>, vector<8x288xf32> -> vector<8x288xf32>
    %c0_21 = arith.constant 0 : index
    %c0_22 = arith.constant 0 : index
    %22 = vector.load %arg3[%c0_21, %c0_22] : memref<8x1xf32, #tpu.memory_space<vmem>>, vector<8x1xf32>
    %23 = vector.broadcast %22 : vector<8x1xf32> to vector<8x288xf32>
    %24 = arith.addf %21, %23 : vector<8x288xf32>
    %cst_23 = arith.constant 0.000000e+00 : f32
    %25 = vector.broadcast %cst_23 : f32 to vector<8x288xf32>
    %26 = arith.maximumf %24, %25 : vector<8x288xf32>
    %27 = vector.broadcast %0 : vector<1x288xf32> to vector<8x288xf32>
    %28 = arith.mulf %26, %27 : vector<8x288xf32>
    %cst_24 = arith.constant 0.000000e+00 : bf16
    %29 = vector.broadcast %cst_24 : bf16 to vector<8x36xbf16>
    %30 = arith.truncf %28 : vector<8x288xf32> to vector<8x288xbf16>
    %cst_25 = arith.constant 0.000000e+00 : bf16
    %31 = vector.broadcast %cst_25 : bf16 to vector<8x60xbf16>
    %32 = tpu.concatenate %29, %30, %31 in 1 : vector<8x36xbf16>, vector<8x288xbf16>, vector<8x60xbf16> -> vector<8x384xbf16>
    %c0_26 = arith.constant 0 : index
    %c0_27 = arith.constant 0 : index
    %33 = vector.load %arg8[%c0_26, %c0_27] : memref<8x384xbf16, #tpu.memory_space<vmem>>, vector<8x384xbf16>
    tpu.vector_store %arg8[%c0_26, %c0_27], %32 {strides = array<i32>} : memref<8x384xbf16, #tpu.memory_space<vmem>>, vector<8x384xbf16>,
    %c0_28 = arith.constant 0 : index
    %c0_29 = arith.constant 0 : index
    %34 = vector.load %arg4[%c0_28, %c0_29] : memref<8x72xbf16, #tpu.memory_space<vmem>>, vector<8x72xbf16>
    %c0_30 = arith.constant 0 : index
    %c17_31 = arith.constant 17 : index
    %35 = vector.load %arg8[%c0_30, %c17_31] : memref<8x384xbf16, #tpu.memory_space<vmem>>, vector<8x288xbf16>
    %c0_32 = arith.constant 0 : index
    %c18_33 = arith.constant 18 : index
    %36 = vector.load %arg8[%c0_32, %c18_33] : memref<8x384xbf16, #tpu.memory_space<vmem>>, vector<8x288xbf16>
    %c0_34 = arith.constant 0 : index
    %c19_35 = arith.constant 19 : index
    %37 = vector.load %arg8[%c0_34, %c19_35] : memref<8x384xbf16, #tpu.memory_space<vmem>>, vector<8x288xbf16>
    %c0_36 = arith.constant 0 : index
    %c35_37 = arith.constant 35 : index
    %38 = vector.load %arg8[%c0_36, %c35_37] : memref<8x384xbf16, #tpu.memory_space<vmem>>, vector<8x288xbf16>
    %c0_38 = arith.constant 0 : index
    %c36_39 = arith.constant 36 : index
    %39 = vector.load %arg8[%c0_38, %c36_39] : memref<8x384xbf16, #tpu.memory_space<vmem>>, vector<8x288xbf16>
    %c0_40 = arith.constant 0 : index
    %c37_41 = arith.constant 37 : index
    %40 = vector.load %arg8[%c0_40, %c37_41] : memref<8x384xbf16, #tpu.memory_space<vmem>>, vector<8x288xbf16>
    %c0_42 = arith.constant 0 : index
    %c53_43 = arith.constant 53 : index
    %41 = vector.load %arg8[%c0_42, %c53_43] : memref<8x384xbf16, #tpu.memory_space<vmem>>, vector<8x288xbf16>
    %c0_44 = arith.constant 0 : index
    %c54_45 = arith.constant 54 : index
    %42 = vector.load %arg8[%c0_44, %c54_45] : memref<8x384xbf16, #tpu.memory_space<vmem>>, vector<8x288xbf16>
    %c0_46 = arith.constant 0 : index
    %c55_47 = arith.constant 55 : index
    %43 = vector.load %arg8[%c0_46, %c55_47] : memref<8x384xbf16, #tpu.memory_space<vmem>>, vector<8x288xbf16>
    %44 = tpu.concatenate %35, %36, %37, %38, %39, %40, %41, %42, %43 in 0 : vector<8x288xbf16>, vector<8x288xbf16>, vector<8x288xbf16>, vector<8x288xbf16>, vector<8x288xbf16>, vector<8x288xbf16>, vector<8x288xbf16>, vector<8x288xbf16>, vector<8x288xbf16> -> vector<72x288xbf16>
    %cst_48 = arith.constant dense<0.000000e+00> : vector<8x288xf32>
    %45 = tpu.matmul %34, %44, %cst_48 {dimension_numbers = #tpu.dot_dimension_numbers<[1], [0], [0], [1], [0, 0, 1, 1], [], []>} : vector<8x72xbf16>, vector<72x288xbf16>, vector<8x288xf32> -> vector<8x288xf32>
    %c0_49 = arith.constant 0 : index
    %c0_50 = arith.constant 0 : index
    %46 = vector.load %arg5[%c0_49, %c0_50] : memref<8x1xf32, #tpu.memory_space<vmem>>, vector<8x1xf32>
    %47 = vector.broadcast %46 : vector<8x1xf32> to vector<8x288xf32>
    %48 = arith.addf %45, %47 : vector<8x288xf32>
    %c0_51 = arith.constant 0 : index
    %c0_52 = arith.constant 0 : index
    %c36_53 = arith.constant 36 : index
    %49 = vector.load %arg1[%c0_51, %c0_52, %c36_53] : memref<1x8x384xbf16, #tpu.memory_space<vmem>>, vector<1x8x288xbf16>
    %50 = vector.shape_cast %49 : vector<1x8x288xbf16> to vector<8x288xbf16>
    %51 = arith.extf %50 : vector<8x288xbf16> to vector<8x288xf32>
    %52 = arith.addf %48, %51 : vector<8x288xf32>
    %cst_54 = arith.constant 0.000000e+00 : f32
    %53 = vector.broadcast %cst_54 : f32 to vector<8x288xf32>
    %54 = arith.maximumf %52, %53 : vector<8x288xf32>
    %55 = vector.broadcast %0 : vector<1x288xf32> to vector<8x288xf32>
    %56 = arith.mulf %54, %55 : vector<8x288xf32>
    %cst_55 = arith.constant 0.000000e+00 : bf16
    %57 = vector.broadcast %cst_55 : bf16 to vector<8x36xbf16>
    %58 = arith.truncf %56 : vector<8x288xf32> to vector<8x288xbf16>
    %cst_56 = arith.constant 0.000000e+00 : bf16
    %59 = vector.broadcast %cst_56 : bf16 to vector<8x60xbf16>
    %60 = tpu.concatenate %57, %58, %59 in 1 : vector<8x36xbf16>, vector<8x288xbf16>, vector<8x60xbf16> -> vector<8x384xbf16>
    %c0_57 = arith.constant 0 : index
    %c0_58 = arith.constant 0 : index
    %c0_59 = arith.constant 0 : index
    %61 = vector.load %arg7[%c0_57, %c0_58, %c0_59] : memref<1x8x384xbf16, #tpu.memory_space<vmem>>, vector<1x8x384xbf16>
    %62 = vector.shape_cast %61 : vector<1x8x384xbf16> to vector<8x384xbf16>
    %63 = vector.shape_cast %60 : vector<8x384xbf16> to vector<1x8x384xbf16>
    tpu.vector_store %arg7[%c0_57, %c0_58, %c0_59], %63 {strides = array<i32>} : memref<1x8x384xbf16, #tpu.memory_space<vmem>>, vector<1x8x384xbf16>,
    return
  }
  func.func @transform_0(%arg0: i32) -> (i32, i32, i32) {
    %c0_i32 = arith.constant 0 : i32
    %c0_i32_0 = arith.constant 0 : i32
    %c0_i32_1 = arith.constant 0 : i32
    return %arg0, %c0_i32, %c0_i32_0 : i32, i32, i32
  }
  func.func @transform_1(%arg0: i32) -> (i32, i32) {
    %c0_i32 = arith.constant 0 : i32
    %c0_i32_0 = arith.constant 0 : i32
    %c0_i32_1 = arith.constant 0 : i32
    return %c0_i32, %c0_i32_0 : i32, i32
  }
  func.func @transform_2(%arg0: i32) -> (i32, i32) {
    %c0_i32 = arith.constant 0 : i32
    %c0_i32_0 = arith.constant 0 : i32
    %c0_i32_1 = arith.constant 0 : i32
    return %c0_i32, %c0_i32_0 : i32, i32
  }
  func.func @transform_3(%arg0: i32) -> (i32, i32) {
    %c0_i32 = arith.constant 0 : i32
    %c0_i32_0 = arith.constant 0 : i32
    %c0_i32_1 = arith.constant 0 : i32
    return %c0_i32, %c0_i32_0 : i32, i32
  }
  func.func @transform_4(%arg0: i32) -> (i32, i32) {
    %c0_i32 = arith.constant 0 : i32
    %c0_i32_0 = arith.constant 0 : i32
    %c0_i32_1 = arith.constant 0 : i32
    return %c0_i32, %c0_i32_0 : i32, i32
  }
  func.func @transform_5(%arg0: i32) -> (i32, i32) {
    %c0_i32 = arith.constant 0 : i32
    %c0_i32_0 = arith.constant 0 : i32
    %c0_i32_1 = arith.constant 0 : i32
    return %c0_i32, %c0_i32_0 : i32, i32
  }
  func.func @transform_6(%arg0: i32) -> (i32, i32, i32) {
    %c0_i32 = arith.constant 0 : i32
    %c0_i32_0 = arith.constant 0 : i32
    %c0_i32_1 = arith.constant 0 : i32
    return %arg0, %c0_i32, %c0_i32_0 : i32, i32, i32
  }
}

module attributes {stable_mosaic.version = 11 : i64} {
  func.func @_conv_pf_kernel(%arg0: i32, %arg1: memref<1x32x128xbf16, #tpu.memory_space<vmem>>, %arg2: memref<16x72xbf16, #tpu.memory_space<vmem>>, %arg3: memref<16x1xf32, #tpu.memory_space<vmem>>, %arg4: memref<1x128xf32, #tpu.memory_space<vmem>>, %arg5: memref<1x16x128xbf16, #tpu.memory_space<vmem>>) attributes {dimension_semantics = [#tpu.dimension_semantics<parallel>], iteration_bounds = array<i64: 4>, scalar_prefetch = 0 : i64, scratch_operands = 0 : i64, tpu.core_type = #tpu.core_type<tc>, window_params = [{transform_indices = @transform_0, window_bounds = array<i64: 1, 32, 128>}, {pipeline_mode = #tpu.pipeline_mode<synchronous>, transform_indices = @transform_1, window_bounds = array<i64: 16, 72>}, {pipeline_mode = #tpu.pipeline_mode<synchronous>, transform_indices = @transform_2, window_bounds = array<i64: 16, 1>}, {pipeline_mode = #tpu.pipeline_mode<synchronous>, transform_indices = @transform_3, window_bounds = array<i64: 1, 128>}, {transform_indices = @transform_4, window_bounds = array<i64: 1, 16, 128>}]} {
    %c0 = arith.constant 0 : index
    %c20 = arith.constant 20 : index
    %0 = vector.load %arg4[%c0, %c20] : memref<1x128xf32, #tpu.memory_space<vmem>>, vector<1x80xf32>
    %c0_0 = arith.constant 0 : index
    %c0_1 = arith.constant 0 : index
    %1 = vector.load %arg2[%c0_0, %c0_1] : memref<16x72xbf16, #tpu.memory_space<vmem>>, vector<16x72xbf16>
    %c0_2 = arith.constant 0 : index
    %c24 = arith.constant 24 : index
    %c9 = arith.constant 9 : index
    %2 = vector.load %arg1[%c0_2, %c24, %c9] : memref<1x32x128xbf16, #tpu.memory_space<vmem>>, vector<1x8x80xbf16>
    %3 = vector.shape_cast %2 : vector<1x8x80xbf16> to vector<8x80xbf16>
    %c0_3 = arith.constant 0 : index
    %c16 = arith.constant 16 : index
    %c10 = arith.constant 10 : index
    %4 = vector.load %arg1[%c0_3, %c16, %c10] : memref<1x32x128xbf16, #tpu.memory_space<vmem>>, vector<1x8x80xbf16>
    %5 = vector.shape_cast %4 : vector<1x8x80xbf16> to vector<8x80xbf16>
    %c0_4 = arith.constant 0 : index
    %c24_5 = arith.constant 24 : index
    %c10_6 = arith.constant 10 : index
    %6 = vector.load %arg1[%c0_4, %c24_5, %c10_6] : memref<1x32x128xbf16, #tpu.memory_space<vmem>>, vector<1x8x80xbf16>
    %7 = vector.shape_cast %6 : vector<1x8x80xbf16> to vector<8x80xbf16>
    %c0_7 = arith.constant 0 : index
    %c8 = arith.constant 8 : index
    %c19 = arith.constant 19 : index
    %8 = vector.load %arg1[%c0_7, %c8, %c19] : memref<1x32x128xbf16, #tpu.memory_space<vmem>>, vector<1x8x80xbf16>
    %9 = vector.shape_cast %8 : vector<1x8x80xbf16> to vector<8x80xbf16>
    %c0_8 = arith.constant 0 : index
    %c0_9 = arith.constant 0 : index
    %c20_10 = arith.constant 20 : index
    %10 = vector.load %arg1[%c0_8, %c0_9, %c20_10] : memref<1x32x128xbf16, #tpu.memory_space<vmem>>, vector<1x8x80xbf16>
    %11 = vector.shape_cast %10 : vector<1x8x80xbf16> to vector<8x80xbf16>
    %c0_11 = arith.constant 0 : index
    %c8_12 = arith.constant 8 : index
    %c20_13 = arith.constant 20 : index
    %12 = vector.load %arg1[%c0_11, %c8_12, %c20_13] : memref<1x32x128xbf16, #tpu.memory_space<vmem>>, vector<1x8x80xbf16>
    %13 = vector.shape_cast %12 : vector<1x8x80xbf16> to vector<8x80xbf16>
    %c0_14 = arith.constant 0 : index
    %c24_15 = arith.constant 24 : index
    %c19_16 = arith.constant 19 : index
    %14 = vector.load %arg1[%c0_14, %c24_15, %c19_16] : memref<1x32x128xbf16, #tpu.memory_space<vmem>>, vector<1x8x80xbf16>
    %15 = vector.shape_cast %14 : vector<1x8x80xbf16> to vector<8x80xbf16>
    %c0_17 = arith.constant 0 : index
    %c16_18 = arith.constant 16 : index
    %c20_19 = arith.constant 20 : index
    %16 = vector.load %arg1[%c0_17, %c16_18, %c20_19] : memref<1x32x128xbf16, #tpu.memory_space<vmem>>, vector<1x8x80xbf16>
    %17 = vector.shape_cast %16 : vector<1x8x80xbf16> to vector<8x80xbf16>
    %c0_20 = arith.constant 0 : index
    %c24_21 = arith.constant 24 : index
    %c20_22 = arith.constant 20 : index
    %18 = vector.load %arg1[%c0_20, %c24_21, %c20_22] : memref<1x32x128xbf16, #tpu.memory_space<vmem>>, vector<1x8x80xbf16>
    %19 = vector.shape_cast %18 : vector<1x8x80xbf16> to vector<8x80xbf16>
    %20 = tpu.concatenate %3, %5, %7, %9, %11, %13, %15, %17, %19 in 0 : vector<8x80xbf16>, vector<8x80xbf16>, vector<8x80xbf16>, vector<8x80xbf16>, vector<8x80xbf16>, vector<8x80xbf16>, vector<8x80xbf16>, vector<8x80xbf16>, vector<8x80xbf16> -> vector<72x80xbf16>
    %cst = arith.constant dense<0.000000e+00> : vector<16x80xf32>
    %21 = tpu.matmul %1, %20, %cst {dimension_numbers = #tpu.dot_dimension_numbers<[1], [0], [0], [1], [0, 0, 1, 1], [], []>} : vector<16x72xbf16>, vector<72x80xbf16>, vector<16x80xf32> -> vector<16x80xf32>
    %c0_23 = arith.constant 0 : index
    %c0_24 = arith.constant 0 : index
    %22 = vector.load %arg3[%c0_23, %c0_24] : memref<16x1xf32, #tpu.memory_space<vmem>>, vector<16x1xf32>
    %23 = vector.broadcast %22 : vector<16x1xf32> to vector<16x80xf32>
    %24 = arith.addf %21, %23 : vector<16x80xf32>
    %cst_25 = arith.constant 0.000000e+00 : f32
    %25 = vector.broadcast %cst_25 : f32 to vector<16x80xf32>
    %26 = arith.maximumf %24, %25 : vector<16x80xf32>
    %27 = vector.broadcast %0 : vector<1x80xf32> to vector<16x80xf32>
    %28 = arith.mulf %26, %27 : vector<16x80xf32>
    %cst_26 = arith.constant 0.000000e+00 : bf16
    %29 = vector.broadcast %cst_26 : bf16 to vector<16x20xbf16>
    %30 = arith.truncf %28 : vector<16x80xf32> to vector<16x80xbf16>
    %cst_27 = arith.constant 0.000000e+00 : bf16
    %31 = vector.broadcast %cst_27 : bf16 to vector<16x28xbf16>
    %32 = tpu.concatenate %29, %30, %31 in 1 : vector<16x20xbf16>, vector<16x80xbf16>, vector<16x28xbf16> -> vector<16x128xbf16>
    %c0_28 = arith.constant 0 : index
    %c0_29 = arith.constant 0 : index
    %c0_30 = arith.constant 0 : index
    %33 = vector.load %arg5[%c0_28, %c0_29, %c0_30] : memref<1x16x128xbf16, #tpu.memory_space<vmem>>, vector<1x16x128xbf16>
    %34 = vector.shape_cast %33 : vector<1x16x128xbf16> to vector<16x128xbf16>
    %35 = vector.shape_cast %32 : vector<16x128xbf16> to vector<1x16x128xbf16>
    tpu.vector_store %arg5[%c0_28, %c0_29, %c0_30], %35 {strides = array<i32>} : memref<1x16x128xbf16, #tpu.memory_space<vmem>>, vector<1x16x128xbf16>,
    return
  }
  func.func @transform_0(%arg0: i32) -> (i32, i32, i32) {
    %c0_i32 = arith.constant 0 : i32
    %c0_i32_0 = arith.constant 0 : i32
    %c0_i32_1 = arith.constant 0 : i32
    return %arg0, %c0_i32, %c0_i32_0 : i32, i32, i32
  }
  func.func @transform_1(%arg0: i32) -> (i32, i32) {
    %c0_i32 = arith.constant 0 : i32
    %c0_i32_0 = arith.constant 0 : i32
    %c0_i32_1 = arith.constant 0 : i32
    return %c0_i32, %c0_i32_0 : i32, i32
  }
  func.func @transform_2(%arg0: i32) -> (i32, i32) {
    %c0_i32 = arith.constant 0 : i32
    %c0_i32_0 = arith.constant 0 : i32
    %c0_i32_1 = arith.constant 0 : i32
    return %c0_i32, %c0_i32_0 : i32, i32
  }
  func.func @transform_3(%arg0: i32) -> (i32, i32) {
    %c0_i32 = arith.constant 0 : i32
    %c0_i32_0 = arith.constant 0 : i32
    %c0_i32_1 = arith.constant 0 : i32
    return %c0_i32, %c0_i32_0 : i32, i32
  }
  func.func @transform_4(%arg0: i32) -> (i32, i32, i32) {
    %c0_i32 = arith.constant 0 : i32
    %c0_i32_0 = arith.constant 0 : i32
    %c0_i32_1 = arith.constant 0 : i32
    return %arg0, %c0_i32, %c0_i32_0 : i32, i32, i32
  }
}

module attributes {stable_mosaic.version = 11 : i64} {
  func.func @_double_conv_pf_kernel(%arg0: i32, %arg1: memref<1x16x128xbf16, #tpu.memory_space<vmem>>, %arg2: memref<16x144xbf16, #tpu.memory_space<vmem>>, %arg3: memref<16x1xf32, #tpu.memory_space<vmem>>, %arg4: memref<16x144xbf16, #tpu.memory_space<vmem>>, %arg5: memref<16x1xf32, #tpu.memory_space<vmem>>, %arg6: memref<1x128xf32, #tpu.memory_space<vmem>>, %arg7: memref<1x16x128xbf16, #tpu.memory_space<vmem>>, %arg8: memref<16x128xbf16, #tpu.memory_space<vmem>>) attributes {dimension_semantics = [#tpu.dimension_semantics<parallel>], iteration_bounds = array<i64: 4>, scalar_prefetch = 0 : i64, scratch_operands = 1 : i64, tpu.core_type = #tpu.core_type<tc>, window_params = [{transform_indices = @transform_0, window_bounds = array<i64: 1, 16, 128>}, {pipeline_mode = #tpu.pipeline_mode<synchronous>, transform_indices = @transform_1, window_bounds = array<i64: 16, 144>}, {pipeline_mode = #tpu.pipeline_mode<synchronous>, transform_indices = @transform_2, window_bounds = array<i64: 16, 1>}, {pipeline_mode = #tpu.pipeline_mode<synchronous>, transform_indices = @transform_3, window_bounds = array<i64: 16, 144>}, {pipeline_mode = #tpu.pipeline_mode<synchronous>, transform_indices = @transform_4, window_bounds = array<i64: 16, 1>}, {pipeline_mode = #tpu.pipeline_mode<synchronous>, transform_indices = @transform_5, window_bounds = array<i64: 1, 128>}, {transform_indices = @transform_6, window_bounds = array<i64: 1, 16, 128>}]} {
    %c0 = arith.constant 0 : index
    %c20 = arith.constant 20 : index
    %0 = vector.load %arg6[%c0, %c20] : memref<1x128xf32, #tpu.memory_space<vmem>>, vector<1x80xf32>
    %c0_0 = arith.constant 0 : index
    %c0_1 = arith.constant 0 : index
    %1 = vector.load %arg2[%c0_0, %c0_1] : memref<16x144xbf16, #tpu.memory_space<vmem>>, vector<16x144xbf16>
    %c0_2 = arith.constant 0 : index
    %c0_3 = arith.constant 0 : index
    %c9 = arith.constant 9 : index
    %2 = vector.load %arg1[%c0_2, %c0_3, %c9] : memref<1x16x128xbf16, #tpu.memory_space<vmem>>, vector<1x16x80xbf16>
    %3 = vector.shape_cast %2 : vector<1x16x80xbf16> to vector<16x80xbf16>
    %c0_4 = arith.constant 0 : index
    %c0_5 = arith.constant 0 : index
    %c10 = arith.constant 10 : index
    %4 = vector.load %arg1[%c0_4, %c0_5, %c10] : memref<1x16x128xbf16, #tpu.memory_space<vmem>>, vector<1x16x80xbf16>
    %5 = vector.shape_cast %4 : vector<1x16x80xbf16> to vector<16x80xbf16>
    %c0_6 = arith.constant 0 : index
    %c0_7 = arith.constant 0 : index
    %c11 = arith.constant 11 : index
    %6 = vector.load %arg1[%c0_6, %c0_7, %c11] : memref<1x16x128xbf16, #tpu.memory_space<vmem>>, vector<1x16x80xbf16>
    %7 = vector.shape_cast %6 : vector<1x16x80xbf16> to vector<16x80xbf16>
    %c0_8 = arith.constant 0 : index
    %c0_9 = arith.constant 0 : index
    %c19 = arith.constant 19 : index
    %8 = vector.load %arg1[%c0_8, %c0_9, %c19] : memref<1x16x128xbf16, #tpu.memory_space<vmem>>, vector<1x16x80xbf16>
    %9 = vector.shape_cast %8 : vector<1x16x80xbf16> to vector<16x80xbf16>
    %c0_10 = arith.constant 0 : index
    %c0_11 = arith.constant 0 : index
    %c20_12 = arith.constant 20 : index
    %10 = vector.load %arg1[%c0_10, %c0_11, %c20_12] : memref<1x16x128xbf16, #tpu.memory_space<vmem>>, vector<1x16x80xbf16>
    %11 = vector.shape_cast %10 : vector<1x16x80xbf16> to vector<16x80xbf16>
    %c0_13 = arith.constant 0 : index
    %c0_14 = arith.constant 0 : index
    %c21 = arith.constant 21 : index
    %12 = vector.load %arg1[%c0_13, %c0_14, %c21] : memref<1x16x128xbf16, #tpu.memory_space<vmem>>, vector<1x16x80xbf16>
    %13 = vector.shape_cast %12 : vector<1x16x80xbf16> to vector<16x80xbf16>
    %c0_15 = arith.constant 0 : index
    %c0_16 = arith.constant 0 : index
    %c29 = arith.constant 29 : index
    %14 = vector.load %arg1[%c0_15, %c0_16, %c29] : memref<1x16x128xbf16, #tpu.memory_space<vmem>>, vector<1x16x80xbf16>
    %15 = vector.shape_cast %14 : vector<1x16x80xbf16> to vector<16x80xbf16>
    %c0_17 = arith.constant 0 : index
    %c0_18 = arith.constant 0 : index
    %c30 = arith.constant 30 : index
    %16 = vector.load %arg1[%c0_17, %c0_18, %c30] : memref<1x16x128xbf16, #tpu.memory_space<vmem>>, vector<1x16x80xbf16>
    %17 = vector.shape_cast %16 : vector<1x16x80xbf16> to vector<16x80xbf16>
    %c0_19 = arith.constant 0 : index
    %c0_20 = arith.constant 0 : index
    %c31 = arith.constant 31 : index
    %18 = vector.load %arg1[%c0_19, %c0_20, %c31] : memref<1x16x128xbf16, #tpu.memory_space<vmem>>, vector<1x16x80xbf16>
    %19 = vector.shape_cast %18 : vector<1x16x80xbf16> to vector<16x80xbf16>
    %20 = tpu.concatenate %3, %5, %7, %9, %11, %13, %15, %17, %19 in 0 : vector<16x80xbf16>, vector<16x80xbf16>, vector<16x80xbf16>, vector<16x80xbf16>, vector<16x80xbf16>, vector<16x80xbf16>, vector<16x80xbf16>, vector<16x80xbf16>, vector<16x80xbf16> -> vector<144x80xbf16>
    %cst = arith.constant dense<0.000000e+00> : vector<16x80xf32>
    %21 = tpu.matmul %1, %20, %cst {dimension_numbers = #tpu.dot_dimension_numbers<[1], [0], [0], [1], [0, 0, 1, 1], [], []>} : vector<16x144xbf16>, vector<144x80xbf16>, vector<16x80xf32> -> vector<16x80xf32>
    %c0_21 = arith.constant 0 : index
    %c0_22 = arith.constant 0 : index
    %22 = vector.load %arg3[%c0_21, %c0_22] : memref<16x1xf32, #tpu.memory_space<vmem>>, vector<16x1xf32>
    %23 = vector.broadcast %22 : vector<16x1xf32> to vector<16x80xf32>
    %24 = arith.addf %21, %23 : vector<16x80xf32>
    %cst_23 = arith.constant 0.000000e+00 : f32
    %25 = vector.broadcast %cst_23 : f32 to vector<16x80xf32>
    %26 = arith.maximumf %24, %25 : vector<16x80xf32>
    %27 = vector.broadcast %0 : vector<1x80xf32> to vector<16x80xf32>
    %28 = arith.mulf %26, %27 : vector<16x80xf32>
    %cst_24 = arith.constant 0.000000e+00 : bf16
    %29 = vector.broadcast %cst_24 : bf16 to vector<16x20xbf16>
    %30 = arith.truncf %28 : vector<16x80xf32> to vector<16x80xbf16>
    %cst_25 = arith.constant 0.000000e+00 : bf16
    %31 = vector.broadcast %cst_25 : bf16 to vector<16x28xbf16>
    %32 = tpu.concatenate %29, %30, %31 in 1 : vector<16x20xbf16>, vector<16x80xbf16>, vector<16x28xbf16> -> vector<16x128xbf16>
    %c0_26 = arith.constant 0 : index
    %c0_27 = arith.constant 0 : index
    %33 = vector.load %arg8[%c0_26, %c0_27] : memref<16x128xbf16, #tpu.memory_space<vmem>>, vector<16x128xbf16>
    tpu.vector_store %arg8[%c0_26, %c0_27], %32 {strides = array<i32>} : memref<16x128xbf16, #tpu.memory_space<vmem>>, vector<16x128xbf16>,
    %c0_28 = arith.constant 0 : index
    %c0_29 = arith.constant 0 : index
    %34 = vector.load %arg4[%c0_28, %c0_29] : memref<16x144xbf16, #tpu.memory_space<vmem>>, vector<16x144xbf16>
    %c0_30 = arith.constant 0 : index
    %c9_31 = arith.constant 9 : index
    %35 = vector.load %arg8[%c0_30, %c9_31] : memref<16x128xbf16, #tpu.memory_space<vmem>>, vector<16x80xbf16>
    %c0_32 = arith.constant 0 : index
    %c10_33 = arith.constant 10 : index
    %36 = vector.load %arg8[%c0_32, %c10_33] : memref<16x128xbf16, #tpu.memory_space<vmem>>, vector<16x80xbf16>
    %c0_34 = arith.constant 0 : index
    %c11_35 = arith.constant 11 : index
    %37 = vector.load %arg8[%c0_34, %c11_35] : memref<16x128xbf16, #tpu.memory_space<vmem>>, vector<16x80xbf16>
    %c0_36 = arith.constant 0 : index
    %c19_37 = arith.constant 19 : index
    %38 = vector.load %arg8[%c0_36, %c19_37] : memref<16x128xbf16, #tpu.memory_space<vmem>>, vector<16x80xbf16>
    %c0_38 = arith.constant 0 : index
    %c20_39 = arith.constant 20 : index
    %39 = vector.load %arg8[%c0_38, %c20_39] : memref<16x128xbf16, #tpu.memory_space<vmem>>, vector<16x80xbf16>
    %c0_40 = arith.constant 0 : index
    %c21_41 = arith.constant 21 : index
    %40 = vector.load %arg8[%c0_40, %c21_41] : memref<16x128xbf16, #tpu.memory_space<vmem>>, vector<16x80xbf16>
    %c0_42 = arith.constant 0 : index
    %c29_43 = arith.constant 29 : index
    %41 = vector.load %arg8[%c0_42, %c29_43] : memref<16x128xbf16, #tpu.memory_space<vmem>>, vector<16x80xbf16>
    %c0_44 = arith.constant 0 : index
    %c30_45 = arith.constant 30 : index
    %42 = vector.load %arg8[%c0_44, %c30_45] : memref<16x128xbf16, #tpu.memory_space<vmem>>, vector<16x80xbf16>
    %c0_46 = arith.constant 0 : index
    %c31_47 = arith.constant 31 : index
    %43 = vector.load %arg8[%c0_46, %c31_47] : memref<16x128xbf16, #tpu.memory_space<vmem>>, vector<16x80xbf16>
    %44 = tpu.concatenate %35, %36, %37, %38, %39, %40, %41, %42, %43 in 0 : vector<16x80xbf16>, vector<16x80xbf16>, vector<16x80xbf16>, vector<16x80xbf16>, vector<16x80xbf16>, vector<16x80xbf16>, vector<16x80xbf16>, vector<16x80xbf16>, vector<16x80xbf16> -> vector<144x80xbf16>
    %cst_48 = arith.constant dense<0.000000e+00> : vector<16x80xf32>
    %45 = tpu.matmul %34, %44, %cst_48 {dimension_numbers = #tpu.dot_dimension_numbers<[1], [0], [0], [1], [0, 0, 1, 1], [], []>} : vector<16x144xbf16>, vector<144x80xbf16>, vector<16x80xf32> -> vector<16x80xf32>
    %c0_49 = arith.constant 0 : index
    %c0_50 = arith.constant 0 : index
    %46 = vector.load %arg5[%c0_49, %c0_50] : memref<16x1xf32, #tpu.memory_space<vmem>>, vector<16x1xf32>
    %47 = vector.broadcast %46 : vector<16x1xf32> to vector<16x80xf32>
    %48 = arith.addf %45, %47 : vector<16x80xf32>
    %c0_51 = arith.constant 0 : index
    %c0_52 = arith.constant 0 : index
    %c20_53 = arith.constant 20 : index
    %49 = vector.load %arg1[%c0_51, %c0_52, %c20_53] : memref<1x16x128xbf16, #tpu.memory_space<vmem>>, vector<1x16x80xbf16>
    %50 = vector.shape_cast %49 : vector<1x16x80xbf16> to vector<16x80xbf16>
    %51 = arith.extf %50 : vector<16x80xbf16> to vector<16x80xf32>
    %52 = arith.addf %48, %51 : vector<16x80xf32>
    %cst_54 = arith.constant 0.000000e+00 : f32
    %53 = vector.broadcast %cst_54 : f32 to vector<16x80xf32>
    %54 = arith.maximumf %52, %53 : vector<16x80xf32>
    %55 = vector.broadcast %0 : vector<1x80xf32> to vector<16x80xf32>
    %56 = arith.mulf %54, %55 : vector<16x80xf32>
    %cst_55 = arith.constant 0.000000e+00 : bf16
    %57 = vector.broadcast %cst_55 : bf16 to vector<16x20xbf16>
    %58 = arith.truncf %56 : vector<16x80xf32> to vector<16x80xbf16>
    %cst_56 = arith.constant 0.000000e+00 : bf16
    %59 = vector.broadcast %cst_56 : bf16 to vector<16x28xbf16>
    %60 = tpu.concatenate %57, %58, %59 in 1 : vector<16x20xbf16>, vector<16x80xbf16>, vector<16x28xbf16> -> vector<16x128xbf16>
    %c0_57 = arith.constant 0 : index
    %c0_58 = arith.constant 0 : index
    %c0_59 = arith.constant 0 : index
    %61 = vector.load %arg7[%c0_57, %c0_58, %c0_59] : memref<1x16x128xbf16, #tpu.memory_space<vmem>>, vector<1x16x128xbf16>
    %62 = vector.shape_cast %61 : vector<1x16x128xbf16> to vector<16x128xbf16>
    %63 = vector.shape_cast %60 : vector<16x128xbf16> to vector<1x16x128xbf16>
    tpu.vector_store %arg7[%c0_57, %c0_58, %c0_59], %63 {strides = array<i32>} : memref<1x16x128xbf16, #tpu.memory_space<vmem>>, vector<1x16x128xbf16>,
    return
  }
  func.func @transform_0(%arg0: i32) -> (i32, i32, i32) {
    %c0_i32 = arith.constant 0 : i32
    %c0_i32_0 = arith.constant 0 : i32
    %c0_i32_1 = arith.constant 0 : i32
    return %arg0, %c0_i32, %c0_i32_0 : i32, i32, i32
  }
  func.func @transform_1(%arg0: i32) -> (i32, i32) {
    %c0_i32 = arith.constant 0 : i32
    %c0_i32_0 = arith.constant 0 : i32
    %c0_i32_1 = arith.constant 0 : i32
    return %c0_i32, %c0_i32_0 : i32, i32
  }
  func.func @transform_2(%arg0: i32) -> (i32, i32) {
    %c0_i32 = arith.constant 0 : i32
    %c0_i32_0 = arith.constant 0 : i32
    %c0_i32_1 = arith.constant 0 : i32
    return %c0_i32, %c0_i32_0 : i32, i32
  }
  func.func @transform_3(%arg0: i32) -> (i32, i32) {
    %c0_i32 = arith.constant 0 : i32
    %c0_i32_0 = arith.constant 0 : i32
    %c0_i32_1 = arith.constant 0 : i32
    return %c0_i32, %c0_i32_0 : i32, i32
  }
  func.func @transform_4(%arg0: i32) -> (i32, i32) {
    %c0_i32 = arith.constant 0 : i32
    %c0_i32_0 = arith.constant 0 : i32
    %c0_i32_1 = arith.constant 0 : i32
    return %c0_i32, %c0_i32_0 : i32, i32
  }
  func.func @transform_5(%arg0: i32) -> (i32, i32) {
    %c0_i32 = arith.constant 0 : i32
    %c0_i32_0 = arith.constant 0 : i32
    %c0_i32_1 = arith.constant 0 : i32
    return %c0_i32, %c0_i32_0 : i32, i32
  }
  func.func @transform_6(%arg0: i32) -> (i32, i32, i32) {
    %c0_i32 = arith.constant 0 : i32
    %c0_i32_0 = arith.constant 0 : i32
    %c0_i32_1 = arith.constant 0 : i32
    return %arg0, %c0_i32, %c0_i32_0 : i32, i32, i32
  }
}

module attributes {stable_mosaic.version = 11 : i64} {
  func.func @_conv_pf_kernel(%arg0: i32, %arg1: memref<1x64x128xbf16, #tpu.memory_space<vmem>>, %arg2: memref<32x144xbf16, #tpu.memory_space<vmem>>, %arg3: memref<32x1xf32, #tpu.memory_space<vmem>>, %arg4: memref<1x128xf32, #tpu.memory_space<vmem>>, %arg5: memref<1x32x128xbf16, #tpu.memory_space<vmem>>) attributes {dimension_semantics = [#tpu.dimension_semantics<parallel>], iteration_bounds = array<i64: 4>, scalar_prefetch = 0 : i64, scratch_operands = 0 : i64, tpu.core_type = #tpu.core_type<tc>, window_params = [{transform_indices = @transform_0, window_bounds = array<i64: 1, 64, 128>}, {pipeline_mode = #tpu.pipeline_mode<synchronous>, transform_indices = @transform_1, window_bounds = array<i64: 32, 144>}, {pipeline_mode = #tpu.pipeline_mode<synchronous>, transform_indices = @transform_2, window_bounds = array<i64: 32, 1>}, {pipeline_mode = #tpu.pipeline_mode<synchronous>, transform_indices = @transform_3, window_bounds = array<i64: 1, 128>}, {transform_indices = @transform_4, window_bounds = array<i64: 1, 32, 128>}]} {
    %c0 = arith.constant 0 : index
    %c12 = arith.constant 12 : index
    %0 = vector.load %arg4[%c0, %c12] : memref<1x128xf32, #tpu.memory_space<vmem>>, vector<1x24xf32>
    %c0_0 = arith.constant 0 : index
    %c0_1 = arith.constant 0 : index
    %1 = vector.load %arg2[%c0_0, %c0_1] : memref<32x144xbf16, #tpu.memory_space<vmem>>, vector<32x144xbf16>
    %c0_2 = arith.constant 0 : index
    %c48 = arith.constant 48 : index
    %c5 = arith.constant 5 : index
    %2 = vector.load %arg1[%c0_2, %c48, %c5] : memref<1x64x128xbf16, #tpu.memory_space<vmem>>, vector<1x16x24xbf16>
    %3 = vector.shape_cast %2 : vector<1x16x24xbf16> to vector<16x24xbf16>
    %c0_3 = arith.constant 0 : index
    %c32 = arith.constant 32 : index
    %c6 = arith.constant 6 : index
    %4 = vector.load %arg1[%c0_3, %c32, %c6] : memref<1x64x128xbf16, #tpu.memory_space<vmem>>, vector<1x16x24xbf16>
    %5 = vector.shape_cast %4 : vector<1x16x24xbf16> to vector<16x24xbf16>
    %c0_4 = arith.constant 0 : index
    %c48_5 = arith.constant 48 : index
    %c6_6 = arith.constant 6 : index
    %6 = vector.load %arg1[%c0_4, %c48_5, %c6_6] : memref<1x64x128xbf16, #tpu.memory_space<vmem>>, vector<1x16x24xbf16>
    %7 = vector.shape_cast %6 : vector<1x16x24xbf16> to vector<16x24xbf16>
    %c0_7 = arith.constant 0 : index
    %c16 = arith.constant 16 : index
    %c11 = arith.constant 11 : index
    %8 = vector.load %arg1[%c0_7, %c16, %c11] : memref<1x64x128xbf16, #tpu.memory_space<vmem>>, vector<1x16x24xbf16>
    %9 = vector.shape_cast %8 : vector<1x16x24xbf16> to vector<16x24xbf16>
    %c0_8 = arith.constant 0 : index
    %c0_9 = arith.constant 0 : index
    %c12_10 = arith.constant 12 : index
    %10 = vector.load %arg1[%c0_8, %c0_9, %c12_10] : memref<1x64x128xbf16, #tpu.memory_space<vmem>>, vector<1x16x24xbf16>
    %11 = vector.shape_cast %10 : vector<1x16x24xbf16> to vector<16x24xbf16>
    %c0_11 = arith.constant 0 : index
    %c16_12 = arith.constant 16 : index
    %c12_13 = arith.constant 12 : index
    %12 = vector.load %arg1[%c0_11, %c16_12, %c12_13] : memref<1x64x128xbf16, #tpu.memory_space<vmem>>, vector<1x16x24xbf16>
    %13 = vector.shape_cast %12 : vector<1x16x24xbf16> to vector<16x24xbf16>
    %c0_14 = arith.constant 0 : index
    %c48_15 = arith.constant 48 : index
    %c11_16 = arith.constant 11 : index
    %14 = vector.load %arg1[%c0_14, %c48_15, %c11_16] : memref<1x64x128xbf16, #tpu.memory_space<vmem>>, vector<1x16x24xbf16>
    %15 = vector.shape_cast %14 : vector<1x16x24xbf16> to vector<16x24xbf16>
    %c0_17 = arith.constant 0 : index
    %c32_18 = arith.constant 32 : index
    %c12_19 = arith.constant 12 : index
    %16 = vector.load %arg1[%c0_17, %c32_18, %c12_19] : memref<1x64x128xbf16, #tpu.memory_space<vmem>>, vector<1x16x24xbf16>
    %17 = vector.shape_cast %16 : vector<1x16x24xbf16> to vector<16x24xbf16>
    %c0_20 = arith.constant 0 : index
    %c48_21 = arith.constant 48 : index
    %c12_22 = arith.constant 12 : index
    %18 = vector.load %arg1[%c0_20, %c48_21, %c12_22] : memref<1x64x128xbf16, #tpu.memory_space<vmem>>, vector<1x16x24xbf16>
    %19 = vector.shape_cast %18 : vector<1x16x24xbf16> to vector<16x24xbf16>
    %20 = tpu.concatenate %3, %5, %7, %9, %11, %13, %15, %17, %19 in 0 : vector<16x24xbf16>, vector<16x24xbf16>, vector<16x24xbf16>, vector<16x24xbf16>, vector<16x24xbf16>, vector<16x24xbf16>, vector<16x24xbf16>, vector<16x24xbf16>, vector<16x24xbf16> -> vector<144x24xbf16>
    %cst = arith.constant dense<0.000000e+00> : vector<32x24xf32>
    %21 = tpu.matmul %1, %20, %cst {dimension_numbers = #tpu.dot_dimension_numbers<[1], [0], [0], [1], [0, 0, 1, 1], [], []>} : vector<32x144xbf16>, vector<144x24xbf16>, vector<32x24xf32> -> vector<32x24xf32>
    %c0_23 = arith.constant 0 : index
    %c0_24 = arith.constant 0 : index
    %22 = vector.load %arg3[%c0_23, %c0_24] : memref<32x1xf32, #tpu.memory_space<vmem>>, vector<32x1xf32>
    %23 = vector.broadcast %22 : vector<32x1xf32> to vector<32x24xf32>
    %24 = arith.addf %21, %23 : vector<32x24xf32>
    %cst_25 = arith.constant 0.000000e+00 : f32
    %25 = vector.broadcast %cst_25 : f32 to vector<32x24xf32>
    %26 = arith.maximumf %24, %25 : vector<32x24xf32>
    %27 = vector.broadcast %0 : vector<1x24xf32> to vector<32x24xf32>
    %28 = arith.mulf %26, %27 : vector<32x24xf32>
    %cst_26 = arith.constant 0.000000e+00 : bf16
    %29 = vector.broadcast %cst_26 : bf16 to vector<32x12xbf16>
    %30 = arith.truncf %28 : vector<32x24xf32> to vector<32x24xbf16>
    %cst_27 = arith.constant 0.000000e+00 : bf16
    %31 = vector.broadcast %cst_27 : bf16 to vector<32x92xbf16>
    %32 = tpu.concatenate %29, %30, %31 in 1 : vector<32x12xbf16>, vector<32x24xbf16>, vector<32x92xbf16> -> vector<32x128xbf16>
    %c0_28 = arith.constant 0 : index
    %c0_29 = arith.constant 0 : index
    %c0_30 = arith.constant 0 : index
    %33 = vector.load %arg5[%c0_28, %c0_29, %c0_30] : memref<1x32x128xbf16, #tpu.memory_space<vmem>>, vector<1x32x128xbf16>
    %34 = vector.shape_cast %33 : vector<1x32x128xbf16> to vector<32x128xbf16>
    %35 = vector.shape_cast %32 : vector<32x128xbf16> to vector<1x32x128xbf16>
    tpu.vector_store %arg5[%c0_28, %c0_29, %c0_30], %35 {strides = array<i32>} : memref<1x32x128xbf16, #tpu.memory_space<vmem>>, vector<1x32x128xbf16>,
    return
  }
  func.func @transform_0(%arg0: i32) -> (i32, i32, i32) {
    %c0_i32 = arith.constant 0 : i32
    %c0_i32_0 = arith.constant 0 : i32
    %c0_i32_1 = arith.constant 0 : i32
    return %arg0, %c0_i32, %c0_i32_0 : i32, i32, i32
  }
  func.func @transform_1(%arg0: i32) -> (i32, i32) {
    %c0_i32 = arith.constant 0 : i32
    %c0_i32_0 = arith.constant 0 : i32
    %c0_i32_1 = arith.constant 0 : i32
    return %c0_i32, %c0_i32_0 : i32, i32
  }
  func.func @transform_2(%arg0: i32) -> (i32, i32) {
    %c0_i32 = arith.constant 0 : i32
    %c0_i32_0 = arith.constant 0 : i32
    %c0_i32_1 = arith.constant 0 : i32
    return %c0_i32, %c0_i32_0 : i32, i32
  }
  func.func @transform_3(%arg0: i32) -> (i32, i32) {
    %c0_i32 = arith.constant 0 : i32
    %c0_i32_0 = arith.constant 0 : i32
    %c0_i32_1 = arith.constant 0 : i32
    return %c0_i32, %c0_i32_0 : i32, i32
  }
  func.func @transform_4(%arg0: i32) -> (i32, i32, i32) {
    %c0_i32 = arith.constant 0 : i32
    %c0_i32_0 = arith.constant 0 : i32
    %c0_i32_1 = arith.constant 0 : i32
    return %arg0, %c0_i32, %c0_i32_0 : i32, i32, i32
  }
}

module attributes {stable_mosaic.version = 11 : i64} {
  func.func @_conv_pf_kernel(%arg0: i32, %arg1: memref<1x32x128xbf16, #tpu.memory_space<vmem>>, %arg2: memref<32x32xbf16, #tpu.memory_space<vmem>>, %arg3: memref<32x1xf32, #tpu.memory_space<vmem>>, %arg4: memref<1x128xf32, #tpu.memory_space<vmem>>, %arg5: memref<1x32x128xbf16, #tpu.memory_space<vmem>>) attributes {dimension_semantics = [#tpu.dimension_semantics<parallel>], iteration_bounds = array<i64: 4>, scalar_prefetch = 0 : i64, scratch_operands = 0 : i64, tpu.core_type = #tpu.core_type<tc>, window_params = [{transform_indices = @transform_0, window_bounds = array<i64: 1, 32, 128>}, {pipeline_mode = #tpu.pipeline_mode<synchronous>, transform_indices = @transform_1, window_bounds = array<i64: 32, 32>}, {pipeline_mode = #tpu.pipeline_mode<synchronous>, transform_indices = @transform_2, window_bounds = array<i64: 32, 1>}, {pipeline_mode = #tpu.pipeline_mode<synchronous>, transform_indices = @transform_3, window_bounds = array<i64: 1, 128>}, {transform_indices = @transform_4, window_bounds = array<i64: 1, 32, 128>}]} {
    %c0 = arith.constant 0 : index
    %c12 = arith.constant 12 : index
    %0 = vector.load %arg4[%c0, %c12] : memref<1x128xf32, #tpu.memory_space<vmem>>, vector<1x24xf32>
    %c0_0 = arith.constant 0 : index
    %c0_1 = arith.constant 0 : index
    %1 = vector.load %arg2[%c0_0, %c0_1] : memref<32x32xbf16, #tpu.memory_space<vmem>>, vector<32x32xbf16>
    %c0_2 = arith.constant 0 : index
    %c0_3 = arith.constant 0 : index
    %c12_4 = arith.constant 12 : index
    %2 = vector.load %arg1[%c0_2, %c0_3, %c12_4] : memref<1x32x128xbf16, #tpu.memory_space<vmem>>, vector<1x32x24xbf16>
    %3 = vector.shape_cast %2 : vector<1x32x24xbf16> to vector<32x24xbf16>
    %cst = arith.constant dense<0.000000e+00> : vector<32x24xf32>
    %4 = tpu.matmul %1, %3, %cst {dimension_numbers = #tpu.dot_dimension_numbers<[1], [0], [0], [1], [0, 0, 1, 1], [], []>} : vector<32x32xbf16>, vector<32x24xbf16>, vector<32x24xf32> -> vector<32x24xf32>
    %c0_5 = arith.constant 0 : index
    %c0_6 = arith.constant 0 : index
    %5 = vector.load %arg3[%c0_5, %c0_6] : memref<32x1xf32, #tpu.memory_space<vmem>>, vector<32x1xf32>
    %6 = vector.broadcast %5 : vector<32x1xf32> to vector<32x24xf32>
    %7 = arith.addf %4, %6 : vector<32x24xf32>
    %8 = vector.broadcast %0 : vector<1x24xf32> to vector<32x24xf32>
    %9 = arith.mulf %7, %8 : vector<32x24xf32>
    %cst_7 = arith.constant 0.000000e+00 : bf16
    %10 = vector.broadcast %cst_7 : bf16 to vector<32x12xbf16>
    %11 = arith.truncf %9 : vector<32x24xf32> to vector<32x24xbf16>
    %cst_8 = arith.constant 0.000000e+00 : bf16
    %12 = vector.broadcast %cst_8 : bf16 to vector<32x92xbf16>
    %13 = tpu.concatenate %10, %11, %12 in 1 : vector<32x12xbf16>, vector<32x24xbf16>, vector<32x92xbf16> -> vector<32x128xbf16>
    %c0_9 = arith.constant 0 : index
    %c0_10 = arith.constant 0 : index
    %c0_11 = arith.constant 0 : index
    %14 = vector.load %arg5[%c0_9, %c0_10, %c0_11] : memref<1x32x128xbf16, #tpu.memory_space<vmem>>, vector<1x32x128xbf16>
    %15 = vector.shape_cast %14 : vector<1x32x128xbf16> to vector<32x128xbf16>
    %16 = vector.shape_cast %13 : vector<32x128xbf16> to vector<1x32x128xbf16>
    tpu.vector_store %arg5[%c0_9, %c0_10, %c0_11], %16 {strides = array<i32>} : memref<1x32x128xbf16, #tpu.memory_space<vmem>>, vector<1x32x128xbf16>,
    return
  }
  func.func @transform_0(%arg0: i32) -> (i32, i32, i32) {
    %c0_i32 = arith.constant 0 : i32
    %c0_i32_0 = arith.constant 0 : i32
    %c0_i32_1 = arith.constant 0 : i32
    return %arg0, %c0_i32, %c0_i32_0 : i32, i32, i32
  }
  func.func @transform_1(%arg0: i32) -> (i32, i32) {
    %c0_i32 = arith.constant 0 : i32
    %c0_i32_0 = arith.constant 0 : i32
    %c0_i32_1 = arith.constant 0 : i32
    return %c0_i32, %c0_i32_0 : i32, i32
  }
  func.func @transform_2(%arg0: i32) -> (i32, i32) {
    %c0_i32 = arith.constant 0 : i32
    %c0_i32_0 = arith.constant 0 : i32
    %c0_i32_1 = arith.constant 0 : i32
    return %c0_i32, %c0_i32_0 : i32, i32
  }
  func.func @transform_3(%arg0: i32) -> (i32, i32) {
    %c0_i32 = arith.constant 0 : i32
    %c0_i32_0 = arith.constant 0 : i32
    %c0_i32_1 = arith.constant 0 : i32
    return %c0_i32, %c0_i32_0 : i32, i32
  }
  func.func @transform_4(%arg0: i32) -> (i32, i32, i32) {
    %c0_i32 = arith.constant 0 : i32
    %c0_i32_0 = arith.constant 0 : i32
    %c0_i32_1 = arith.constant 0 : i32
    return %arg0, %c0_i32, %c0_i32_0 : i32, i32, i32
  }
}

module attributes {stable_mosaic.version = 11 : i64} {
  func.func @_double_conv_pf_kernel(%arg0: i32, %arg1: memref<1x32x128xbf16, #tpu.memory_space<vmem>>, %arg2: memref<32x288xbf16, #tpu.memory_space<vmem>>, %arg3: memref<32x1xf32, #tpu.memory_space<vmem>>, %arg4: memref<32x288xbf16, #tpu.memory_space<vmem>>, %arg5: memref<32x1xf32, #tpu.memory_space<vmem>>, %arg6: memref<1x128xf32, #tpu.memory_space<vmem>>, %arg7: memref<1x32x128xbf16, #tpu.memory_space<vmem>>, %arg8: memref<32x128xbf16, #tpu.memory_space<vmem>>) attributes {dimension_semantics = [#tpu.dimension_semantics<parallel>], iteration_bounds = array<i64: 4>, scalar_prefetch = 0 : i64, scratch_operands = 1 : i64, tpu.core_type = #tpu.core_type<tc>, window_params = [{transform_indices = @transform_0, window_bounds = array<i64: 1, 32, 128>}, {pipeline_mode = #tpu.pipeline_mode<synchronous>, transform_indices = @transform_1, window_bounds = array<i64: 32, 288>}, {pipeline_mode = #tpu.pipeline_mode<synchronous>, transform_indices = @transform_2, window_bounds = array<i64: 32, 1>}, {pipeline_mode = #tpu.pipeline_mode<synchronous>, transform_indices = @transform_3, window_bounds = array<i64: 32, 288>}, {pipeline_mode = #tpu.pipeline_mode<synchronous>, transform_indices = @transform_4, window_bounds = array<i64: 32, 1>}, {pipeline_mode = #tpu.pipeline_mode<synchronous>, transform_indices = @transform_5, window_bounds = array<i64: 1, 128>}, {transform_indices = @transform_6, window_bounds = array<i64: 1, 32, 128>}]} {
    %c0 = arith.constant 0 : index
    %c12 = arith.constant 12 : index
    %0 = vector.load %arg6[%c0, %c12] : memref<1x128xf32, #tpu.memory_space<vmem>>, vector<1x24xf32>
    %c0_0 = arith.constant 0 : index
    %c0_1 = arith.constant 0 : index
    %1 = vector.load %arg2[%c0_0, %c0_1] : memref<32x288xbf16, #tpu.memory_space<vmem>>, vector<32x288xbf16>
    %c0_2 = arith.constant 0 : index
    %c0_3 = arith.constant 0 : index
    %c5 = arith.constant 5 : index
    %2 = vector.load %arg1[%c0_2, %c0_3, %c5] : memref<1x32x128xbf16, #tpu.memory_space<vmem>>, vector<1x32x24xbf16>
    %3 = vector.shape_cast %2 : vector<1x32x24xbf16> to vector<32x24xbf16>
    %c0_4 = arith.constant 0 : index
    %c0_5 = arith.constant 0 : index
    %c6 = arith.constant 6 : index
    %4 = vector.load %arg1[%c0_4, %c0_5, %c6] : memref<1x32x128xbf16, #tpu.memory_space<vmem>>, vector<1x32x24xbf16>
    %5 = vector.shape_cast %4 : vector<1x32x24xbf16> to vector<32x24xbf16>
    %c0_6 = arith.constant 0 : index
    %c0_7 = arith.constant 0 : index
    %c7 = arith.constant 7 : index
    %6 = vector.load %arg1[%c0_6, %c0_7, %c7] : memref<1x32x128xbf16, #tpu.memory_space<vmem>>, vector<1x32x24xbf16>
    %7 = vector.shape_cast %6 : vector<1x32x24xbf16> to vector<32x24xbf16>
    %c0_8 = arith.constant 0 : index
    %c0_9 = arith.constant 0 : index
    %c11 = arith.constant 11 : index
    %8 = vector.load %arg1[%c0_8, %c0_9, %c11] : memref<1x32x128xbf16, #tpu.memory_space<vmem>>, vector<1x32x24xbf16>
    %9 = vector.shape_cast %8 : vector<1x32x24xbf16> to vector<32x24xbf16>
    %c0_10 = arith.constant 0 : index
    %c0_11 = arith.constant 0 : index
    %c12_12 = arith.constant 12 : index
    %10 = vector.load %arg1[%c0_10, %c0_11, %c12_12] : memref<1x32x128xbf16, #tpu.memory_space<vmem>>, vector<1x32x24xbf16>
    %11 = vector.shape_cast %10 : vector<1x32x24xbf16> to vector<32x24xbf16>
    %c0_13 = arith.constant 0 : index
    %c0_14 = arith.constant 0 : index
    %c13 = arith.constant 13 : index
    %12 = vector.load %arg1[%c0_13, %c0_14, %c13] : memref<1x32x128xbf16, #tpu.memory_space<vmem>>, vector<1x32x24xbf16>
    %13 = vector.shape_cast %12 : vector<1x32x24xbf16> to vector<32x24xbf16>
    %c0_15 = arith.constant 0 : index
    %c0_16 = arith.constant 0 : index
    %c17 = arith.constant 17 : index
    %14 = vector.load %arg1[%c0_15, %c0_16, %c17] : memref<1x32x128xbf16, #tpu.memory_space<vmem>>, vector<1x32x24xbf16>
    %15 = vector.shape_cast %14 : vector<1x32x24xbf16> to vector<32x24xbf16>
    %c0_17 = arith.constant 0 : index
    %c0_18 = arith.constant 0 : index
    %c18 = arith.constant 18 : index
    %16 = vector.load %arg1[%c0_17, %c0_18, %c18] : memref<1x32x128xbf16, #tpu.memory_space<vmem>>, vector<1x32x24xbf16>
    %17 = vector.shape_cast %16 : vector<1x32x24xbf16> to vector<32x24xbf16>
    %c0_19 = arith.constant 0 : index
    %c0_20 = arith.constant 0 : index
    %c19 = arith.constant 19 : index
    %18 = vector.load %arg1[%c0_19, %c0_20, %c19] : memref<1x32x128xbf16, #tpu.memory_space<vmem>>, vector<1x32x24xbf16>
    %19 = vector.shape_cast %18 : vector<1x32x24xbf16> to vector<32x24xbf16>
    %20 = tpu.concatenate %3, %5, %7, %9, %11, %13, %15, %17, %19 in 0 : vector<32x24xbf16>, vector<32x24xbf16>, vector<32x24xbf16>, vector<32x24xbf16>, vector<32x24xbf16>, vector<32x24xbf16>, vector<32x24xbf16>, vector<32x24xbf16>, vector<32x24xbf16> -> vector<288x24xbf16>
    %cst = arith.constant dense<0.000000e+00> : vector<32x24xf32>
    %21 = tpu.matmul %1, %20, %cst {dimension_numbers = #tpu.dot_dimension_numbers<[1], [0], [0], [1], [0, 0, 1, 1], [], []>} : vector<32x288xbf16>, vector<288x24xbf16>, vector<32x24xf32> -> vector<32x24xf32>
    %c0_21 = arith.constant 0 : index
    %c0_22 = arith.constant 0 : index
    %22 = vector.load %arg3[%c0_21, %c0_22] : memref<32x1xf32, #tpu.memory_space<vmem>>, vector<32x1xf32>
    %23 = vector.broadcast %22 : vector<32x1xf32> to vector<32x24xf32>
    %24 = arith.addf %21, %23 : vector<32x24xf32>
    %cst_23 = arith.constant 0.000000e+00 : f32
    %25 = vector.broadcast %cst_23 : f32 to vector<32x24xf32>
    %26 = arith.maximumf %24, %25 : vector<32x24xf32>
    %27 = vector.broadcast %0 : vector<1x24xf32> to vector<32x24xf32>
    %28 = arith.mulf %26, %27 : vector<32x24xf32>
    %cst_24 = arith.constant 0.000000e+00 : bf16
    %29 = vector.broadcast %cst_24 : bf16 to vector<32x12xbf16>
    %30 = arith.truncf %28 : vector<32x24xf32> to vector<32x24xbf16>
    %cst_25 = arith.constant 0.000000e+00 : bf16
    %31 = vector.broadcast %cst_25 : bf16 to vector<32x92xbf16>
    %32 = tpu.concatenate %29, %30, %31 in 1 : vector<32x12xbf16>, vector<32x24xbf16>, vector<32x92xbf16> -> vector<32x128xbf16>
    %c0_26 = arith.constant 0 : index
    %c0_27 = arith.constant 0 : index
    %33 = vector.load %arg8[%c0_26, %c0_27] : memref<32x128xbf16, #tpu.memory_space<vmem>>, vector<32x128xbf16>
    tpu.vector_store %arg8[%c0_26, %c0_27], %32 {strides = array<i32>} : memref<32x128xbf16, #tpu.memory_space<vmem>>, vector<32x128xbf16>,
    %c0_28 = arith.constant 0 : index
    %c0_29 = arith.constant 0 : index
    %34 = vector.load %arg4[%c0_28, %c0_29] : memref<32x288xbf16, #tpu.memory_space<vmem>>, vector<32x288xbf16>
    %c0_30 = arith.constant 0 : index
    %c5_31 = arith.constant 5 : index
    %35 = vector.load %arg8[%c0_30, %c5_31] : memref<32x128xbf16, #tpu.memory_space<vmem>>, vector<32x24xbf16>
    %c0_32 = arith.constant 0 : index
    %c6_33 = arith.constant 6 : index
    %36 = vector.load %arg8[%c0_32, %c6_33] : memref<32x128xbf16, #tpu.memory_space<vmem>>, vector<32x24xbf16>
    %c0_34 = arith.constant 0 : index
    %c7_35 = arith.constant 7 : index
    %37 = vector.load %arg8[%c0_34, %c7_35] : memref<32x128xbf16, #tpu.memory_space<vmem>>, vector<32x24xbf16>
    %c0_36 = arith.constant 0 : index
    %c11_37 = arith.constant 11 : index
    %38 = vector.load %arg8[%c0_36, %c11_37] : memref<32x128xbf16, #tpu.memory_space<vmem>>, vector<32x24xbf16>
    %c0_38 = arith.constant 0 : index
    %c12_39 = arith.constant 12 : index
    %39 = vector.load %arg8[%c0_38, %c12_39] : memref<32x128xbf16, #tpu.memory_space<vmem>>, vector<32x24xbf16>
    %c0_40 = arith.constant 0 : index
    %c13_41 = arith.constant 13 : index
    %40 = vector.load %arg8[%c0_40, %c13_41] : memref<32x128xbf16, #tpu.memory_space<vmem>>, vector<32x24xbf16>
    %c0_42 = arith.constant 0 : index
    %c17_43 = arith.constant 17 : index
    %41 = vector.load %arg8[%c0_42, %c17_43] : memref<32x128xbf16, #tpu.memory_space<vmem>>, vector<32x24xbf16>
    %c0_44 = arith.constant 0 : index
    %c18_45 = arith.constant 18 : index
    %42 = vector.load %arg8[%c0_44, %c18_45] : memref<32x128xbf16, #tpu.memory_space<vmem>>, vector<32x24xbf16>
    %c0_46 = arith.constant 0 : index
    %c19_47 = arith.constant 19 : index
    %43 = vector.load %arg8[%c0_46, %c19_47] : memref<32x128xbf16, #tpu.memory_space<vmem>>, vector<32x24xbf16>
    %44 = tpu.concatenate %35, %36, %37, %38, %39, %40, %41, %42, %43 in 0 : vector<32x24xbf16>, vector<32x24xbf16>, vector<32x24xbf16>, vector<32x24xbf16>, vector<32x24xbf16>, vector<32x24xbf16>, vector<32x24xbf16>, vector<32x24xbf16>, vector<32x24xbf16> -> vector<288x24xbf16>
    %cst_48 = arith.constant dense<0.000000e+00> : vector<32x24xf32>
    %45 = tpu.matmul %34, %44, %cst_48 {dimension_numbers = #tpu.dot_dimension_numbers<[1], [0], [0], [1], [0, 0, 1, 1], [], []>} : vector<32x288xbf16>, vector<288x24xbf16>, vector<32x24xf32> -> vector<32x24xf32>
    %c0_49 = arith.constant 0 : index
    %c0_50 = arith.constant 0 : index
    %46 = vector.load %arg5[%c0_49, %c0_50] : memref<32x1xf32, #tpu.memory_space<vmem>>, vector<32x1xf32>
    %47 = vector.broadcast %46 : vector<32x1xf32> to vector<32x24xf32>
    %48 = arith.addf %45, %47 : vector<32x24xf32>
    %c0_51 = arith.constant 0 : index
    %c0_52 = arith.constant 0 : index
    %c12_53 = arith.constant 12 : index
    %49 = vector.load %arg1[%c0_51, %c0_52, %c12_53] : memref<1x32x128xbf16, #tpu.memory_space<vmem>>, vector<1x32x24xbf16>
    %50 = vector.shape_cast %49 : vector<1x32x24xbf16> to vector<32x24xbf16>
    %51 = arith.extf %50 : vector<32x24xbf16> to vector<32x24xf32>
    %52 = arith.addf %48, %51 : vector<32x24xf32>
    %cst_54 = arith.constant 0.000000e+00 : f32
    %53 = vector.broadcast %cst_54 : f32 to vector<32x24xf32>
    %54 = arith.maximumf %52, %53 : vector<32x24xf32>
    %55 = vector.broadcast %0 : vector<1x24xf32> to vector<32x24xf32>
    %56 = arith.mulf %54, %55 : vector<32x24xf32>
    %cst_55 = arith.constant 0.000000e+00 : bf16
    %57 = vector.broadcast %cst_55 : bf16 to vector<32x12xbf16>
    %58 = arith.truncf %56 : vector<32x24xf32> to vector<32x24xbf16>
    %cst_56 = arith.constant 0.000000e+00 : bf16
    %59 = vector.broadcast %cst_56 : bf16 to vector<32x92xbf16>
    %60 = tpu.concatenate %57, %58, %59 in 1 : vector<32x12xbf16>, vector<32x24xbf16>, vector<32x92xbf16> -> vector<32x128xbf16>
    %c0_57 = arith.constant 0 : index
    %c0_58 = arith.constant 0 : index
    %c0_59 = arith.constant 0 : index
    %61 = vector.load %arg7[%c0_57, %c0_58, %c0_59] : memref<1x32x128xbf16, #tpu.memory_space<vmem>>, vector<1x32x128xbf16>
    %62 = vector.shape_cast %61 : vector<1x32x128xbf16> to vector<32x128xbf16>
    %63 = vector.shape_cast %60 : vector<32x128xbf16> to vector<1x32x128xbf16>
    tpu.vector_store %arg7[%c0_57, %c0_58, %c0_59], %63 {strides = array<i32>} : memref<1x32x128xbf16, #tpu.memory_space<vmem>>, vector<1x32x128xbf16>,
    return
  }
  func.func @transform_0(%arg0: i32) -> (i32, i32, i32) {
    %c0_i32 = arith.constant 0 : i32
    %c0_i32_0 = arith.constant 0 : i32
    %c0_i32_1 = arith.constant 0 : i32
    return %arg0, %c0_i32, %c0_i32_0 : i32, i32, i32
  }
  func.func @transform_1(%arg0: i32) -> (i32, i32) {
    %c0_i32 = arith.constant 0 : i32
    %c0_i32_0 = arith.constant 0 : i32
    %c0_i32_1 = arith.constant 0 : i32
    return %c0_i32, %c0_i32_0 : i32, i32
  }
  func.func @transform_2(%arg0: i32) -> (i32, i32) {
    %c0_i32 = arith.constant 0 : i32
    %c0_i32_0 = arith.constant 0 : i32
    %c0_i32_1 = arith.constant 0 : i32
    return %c0_i32, %c0_i32_0 : i32, i32
  }
  func.func @transform_3(%arg0: i32) -> (i32, i32) {
    %c0_i32 = arith.constant 0 : i32
    %c0_i32_0 = arith.constant 0 : i32
    %c0_i32_1 = arith.constant 0 : i32
    return %c0_i32, %c0_i32_0 : i32, i32
  }
  func.func @transform_4(%arg0: i32) -> (i32, i32) {
    %c0_i32 = arith.constant 0 : i32
    %c0_i32_0 = arith.constant 0 : i32
    %c0_i32_1 = arith.constant 0 : i32
    return %c0_i32, %c0_i32_0 : i32, i32
  }
  func.func @transform_5(%arg0: i32) -> (i32, i32) {
    %c0_i32 = arith.constant 0 : i32
    %c0_i32_0 = arith.constant 0 : i32
    %c0_i32_1 = arith.constant 0 : i32
    return %c0_i32, %c0_i32_0 : i32, i32
  }
  func.func @transform_6(%arg0: i32) -> (i32, i32, i32) {
    %c0_i32 = arith.constant 0 : i32
    %c0_i32_0 = arith.constant 0 : i32
    %c0_i32_1 = arith.constant 0 : i32
    return %arg0, %c0_i32, %c0_i32_0 : i32, i32, i32
  }
}

module attributes {stable_mosaic.version = 11 : i64} {
  func.func @_conv_pf_kernel(%arg0: i32, %arg1: memref<1x16x128xbf16, #tpu.memory_space<vmem>>, %arg2: memref<32x16xbf16, #tpu.memory_space<vmem>>, %arg3: memref<32x1xf32, #tpu.memory_space<vmem>>, %arg4: memref<1x128xf32, #tpu.memory_space<vmem>>, %arg5: memref<1x32x128xbf16, #tpu.memory_space<vmem>>, %arg6: memref<1x32x128xbf16, #tpu.memory_space<vmem>>) attributes {dimension_semantics = [#tpu.dimension_semantics<parallel>], iteration_bounds = array<i64: 4>, scalar_prefetch = 0 : i64, scratch_operands = 0 : i64, tpu.core_type = #tpu.core_type<tc>, window_params = [{transform_indices = @transform_0, window_bounds = array<i64: 1, 16, 128>}, {pipeline_mode = #tpu.pipeline_mode<synchronous>, transform_indices = @transform_1, window_bounds = array<i64: 32, 16>}, {pipeline_mode = #tpu.pipeline_mode<synchronous>, transform_indices = @transform_2, window_bounds = array<i64: 32, 1>}, {pipeline_mode = #tpu.pipeline_mode<synchronous>, transform_indices = @transform_3, window_bounds = array<i64: 1, 128>}, {transform_indices = @transform_4, window_bounds = array<i64: 1, 32, 128>}, {transform_indices = @transform_5, window_bounds = array<i64: 1, 32, 128>}]} {
    %c0 = arith.constant 0 : index
    %c20 = arith.constant 20 : index
    %0 = vector.load %arg4[%c0, %c20] : memref<1x128xf32, #tpu.memory_space<vmem>>, vector<1x80xf32>
    %c0_0 = arith.constant 0 : index
    %c0_1 = arith.constant 0 : index
    %1 = vector.load %arg2[%c0_0, %c0_1] : memref<32x16xbf16, #tpu.memory_space<vmem>>, vector<32x16xbf16>
    %c0_2 = arith.constant 0 : index
    %c0_3 = arith.constant 0 : index
    %c20_4 = arith.constant 20 : index
    %2 = vector.load %arg1[%c0_2, %c0_3, %c20_4] : memref<1x16x128xbf16, #tpu.memory_space<vmem>>, vector<1x16x80xbf16>
    %3 = vector.shape_cast %2 : vector<1x16x80xbf16> to vector<16x80xbf16>
    %cst = arith.constant dense<0.000000e+00> : vector<32x80xf32>
    %4 = tpu.matmul %1, %3, %cst {dimension_numbers = #tpu.dot_dimension_numbers<[1], [0], [0], [1], [0, 0, 1, 1], [], []>} : vector<32x16xbf16>, vector<16x80xbf16>, vector<32x80xf32> -> vector<32x80xf32>
    %c0_5 = arith.constant 0 : index
    %c0_6 = arith.constant 0 : index
    %5 = vector.load %arg3[%c0_5, %c0_6] : memref<32x1xf32, #tpu.memory_space<vmem>>, vector<32x1xf32>
    %6 = vector.broadcast %5 : vector<32x1xf32> to vector<32x80xf32>
    %7 = arith.addf %4, %6 : vector<32x80xf32>
    %c0_7 = arith.constant 0 : index
    %c0_8 = arith.constant 0 : index
    %c20_9 = arith.constant 20 : index
    %8 = vector.load %arg5[%c0_7, %c0_8, %c20_9] : memref<1x32x128xbf16, #tpu.memory_space<vmem>>, vector<1x32x80xbf16>
    %9 = vector.shape_cast %8 : vector<1x32x80xbf16> to vector<32x80xbf16>
    %10 = arith.extf %9 : vector<32x80xbf16> to vector<32x80xf32>
    %11 = arith.addf %7, %10 : vector<32x80xf32>
    %12 = vector.broadcast %0 : vector<1x80xf32> to vector<32x80xf32>
    %13 = arith.mulf %11, %12 : vector<32x80xf32>
    %cst_10 = arith.constant 0.000000e+00 : bf16
    %14 = vector.broadcast %cst_10 : bf16 to vector<32x20xbf16>
    %15 = arith.truncf %13 : vector<32x80xf32> to vector<32x80xbf16>
    %cst_11 = arith.constant 0.000000e+00 : bf16
    %16 = vector.broadcast %cst_11 : bf16 to vector<32x28xbf16>
    %17 = tpu.concatenate %14, %15, %16 in 1 : vector<32x20xbf16>, vector<32x80xbf16>, vector<32x28xbf16> -> vector<32x128xbf16>
    %c0_12 = arith.constant 0 : index
    %c0_13 = arith.constant 0 : index
    %c0_14 = arith.constant 0 : index
    %18 = vector.load %arg6[%c0_12, %c0_13, %c0_14] : memref<1x32x128xbf16, #tpu.memory_space<vmem>>, vector<1x32x128xbf16>
    %19 = vector.shape_cast %18 : vector<1x32x128xbf16> to vector<32x128xbf16>
    %20 = vector.shape_cast %17 : vector<32x128xbf16> to vector<1x32x128xbf16>
    tpu.vector_store %arg6[%c0_12, %c0_13, %c0_14], %20 {strides = array<i32>} : memref<1x32x128xbf16, #tpu.memory_space<vmem>>, vector<1x32x128xbf16>,
    return
  }
  func.func @transform_0(%arg0: i32) -> (i32, i32, i32) {
    %c0_i32 = arith.constant 0 : i32
    %c0_i32_0 = arith.constant 0 : i32
    %c0_i32_1 = arith.constant 0 : i32
    return %arg0, %c0_i32, %c0_i32_0 : i32, i32, i32
  }
  func.func @transform_1(%arg0: i32) -> (i32, i32) {
    %c0_i32 = arith.constant 0 : i32
    %c0_i32_0 = arith.constant 0 : i32
    %c0_i32_1 = arith.constant 0 : i32
    return %c0_i32, %c0_i32_0 : i32, i32
  }
  func.func @transform_2(%arg0: i32) -> (i32, i32) {
    %c0_i32 = arith.constant 0 : i32
    %c0_i32_0 = arith.constant 0 : i32
    %c0_i32_1 = arith.constant 0 : i32
    return %c0_i32, %c0_i32_0 : i32, i32
  }
  func.func @transform_3(%arg0: i32) -> (i32, i32) {
    %c0_i32 = arith.constant 0 : i32
    %c0_i32_0 = arith.constant 0 : i32
    %c0_i32_1 = arith.constant 0 : i32
    return %c0_i32, %c0_i32_0 : i32, i32
  }
  func.func @transform_4(%arg0: i32) -> (i32, i32, i32) {
    %c0_i32 = arith.constant 0 : i32
    %c0_i32_0 = arith.constant 0 : i32
    %c0_i32_1 = arith.constant 0 : i32
    return %arg0, %c0_i32, %c0_i32_0 : i32, i32, i32
  }
  func.func @transform_5(%arg0: i32) -> (i32, i32, i32) {
    %c0_i32 = arith.constant 0 : i32
    %c0_i32_0 = arith.constant 0 : i32
    %c0_i32_1 = arith.constant 0 : i32
    return %arg0, %c0_i32, %c0_i32_0 : i32, i32, i32
  }
}

module attributes {stable_mosaic.version = 11 : i64} {
  func.func @_double_conv_pf_kernel(%arg0: i32, %arg1: memref<1x32x128xbf16, #tpu.memory_space<vmem>>, %arg2: memref<32x288xbf16, #tpu.memory_space<vmem>>, %arg3: memref<32x1xf32, #tpu.memory_space<vmem>>, %arg4: memref<16x288xbf16, #tpu.memory_space<vmem>>, %arg5: memref<16x1xf32, #tpu.memory_space<vmem>>, %arg6: memref<1x128xf32, #tpu.memory_space<vmem>>, %arg7: memref<1x16x128xbf16, #tpu.memory_space<vmem>>, %arg8: memref<32x128xbf16, #tpu.memory_space<vmem>>) attributes {dimension_semantics = [#tpu.dimension_semantics<parallel>], iteration_bounds = array<i64: 4>, scalar_prefetch = 0 : i64, scratch_operands = 1 : i64, tpu.core_type = #tpu.core_type<tc>, window_params = [{transform_indices = @transform_0, window_bounds = array<i64: 1, 32, 128>}, {pipeline_mode = #tpu.pipeline_mode<synchronous>, transform_indices = @transform_1, window_bounds = array<i64: 32, 288>}, {pipeline_mode = #tpu.pipeline_mode<synchronous>, transform_indices = @transform_2, window_bounds = array<i64: 32, 1>}, {pipeline_mode = #tpu.pipeline_mode<synchronous>, transform_indices = @transform_3, window_bounds = array<i64: 16, 288>}, {pipeline_mode = #tpu.pipeline_mode<synchronous>, transform_indices = @transform_4, window_bounds = array<i64: 16, 1>}, {pipeline_mode = #tpu.pipeline_mode<synchronous>, transform_indices = @transform_5, window_bounds = array<i64: 1, 128>}, {transform_indices = @transform_6, window_bounds = array<i64: 1, 16, 128>}]} {
    %c0 = arith.constant 0 : index
    %c20 = arith.constant 20 : index
    %0 = vector.load %arg6[%c0, %c20] : memref<1x128xf32, #tpu.memory_space<vmem>>, vector<1x80xf32>
    %c0_0 = arith.constant 0 : index
    %c0_1 = arith.constant 0 : index
    %1 = vector.load %arg2[%c0_0, %c0_1] : memref<32x288xbf16, #tpu.memory_space<vmem>>, vector<32x288xbf16>
    %c0_2 = arith.constant 0 : index
    %c0_3 = arith.constant 0 : index
    %c9 = arith.constant 9 : index
    %2 = vector.load %arg1[%c0_2, %c0_3, %c9] : memref<1x32x128xbf16, #tpu.memory_space<vmem>>, vector<1x32x80xbf16>
    %3 = vector.shape_cast %2 : vector<1x32x80xbf16> to vector<32x80xbf16>
    %c0_4 = arith.constant 0 : index
    %c0_5 = arith.constant 0 : index
    %c10 = arith.constant 10 : index
    %4 = vector.load %arg1[%c0_4, %c0_5, %c10] : memref<1x32x128xbf16, #tpu.memory_space<vmem>>, vector<1x32x80xbf16>
    %5 = vector.shape_cast %4 : vector<1x32x80xbf16> to vector<32x80xbf16>
    %c0_6 = arith.constant 0 : index
    %c0_7 = arith.constant 0 : index
    %c11 = arith.constant 11 : index
    %6 = vector.load %arg1[%c0_6, %c0_7, %c11] : memref<1x32x128xbf16, #tpu.memory_space<vmem>>, vector<1x32x80xbf16>
    %7 = vector.shape_cast %6 : vector<1x32x80xbf16> to vector<32x80xbf16>
    %c0_8 = arith.constant 0 : index
    %c0_9 = arith.constant 0 : index
    %c19 = arith.constant 19 : index
    %8 = vector.load %arg1[%c0_8, %c0_9, %c19] : memref<1x32x128xbf16, #tpu.memory_space<vmem>>, vector<1x32x80xbf16>
    %9 = vector.shape_cast %8 : vector<1x32x80xbf16> to vector<32x80xbf16>
    %c0_10 = arith.constant 0 : index
    %c0_11 = arith.constant 0 : index
    %c20_12 = arith.constant 20 : index
    %10 = vector.load %arg1[%c0_10, %c0_11, %c20_12] : memref<1x32x128xbf16, #tpu.memory_space<vmem>>, vector<1x32x80xbf16>
    %11 = vector.shape_cast %10 : vector<1x32x80xbf16> to vector<32x80xbf16>
    %c0_13 = arith.constant 0 : index
    %c0_14 = arith.constant 0 : index
    %c21 = arith.constant 21 : index
    %12 = vector.load %arg1[%c0_13, %c0_14, %c21] : memref<1x32x128xbf16, #tpu.memory_space<vmem>>, vector<1x32x80xbf16>
    %13 = vector.shape_cast %12 : vector<1x32x80xbf16> to vector<32x80xbf16>
    %c0_15 = arith.constant 0 : index
    %c0_16 = arith.constant 0 : index
    %c29 = arith.constant 29 : index
    %14 = vector.load %arg1[%c0_15, %c0_16, %c29] : memref<1x32x128xbf16, #tpu.memory_space<vmem>>, vector<1x32x80xbf16>
    %15 = vector.shape_cast %14 : vector<1x32x80xbf16> to vector<32x80xbf16>
    %c0_17 = arith.constant 0 : index
    %c0_18 = arith.constant 0 : index
    %c30 = arith.constant 30 : index
    %16 = vector.load %arg1[%c0_17, %c0_18, %c30] : memref<1x32x128xbf16, #tpu.memory_space<vmem>>, vector<1x32x80xbf16>
    %17 = vector.shape_cast %16 : vector<1x32x80xbf16> to vector<32x80xbf16>
    %c0_19 = arith.constant 0 : index
    %c0_20 = arith.constant 0 : index
    %c31 = arith.constant 31 : index
    %18 = vector.load %arg1[%c0_19, %c0_20, %c31] : memref<1x32x128xbf16, #tpu.memory_space<vmem>>, vector<1x32x80xbf16>
    %19 = vector.shape_cast %18 : vector<1x32x80xbf16> to vector<32x80xbf16>
    %20 = tpu.concatenate %3, %5, %7, %9, %11, %13, %15, %17, %19 in 0 : vector<32x80xbf16>, vector<32x80xbf16>, vector<32x80xbf16>, vector<32x80xbf16>, vector<32x80xbf16>, vector<32x80xbf16>, vector<32x80xbf16>, vector<32x80xbf16>, vector<32x80xbf16> -> vector<288x80xbf16>
    %cst = arith.constant dense<0.000000e+00> : vector<32x80xf32>
    %21 = tpu.matmul %1, %20, %cst {dimension_numbers = #tpu.dot_dimension_numbers<[1], [0], [0], [1], [0, 0, 1, 1], [], []>} : vector<32x288xbf16>, vector<288x80xbf16>, vector<32x80xf32> -> vector<32x80xf32>
    %c0_21 = arith.constant 0 : index
    %c0_22 = arith.constant 0 : index
    %22 = vector.load %arg3[%c0_21, %c0_22] : memref<32x1xf32, #tpu.memory_space<vmem>>, vector<32x1xf32>
    %23 = vector.broadcast %22 : vector<32x1xf32> to vector<32x80xf32>
    %24 = arith.addf %21, %23 : vector<32x80xf32>
    %cst_23 = arith.constant 0.000000e+00 : f32
    %25 = vector.broadcast %cst_23 : f32 to vector<32x80xf32>
    %26 = arith.cmpf ogt, %24, %25 : vector<32x80xf32>
    %cst_24 = arith.constant 0.00999999977 : f32
    %27 = vector.broadcast %cst_24 : f32 to vector<32x80xf32>
    %28 = arith.mulf %27, %24 : vector<32x80xf32>
    %29 = arith.select %26, %24, %28 : vector<32x80xi1>, vector<32x80xf32>
    %30 = vector.broadcast %0 : vector<1x80xf32> to vector<32x80xf32>
    %31 = arith.mulf %29, %30 : vector<32x80xf32>
    %cst_25 = arith.constant 0.000000e+00 : bf16
    %32 = vector.broadcast %cst_25 : bf16 to vector<32x20xbf16>
    %33 = arith.truncf %31 : vector<32x80xf32> to vector<32x80xbf16>
    %cst_26 = arith.constant 0.000000e+00 : bf16
    %34 = vector.broadcast %cst_26 : bf16 to vector<32x28xbf16>
    %35 = tpu.concatenate %32, %33, %34 in 1 : vector<32x20xbf16>, vector<32x80xbf16>, vector<32x28xbf16> -> vector<32x128xbf16>
    %c0_27 = arith.constant 0 : index
    %c0_28 = arith.constant 0 : index
    %36 = vector.load %arg8[%c0_27, %c0_28] : memref<32x128xbf16, #tpu.memory_space<vmem>>, vector<32x128xbf16>
    tpu.vector_store %arg8[%c0_27, %c0_28], %35 {strides = array<i32>} : memref<32x128xbf16, #tpu.memory_space<vmem>>, vector<32x128xbf16>,
    %c0_29 = arith.constant 0 : index
    %c0_30 = arith.constant 0 : index
    %37 = vector.load %arg4[%c0_29, %c0_30] : memref<16x288xbf16, #tpu.memory_space<vmem>>, vector<16x288xbf16>
    %c0_31 = arith.constant 0 : index
    %c9_32 = arith.constant 9 : index
    %38 = vector.load %arg8[%c0_31, %c9_32] : memref<32x128xbf16, #tpu.memory_space<vmem>>, vector<32x80xbf16>
    %c0_33 = arith.constant 0 : index
    %c10_34 = arith.constant 10 : index
    %39 = vector.load %arg8[%c0_33, %c10_34] : memref<32x128xbf16, #tpu.memory_space<vmem>>, vector<32x80xbf16>
    %c0_35 = arith.constant 0 : index
    %c11_36 = arith.constant 11 : index
    %40 = vector.load %arg8[%c0_35, %c11_36] : memref<32x128xbf16, #tpu.memory_space<vmem>>, vector<32x80xbf16>
    %c0_37 = arith.constant 0 : index
    %c19_38 = arith.constant 19 : index
    %41 = vector.load %arg8[%c0_37, %c19_38] : memref<32x128xbf16, #tpu.memory_space<vmem>>, vector<32x80xbf16>
    %c0_39 = arith.constant 0 : index
    %c20_40 = arith.constant 20 : index
    %42 = vector.load %arg8[%c0_39, %c20_40] : memref<32x128xbf16, #tpu.memory_space<vmem>>, vector<32x80xbf16>
    %c0_41 = arith.constant 0 : index
    %c21_42 = arith.constant 21 : index
    %43 = vector.load %arg8[%c0_41, %c21_42] : memref<32x128xbf16, #tpu.memory_space<vmem>>, vector<32x80xbf16>
    %c0_43 = arith.constant 0 : index
    %c29_44 = arith.constant 29 : index
    %44 = vector.load %arg8[%c0_43, %c29_44] : memref<32x128xbf16, #tpu.memory_space<vmem>>, vector<32x80xbf16>
    %c0_45 = arith.constant 0 : index
    %c30_46 = arith.constant 30 : index
    %45 = vector.load %arg8[%c0_45, %c30_46] : memref<32x128xbf16, #tpu.memory_space<vmem>>, vector<32x80xbf16>
    %c0_47 = arith.constant 0 : index
    %c31_48 = arith.constant 31 : index
    %46 = vector.load %arg8[%c0_47, %c31_48] : memref<32x128xbf16, #tpu.memory_space<vmem>>, vector<32x80xbf16>
    %47 = tpu.concatenate %38, %39, %40, %41, %42, %43, %44, %45, %46 in 0 : vector<32x80xbf16>, vector<32x80xbf16>, vector<32x80xbf16>, vector<32x80xbf16>, vector<32x80xbf16>, vector<32x80xbf16>, vector<32x80xbf16>, vector<32x80xbf16>, vector<32x80xbf16> -> vector<288x80xbf16>
    %cst_49 = arith.constant dense<0.000000e+00> : vector<16x80xf32>
    %48 = tpu.matmul %37, %47, %cst_49 {dimension_numbers = #tpu.dot_dimension_numbers<[1], [0], [0], [1], [0, 0, 1, 1], [], []>} : vector<16x288xbf16>, vector<288x80xbf16>, vector<16x80xf32> -> vector<16x80xf32>
    %c0_50 = arith.constant 0 : index
    %c0_51 = arith.constant 0 : index
    %49 = vector.load %arg5[%c0_50, %c0_51] : memref<16x1xf32, #tpu.memory_space<vmem>>, vector<16x1xf32>
    %50 = vector.broadcast %49 : vector<16x1xf32> to vector<16x80xf32>
    %51 = arith.addf %48, %50 : vector<16x80xf32>
    %52 = vector.broadcast %0 : vector<1x80xf32> to vector<16x80xf32>
    %53 = arith.mulf %51, %52 : vector<16x80xf32>
    %cst_52 = arith.constant 0.000000e+00 : bf16
    %54 = vector.broadcast %cst_52 : bf16 to vector<16x20xbf16>
    %55 = arith.truncf %53 : vector<16x80xf32> to vector<16x80xbf16>
    %cst_53 = arith.constant 0.000000e+00 : bf16
    %56 = vector.broadcast %cst_53 : bf16 to vector<16x28xbf16>
    %57 = tpu.concatenate %54, %55, %56 in 1 : vector<16x20xbf16>, vector<16x80xbf16>, vector<16x28xbf16> -> vector<16x128xbf16>
    %c0_54 = arith.constant 0 : index
    %c0_55 = arith.constant 0 : index
    %c0_56 = arith.constant 0 : index
    %58 = vector.load %arg7[%c0_54, %c0_55, %c0_56] : memref<1x16x128xbf16, #tpu.memory_space<vmem>>, vector<1x16x128xbf16>
    %59 = vector.shape_cast %58 : vector<1x16x128xbf16> to vector<16x128xbf16>
    %60 = vector.shape_cast %57 : vector<16x128xbf16> to vector<1x16x128xbf16>
    tpu.vector_store %arg7[%c0_54, %c0_55, %c0_56], %60 {strides = array<i32>} : memref<1x16x128xbf16, #tpu.memory_space<vmem>>, vector<1x16x128xbf16>,
    return
  }
  func.func @transform_0(%arg0: i32) -> (i32, i32, i32) {
    %c0_i32 = arith.constant 0 : i32
    %c0_i32_0 = arith.constant 0 : i32
    %c0_i32_1 = arith.constant 0 : i32
    return %arg0, %c0_i32, %c0_i32_0 : i32, i32, i32
  }
  func.func @transform_1(%arg0: i32) -> (i32, i32) {
    %c0_i32 = arith.constant 0 : i32
    %c0_i32_0 = arith.constant 0 : i32
    %c0_i32_1 = arith.constant 0 : i32
    return %c0_i32, %c0_i32_0 : i32, i32
  }
  func.func @transform_2(%arg0: i32) -> (i32, i32) {
    %c0_i32 = arith.constant 0 : i32
    %c0_i32_0 = arith.constant 0 : i32
    %c0_i32_1 = arith.constant 0 : i32
    return %c0_i32, %c0_i32_0 : i32, i32
  }
  func.func @transform_3(%arg0: i32) -> (i32, i32) {
    %c0_i32 = arith.constant 0 : i32
    %c0_i32_0 = arith.constant 0 : i32
    %c0_i32_1 = arith.constant 0 : i32
    return %c0_i32, %c0_i32_0 : i32, i32
  }
  func.func @transform_4(%arg0: i32) -> (i32, i32) {
    %c0_i32 = arith.constant 0 : i32
    %c0_i32_0 = arith.constant 0 : i32
    %c0_i32_1 = arith.constant 0 : i32
    return %c0_i32, %c0_i32_0 : i32, i32
  }
  func.func @transform_5(%arg0: i32) -> (i32, i32) {
    %c0_i32 = arith.constant 0 : i32
    %c0_i32_0 = arith.constant 0 : i32
    %c0_i32_1 = arith.constant 0 : i32
    return %c0_i32, %c0_i32_0 : i32, i32
  }
  func.func @transform_6(%arg0: i32) -> (i32, i32, i32) {
    %c0_i32 = arith.constant 0 : i32
    %c0_i32_0 = arith.constant 0 : i32
    %c0_i32_1 = arith.constant 0 : i32
    return %arg0, %c0_i32, %c0_i32_0 : i32, i32, i32
  }
}

module attributes {stable_mosaic.version = 11 : i64} {
  func.func @_conv_pf_kernel(%arg0: i32, %arg1: memref<1x8x384xbf16, #tpu.memory_space<vmem>>, %arg2: memref<16x8xbf16, #tpu.memory_space<vmem>>, %arg3: memref<16x1xf32, #tpu.memory_space<vmem>>, %arg4: memref<1x384xf32, #tpu.memory_space<vmem>>, %arg5: memref<1x16x384xbf16, #tpu.memory_space<vmem>>, %arg6: memref<1x16x384xbf16, #tpu.memory_space<vmem>>) attributes {dimension_semantics = [#tpu.dimension_semantics<parallel>], iteration_bounds = array<i64: 4>, scalar_prefetch = 0 : i64, scratch_operands = 0 : i64, tpu.core_type = #tpu.core_type<tc>, window_params = [{transform_indices = @transform_0, window_bounds = array<i64: 1, 8, 384>}, {pipeline_mode = #tpu.pipeline_mode<synchronous>, transform_indices = @transform_1, window_bounds = array<i64: 16, 8>}, {pipeline_mode = #tpu.pipeline_mode<synchronous>, transform_indices = @transform_2, window_bounds = array<i64: 16, 1>}, {pipeline_mode = #tpu.pipeline_mode<synchronous>, transform_indices = @transform_3, window_bounds = array<i64: 1, 384>}, {transform_indices = @transform_4, window_bounds = array<i64: 1, 16, 384>}, {transform_indices = @transform_5, window_bounds = array<i64: 1, 16, 384>}]} {
    %c0 = arith.constant 0 : index
    %c36 = arith.constant 36 : index
    %0 = vector.load %arg4[%c0, %c36] : memref<1x384xf32, #tpu.memory_space<vmem>>, vector<1x288xf32>
    %c0_0 = arith.constant 0 : index
    %c0_1 = arith.constant 0 : index
    %1 = vector.load %arg2[%c0_0, %c0_1] : memref<16x8xbf16, #tpu.memory_space<vmem>>, vector<16x8xbf16>
    %c0_2 = arith.constant 0 : index
    %c0_3 = arith.constant 0 : index
    %c36_4 = arith.constant 36 : index
    %2 = vector.load %arg1[%c0_2, %c0_3, %c36_4] : memref<1x8x384xbf16, #tpu.memory_space<vmem>>, vector<1x8x288xbf16>
    %3 = vector.shape_cast %2 : vector<1x8x288xbf16> to vector<8x288xbf16>
    %cst = arith.constant dense<0.000000e+00> : vector<16x288xf32>
    %4 = tpu.matmul %1, %3, %cst {dimension_numbers = #tpu.dot_dimension_numbers<[1], [0], [0], [1], [0, 0, 1, 1], [], []>} : vector<16x8xbf16>, vector<8x288xbf16>, vector<16x288xf32> -> vector<16x288xf32>
    %c0_5 = arith.constant 0 : index
    %c0_6 = arith.constant 0 : index
    %5 = vector.load %arg3[%c0_5, %c0_6] : memref<16x1xf32, #tpu.memory_space<vmem>>, vector<16x1xf32>
    %6 = vector.broadcast %5 : vector<16x1xf32> to vector<16x288xf32>
    %7 = arith.addf %4, %6 : vector<16x288xf32>
    %c0_7 = arith.constant 0 : index
    %c0_8 = arith.constant 0 : index
    %c36_9 = arith.constant 36 : index
    %8 = vector.load %arg5[%c0_7, %c0_8, %c36_9] : memref<1x16x384xbf16, #tpu.memory_space<vmem>>, vector<1x16x288xbf16>
    %9 = vector.shape_cast %8 : vector<1x16x288xbf16> to vector<16x288xbf16>
    %10 = arith.extf %9 : vector<16x288xbf16> to vector<16x288xf32>
    %11 = arith.addf %7, %10 : vector<16x288xf32>
    %12 = vector.broadcast %0 : vector<1x288xf32> to vector<16x288xf32>
    %13 = arith.mulf %11, %12 : vector<16x288xf32>
    %cst_10 = arith.constant 0.000000e+00 : bf16
    %14 = vector.broadcast %cst_10 : bf16 to vector<16x36xbf16>
    %15 = arith.truncf %13 : vector<16x288xf32> to vector<16x288xbf16>
    %cst_11 = arith.constant 0.000000e+00 : bf16
    %16 = vector.broadcast %cst_11 : bf16 to vector<16x60xbf16>
    %17 = tpu.concatenate %14, %15, %16 in 1 : vector<16x36xbf16>, vector<16x288xbf16>, vector<16x60xbf16> -> vector<16x384xbf16>
    %c0_12 = arith.constant 0 : index
    %c0_13 = arith.constant 0 : index
    %c0_14 = arith.constant 0 : index
    %18 = vector.load %arg6[%c0_12, %c0_13, %c0_14] : memref<1x16x384xbf16, #tpu.memory_space<vmem>>, vector<1x16x384xbf16>
    %19 = vector.shape_cast %18 : vector<1x16x384xbf16> to vector<16x384xbf16>
    %20 = vector.shape_cast %17 : vector<16x384xbf16> to vector<1x16x384xbf16>
    tpu.vector_store %arg6[%c0_12, %c0_13, %c0_14], %20 {strides = array<i32>} : memref<1x16x384xbf16, #tpu.memory_space<vmem>>, vector<1x16x384xbf16>,
    return
  }
  func.func @transform_0(%arg0: i32) -> (i32, i32, i32) {
    %c0_i32 = arith.constant 0 : i32
    %c0_i32_0 = arith.constant 0 : i32
    %c0_i32_1 = arith.constant 0 : i32
    return %arg0, %c0_i32, %c0_i32_0 : i32, i32, i32
  }
  func.func @transform_1(%arg0: i32) -> (i32, i32) {
    %c0_i32 = arith.constant 0 : i32
    %c0_i32_0 = arith.constant 0 : i32
    %c0_i32_1 = arith.constant 0 : i32
    return %c0_i32, %c0_i32_0 : i32, i32
  }
  func.func @transform_2(%arg0: i32) -> (i32, i32) {
    %c0_i32 = arith.constant 0 : i32
    %c0_i32_0 = arith.constant 0 : i32
    %c0_i32_1 = arith.constant 0 : i32
    return %c0_i32, %c0_i32_0 : i32, i32
  }
  func.func @transform_3(%arg0: i32) -> (i32, i32) {
    %c0_i32 = arith.constant 0 : i32
    %c0_i32_0 = arith.constant 0 : i32
    %c0_i32_1 = arith.constant 0 : i32
    return %c0_i32, %c0_i32_0 : i32, i32
  }
  func.func @transform_4(%arg0: i32) -> (i32, i32, i32) {
    %c0_i32 = arith.constant 0 : i32
    %c0_i32_0 = arith.constant 0 : i32
    %c0_i32_1 = arith.constant 0 : i32
    return %arg0, %c0_i32, %c0_i32_0 : i32, i32, i32
  }
  func.func @transform_5(%arg0: i32) -> (i32, i32, i32) {
    %c0_i32 = arith.constant 0 : i32
    %c0_i32_0 = arith.constant 0 : i32
    %c0_i32_1 = arith.constant 0 : i32
    return %arg0, %c0_i32, %c0_i32_0 : i32, i32, i32
  }
}

module attributes {stable_mosaic.version = 11 : i64} {
  func.func @_double_conv_pf_kernel(%arg0: i32, %arg1: memref<1x16x384xbf16, #tpu.memory_space<vmem>>, %arg2: memref<16x144xbf16, #tpu.memory_space<vmem>>, %arg3: memref<16x1xf32, #tpu.memory_space<vmem>>, %arg4: memref<8x144xbf16, #tpu.memory_space<vmem>>, %arg5: memref<8x1xf32, #tpu.memory_space<vmem>>, %arg6: memref<1x384xf32, #tpu.memory_space<vmem>>, %arg7: memref<1x8x384xbf16, #tpu.memory_space<vmem>>, %arg8: memref<16x384xbf16, #tpu.memory_space<vmem>>) attributes {dimension_semantics = [#tpu.dimension_semantics<parallel>], iteration_bounds = array<i64: 4>, scalar_prefetch = 0 : i64, scratch_operands = 1 : i64, tpu.core_type = #tpu.core_type<tc>, window_params = [{transform_indices = @transform_0, window_bounds = array<i64: 1, 16, 384>}, {pipeline_mode = #tpu.pipeline_mode<synchronous>, transform_indices = @transform_1, window_bounds = array<i64: 16, 144>}, {pipeline_mode = #tpu.pipeline_mode<synchronous>, transform_indices = @transform_2, window_bounds = array<i64: 16, 1>}, {pipeline_mode = #tpu.pipeline_mode<synchronous>, transform_indices = @transform_3, window_bounds = array<i64: 8, 144>}, {pipeline_mode = #tpu.pipeline_mode<synchronous>, transform_indices = @transform_4, window_bounds = array<i64: 8, 1>}, {pipeline_mode = #tpu.pipeline_mode<synchronous>, transform_indices = @transform_5, window_bounds = array<i64: 1, 384>}, {transform_indices = @transform_6, window_bounds = array<i64: 1, 8, 384>}]} {
    %c0 = arith.constant 0 : index
    %c36 = arith.constant 36 : index
    %0 = vector.load %arg6[%c0, %c36] : memref<1x384xf32, #tpu.memory_space<vmem>>, vector<1x288xf32>
    %c0_0 = arith.constant 0 : index
    %c0_1 = arith.constant 0 : index
    %1 = vector.load %arg2[%c0_0, %c0_1] : memref<16x144xbf16, #tpu.memory_space<vmem>>, vector<16x144xbf16>
    %c0_2 = arith.constant 0 : index
    %c0_3 = arith.constant 0 : index
    %c17 = arith.constant 17 : index
    %2 = vector.load %arg1[%c0_2, %c0_3, %c17] : memref<1x16x384xbf16, #tpu.memory_space<vmem>>, vector<1x16x288xbf16>
    %3 = vector.shape_cast %2 : vector<1x16x288xbf16> to vector<16x288xbf16>
    %c0_4 = arith.constant 0 : index
    %c0_5 = arith.constant 0 : index
    %c18 = arith.constant 18 : index
    %4 = vector.load %arg1[%c0_4, %c0_5, %c18] : memref<1x16x384xbf16, #tpu.memory_space<vmem>>, vector<1x16x288xbf16>
    %5 = vector.shape_cast %4 : vector<1x16x288xbf16> to vector<16x288xbf16>
    %c0_6 = arith.constant 0 : index
    %c0_7 = arith.constant 0 : index
    %c19 = arith.constant 19 : index
    %6 = vector.load %arg1[%c0_6, %c0_7, %c19] : memref<1x16x384xbf16, #tpu.memory_space<vmem>>, vector<1x16x288xbf16>
    %7 = vector.shape_cast %6 : vector<1x16x288xbf16> to vector<16x288xbf16>
    %c0_8 = arith.constant 0 : index
    %c0_9 = arith.constant 0 : index
    %c35 = arith.constant 35 : index
    %8 = vector.load %arg1[%c0_8, %c0_9, %c35] : memref<1x16x384xbf16, #tpu.memory_space<vmem>>, vector<1x16x288xbf16>
    %9 = vector.shape_cast %8 : vector<1x16x288xbf16> to vector<16x288xbf16>
    %c0_10 = arith.constant 0 : index
    %c0_11 = arith.constant 0 : index
    %c36_12 = arith.constant 36 : index
    %10 = vector.load %arg1[%c0_10, %c0_11, %c36_12] : memref<1x16x384xbf16, #tpu.memory_space<vmem>>, vector<1x16x288xbf16>
    %11 = vector.shape_cast %10 : vector<1x16x288xbf16> to vector<16x288xbf16>
    %c0_13 = arith.constant 0 : index
    %c0_14 = arith.constant 0 : index
    %c37 = arith.constant 37 : index
    %12 = vector.load %arg1[%c0_13, %c0_14, %c37] : memref<1x16x384xbf16, #tpu.memory_space<vmem>>, vector<1x16x288xbf16>
    %13 = vector.shape_cast %12 : vector<1x16x288xbf16> to vector<16x288xbf16>
    %c0_15 = arith.constant 0 : index
    %c0_16 = arith.constant 0 : index
    %c53 = arith.constant 53 : index
    %14 = vector.load %arg1[%c0_15, %c0_16, %c53] : memref<1x16x384xbf16, #tpu.memory_space<vmem>>, vector<1x16x288xbf16>
    %15 = vector.shape_cast %14 : vector<1x16x288xbf16> to vector<16x288xbf16>
    %c0_17 = arith.constant 0 : index
    %c0_18 = arith.constant 0 : index
    %c54 = arith.constant 54 : index
    %16 = vector.load %arg1[%c0_17, %c0_18, %c54] : memref<1x16x384xbf16, #tpu.memory_space<vmem>>, vector<1x16x288xbf16>
    %17 = vector.shape_cast %16 : vector<1x16x288xbf16> to vector<16x288xbf16>
    %c0_19 = arith.constant 0 : index
    %c0_20 = arith.constant 0 : index
    %c55 = arith.constant 55 : index
    %18 = vector.load %arg1[%c0_19, %c0_20, %c55] : memref<1x16x384xbf16, #tpu.memory_space<vmem>>, vector<1x16x288xbf16>
    %19 = vector.shape_cast %18 : vector<1x16x288xbf16> to vector<16x288xbf16>
    %20 = tpu.concatenate %3, %5, %7, %9, %11, %13, %15, %17, %19 in 0 : vector<16x288xbf16>, vector<16x288xbf16>, vector<16x288xbf16>, vector<16x288xbf16>, vector<16x288xbf16>, vector<16x288xbf16>, vector<16x288xbf16>, vector<16x288xbf16>, vector<16x288xbf16> -> vector<144x288xbf16>
    %cst = arith.constant dense<0.000000e+00> : vector<16x288xf32>
    %21 = tpu.matmul %1, %20, %cst {dimension_numbers = #tpu.dot_dimension_numbers<[1], [0], [0], [1], [0, 0, 1, 1], [], []>} : vector<16x144xbf16>, vector<144x288xbf16>, vector<16x288xf32> -> vector<16x288xf32>
    %c0_21 = arith.constant 0 : index
    %c0_22 = arith.constant 0 : index
    %22 = vector.load %arg3[%c0_21, %c0_22] : memref<16x1xf32, #tpu.memory_space<vmem>>, vector<16x1xf32>
    %23 = vector.broadcast %22 : vector<16x1xf32> to vector<16x288xf32>
    %24 = arith.addf %21, %23 : vector<16x288xf32>
    %cst_23 = arith.constant 0.000000e+00 : f32
    %25 = vector.broadcast %cst_23 : f32 to vector<16x288xf32>
    %26 = arith.cmpf ogt, %24, %25 : vector<16x288xf32>
    %cst_24 = arith.constant 0.00999999977 : f32
    %27 = vector.broadcast %cst_24 : f32 to vector<16x288xf32>
    %28 = arith.mulf %27, %24 : vector<16x288xf32>
    %29 = arith.select %26, %24, %28 : vector<16x288xi1>, vector<16x288xf32>
    %30 = vector.broadcast %0 : vector<1x288xf32> to vector<16x288xf32>
    %31 = arith.mulf %29, %30 : vector<16x288xf32>
    %cst_25 = arith.constant 0.000000e+00 : bf16
    %32 = vector.broadcast %cst_25 : bf16 to vector<16x36xbf16>
    %33 = arith.truncf %31 : vector<16x288xf32> to vector<16x288xbf16>
    %cst_26 = arith.constant 0.000000e+00 : bf16
    %34 = vector.broadcast %cst_26 : bf16 to vector<16x60xbf16>
    %35 = tpu.concatenate %32, %33, %34 in 1 : vector<16x36xbf16>, vector<16x288xbf16>, vector<16x60xbf16> -> vector<16x384xbf16>
    %c0_27 = arith.constant 0 : index
    %c0_28 = arith.constant 0 : index
    %36 = vector.load %arg8[%c0_27, %c0_28] : memref<16x384xbf16, #tpu.memory_space<vmem>>, vector<16x384xbf16>
    tpu.vector_store %arg8[%c0_27, %c0_28], %35 {strides = array<i32>} : memref<16x384xbf16, #tpu.memory_space<vmem>>, vector<16x384xbf16>,
    %c0_29 = arith.constant 0 : index
    %c0_30 = arith.constant 0 : index
    %37 = vector.load %arg4[%c0_29, %c0_30] : memref<8x144xbf16, #tpu.memory_space<vmem>>, vector<8x144xbf16>
    %c0_31 = arith.constant 0 : index
    %c17_32 = arith.constant 17 : index
    %38 = vector.load %arg8[%c0_31, %c17_32] : memref<16x384xbf16, #tpu.memory_space<vmem>>, vector<16x288xbf16>
    %c0_33 = arith.constant 0 : index
    %c18_34 = arith.constant 18 : index
    %39 = vector.load %arg8[%c0_33, %c18_34] : memref<16x384xbf16, #tpu.memory_space<vmem>>, vector<16x288xbf16>
    %c0_35 = arith.constant 0 : index
    %c19_36 = arith.constant 19 : index
    %40 = vector.load %arg8[%c0_35, %c19_36] : memref<16x384xbf16, #tpu.memory_space<vmem>>, vector<16x288xbf16>
    %c0_37 = arith.constant 0 : index
    %c35_38 = arith.constant 35 : index
    %41 = vector.load %arg8[%c0_37, %c35_38] : memref<16x384xbf16, #tpu.memory_space<vmem>>, vector<16x288xbf16>
    %c0_39 = arith.constant 0 : index
    %c36_40 = arith.constant 36 : index
    %42 = vector.load %arg8[%c0_39, %c36_40] : memref<16x384xbf16, #tpu.memory_space<vmem>>, vector<16x288xbf16>
    %c0_41 = arith.constant 0 : index
    %c37_42 = arith.constant 37 : index
    %43 = vector.load %arg8[%c0_41, %c37_42] : memref<16x384xbf16, #tpu.memory_space<vmem>>, vector<16x288xbf16>
    %c0_43 = arith.constant 0 : index
    %c53_44 = arith.constant 53 : index
    %44 = vector.load %arg8[%c0_43, %c53_44] : memref<16x384xbf16, #tpu.memory_space<vmem>>, vector<16x288xbf16>
    %c0_45 = arith.constant 0 : index
    %c54_46 = arith.constant 54 : index
    %45 = vector.load %arg8[%c0_45, %c54_46] : memref<16x384xbf16, #tpu.memory_space<vmem>>, vector<16x288xbf16>
    %c0_47 = arith.constant 0 : index
    %c55_48 = arith.constant 55 : index
    %46 = vector.load %arg8[%c0_47, %c55_48] : memref<16x384xbf16, #tpu.memory_space<vmem>>, vector<16x288xbf16>
    %47 = tpu.concatenate %38, %39, %40, %41, %42, %43, %44, %45, %46 in 0 : vector<16x288xbf16>, vector<16x288xbf16>, vector<16x288xbf16>, vector<16x288xbf16>, vector<16x288xbf16>, vector<16x288xbf16>, vector<16x288xbf16>, vector<16x288xbf16>, vector<16x288xbf16> -> vector<144x288xbf16>
    %cst_49 = arith.constant dense<0.000000e+00> : vector<8x288xf32>
    %48 = tpu.matmul %37, %47, %cst_49 {dimension_numbers = #tpu.dot_dimension_numbers<[1], [0], [0], [1], [0, 0, 1, 1], [], []>} : vector<8x144xbf16>, vector<144x288xbf16>, vector<8x288xf32> -> vector<8x288xf32>
    %c0_50 = arith.constant 0 : index
    %c0_51 = arith.constant 0 : index
    %49 = vector.load %arg5[%c0_50, %c0_51] : memref<8x1xf32, #tpu.memory_space<vmem>>, vector<8x1xf32>
    %50 = vector.broadcast %49 : vector<8x1xf32> to vector<8x288xf32>
    %51 = arith.addf %48, %50 : vector<8x288xf32>
    %52 = vector.broadcast %0 : vector<1x288xf32> to vector<8x288xf32>
    %53 = arith.mulf %51, %52 : vector<8x288xf32>
    %cst_52 = arith.constant 0.000000e+00 : bf16
    %54 = vector.broadcast %cst_52 : bf16 to vector<8x36xbf16>
    %55 = arith.truncf %53 : vector<8x288xf32> to vector<8x288xbf16>
    %cst_53 = arith.constant 0.000000e+00 : bf16
    %56 = vector.broadcast %cst_53 : bf16 to vector<8x60xbf16>
    %57 = tpu.concatenate %54, %55, %56 in 1 : vector<8x36xbf16>, vector<8x288xbf16>, vector<8x60xbf16> -> vector<8x384xbf16>
    %c0_54 = arith.constant 0 : index
    %c0_55 = arith.constant 0 : index
    %c0_56 = arith.constant 0 : index
    %58 = vector.load %arg7[%c0_54, %c0_55, %c0_56] : memref<1x8x384xbf16, #tpu.memory_space<vmem>>, vector<1x8x384xbf16>
    %59 = vector.shape_cast %58 : vector<1x8x384xbf16> to vector<8x384xbf16>
    %60 = vector.shape_cast %57 : vector<8x384xbf16> to vector<1x8x384xbf16>
    tpu.vector_store %arg7[%c0_54, %c0_55, %c0_56], %60 {strides = array<i32>} : memref<1x8x384xbf16, #tpu.memory_space<vmem>>, vector<1x8x384xbf16>,
    return
  }
  func.func @transform_0(%arg0: i32) -> (i32, i32, i32) {
    %c0_i32 = arith.constant 0 : i32
    %c0_i32_0 = arith.constant 0 : i32
    %c0_i32_1 = arith.constant 0 : i32
    return %arg0, %c0_i32, %c0_i32_0 : i32, i32, i32
  }
  func.func @transform_1(%arg0: i32) -> (i32, i32) {
    %c0_i32 = arith.constant 0 : i32
    %c0_i32_0 = arith.constant 0 : i32
    %c0_i32_1 = arith.constant 0 : i32
    return %c0_i32, %c0_i32_0 : i32, i32
  }
  func.func @transform_2(%arg0: i32) -> (i32, i32) {
    %c0_i32 = arith.constant 0 : i32
    %c0_i32_0 = arith.constant 0 : i32
    %c0_i32_1 = arith.constant 0 : i32
    return %c0_i32, %c0_i32_0 : i32, i32
  }
  func.func @transform_3(%arg0: i32) -> (i32, i32) {
    %c0_i32 = arith.constant 0 : i32
    %c0_i32_0 = arith.constant 0 : i32
    %c0_i32_1 = arith.constant 0 : i32
    return %c0_i32, %c0_i32_0 : i32, i32
  }
  func.func @transform_4(%arg0: i32) -> (i32, i32) {
    %c0_i32 = arith.constant 0 : i32
    %c0_i32_0 = arith.constant 0 : i32
    %c0_i32_1 = arith.constant 0 : i32
    return %c0_i32, %c0_i32_0 : i32, i32
  }
  func.func @transform_5(%arg0: i32) -> (i32, i32) {
    %c0_i32 = arith.constant 0 : i32
    %c0_i32_0 = arith.constant 0 : i32
    %c0_i32_1 = arith.constant 0 : i32
    return %c0_i32, %c0_i32_0 : i32, i32
  }
  func.func @transform_6(%arg0: i32) -> (i32, i32, i32) {
    %c0_i32 = arith.constant 0 : i32
    %c0_i32_0 = arith.constant 0 : i32
    %c0_i32_1 = arith.constant 0 : i32
    return %arg0, %c0_i32, %c0_i32_0 : i32, i32, i32
  }
}

</mosaic_0001>

<llo_original>
// kernel: mfe_backbone_forward.11
$region0: #{mfe_backbone_forward.11}
  #allocation0 [shape = 'u32[]', space=smem, size = 0x4, offset = 0x4, fixed_abs, tag = 'smem constant byte address 0x4 - core index']
  #allocation1 [shape = 'u32[144,128]{1,0:T(1,128)}', space=vmem, size = 0x12000, scoped, tag = 'internal scratch']
  %s0 = inlined_call_operand.vmem [shape: bf16[4,4,384], index: 0, kind: input, shape index: {}]
  %s1 = inlined_call_operand.vmem [shape: bf16[8,9], index: 1, kind: input, shape index: {}]
  %s2 = inlined_call_operand.vmem [shape: f32[8,1], index: 2, kind: input, shape index: {}]
  %s3 = inlined_call_operand.vmem [shape: f32[1,384], index: 3, kind: input, shape index: {}]
  %s4 = inlined_call_operand.vmem [shape: bf16[4,8,384], index: 4, kind: output, shape index: {}]
  %s5 = sld [smem:[#allocation0]]
  $region49: #{mfe_backbone_forward.11} parent=0
    _
  %s7 = ssub.s32 1, %s5
  %s8 = scalar_select 0, %s7, %s5
  loop: start=0, step=1, limit=6
  $region2: #{mfe_backbone_forward.11} parent=0 // loop_pre_header
    _
  $region3: #{mfe_backbone_forward.11} parent=0 // loop_header
    %s10 = sphi 0, %s14
    %p11 = scmp.ge.s32.totalorder %s10, 6
    %s20 = sphi 0, %s22
    %s23 = sphi 0, %s20
    %s24 = sphi 0, %s23
    %s40 = sphi 0, %s24
    %s44 = sphi 0, %s44
    %s46 = sphi 0, %s44
    %s47 = sphi 0, %s46
    %s61 = sphi 0, %s47
    %s65 = sphi 0, %s65
    %s67 = sphi 0, %s65
    %s68 = sphi 0, %s67
    %s82 = sphi 0, %s68
    %s86 = sphi 0, %s86
    %s88 = sphi 0, %s86
    %s89 = sphi 0, %s88
    %s103 = sphi 0, %s89
    %s109 = sphi 0, %s111
    %s112 = sphi 0, %s109
    %s113 = sphi 0, %s112
    %s129 = sphi 0, %s113
  $region4: #{mfe_backbone_forward.11} parent=0 // loop_header_branch
    %13 = sbr.rel (%p11) target = $region8
  $region5: #{mfe_backbone_forward.11} parent=0 // loop_body
    %s15 = ssub.s32 %s10, 1
    %s16 = ssub.s32 %s10, 2
    %s17 = sadd.s32 %s10, 1
    %s18 = ssub.s32 %s10, %s17
    %p19 = scmp.eq.s32.totalorder %s18, 0
    %s21 = sadd.s32 %s20, 1
    %s22 = scalar_select %p19, %s20, %s21
    %p25 = pneg %p19
    %p26 = scmp.eq.s32.totalorder %s10, 3
    %p27 = por %p25, %p26
    %p28 = scmp.ne.s32.totalorder %s20, %s23
    %p29 = scmp.eq.s32.totalorder %s10, 0
    %p30 = por %p28, %p29
    %p31 = scmp.ne.s32.totalorder %s20, %s23
    %p32 = scmp.eq.s32.totalorder %s15, 3
    %p33 = por %p31, %p32
    %p34 = scmp.ne.s32.totalorder %s23, %s24
    %p35 = scmp.eq.s32.totalorder %s15, 0
    %p36 = por %p34, %p35
    %p37 = scmp.ne.s32.totalorder %s23, %s24
    %p38 = scmp.eq.s32.totalorder %s16, 3
    %p39 = por %p37, %p38
    %p41 = scmp.ne.s32.totalorder %s24, %s40
    %p42 = scmp.eq.s32.totalorder %s16, 0
    %p43 = por %p41, %p42
    %s45 = sadd.s32 %s44, 1
    %p48 = scmp.eq.s32.totalorder %s10, 3
    %p49 = scmp.ne.s32.totalorder %s44, %s46
    %p50 = scmp.eq.s32.totalorder %s10, 0
    %p51 = por %p49, %p50
    %p52 = scmp.ne.s32.totalorder %s44, %s46
    %p53 = scmp.eq.s32.totalorder %s15, 3
    %p54 = por %p52, %p53
    %p55 = scmp.ne.s32.totalorder %s46, %s47
    %p56 = scmp.eq.s32.totalorder %s15, 0
    %p57 = por %p55, %p56
    %p58 = scmp.ne.s32.totalorder %s46, %s47
    %p59 = scmp.eq.s32.totalorder %s16, 3
    %p60 = por %p58, %p59
    %p62 = scmp.ne.s32.totalorder %s47, %s61
    %p63 = scmp.eq.s32.totalorder %s16, 0
    %p64 = por %p62, %p63
    %s66 = sadd.s32 %s65, 1
    %p69 = scmp.eq.s32.totalorder %s10, 3
    %p70 = scmp.ne.s32.totalorder %s65, %s67
    %p71 = scmp.eq.s32.totalorder %s10, 0
    %p72 = por %p70, %p71
    %p73 = scmp.ne.s32.totalorder %s65, %s67
    %p74 = scmp.eq.s32.totalorder %s15, 3
    %p75 = por %p73, %p74
    %p76 = scmp.ne.s32.totalorder %s67, %s68
    %p77 = scmp.eq.s32.totalorder %s15, 0
    %p78 = por %p76, %p77
    %p79 = scmp.ne.s32.totalorder %s67, %s68
    %p80 = scmp.eq.s32.totalorder %s16, 3
    %p81 = por %p79, %p80
    %p83 = scmp.ne.s32.totalorder %s68, %s82
    %p84 = scmp.eq.s32.totalorder %s16, 0
    %p85 = por %p83, %p84
    %s87 = sadd.s32 %s86, 1
    %p90 = scmp.eq.s32.totalorder %s10, 3
    %p91 = scmp.ne.s32.totalorder %s86, %s88
    %p92 = scmp.eq.s32.totalorder %s10, 0
    %p93 = por %p91, %p92
    %p94 = scmp.ne.s32.totalorder %s86, %s88
    %p95 = scmp.eq.s32.totalorder %s15, 3
    %p96 = por %p94, %p95
    %p97 = scmp.ne.s32.totalorder %s88, %s89
    %p98 = scmp.eq.s32.totalorder %s15, 0
    %p99 = por %p97, %p98
    %p100 = scmp.ne.s32.totalorder %s88, %s89
    %p101 = scmp.eq.s32.totalorder %s16, 3
    %p102 = por %p100, %p101
    %p104 = scmp.ne.s32.totalorder %s89, %s103
    %p105 = scmp.eq.s32.totalorder %s16, 0
    %p106 = por %p104, %p105
    %s107 = ssub.s32 %s10, %s17
    %p108 = scmp.eq.s32.totalorder %s107, 0
    %s110 = sadd.s32 %s109, 1
    %s111 = scalar_select %p108, %s109, %s110
    %p114 = pneg %p108
    %p115 = scmp.eq.s32.totalorder %s10, 3
    %p116 = por %p114, %p115
    %p117 = scmp.ne.s32.totalorder %s109, %s112
    %p118 = scmp.eq.s32.totalorder %s10, 0
    %p119 = por %p117, %p118
    %p120 = scmp.ne.s32.totalorder %s109, %s112
    %p121 = scmp.eq.s32.totalorder %s15, 3
    %p122 = por %p120, %p121
    %p123 = scmp.ne.s32.totalorder %s112, %s113
    %p124 = scmp.eq.s32.totalorder %s15, 0
    %p125 = por %p123, %p124
    %p126 = scmp.ne.s32.totalorder %s112, %s113
    %p127 = scmp.eq.s32.totalorder %s16, 3
    %p128 = por %p126, %p127
    %p130 = scmp.ne.s32.totalorder %s113, %s129
    %p131 = scmp.eq.s32.totalorder %s16, 0
    %p132 = por %p130, %p131
    %p133 = scmp.le.s32.totalorder 1, %s10
    %p134 = scmp.lt.s32.totalorder %s10, 5
    %p135 = pnand %p133, %p134
    %p136 = pneg %p135
    // Predicated region
    $region9: #{mfe_backbone_forward.11} parent=5 // pred_check
      _
    $region10: #{mfe_backbone_forward.11} parent=5 // pred_check_branch
      %138 = sbr.rel (%p135) target = $region12
    $region11: #{mfe_backbone_forward.11} parent=5 // pred_region
      %s139 = ssub.s32 %s10, 1
      // Predicated region
      $region13: #{mfe_backbone_forward.11} parent=11 // pred_check
        %p140 = pneg %p57
      $region14: #{mfe_backbone_forward.11} parent=11 // pred_check_branch
        %142 = sbr.rel (%p140) target = $region16
      $region15: #{mfe_backbone_forward.11} parent=11 // pred_region
        _
      $region16: #{mfe_backbone_forward.11} parent=11 // pred_fallthru
        _
      // Predicated region
      $region17: #{mfe_backbone_forward.11} parent=11 // pred_check
        %p143 = pneg %p78
      $region18: #{mfe_backbone_forward.11} parent=11 // pred_check_branch
        %145 = sbr.rel (%p143) target = $region20
      $region19: #{mfe_backbone_forward.11} parent=11 // pred_region
        _
      $region20: #{mfe_backbone_forward.11} parent=11 // pred_fallthru
        _
      // Predicated region
      $region21: #{mfe_backbone_forward.11} parent=11 // pred_check
        %p146 = pneg %p99
      $region22: #{mfe_backbone_forward.11} parent=11 // pred_check_branch
        %148 = sbr.rel (%p146) target = $region24
      $region23: #{mfe_backbone_forward.11} parent=11 // pred_region
        _
      $region24: #{mfe_backbone_forward.11} parent=11 // pred_fallthru
        _
    $region12: #{mfe_backbone_forward.11} parent=5 // pred_fallthru
      _
    %p149 = scmp.lt.s32.totalorder %s10, 4
    // Predicated region
    $region25: #{mfe_backbone_forward.11} parent=5 // pred_check
      %p150 = pneg %p149
    $region26: #{mfe_backbone_forward.11} parent=5 // pred_check_branch
      %152 = sbr.rel (%p150) target = $region28
    $region27: #{mfe_backbone_forward.11} parent=5 // pred_region
      // Predicated region
      $region29: #{mfe_backbone_forward.11} parent=27 // pred_check
        %p153 = pneg %p30
      $region30: #{mfe_backbone_forward.11} parent=27 // pred_check_branch
        %155 = sbr.rel (%p153) target = $region32
      $region31: #{mfe_backbone_forward.11} parent=27 // pred_region
        %p156 = scmp.lt.s32.totalorder %s10, 3
        %s157 = scalar_select %p156, %s10, 3
        %s158 = smul.addr %s157, 3
        %s159 = smul.addr %s158, 2
        %s160 = scalar_lea.vmem %s0, %s159
      $region32: #{mfe_backbone_forward.11} parent=27 // pred_fallthru
        _
    $region28: #{mfe_backbone_forward.11} parent=5 // pred_fallthru
      _
    %p161 = scmp.le.s32.totalorder 1, %s10
    %p162 = scmp.lt.s32.totalorder %s10, 5
    %p163 = pnand %p161, %p162
    %p164 = pneg %p163
    // Predicated region
    $region33: #{mfe_backbone_forward.11} parent=5 // pred_check
      _
    $region34: #{mfe_backbone_forward.11} parent=5 // pred_check_branch
      %166 = sbr.rel (%p163) target = $region36
    $region35: #{mfe_backbone_forward.11} parent=5 // pred_region
      %s167 = ssub.s32 %s10, 1
      %p168 = scmp.lt.s32.totalorder %s15, 3
      %s169 = scalar_select %p168, %s15, 3
      %s170 = smul.addr %s169, 3
      %s171 = smul.addr %s170, 2
      %s172 = scalar_lea.vmem %s0, %s171
      %p173 = pneg %p36
      %p174 = pneg %p33
      %p175 = pneg %p57
      %p176 = pneg %p54
      %p177 = pneg %p78
      %p178 = pneg %p75
      %p179 = pneg %p99
      %p180 = pneg %p96
      %p181 = pneg %p125
      %p182 = pneg %p122
      %p183 = scmp.lt.s32.totalorder %s15, 3
      %s184 = scalar_select %p183, %s15, 3
      %s185 = smul.addr %s184, 3
      %s186 = smul.addr %s185, 4
      %s187 = scalar_lea.vmem %s4, %s186
      %p188 = scmp.lt.s32.totalorder %s15, 3
      %s189 = scalar_select %p188, %s15, 3
      %s190 = smul.addr %s189, 3
      %s191 = smul.addr %s190, 2
      %s192 = scalar_lea.vmem %s0, %s191
      %p193 = scmp.lt.s32.totalorder %s15, 3
      %s194 = scalar_select %p193, %s15, 3
      %s195 = smul.addr %s194, 3
      %s196 = smul.addr %s195, 4
      %s197 = scalar_lea.vmem %s4, %s196
      %v199 = vld [vmem:[%s3] sm:$0x7]
      %v200 = vld [vmem:[%s1] sm:$0xf]
      %v201 = vld [vmem:[%s192] sm:$0x2a]
      %v202 = vld [vmem:[%s192] sm:$0x15]
      %v204 = vcombine.high %v201, %v201
      %v206 = vunpack.c.l.s4 1983009808
      %v207 = vunpack.c.0.s8 %v206
      %v208 = vlaneseq
      %v209 = vshrl.u32 %v208, 7
      %v210 = vsub.s32 %v207, %v209
      %v211 = vrot.slane %v201, %v210
      %v213 = vunpack.c.l.s4 1983009808
      %v214 = vunpack.c.0.s8 %v213
      %v215 = vlaneseq
      %v216 = vshrl.u32 %v215, 7
      %v217 = vsub.s32 %v214, %v216
      %v218 = vrot.slane %v204, %v217
      %v219 = vcombine.high %v211, %v211
      %v221 = vshrl.u32 %v211, 16
      %v223 = vrot.slane %v221, 1
      %v225 = vshrl.u32 %v219, 16
      %v227 = vrot.slane %v225, 1
      %v229 = vshrl.u32 %v218, 16
      %v231 = vrot.slane %v229, 1
      %v235 = vshll.u32 %v211, 16
      %v237 = vrot.slane %v235, 1
      %v238 = vshll.u32 %v219, 16
      %v240 = vrot.slane %v238, 1
      %v241 = vshll.u32 %v218, 16
      %v243 = vrot.slane %v241, 1
      %244 = vrot.lane.b32.xlu0 %v237, 127
      %v245 = vpop.permute.xlu0 %244
      %246 = vrot.lane.b32.xlu0 %v240, 127
      %v247 = vpop.permute.xlu0 %246
      %248 = vrot.lane.b32.xlu0 %v243, 127
      %v249 = vpop.permute.xlu0 %248
      %vm250 = vcmask 1039360
      %v251 = vsel %vm250, %v245, %v247
      %v252 = vsel %vm250, %v247, %v249
      %256 = vrot.lane.b32.xlu0 %v221, 127
      %v257 = vpop.permute.xlu0 %256
      %258 = vrot.lane.b32.xlu0 %v225, 127
      %v259 = vpop.permute.xlu0 %258
      %260 = vrot.lane.b32.xlu0 %v229, 127
      %v261 = vpop.permute.xlu0 %260
      %v262 = vsel %vm250, %v257, %v259
      %v263 = vsel %vm250, %v259, %v261
      %v265 = vcombine.high %v202, %v202
      %v267 = vunpack.c.l.s4 1983009808
      %v268 = vunpack.c.0.s8 %v267
      %v269 = vlaneseq
      %v270 = vshrl.u32 %v269, 7
      %v271 = vsub.s32 %v268, %v270
      %v272 = vrot.slane %v202, %v271
      %v274 = vunpack.c.l.s4 1983009808
      %v275 = vunpack.c.0.s8 %v274
      %v276 = vlaneseq
      %v277 = vshrl.u32 %v276, 7
      %v278 = vsub.s32 %v275, %v277
      %v279 = vrot.slane %v265, %v278
      %v280 = vcombine.high %v272, %v272
      %v281 = vrot.slane %v272, 7
      %v282 = vrot.slane %v280, 7
      %v283 = vrot.slane %v279, 7
      %284 = vrot.lane.b32.xlu0 %v281, 110
      %v285 = vpop.permute.xlu0 %284
      %286 = vrot.lane.b32.xlu0 %v282, 110
      %v287 = vpop.permute.xlu0 %286
      %288 = vrot.lane.b32.xlu0 %v283, 110
      %v289 = vpop.permute.xlu0 %288
      %vm290 = vcmask 900096
      %v291 = vsel %vm290, %v285, %v287
      %v292 = vsel %vm290, %v287, %v289
      %v296 = vcombine.low %v202, %v202
      %v298 = vunpack.c.l.s4 1983009808
      %v299 = vunpack.c.0.s8 %v298
      %v300 = vlaneseq
      %v301 = vshrl.u32 %v300, 7
      %v302 = vsub.s32 %v299, %v301
      %v303 = vrot.slane %v296, %v302
      %v304 = vcombine.high %v303, %v303
      %305 = vrot.lane.b32.xlu0 %v303, 109
      %v306 = vpop.permute.xlu0 %305
      %307 = vrot.lane.b32.xlu0 %v304, 109
      %v308 = vpop.permute.xlu0 %307
      %309 = vrot.lane.b32.xlu0 %v272, 109
      %v310 = vpop.permute.xlu0 %309
      %vm311 = vcmask 891904
      %v312 = vsel %vm311, %v306, %v308
      %v313 = vsel %vm311, %v308, %v310
      %v317 = vrot.slane %v221, 6
      %v318 = vrot.slane %v225, 6
      %v319 = vrot.slane %v229, 6
      %320 = vrot.lane.b32.xlu0 %v317, 110
      %v321 = vpop.permute.xlu0 %320
      %322 = vrot.lane.b32.xlu0 %v318, 110
      %v323 = vpop.permute.xlu0 %322
      %324 = vrot.lane.b32.xlu0 %v319, 110
      %v325 = vpop.permute.xlu0 %324
      %v326 = vsel %vm290, %v321, %v323
      %v327 = vsel %vm290, %v323, %v325
      %v328 = vrot.slane %v235, 6
      %v329 = vrot.slane %v238, 6
      %v330 = vrot.slane %v241, 6
      %331 = vrot.lane.b32.xlu0 %v328, 109
      %v332 = vpop.permute.xlu0 %331
      %333 = vrot.lane.b32.xlu0 %v329, 109
      %v334 = vpop.permute.xlu0 %333
      %335 = vrot.lane.b32.xlu0 %v330, 109
      %v336 = vpop.permute.xlu0 %335
      %v337 = vsel %vm311, %v332, %v334
      %v338 = vsel %vm311, %v334, %v336
      %v342 = vrot.slane %v221, 5
      %v343 = vrot.slane %v225, 5
      %v344 = vrot.slane %v229, 5
      %345 = vrot.lane.b32.xlu0 %v342, 109
      %v346 = vpop.permute.xlu0 %345
      %347 = vrot.lane.b32.xlu0 %v343, 109
      %v348 = vpop.permute.xlu0 %347
      %349 = vrot.lane.b32.xlu0 %v344, 109
      %v350 = vpop.permute.xlu0 %349
      %v351 = vsel %vm311, %v346, %v348
      %v352 = vsel %vm311, %v348, %v350
      %vm353 = vcmask 1040384
      %vm354 = vsmask.f32 256
      %vm355 = vmand %vm353, %vm354
      %v356 = vsel %vm355, %v223, %v251
      %v357 = vsel %vm355, %v227, %v252
      %v358 = vsel %vm355, %v231, %v249
      %vm359 = vcmask 1040384
      %v362 = vsel %vm359, %v356, %v262
      %v366 = vsel %vm359, %v357, %v263
      %v370 = vsel %vm359, %v358, %v261
      %vm372 = vcmask 1041408
      %vm373 = vsmask.f32 1280
      %vm374 = vmand %vm372, %vm373
      %v375 = vsel %vm374, %v362, %v291
      %v376 = vsel %vm374, %v366, %v292
      %v377 = vsel %vm374, %v370, %v289
      %vm378 = vcmask 1041408
      %v381 = vsel %vm378, %v375, %v312
      %v385 = vsel %vm378, %v376, %v313
      %v389 = vsel %vm378, %v377, %v310
      %vm391 = vcmask 1042432
      %vm392 = vsmask.f32 2304
      %vm393 = vmand %vm391, %vm392
      %v394 = vsel %vm393, %v381, %v312
      %v395 = vsel %vm393, %v385, %v313
      %v396 = vsel %vm393, %v389, %v310
      %vm397 = vcmask 1042432
      %v400 = vsel %vm397, %v394, %v326
      %v404 = vsel %vm397, %v395, %v327
      %v408 = vsel %vm397, %v396, %v325
      %vm410 = vcmask 1043456
      %vm411 = vsmask.f32 3328
      %vm412 = vmand %vm410, %vm411
      %v413 = vsel %vm412, %v400, %v337
      %v414 = vsel %vm412, %v404, %v338
      %v415 = vsel %vm412, %v408, %v336
      %vm416 = vcmask 1043456
      %v419 = vsel %vm416, %v413, %v351
      %v422 = vsel %vm416, %v414, %v352
      %v425 = vsel %vm416, %v415, %v350
      %v426 = vld [vmem:[%s2] sm:$0xff]
      %428 = vset.pattern.permute.xlu0 0
      %429 = vperm.xlu0 %428, %v426
      %v430 = vpop.permute.xlu0 %429
      %435 = vrot.lane.b32.xlu0 %v419, 111
      %v436 = vpop.permute.xlu0 %435
      %437 = vrot.lane.b32.xlu0 %v422, 111
      %v438 = vpop.permute.xlu0 %437
      %439 = vrot.lane.b32.xlu0 %v425, 111
      %v440 = vpop.permute.xlu0 %439
      %vm441 = vcmask 908288
      %v442 = vsel %vm441, %v436, %v438
      %v443 = vsel %vm441, %v438, %v440
      %vm444 = vcmask 72704
      %v446 = vsel %vm444, %v200, 0
      %vm448 = vcmask 1044480
      %v449 = vsel %vm416, 4294967295, 65535
      %v450 = vsel %vm448, %v449, 0
      %v452 = vand.u32 %v442, %v450
      %v455 = vand.u32 %v443, %v450
      %v458 = vand.u32 %v440, %v450
      %460 = vmatprep.subr.bf16.mxu0 %v455
      %461 = vmatpush1.bf16.msra.mxu0 %v452
      %462 = vmatprep.subr.bf16.mxu0 0
      %463 = vmatpush1.bf16.msra.mxu0 0
      %464 = vmatprep.subr.bf16.mxu0 0
      %465 = vmatpush1.bf16.msra.mxu0 0
      %466 = vmatprep.subr.bf16.mxu0 0
      %467 = vmatpush1.bf16.msra.mxu0 0
      %468 = vmatprep.subr.bf16.mxu0 0
      %469 = vmatpush1.bf16.msra.mxu0 0
      %470 = vmatprep.subr.bf16.mxu0 0
      %471 = vmatpush1.bf16.msra.mxu0 0
      %472 = vmatprep.subr.bf16.mxu0 0
      %473 = vmatpush1.bf16.msra.mxu0 0
      %474 = vmatprep.subr.bf16.mxu0 0
      %475 = vmatpush1.bf16.msra.mxu0 0
      %476 = vmatprep.subr.bf16.mxu0 0
      %477 = vmatpush1.bf16.msra.mxu0 0
      %478 = vmatprep.subr.bf16.mxu0 0
      %479 = vmatpush1.bf16.msra.mxu0 0
      %480 = vmatprep.subr.bf16.mxu0 0
      %481 = vmatpush1.bf16.msra.mxu0 0
      %482 = vmatprep.subr.bf16.mxu0 0
      %483 = vmatpush1.bf16.msra.mxu0 0
      %484 = vmatprep.subr.bf16.mxu0 0
      %485 = vmatpush1.bf16.msra.mxu0 0
      %486 = vmatprep.subr.bf16.mxu0 0
      %487 = vmatpush1.bf16.msra.mxu0 0
      %488 = vmatprep.subr.bf16.mxu0 0
      %489 = vmatpush1.bf16.msra.mxu0 0
      %490 = vmatprep.subr.bf16.mxu0 0
      %491 = vmatpush1.bf16.msra.mxu0 0
      %492 = vmatprep.mubr.bf16.mxu0 0
      %493 = vmatmul.mubr.bf16.gmra.mrb[0].mxu0 %v446
      %v494 = vpop.f32.mrb[0].mxu0
      %v495 = vadd.f32 %v430, %v494
      %v496 = vpop.f32.mrb[0].mxu0
      %v497 = vadd.f32 %v430, %v496
      %v498 = vpop.f32.mrb[0].mxu0
      %v499 = vpop.f32.mrb[0].mxu0
      %500 = vdwg.mxu0
      %501 = vmatprep.subr.bf16.mxu0 0
      %502 = vmatpush1.bf16.msra.mxu0 %v458
      %503 = vmatprep.subr.bf16.mxu0 0
      %504 = vmatpush1.bf16.msra.mxu0 0
      %505 = vmatprep.subr.bf16.mxu0 0
      %506 = vmatpush1.bf16.msra.mxu0 0
      %507 = vmatprep.subr.bf16.mxu0 0
      %508 = vmatpush1.bf16.msra.mxu0 0
      %509 = vmatprep.subr.bf16.mxu0 0
      %510 = vmatpush1.bf16.msra.mxu0 0
      %511 = vmatprep.subr.bf16.mxu0 0
      %512 = vmatpush1.bf16.msra.mxu0 0
      %513 = vmatprep.subr.bf16.mxu0 0
      %514 = vmatpush1.bf16.msra.mxu0 0
      %515 = vmatprep.subr.bf16.mxu0 0
      %516 = vmatpush1.bf16.msra.mxu0 0
      %517 = vmatprep.subr.bf16.mxu0 0
      %518 = vmatpush1.bf16.msra.mxu0 0
      %519 = vmatprep.subr.bf16.mxu0 0
      %520 = vmatpush1.bf16.msra.mxu0 0
      %521 = vmatprep.subr.bf16.mxu0 0
      %522 = vmatpush1.bf16.msra.mxu0 0
      %523 = vmatprep.subr.bf16.mxu0 0
      %524 = vmatpush1.bf16.msra.mxu0 0
      %525 = vmatprep.subr.bf16.mxu0 0
      %526 = vmatpush1.bf16.msra.mxu0 0
      %527 = vmatprep.subr.bf16.mxu0 0
      %528 = vmatpush1.bf16.msra.mxu0 0
      %529 = vmatprep.subr.bf16.mxu0 0
      %530 = vmatpush1.bf16.msra.mxu0 0
      %531 = vmatprep.subr.bf16.mxu0 0
      %532 = vmatpush1.bf16.msra.mxu0 0
      %533 = vmatprep.mubr.bf16.mxu0 0
      %534 = vmatmul.mubr.bf16.gmra.mrb[0].mxu0 %v446
      %v535 = vpop.f32.mrb[0].mxu0
      %v536 = vadd.f32 %v430, %v535
      %v537 = vpop.f32.mrb[0].mxu0
      %v538 = vpop.f32.mrb[0].mxu0
      %v539 = vpop.f32.mrb[0].mxu0
      %540 = vdwg.mxu0
      %v541 = vmax.f32 %v495, 0.0
      %v542 = vmax.f32 %v497, 0.0
      %v543 = vmax.f32 %v536, 0.0
      %v545 = vlaneseq
      %v546 = vshrl.u32 %v545, 7
      %v547 = vsub.s32 0, %v546
      %v548 = vrot.slane %v199, %v547
      %v549 = vlaneseq
      %v550 = vshrl.u32 %v549, 7
      %v551 = vsub.s32 1, %v550
      %v552 = vrot.slane %v199, %v551
      %v553 = vlaneseq
      %v554 = vshrl.u32 %v553, 7
      %v555 = vsub.s32 2, %v554
      %v556 = vrot.slane %v199, %v555
      %557 = vrot.lane.b32.xlu0 %v548, 92
      %v558 = vpop.permute.xlu0 %557
      %559 = vrot.lane.b32.xlu0 %v552, 92
      %v560 = vpop.permute.xlu0 %559
      %561 = vrot.lane.b32.xlu0 %v556, 92
      %v562 = vpop.permute.xlu0 %561
      %vm563 = vcmask 752640
      %v564 = vsel %vm563, %v558, %v560
      %v565 = vsel %vm563, %v560, %v562
      %v569 = vmul.f32 %v541, %v564
      %v570 = vmul.f32 %v542, %v565
      %v571 = vmul.f32 %v543, %v562
      %v572 = vpack.c.bf16 %v569, %v569
      %v573 = vpack.c.bf16 %v570, %v570
      %v574 = vpack.c.bf16 %v571, %v571
      %578 = vrot.lane.b32.xlu0 %v572, 36
      %v579 = vpop.permute.xlu0 %578
      %580 = vrot.lane.b32.xlu0 %v573, 36
      %v581 = vpop.permute.xlu0 %580
      %582 = vrot.lane.b32.xlu0 %v574, 36
      %v583 = vpop.permute.xlu0 %582
      %vm584 = vcmask 293888
      %v585 = vsel %vm584, %v579, %v581
      %v586 = vsel %vm584, %v581, %v583
      %vm587 = vcmask 293888
      %v590 = vsel %vm587, 0, %v579
      %vm591 = vcmask 556032
      %v593 = vsel %vm591, %v586, 0
      %v596 = vunpack.c.l.b16 %v590
      %v597 = vunpack.c.l.b16 %v585
      %v598 = vunpack.c.l.b16 %v593
      %v599 = vpack.c.b16 %v597, %v596
      %v600 = vpack.c.b16 %v598, %v598
      %603 = vst [vmem:[%s197] sm:$0xff] %v599
      %604 = vst [vmem:[%s197 + $0x8] sm:$0xf] %v600
      %p605 = scmp.lt.s32.totalorder %s15, 3
      %s606 = scalar_select %p605, %s15, 3
      %s607 = smul.addr %s606, 3
      %s608 = smul.addr %s607, 4
      %s609 = scalar_lea.vmem %s4, %s608
      // Predicated region
      $region37: #{mfe_backbone_forward.11} parent=35 // pred_check
        %p610 = pneg %p122
      $region38: #{mfe_backbone_forward.11} parent=35 // pred_check_branch
        %612 = sbr.rel (%p610) target = $region40
      $region39: #{mfe_backbone_forward.11} parent=35 // pred_region
        _
      $region40: #{mfe_backbone_forward.11} parent=35 // pred_fallthru
        _
    $region36: #{mfe_backbone_forward.11} parent=5 // pred_fallthru
      _
    %p613 = scmp.le.s32.totalorder 2, %s10
    // Predicated region
    $region41: #{mfe_backbone_forward.11} parent=5 // pred_check
      %p614 = pneg %p613
    $region42: #{mfe_backbone_forward.11} parent=5 // pred_check_branch
      %616 = sbr.rel (%p614) target = $region44
    $region43: #{mfe_backbone_forward.11} parent=5 // pred_region
      %s617 = ssub.s32 %s10, 2
      // Predicated region
      $region45: #{mfe_backbone_forward.11} parent=43 // pred_check
        %p618 = pneg %p128
      $region46: #{mfe_backbone_forward.11} parent=43 // pred_check_branch
        %620 = sbr.rel (%p618) target = $region48
      $region47: #{mfe_backbone_forward.11} parent=43 // pred_region
        %p621 = scmp.lt.s32.totalorder %s16, 3
        %s622 = scalar_select %p621, %s16, 3
        %s623 = smul.addr %s622, 3
        %s624 = smul.addr %s623, 4
        %s625 = scalar_lea.vmem %s4, %s624
      $region48: #{mfe_backbone_forward.11} parent=43 // pred_fallthru
        _
    $region44: #{mfe_backbone_forward.11} parent=5 // pred_fallthru
      _
  $region6: #{mfe_backbone_forward.11} parent=0 // loop_footer
    %s14 = sadd.s32 1, %s10
  $region7: #{mfe_backbone_forward.11} parent=0 // loop_footer_branch
    %9 = sbr.rel target = $region3
  $region8: #{mfe_backbone_forward.11} parent=0 // loop_exit
    _

// kernel: mfe_backbone_forward.12
$region0: #{mfe_backbone_forward.12}
  #allocation0 [shape = 'u32[]', space=smem, size = 0x4, offset = 0x4, fixed_abs, tag = 'smem constant byte address 0x4 - core index']
  #allocation1 [shape = 'u32[144,128]{1,0:T(1,128)}', space=vmem, size = 0x12000, scoped, tag = 'internal scratch']
  #allocation2 [shape = 'bf16[8,384]{1,0:T(8,128)(2,1)}', space=vmem, size = 0x1800, scoped, tag = 'scratch operand']
  %s0 = inlined_call_operand.vmem [shape: bf16[4,8,384], index: 0, kind: input, shape index: {}]
  %s1 = inlined_call_operand.vmem [shape: bf16[8,72], index: 1, kind: input, shape index: {}]
  %s2 = inlined_call_operand.vmem [shape: f32[8,1], index: 2, kind: input, shape index: {}]
  %s3 = inlined_call_operand.vmem [shape: bf16[8,72], index: 3, kind: input, shape index: {}]
  %s4 = inlined_call_operand.vmem [shape: f32[8,1], index: 4, kind: input, shape index: {}]
  %s5 = inlined_call_operand.vmem [shape: f32[1,384], index: 5, kind: input, shape index: {}]
  %s6 = inlined_call_operand.vmem [shape: bf16[4,8,384], index: 6, kind: output, shape index: {}]
  %s7 = sld [smem:[#allocation0]]
  $region57: #{mfe_backbone_forward.12} parent=0
    _
  %s9 = ssub.s32 1, %s7
  %s10 = scalar_select 0, %s9, %s7
  loop: start=0, step=1, limit=6
  $region2: #{mfe_backbone_forward.12} parent=0 // loop_pre_header
    _
  $region3: #{mfe_backbone_forward.12} parent=0 // loop_header
    %s12 = sphi 0, %s16
    %p13 = scmp.ge.s32.totalorder %s12, 6
    %s22 = sphi 0, %s24
    %s25 = sphi 0, %s22
    %s26 = sphi 0, %s25
    %s42 = sphi 0, %s26
    %s46 = sphi 0, %s46
    %s48 = sphi 0, %s46
    %s49 = sphi 0, %s48
    %s63 = sphi 0, %s49
    %s67 = sphi 0, %s67
    %s69 = sphi 0, %s67
    %s70 = sphi 0, %s69
    %s84 = sphi 0, %s70
    %s88 = sphi 0, %s88
    %s90 = sphi 0, %s88
    %s91 = sphi 0, %s90
    %s105 = sphi 0, %s91
    %s109 = sphi 0, %s109
    %s111 = sphi 0, %s109
    %s112 = sphi 0, %s111
    %s126 = sphi 0, %s112
    %s130 = sphi 0, %s130
    %s132 = sphi 0, %s130
    %s133 = sphi 0, %s132
    %s147 = sphi 0, %s133
    %s153 = sphi 0, %s155
    %s156 = sphi 0, %s153
    %s157 = sphi 0, %s156
    %s173 = sphi 0, %s157
  $region4: #{mfe_backbone_forward.12} parent=0 // loop_header_branch
    %15 = sbr.rel (%p13) target = $region8
  $region5: #{mfe_backbone_forward.12} parent=0 // loop_body
    %s17 = ssub.s32 %s12, 1
    %s18 = ssub.s32 %s12, 2
    %s19 = sadd.s32 %s12, 1
    %s20 = ssub.s32 %s12, %s19
    %p21 = scmp.eq.s32.totalorder %s20, 0
    %s23 = sadd.s32 %s22, 1
    %s24 = scalar_select %p21, %s22, %s23
    %p27 = pneg %p21
    %p28 = scmp.eq.s32.totalorder %s12, 3
    %p29 = por %p27, %p28
    %p30 = scmp.ne.s32.totalorder %s22, %s25
    %p31 = scmp.eq.s32.totalorder %s12, 0
    %p32 = por %p30, %p31
    %p33 = scmp.ne.s32.totalorder %s22, %s25
    %p34 = scmp.eq.s32.totalorder %s17, 3
    %p35 = por %p33, %p34
    %p36 = scmp.ne.s32.totalorder %s25, %s26
    %p37 = scmp.eq.s32.totalorder %s17, 0
    %p38 = por %p36, %p37
    %p39 = scmp.ne.s32.totalorder %s25, %s26
    %p40 = scmp.eq.s32.totalorder %s18, 3
    %p41 = por %p39, %p40
    %p43 = scmp.ne.s32.totalorder %s26, %s42
    %p44 = scmp.eq.s32.totalorder %s18, 0
    %p45 = por %p43, %p44
    %s47 = sadd.s32 %s46, 1
    %p50 = scmp.eq.s32.totalorder %s12, 3
    %p51 = scmp.ne.s32.totalorder %s46, %s48
    %p52 = scmp.eq.s32.totalorder %s12, 0
    %p53 = por %p51, %p52
    %p54 = scmp.ne.s32.totalorder %s46, %s48
    %p55 = scmp.eq.s32.totalorder %s17, 3
    %p56 = por %p54, %p55
    %p57 = scmp.ne.s32.totalorder %s48, %s49
    %p58 = scmp.eq.s32.totalorder %s17, 0
    %p59 = por %p57, %p58
    %p60 = scmp.ne.s32.totalorder %s48, %s49
    %p61 = scmp.eq.s32.totalorder %s18, 3
    %p62 = por %p60, %p61
    %p64 = scmp.ne.s32.totalorder %s49, %s63
    %p65 = scmp.eq.s32.totalorder %s18, 0
    %p66 = por %p64, %p65
    %s68 = sadd.s32 %s67, 1
    %p71 = scmp.eq.s32.totalorder %s12, 3
    %p72 = scmp.ne.s32.totalorder %s67, %s69
    %p73 = scmp.eq.s32.totalorder %s12, 0
    %p74 = por %p72, %p73
    %p75 = scmp.ne.s32.totalorder %s67, %s69
    %p76 = scmp.eq.s32.totalorder %s17, 3
    %p77 = por %p75, %p76
    %p78 = scmp.ne.s32.totalorder %s69, %s70
    %p79 = scmp.eq.s32.totalorder %s17, 0
    %p80 = por %p78, %p79
    %p81 = scmp.ne.s32.totalorder %s69, %s70
    %p82 = scmp.eq.s32.totalorder %s18, 3
    %p83 = por %p81, %p82
    %p85 = scmp.ne.s32.totalorder %s70, %s84
    %p86 = scmp.eq.s32.totalorder %s18, 0
    %p87 = por %p85, %p86
    %s89 = sadd.s32 %s88, 1
    %p92 = scmp.eq.s32.totalorder %s12, 3
    %p93 = scmp.ne.s32.totalorder %s88, %s90
    %p94 = scmp.eq.s32.totalorder %s12, 0
    %p95 = por %p93, %p94
    %p96 = scmp.ne.s32.totalorder %s88, %s90
    %p97 = scmp.eq.s32.totalorder %s17, 3
    %p98 = por %p96, %p97
    %p99 = scmp.ne.s32.totalorder %s90, %s91
    %p100 = scmp.eq.s32.totalorder %s17, 0
    %p101 = por %p99, %p100
    %p102 = scmp.ne.s32.totalorder %s90, %s91
    %p103 = scmp.eq.s32.totalorder %s18, 3
    %p104 = por %p102, %p103
    %p106 = scmp.ne.s32.totalorder %s91, %s105
    %p107 = scmp.eq.s32.totalorder %s18, 0
    %p108 = por %p106, %p107
    %s110 = sadd.s32 %s109, 1
    %p113 = scmp.eq.s32.totalorder %s12, 3
    %p114 = scmp.ne.s32.totalorder %s109, %s111
    %p115 = scmp.eq.s32.totalorder %s12, 0
    %p116 = por %p114, %p115
    %p117 = scmp.ne.s32.totalorder %s109, %s111
    %p118 = scmp.eq.s32.totalorder %s17, 3
    %p119 = por %p117, %p118
    %p120 = scmp.ne.s32.totalorder %s111, %s112
    %p121 = scmp.eq.s32.totalorder %s17, 0
    %p122 = por %p120, %p121
    %p123 = scmp.ne.s32.totalorder %s111, %s112
    %p124 = scmp.eq.s32.totalorder %s18, 3
    %p125 = por %p123, %p124
    %p127 = scmp.ne.s32.totalorder %s112, %s126
    %p128 = scmp.eq.s32.totalorder %s18, 0
    %p129 = por %p127, %p128
    %s131 = sadd.s32 %s130, 1
    %p134 = scmp.eq.s32.totalorder %s12, 3
    %p135 = scmp.ne.s32.totalorder %s130, %s132
    %p136 = scmp.eq.s32.totalorder %s12, 0
    %p137 = por %p135, %p136
    %p138 = scmp.ne.s32.totalorder %s130, %s132
    %p139 = scmp.eq.s32.totalorder %s17, 3
    %p140 = por %p138, %p139
    %p141 = scmp.ne.s32.totalorder %s132, %s133
    %p142 = scmp.eq.s32.totalorder %s17, 0
    %p143 = por %p141, %p142
    %p144 = scmp.ne.s32.totalorder %s132, %s133
    %p145 = scmp.eq.s32.totalorder %s18, 3
    %p146 = por %p144, %p145
    %p148 = scmp.ne.s32.totalorder %s133, %s147
    %p149 = scmp.eq.s32.totalorder %s18, 0
    %p150 = por %p148, %p149
    %s151 = ssub.s32 %s12, %s19
    %p152 = scmp.eq.s32.totalorder %s151, 0
    %s154 = sadd.s32 %s153, 1
    %s155 = scalar_select %p152, %s153, %s154
    %p158 = pneg %p152
    %p159 = scmp.eq.s32.totalorder %s12, 3
    %p160 = por %p158, %p159
    %p161 = scmp.ne.s32.totalorder %s153, %s156
    %p162 = scmp.eq.s32.totalorder %s12, 0
    %p163 = por %p161, %p162
    %p164 = scmp.ne.s32.totalorder %s153, %s156
    %p165 = scmp.eq.s32.totalorder %s17, 3
    %p166 = por %p164, %p165
    %p167 = scmp.ne.s32.totalorder %s156, %s157
    %p168 = scmp.eq.s32.totalorder %s17, 0
    %p169 = por %p167, %p168
    %p170 = scmp.ne.s32.totalorder %s156, %s157
    %p171 = scmp.eq.s32.totalorder %s18, 3
    %p172 = por %p170, %p171
    %p174 = scmp.ne.s32.totalorder %s157, %s173
    %p175 = scmp.eq.s32.totalorder %s18, 0
    %p176 = por %p174, %p175
    %p177 = scmp.le.s32.totalorder 1, %s12
    %p178 = scmp.lt.s32.totalorder %s12, 5
    %p179 = pnand %p177, %p178
    %p180 = pneg %p179
    // Predicated region
    $region9: #{mfe_backbone_forward.12} parent=5 // pred_check
      _
    $region10: #{mfe_backbone_forward.12} parent=5 // pred_check_branch
      %182 = sbr.rel (%p179) target = $region12
    $region11: #{mfe_backbone_forward.12} parent=5 // pred_region
      %s183 = ssub.s32 %s12, 1
      // Predicated region
      $region13: #{mfe_backbone_forward.12} parent=11 // pred_check
        %p184 = pneg %p59
      $region14: #{mfe_backbone_forward.12} parent=11 // pred_check_branch
        %186 = sbr.rel (%p184) target = $region16
      $region15: #{mfe_backbone_forward.12} parent=11 // pred_region
        _
      $region16: #{mfe_backbone_forward.12} parent=11 // pred_fallthru
        _
      // Predicated region
      $region17: #{mfe_backbone_forward.12} parent=11 // pred_check
        %p187 = pneg %p80
      $region18: #{mfe_backbone_forward.12} parent=11 // pred_check_branch
        %189 = sbr.rel (%p187) target = $region20
      $region19: #{mfe_backbone_forward.12} parent=11 // pred_region
        _
      $region20: #{mfe_backbone_forward.12} parent=11 // pred_fallthru
        _
      // Predicated region
      $region21: #{mfe_backbone_forward.12} parent=11 // pred_check
        %p190 = pneg %p101
      $region22: #{mfe_backbone_forward.12} parent=11 // pred_check_branch
        %192 = sbr.rel (%p190) target = $region24
      $region23: #{mfe_backbone_forward.12} parent=11 // pred_region
        _
      $region24: #{mfe_backbone_forward.12} parent=11 // pred_fallthru
        _
      // Predicated region
      $region25: #{mfe_backbone_forward.12} parent=11 // pred_check
        %p193 = pneg %p122
      $region26: #{mfe_backbone_forward.12} parent=11 // pred_check_branch
        %195 = sbr.rel (%p193) target = $region28
      $region27: #{mfe_backbone_forward.12} parent=11 // pred_region
        _
      $region28: #{mfe_backbone_forward.12} parent=11 // pred_fallthru
        _
      // Predicated region
      $region29: #{mfe_backbone_forward.12} parent=11 // pred_check
        %p196 = pneg %p143
      $region30: #{mfe_backbone_forward.12} parent=11 // pred_check_branch
        %198 = sbr.rel (%p196) target = $region32
      $region31: #{mfe_backbone_forward.12} parent=11 // pred_region
        _
      $region32: #{mfe_backbone_forward.12} parent=11 // pred_fallthru
        _
    $region12: #{mfe_backbone_forward.12} parent=5 // pred_fallthru
      _
    %p199 = scmp.lt.s32.totalorder %s12, 4
    // Predicated region
    $region33: #{mfe_backbone_forward.12} parent=5 // pred_check
      %p200 = pneg %p199
    $region34: #{mfe_backbone_forward.12} parent=5 // pred_check_branch
      %202 = sbr.rel (%p200) target = $region36
    $region35: #{mfe_backbone_forward.12} parent=5 // pred_region
      // Predicated region
      $region37: #{mfe_backbone_forward.12} parent=35 // pred_check
        %p203 = pneg %p32
      $region38: #{mfe_backbone_forward.12} parent=35 // pred_check_branch
        %205 = sbr.rel (%p203) target = $region40
      $region39: #{mfe_backbone_forward.12} parent=35 // pred_region
        %p206 = scmp.lt.s32.totalorder %s12, 3
        %s207 = scalar_select %p206, %s12, 3
        %s208 = smul.addr %s207, 3
        %s209 = smul.addr %s208, 4
        %s210 = scalar_lea.vmem %s0, %s209
      $region40: #{mfe_backbone_forward.12} parent=35 // pred_fallthru
        _
    $region36: #{mfe_backbone_forward.12} parent=5 // pred_fallthru
      _
    %p211 = scmp.le.s32.totalorder 1, %s12
    %p212 = scmp.lt.s32.totalorder %s12, 5
    %p213 = pnand %p211, %p212
    %p214 = pneg %p213
    // Predicated region
    $region41: #{mfe_backbone_forward.12} parent=5 // pred_check
      _
    $region42: #{mfe_backbone_forward.12} parent=5 // pred_check_branch
      %216 = sbr.rel (%p213) target = $region44
    $region43: #{mfe_backbone_forward.12} parent=5 // pred_region
      %s217 = ssub.s32 %s12, 1
      %p218 = scmp.lt.s32.totalorder %s17, 3
      %s219 = scalar_select %p218, %s17, 3
      %s220 = smul.addr %s219, 3
      %s221 = smul.addr %s220, 4
      %s222 = scalar_lea.vmem %s0, %s221
      %p223 = pneg %p38
      %p224 = pneg %p35
      %p225 = pneg %p59
      %p226 = pneg %p56
      %p227 = pneg %p80
      %p228 = pneg %p77
      %p229 = pneg %p101
      %p230 = pneg %p98
      %p231 = pneg %p122
      %p232 = pneg %p119
      %p233 = pneg %p143
      %p234 = pneg %p140
      %p235 = pneg %p169
      %p236 = pneg %p166
      %p237 = scmp.lt.s32.totalorder %s17, 3
      %s238 = scalar_select %p237, %s17, 3
      %s239 = smul.addr %s238, 3
      %s240 = smul.addr %s239, 4
      %s241 = scalar_lea.vmem %s6, %s240
      %p242 = scmp.lt.s32.totalorder %s17, 3
      %s243 = scalar_select %p242, %s17, 3
      %s244 = smul.addr %s243, 3
      %s245 = smul.addr %s244, 4
      %s246 = scalar_lea.vmem %s0, %s245
      %p247 = scmp.lt.s32.totalorder %s17, 3
      %s248 = scalar_select %p247, %s17, 3
      %s249 = smul.addr %s248, 3
      %s250 = smul.addr %s249, 4
      %s251 = scalar_lea.vmem %s6, %s250
      %v253 = vld [vmem:[%s5] sm:$0x7]
      %v254 = vld [vmem:[%s1] sm:$0xf]
      %v255 = vld [vmem:[%s246] sm:$0xff]
      %v256 = vld [vmem:[%s246 + $0x8] sm:$0xf]
      %v259 = vunpack.c.l.b16 %v255
      %v260 = vunpack.c.h.b16 %v255
      %v261 = vunpack.c.l.b16 %v256
      %v262 = vpack.c.b16 %v259, %v259
      %v263 = vpack.c.b16 %v260, %v260
      %v264 = vpack.c.b16 %v261, %v261
      %265 = vrot.lane.b32.xlu0 %v262, 127
      %v266 = vpop.permute.xlu0 %265
      %267 = vrot.lane.b32.xlu0 %v263, 127
      %v268 = vpop.permute.xlu0 %267
      %269 = vrot.lane.b32.xlu0 %v264, 127
      %v270 = vpop.permute.xlu0 %269
      %vm271 = vcmask 1039360
      %v272 = vsel %vm271, %v266, %v268
      %v273 = vsel %vm271, %v268, %v270
      %274 = vrot.lane.b32.xlu0 %v262, 126
      %v275 = vpop.permute.xlu0 %274
      %276 = vrot.lane.b32.xlu0 %v263, 126
      %v277 = vpop.permute.xlu0 %276
      %278 = vrot.lane.b32.xlu0 %v264, 126
      %v279 = vpop.permute.xlu0 %278
      %vm280 = vcmask 1031168
      %v281 = vsel %vm280, %v275, %v277
      %v282 = vsel %vm280, %v277, %v279
      %283 = vrot.lane.b32.xlu0 %v262, 110
      %v284 = vpop.permute.xlu0 %283
      %285 = vrot.lane.b32.xlu0 %v263, 110
      %v286 = vpop.permute.xlu0 %285
      %287 = vrot.lane.b32.xlu0 %v264, 110
      %v288 = vpop.permute.xlu0 %287
      %vm289 = vcmask 900096
      %v290 = vsel %vm289, %v284, %v286
      %v291 = vsel %vm289, %v286, %v288
      %292 = vrot.lane.b32.xlu0 %v262, 109
      %v293 = vpop.permute.xlu0 %292
      %294 = vrot.lane.b32.xlu0 %v263, 109
      %v295 = vpop.permute.xlu0 %294
      %296 = vrot.lane.b32.xlu0 %v264, 109
      %v297 = vpop.permute.xlu0 %296
      %vm298 = vcmask 891904
      %v299 = vsel %vm298, %v293, %v295
      %v300 = vsel %vm298, %v295, %v297
      %301 = vrot.lane.b32.xlu0 %v262, 108
      %v302 = vpop.permute.xlu0 %301
      %303 = vrot.lane.b32.xlu0 %v263, 108
      %v304 = vpop.permute.xlu0 %303
      %305 = vrot.lane.b32.xlu0 %v264, 108
      %v306 = vpop.permute.xlu0 %305
      %vm307 = vcmask 883712
      %v308 = vsel %vm307, %v302, %v304
      %v309 = vsel %vm307, %v304, %v306
      %310 = vrot.lane.b32.xlu0 %v262, 92
      %v311 = vpop.permute.xlu0 %310
      %312 = vrot.lane.b32.xlu0 %v263, 92
      %v313 = vpop.permute.xlu0 %312
      %314 = vrot.lane.b32.xlu0 %v264, 92
      %v315 = vpop.permute.xlu0 %314
      %vm316 = vcmask 752640
      %v317 = vsel %vm316, %v311, %v313
      %v318 = vsel %vm316, %v313, %v315
      %319 = vrot.lane.b32.xlu0 %v262, 91
      %v320 = vpop.permute.xlu0 %319
      %321 = vrot.lane.b32.xlu0 %v263, 91
      %v322 = vpop.permute.xlu0 %321
      %323 = vrot.lane.b32.xlu0 %v264, 91
      %v324 = vpop.permute.xlu0 %323
      %vm325 = vcmask 744448
      %v326 = vsel %vm325, %v320, %v322
      %v327 = vsel %vm325, %v322, %v324
      %328 = vrot.lane.b32.xlu0 %v262, 90
      %v329 = vpop.permute.xlu0 %328
      %330 = vrot.lane.b32.xlu0 %v263, 90
      %v331 = vpop.permute.xlu0 %330
      %332 = vrot.lane.b32.xlu0 %v264, 90
      %v333 = vpop.permute.xlu0 %332
      %vm334 = vcmask 736256
      %v335 = vsel %vm334, %v329, %v331
      %v336 = vsel %vm334, %v331, %v333
      %vm337 = vcmask 1043456
      %v340 = vsel %vm337, %v262, %v272
      %v343 = vsel %vm337, %v263, %v273
      %v346 = vsel %vm337, %v264, %v270
      %v349 = vsel %vm337, %v281, %v290
      %v352 = vsel %vm337, %v282, %v291
      %v355 = vsel %vm337, %v279, %v288
      %v358 = vsel %vm337, %v299, %v308
      %v361 = vsel %vm337, %v300, %v309
      %v364 = vsel %vm337, %v297, %v306
      %v367 = vsel %vm337, %v317, %v326
      %v370 = vsel %vm337, %v318, %v327
      %v373 = vsel %vm337, %v315, %v324
      %v374 = vld [vmem:[%s2] sm:$0xff]
      %376 = vset.pattern.permute.xlu0 0
      %377 = vperm.xlu0 %376, %v374
      %v378 = vpop.permute.xlu0 %377
      %392 = vrot.lane.b32.xlu0 %v340, 111
      %v393 = vpop.permute.xlu0 %392
      %394 = vrot.lane.b32.xlu0 %v343, 111
      %v395 = vpop.permute.xlu0 %394
      %396 = vrot.lane.b32.xlu0 %v346, 111
      %v397 = vpop.permute.xlu0 %396
      %398 = vrot.lane.b32.xlu0 %v349, 111
      %v399 = vpop.permute.xlu0 %398
      %400 = vrot.lane.b32.xlu0 %v352, 111
      %v401 = vpop.permute.xlu0 %400
      %402 = vrot.lane.b32.xlu0 %v355, 111
      %v403 = vpop.permute.xlu0 %402
      %404 = vrot.lane.b32.xlu0 %v358, 111
      %v405 = vpop.permute.xlu0 %404
      %406 = vrot.lane.b32.xlu0 %v361, 111
      %v407 = vpop.permute.xlu0 %406
      %408 = vrot.lane.b32.xlu0 %v364, 111
      %v409 = vpop.permute.xlu0 %408
      %410 = vrot.lane.b32.xlu0 %v367, 111
      %v411 = vpop.permute.xlu0 %410
      %412 = vrot.lane.b32.xlu0 %v370, 111
      %v413 = vpop.permute.xlu0 %412
      %414 = vrot.lane.b32.xlu0 %v373, 111
      %v415 = vpop.permute.xlu0 %414
      %416 = vrot.lane.b32.xlu0 %v335, 111
      %v417 = vpop.permute.xlu0 %416
      %418 = vrot.lane.b32.xlu0 %v336, 111
      %v419 = vpop.permute.xlu0 %418
      %420 = vrot.lane.b32.xlu0 %v333, 111
      %v421 = vpop.permute.xlu0 %420
      %vm422 = vcmask 908288
      %v423 = vsel %vm422, %v393, %v395
      %v424 = vsel %vm422, %v395, %v397
      %v425 = vsel %vm422, %v399, %v401
      %v426 = vsel %vm422, %v401, %v403
      %v427 = vsel %vm422, %v405, %v407
      %v428 = vsel %vm422, %v407, %v409
      %v429 = vsel %vm422, %v411, %v413
      %v430 = vsel %vm422, %v413, %v415
      %v431 = vsel %vm422, %v417, %v419
      %v432 = vsel %vm422, %v419, %v421
      %vm445 = vcmask 588800
      %v447 = vsel %vm445, %v254, 0
      %v450 = vsel %vm337, %v431, 0
      %v453 = vsel %vm337, %v432, 0
      %v456 = vsel %vm337, %v421, 0
      %458 = vmatprep.subr.bf16.mxu0 %v424
      %459 = vmatpush1.bf16.msra.mxu0 %v423
      %460 = vmatprep.subr.bf16.mxu0 %v426
      %461 = vmatpush1.bf16.msra.mxu0 %v425
      %462 = vmatprep.subr.bf16.mxu0 %v428
      %463 = vmatpush1.bf16.msra.mxu0 %v427
      %464 = vmatprep.subr.bf16.mxu0 %v430
      %465 = vmatpush1.bf16.msra.mxu0 %v429
      %466 = vmatprep.subr.bf16.mxu0 %v453
      %467 = vmatpush1.bf16.msra.mxu0 %v450
      %468 = vmatprep.subr.bf16.mxu0 0
      %469 = vmatpush1.bf16.msra.mxu0 0
      %470 = vmatprep.subr.bf16.mxu0 0
      %471 = vmatpush1.bf16.msra.mxu0 0
      %472 = vmatprep.subr.bf16.mxu0 0
      %473 = vmatpush1.bf16.msra.mxu0 0
      %474 = vmatprep.subr.bf16.mxu0 0
      %475 = vmatpush1.bf16.msra.mxu0 0
      %476 = vmatprep.subr.bf16.mxu0 0
      %477 = vmatpush1.bf16.msra.mxu0 0
      %478 = vmatprep.subr.bf16.mxu0 0
      %479 = vmatpush1.bf16.msra.mxu0 0
      %480 = vmatprep.subr.bf16.mxu0 0
      %481 = vmatpush1.bf16.msra.mxu0 0
      %482 = vmatprep.subr.bf16.mxu0 0
      %483 = vmatpush1.bf16.msra.mxu0 0
      %484 = vmatprep.subr.bf16.mxu0 0
      %485 = vmatpush1.bf16.msra.mxu0 0
      %486 = vmatprep.subr.bf16.mxu0 0
      %487 = vmatpush1.bf16.msra.mxu0 0
      %488 = vmatprep.subr.bf16.mxu0 0
      %489 = vmatpush1.bf16.msra.mxu0 0
      %490 = vmatprep.mubr.bf16.mxu0 0
      %491 = vmatmul.mubr.bf16.gmra.mrb[0].mxu0 %v447
      %v492 = vpop.f32.mrb[0].mxu0
      %v493 = vadd.f32 %v378, %v492
      %v494 = vpop.f32.mrb[0].mxu0
      %v495 = vadd.f32 %v378, %v494
      %v496 = vpop.f32.mrb[0].mxu0
      %v497 = vpop.f32.mrb[0].mxu0
      %498 = vdwg.mxu0
      %499 = vmatprep.subr.bf16.mxu0 0
      %500 = vmatpush1.bf16.msra.mxu0 %v397
      %501 = vmatprep.subr.bf16.mxu0 0
      %502 = vmatpush1.bf16.msra.mxu0 %v403
      %503 = vmatprep.subr.bf16.mxu0 0
      %504 = vmatpush1.bf16.msra.mxu0 %v409
      %505 = vmatprep.subr.bf16.mxu0 0
      %506 = vmatpush1.bf16.msra.mxu0 %v415
      %507 = vmatprep.subr.bf16.mxu0 0
      %508 = vmatpush1.bf16.msra.mxu0 %v456
      %509 = vmatprep.subr.bf16.mxu0 0
      %510 = vmatpush1.bf16.msra.mxu0 0
      %511 = vmatprep.subr.bf16.mxu0 0
      %512 = vmatpush1.bf16.msra.mxu0 0
      %513 = vmatprep.subr.bf16.mxu0 0
      %514 = vmatpush1.bf16.msra.mxu0 0
      %515 = vmatprep.subr.bf16.mxu0 0
      %516 = vmatpush1.bf16.msra.mxu0 0
      %517 = vmatprep.subr.bf16.mxu0 0
      %518 = vmatpush1.bf16.msra.mxu0 0
      %519 = vmatprep.subr.bf16.mxu0 0
      %520 = vmatpush1.bf16.msra.mxu0 0
      %521 = vmatprep.subr.bf16.mxu0 0
      %522 = vmatpush1.bf16.msra.mxu0 0
      %523 = vmatprep.subr.bf16.mxu0 0
      %524 = vmatpush1.bf16.msra.mxu0 0
      %525 = vmatprep.subr.bf16.mxu0 0
      %526 = vmatpush1.bf16.msra.mxu0 0
      %527 = vmatprep.subr.bf16.mxu0 0
      %528 = vmatpush1.bf16.msra.mxu0 0
      %529 = vmatprep.subr.bf16.mxu0 0
      %530 = vmatpush1.bf16.msra.mxu0 0
      %531 = vmatprep.mubr.bf16.mxu0 0
      %532 = vmatmul.mubr.bf16.gmra.mrb[0].mxu0 %v447
      %v533 = vpop.f32.mrb[0].mxu0
      %v534 = vadd.f32 %v378, %v533
      %v535 = vpop.f32.mrb[0].mxu0
      %v536 = vpop.f32.mrb[0].mxu0
      %v537 = vpop.f32.mrb[0].mxu0
      %538 = vdwg.mxu0
      %v539 = vmax.f32 %v493, 0.0
      %v540 = vmax.f32 %v495, 0.0
      %v541 = vmax.f32 %v534, 0.0
      %v543 = vlaneseq
      %v544 = vshrl.u32 %v543, 7
      %v545 = vsub.s32 0, %v544
      %v546 = vrot.slane %v253, %v545
      %v547 = vlaneseq
      %v548 = vshrl.u32 %v547, 7
      %v549 = vsub.s32 1, %v548
      %v550 = vrot.slane %v253, %v549
      %v551 = vlaneseq
      %v552 = vshrl.u32 %v551, 7
      %v553 = vsub.s32 2, %v552
      %v554 = vrot.slane %v253, %v553
      %555 = vrot.lane.b32.xlu0 %v546, 92
      %v556 = vpop.permute.xlu0 %555
      %557 = vrot.lane.b32.xlu0 %v550, 92
      %v558 = vpop.permute.xlu0 %557
      %559 = vrot.lane.b32.xlu0 %v554, 92
      %v560 = vpop.permute.xlu0 %559
      %vm561 = vcmask 752640
      %v562 = vsel %vm561, %v556, %v558
      %v563 = vsel %vm561, %v558, %v560
      %v567 = vmul.f32 %v539, %v562
      %v568 = vmul.f32 %v540, %v563
      %v569 = vmul.f32 %v541, %v560
      %v570 = vpack.c.bf16 %v567, %v567
      %v571 = vpack.c.bf16 %v568, %v568
      %v572 = vpack.c.bf16 %v569, %v569
      %576 = vrot.lane.b32.xlu0 %v570, 36
      %v577 = vpop.permute.xlu0 %576
      %578 = vrot.lane.b32.xlu0 %v571, 36
      %v579 = vpop.permute.xlu0 %578
      %580 = vrot.lane.b32.xlu0 %v572, 36
      %v581 = vpop.permute.xlu0 %580
      %vm582 = vcmask 293888
      %v583 = vsel %vm582, %v577, %v579
      %v584 = vsel %vm582, %v579, %v581
      %vm585 = vcmask 293888
      %v588 = vsel %vm585, 0, %v577
      %vm589 = vcmask 556032
      %v591 = vsel %vm589, %v584, 0
      %v594 = vunpack.c.l.b16 %v588
      %v595 = vunpack.c.l.b16 %v583
      %v596 = vunpack.c.l.b16 %v591
      %v597 = vpack.c.b16 %v595, %v594
      %v598 = vpack.c.b16 %v596, %v596
      %601 = vst [vmem:[#allocation2] sm:$0xff] %v597
      %602 = vst [vmem:[#allocation2 + $0x8] sm:$0xf] %v598
      %v603 = vld [vmem:[%s3] sm:$0xf]
      %v604 = vld [vmem:[#allocation2] sm:$0xff]
      %v605 = vld [vmem:[#allocation2 + $0x8] sm:$0xf]
      %v608 = vunpack.c.l.b16 %v604
      %v609 = vunpack.c.h.b16 %v604
      %v610 = vunpack.c.l.b16 %v605
      %v611 = vpack.c.b16 %v608, %v608
      %v612 = vpack.c.b16 %v609, %v609
      %v613 = vpack.c.b16 %v610, %v610
      %614 = vrot.lane.b32.xlu0 %v611, 127
      %v615 = vpop.permute.xlu0 %614
      %616 = vrot.lane.b32.xlu0 %v612, 127
      %v617 = vpop.permute.xlu0 %616
      %618 = vrot.lane.b32.xlu0 %v613, 127
      %v619 = vpop.permute.xlu0 %618
      %v620 = vsel %vm271, %v615, %v617
      %v621 = vsel %vm271, %v617, %v619
      %622 = vrot.lane.b32.xlu0 %v611, 126
      %v623 = vpop.permute.xlu0 %622
      %624 = vrot.lane.b32.xlu0 %v612, 126
      %v625 = vpop.permute.xlu0 %624
      %626 = vrot.lane.b32.xlu0 %v613, 126
      %v627 = vpop.permute.xlu0 %626
      %v628 = vsel %vm280, %v623, %v625
      %v629 = vsel %vm280, %v625, %v627
      %630 = vrot.lane.b32.xlu0 %v611, 110
      %v631 = vpop.permute.xlu0 %630
      %632 = vrot.lane.b32.xlu0 %v612, 110
      %v633 = vpop.permute.xlu0 %632
      %634 = vrot.lane.b32.xlu0 %v613, 110
      %v635 = vpop.permute.xlu0 %634
      %v636 = vsel %vm289, %v631, %v633
      %v637 = vsel %vm289, %v633, %v635
      %638 = vrot.lane.b32.xlu0 %v611, 109
      %v639 = vpop.permute.xlu0 %638
      %640 = vrot.lane.b32.xlu0 %v612, 109
      %v641 = vpop.permute.xlu0 %640
      %642 = vrot.lane.b32.xlu0 %v613, 109
      %v643 = vpop.permute.xlu0 %642
      %v644 = vsel %vm298, %v639, %v641
      %v645 = vsel %vm298, %v641, %v643
      %646 = vrot.lane.b32.xlu0 %v611, 108
      %v647 = vpop.permute.xlu0 %646
      %648 = vrot.lane.b32.xlu0 %v612, 108
      %v649 = vpop.permute.xlu0 %648
      %650 = vrot.lane.b32.xlu0 %v613, 108
      %v651 = vpop.permute.xlu0 %650
      %v652 = vsel %vm307, %v647, %v649
      %v653 = vsel %vm307, %v649, %v651
      %654 = vrot.lane.b32.xlu0 %v611, 92
      %v655 = vpop.permute.xlu0 %654
      %656 = vrot.lane.b32.xlu0 %v612, 92
      %v657 = vpop.permute.xlu0 %656
      %658 = vrot.lane.b32.xlu0 %v613, 92
      %v659 = vpop.permute.xlu0 %658
      %v660 = vsel %vm316, %v655, %v657
      %v661 = vsel %vm316, %v657, %v659
      %662 = vrot.lane.b32.xlu0 %v611, 91
      %v663 = vpop.permute.xlu0 %662
      %664 = vrot.lane.b32.xlu0 %v612, 91
      %v665 = vpop.permute.xlu0 %664
      %666 = vrot.lane.b32.xlu0 %v613, 91
      %v667 = vpop.permute.xlu0 %666
      %v668 = vsel %vm325, %v663, %v665
      %v669 = vsel %vm325, %v665, %v667
      %670 = vrot.lane.b32.xlu0 %v611, 90
      %v671 = vpop.permute.xlu0 %670
      %672 = vrot.lane.b32.xlu0 %v612, 90
      %v673 = vpop.permute.xlu0 %672
      %674 = vrot.lane.b32.xlu0 %v613, 90
      %v675 = vpop.permute.xlu0 %674
      %v676 = vsel %vm334, %v671, %v673
      %v677 = vsel %vm334, %v673, %v675
      %v680 = vsel %vm337, %v611, %v620
      %v683 = vsel %vm337, %v612, %v621
      %v686 = vsel %vm337, %v613, %v619
      %v689 = vsel %vm337, %v628, %v636
      %v692 = vsel %vm337, %v629, %v637
      %v695 = vsel %vm337, %v627, %v635
      %v698 = vsel %vm337, %v644, %v652
      %v701 = vsel %vm337, %v645, %v653
      %v704 = vsel %vm337, %v643, %v651
      %v707 = vsel %vm337, %v660, %v668
      %v710 = vsel %vm337, %v661, %v669
      %v713 = vsel %vm337, %v659, %v667
      %v714 = vld [vmem:[%s4] sm:$0xff]
      %716 = vset.pattern.permute.xlu0 0
      %717 = vperm.xlu0 %716, %v714
      %v718 = vpop.permute.xlu0 %717
      %732 = vrot.lane.b32.xlu0 %v680, 111
      %v733 = vpop.permute.xlu0 %732
      %734 = vrot.lane.b32.xlu0 %v683, 111
      %v735 = vpop.permute.xlu0 %734
      %736 = vrot.lane.b32.xlu0 %v686, 111
      %v737 = vpop.permute.xlu0 %736
      %738 = vrot.lane.b32.xlu0 %v689, 111
      %v739 = vpop.permute.xlu0 %738
      %740 = vrot.lane.b32.xlu0 %v692, 111
      %v741 = vpop.permute.xlu0 %740
      %742 = vrot.lane.b32.xlu0 %v695, 111
      %v743 = vpop.permute.xlu0 %742
      %744 = vrot.lane.b32.xlu0 %v698, 111
      %v745 = vpop.permute.xlu0 %744
      %746 = vrot.lane.b32.xlu0 %v701, 111
      %v747 = vpop.permute.xlu0 %746
      %748 = vrot.lane.b32.xlu0 %v704, 111
      %v749 = vpop.permute.xlu0 %748
      %750 = vrot.lane.b32.xlu0 %v707, 111
      %v751 = vpop.permute.xlu0 %750
      %752 = vrot.lane.b32.xlu0 %v710, 111
      %v753 = vpop.permute.xlu0 %752
      %754 = vrot.lane.b32.xlu0 %v713, 111
      %v755 = vpop.permute.xlu0 %754
      %756 = vrot.lane.b32.xlu0 %v676, 111
      %v757 = vpop.permute.xlu0 %756
      %758 = vrot.lane.b32.xlu0 %v677, 111
      %v759 = vpop.permute.xlu0 %758
      %760 = vrot.lane.b32.xlu0 %v675, 111
      %v761 = vpop.permute.xlu0 %760
      %v762 = vsel %vm422, %v733, %v735
      %v763 = vsel %vm422, %v735, %v737
      %v764 = vsel %vm422, %v739, %v741
      %v765 = vsel %vm422, %v741, %v743
      %v766 = vsel %vm422, %v745, %v747
      %v767 = vsel %vm422, %v747, %v749
      %v768 = vsel %vm422, %v751, %v753
      %v769 = vsel %vm422, %v753, %v755
      %v770 = vsel %vm422, %v757, %v759
      %v771 = vsel %vm422, %v759, %v761
      %v785 = vsel %vm445, %v603, 0
      %v788 = vsel %vm337, %v770, 0
      %v791 = vsel %vm337, %v771, 0
      %v794 = vsel %vm337, %v761, 0
      %796 = vmatprep.subr.bf16.mxu0 %v763
      %797 = vmatpush1.bf16.msra.mxu0 %v762
      %798 = vmatprep.subr.bf16.mxu0 %v765
      %799 = vmatpush1.bf16.msra.mxu0 %v764
      %800 = vmatprep.subr.bf16.mxu0 %v767
      %801 = vmatpush1.bf16.msra.mxu0 %v766
      %802 = vmatprep.subr.bf16.mxu0 %v769
      %803 = vmatpush1.bf16.msra.mxu0 %v768
      %804 = vmatprep.subr.bf16.mxu0 %v791
      %805 = vmatpush1.bf16.msra.mxu0 %v788
      %806 = vmatprep.subr.bf16.mxu0 0
      %807 = vmatpush1.bf16.msra.mxu0 0
      %808 = vmatprep.subr.bf16.mxu0 0
      %809 = vmatpush1.bf16.msra.mxu0 0
      %810 = vmatprep.subr.bf16.mxu0 0
      %811 = vmatpush1.bf16.msra.mxu0 0
      %812 = vmatprep.subr.bf16.mxu0 0
      %813 = vmatpush1.bf16.msra.mxu0 0
      %814 = vmatprep.subr.bf16.mxu0 0
      %815 = vmatpush1.bf16.msra.mxu0 0
      %816 = vmatprep.subr.bf16.mxu0 0
      %817 = vmatpush1.bf16.msra.mxu0 0
      %818 = vmatprep.subr.bf16.mxu0 0
      %819 = vmatpush1.bf16.msra.mxu0 0
      %820 = vmatprep.subr.bf16.mxu0 0
      %821 = vmatpush1.bf16.msra.mxu0 0
      %822 = vmatprep.subr.bf16.mxu0 0
      %823 = vmatpush1.bf16.msra.mxu0 0
      %824 = vmatprep.subr.bf16.mxu0 0
      %825 = vmatpush1.bf16.msra.mxu0 0
      %826 = vmatprep.subr.bf16.mxu0 0
      %827 = vmatpush1.bf16.msra.mxu0 0
      %828 = vmatprep.mubr.bf16.mxu0 0
      %829 = vmatmul.mubr.bf16.gmra.mrb[0].mxu0 %v785
      %v830 = vpop.f32.mrb[0].mxu0
      %v831 = vadd.f32 %v718, %v830
      %v832 = vpop.f32.mrb[0].mxu0
      %v833 = vadd.f32 %v718, %v832
      %v834 = vpop.f32.mrb[0].mxu0
      %v835 = vpop.f32.mrb[0].mxu0
      %836 = vdwg.mxu0
      %837 = vmatprep.subr.bf16.mxu0 0
      %838 = vmatpush1.bf16.msra.mxu0 %v737
      %839 = vmatprep.subr.bf16.mxu0 0
      %840 = vmatpush1.bf16.msra.mxu0 %v743
      %841 = vmatprep.subr.bf16.mxu0 0
      %842 = vmatpush1.bf16.msra.mxu0 %v749
      %843 = vmatprep.subr.bf16.mxu0 0
      %844 = vmatpush1.bf16.msra.mxu0 %v755
      %845 = vmatprep.subr.bf16.mxu0 0
      %846 = vmatpush1.bf16.msra.mxu0 %v794
      %847 = vmatprep.subr.bf16.mxu0 0
      %848 = vmatpush1.bf16.msra.mxu0 0
      %849 = vmatprep.subr.bf16.mxu0 0
      %850 = vmatpush1.bf16.msra.mxu0 0
      %851 = vmatprep.subr.bf16.mxu0 0
      %852 = vmatpush1.bf16.msra.mxu0 0
      %853 = vmatprep.subr.bf16.mxu0 0
      %854 = vmatpush1.bf16.msra.mxu0 0
      %855 = vmatprep.subr.bf16.mxu0 0
      %856 = vmatpush1.bf16.msra.mxu0 0
      %857 = vmatprep.subr.bf16.mxu0 0
      %858 = vmatpush1.bf16.msra.mxu0 0
      %859 = vmatprep.subr.bf16.mxu0 0
      %860 = vmatpush1.bf16.msra.mxu0 0
      %861 = vmatprep.subr.bf16.mxu0 0
      %862 = vmatpush1.bf16.msra.mxu0 0
      %863 = vmatprep.subr.bf16.mxu0 0
      %864 = vmatpush1.bf16.msra.mxu0 0
      %865 = vmatprep.subr.bf16.mxu0 0
      %866 = vmatpush1.bf16.msra.mxu0 0
      %867 = vmatprep.subr.bf16.mxu0 0
      %868 = vmatpush1.bf16.msra.mxu0 0
      %869 = vmatprep.mubr.bf16.mxu0 0
      %870 = vmatmul.mubr.bf16.gmra.mrb[0].mxu0 %v785
      %v871 = vpop.f32.mrb[0].mxu0
      %v872 = vadd.f32 %v718, %v871
      %v873 = vpop.f32.mrb[0].mxu0
      %v874 = vpop.f32.mrb[0].mxu0
      %v875 = vpop.f32.mrb[0].mxu0
      %876 = vdwg.mxu0
      %v877 = vld [vmem:[%s246] sm:$0xff]
      %v878 = vld [vmem:[%s246 + $0x8] sm:$0xf]
      %v879 = vunpack.c.l.bf16 %v877
      %v880 = vunpack.c.h.bf16 %v877
      %v881 = vunpack.c.l.bf16 %v878
      %885 = vrot.lane.b32.xlu0 %v879, 92
      %v886 = vpop.permute.xlu0 %885
      %887 = vrot.lane.b32.xlu0 %v880, 92
      %v888 = vpop.permute.xlu0 %887
      %889 = vrot.lane.b32.xlu0 %v881, 92
      %v890 = vpop.permute.xlu0 %889
      %v891 = vsel %vm561, %v886, %v888
      %v892 = vsel %vm561, %v888, %v890
      %v896 = vadd.f32 %v831, %v891
      %v897 = vadd.f32 %v833, %v892
      %v898 = vadd.f32 %v872, %v890
      %v899 = vmax.f32 %v896, 0.0
      %v900 = vmax.f32 %v897, 0.0
      %v901 = vmax.f32 %v898, 0.0
      %v902 = vmul.f32 %v899, %v562
      %v903 = vmul.f32 %v900, %v563
      %v904 = vmul.f32 %v901, %v560
      %v905 = vpack.c.bf16 %v902, %v902
      %v906 = vpack.c.bf16 %v903, %v903
      %v907 = vpack.c.bf16 %v904, %v904
      %911 = vrot.lane.b32.xlu0 %v905, 36
      %v912 = vpop.permute.xlu0 %911
      %913 = vrot.lane.b32.xlu0 %v906, 36
      %v914 = vpop.permute.xlu0 %913
      %915 = vrot.lane.b32.xlu0 %v907, 36
      %v916 = vpop.permute.xlu0 %915
      %v917 = vsel %vm582, %v912, %v914
      %v918 = vsel %vm582, %v914, %v916
      %v920 = vsel %vm585, 0, %v912
      %v922 = vsel %vm589, %v918, 0
      %v925 = vunpack.c.l.b16 %v920
      %v926 = vunpack.c.l.b16 %v917
      %v927 = vunpack.c.l.b16 %v922
      %v928 = vpack.c.b16 %v926, %v925
      %v929 = vpack.c.b16 %v927, %v927
      %932 = vst [vmem:[%s251] sm:$0xff] %v928
      %933 = vst [vmem:[%s251 + $0x8] sm:$0xf] %v929
      %p934 = scmp.lt.s32.totalorder %s17, 3
      %s935 = scalar_select %p934, %s17, 3
      %s936 = smul.addr %s935, 3
      %s937 = smul.addr %s936, 4
      %s938 = scalar_lea.vmem %s6, %s937
      // Predicated region
      $region45: #{mfe_backbone_forward.12} parent=43 // pred_check
        %p939 = pneg %p166
      $region46: #{mfe_backbone_forward.12} parent=43 // pred_check_branch
        %941 = sbr.rel (%p939) target = $region48
      $region47: #{mfe_backbone_forward.12} parent=43 // pred_region
        _
      $region48: #{mfe_backbone_forward.12} parent=43 // pred_fallthru
        _
    $region44: #{mfe_backbone_forward.12} parent=5 // pred_fallthru
      _
    %p942 = scmp.le.s32.totalorder 2, %s12
    // Predicated region
    $region49: #{mfe_backbone_forward.12} parent=5 // pred_check
      %p943 = pneg %p942
    $region50: #{mfe_backbone_forward.12} parent=5 // pred_check_branch
      %945 = sbr.rel (%p943) target = $region52
    $region51: #{mfe_backbone_forward.12} parent=5 // pred_region
      %s946 = ssub.s32 %s12, 2
      // Predicated region
      $region53: #{mfe_backbone_forward.12} parent=51 // pred_check
        %p947 = pneg %p172
      $region54: #{mfe_backbone_forward.12} parent=51 // pred_check_branch
        %949 = sbr.rel (%p947) target = $region56
      $region55: #{mfe_backbone_forward.12} parent=51 // pred_region
        %p950 = scmp.lt.s32.totalorder %s18, 3
        %s951 = scalar_select %p950, %s18, 3
        %s952 = smul.addr %s951, 3
        %s953 = smul.addr %s952, 4
        %s954 = scalar_lea.vmem %s6, %s953
      $region56: #{mfe_backbone_forward.12} parent=51 // pred_fallthru
        _
    $region52: #{mfe_backbone_forward.12} parent=5 // pred_fallthru
      _
  $region6: #{mfe_backbone_forward.12} parent=0 // loop_footer
    %s16 = sadd.s32 1, %s12
  $region7: #{mfe_backbone_forward.12} parent=0 // loop_footer_branch
    %11 = sbr.rel target = $region3
  $region8: #{mfe_backbone_forward.12} parent=0 // loop_exit
    _

// kernel: mfe_backbone_forward.13
$region0: #{mfe_backbone_forward.13}
  #allocation0 [shape = 'u32[]', space=smem, size = 0x4, offset = 0x4, fixed_abs, tag = 'smem constant byte address 0x4 - core index']
  #allocation1 [shape = 'u32[144,128]{1,0:T(1,128)}', space=vmem, size = 0x12000, scoped, tag = 'internal scratch']
  %s0 = inlined_call_operand.vmem [shape: bf16[4,32,128], index: 0, kind: input, shape index: {}]
  %s1 = inlined_call_operand.vmem [shape: bf16[16,72], index: 1, kind: input, shape index: {}]
  %s2 = inlined_call_operand.vmem [shape: f32[16,1], index: 2, kind: input, shape index: {}]
  %s3 = inlined_call_operand.vmem [shape: f32[1,128], index: 3, kind: input, shape index: {}]
  %s4 = inlined_call_operand.vmem [shape: bf16[4,16,128], index: 4, kind: output, shape index: {}]
  %s5 = sld [smem:[#allocation0]]
  $region49: #{mfe_backbone_forward.13} parent=0
    _
  %s7 = ssub.s32 1, %s5
  %s8 = scalar_select 0, %s7, %s5
  loop: start=0, step=1, limit=6
  $region2: #{mfe_backbone_forward.13} parent=0 // loop_pre_header
    _
  $region3: #{mfe_backbone_forward.13} parent=0 // loop_header
    %s10 = sphi 0, %s14
    %p11 = scmp.ge.s32.totalorder %s10, 6
    %s20 = sphi 0, %s22
    %s23 = sphi 0, %s20
    %s24 = sphi 0, %s23
    %s40 = sphi 0, %s24
    %s44 = sphi 0, %s44
    %s46 = sphi 0, %s44
    %s47 = sphi 0, %s46
    %s61 = sphi 0, %s47
    %s65 = sphi 0, %s65
    %s67 = sphi 0, %s65
    %s68 = sphi 0, %s67
    %s82 = sphi 0, %s68
    %s86 = sphi 0, %s86
    %s88 = sphi 0, %s86
    %s89 = sphi 0, %s88
    %s103 = sphi 0, %s89
    %s109 = sphi 0, %s111
    %s112 = sphi 0, %s109
    %s113 = sphi 0, %s112
    %s129 = sphi 0, %s113
  $region4: #{mfe_backbone_forward.13} parent=0 // loop_header_branch
    %13 = sbr.rel (%p11) target = $region8
  $region5: #{mfe_backbone_forward.13} parent=0 // loop_body
    %s15 = ssub.s32 %s10, 1
    %s16 = ssub.s32 %s10, 2
    %s17 = sadd.s32 %s10, 1
    %s18 = ssub.s32 %s10, %s17
    %p19 = scmp.eq.s32.totalorder %s18, 0
    %s21 = sadd.s32 %s20, 1
    %s22 = scalar_select %p19, %s20, %s21
    %p25 = pneg %p19
    %p26 = scmp.eq.s32.totalorder %s10, 3
    %p27 = por %p25, %p26
    %p28 = scmp.ne.s32.totalorder %s20, %s23
    %p29 = scmp.eq.s32.totalorder %s10, 0
    %p30 = por %p28, %p29
    %p31 = scmp.ne.s32.totalorder %s20, %s23
    %p32 = scmp.eq.s32.totalorder %s15, 3
    %p33 = por %p31, %p32
    %p34 = scmp.ne.s32.totalorder %s23, %s24
    %p35 = scmp.eq.s32.totalorder %s15, 0
    %p36 = por %p34, %p35
    %p37 = scmp.ne.s32.totalorder %s23, %s24
    %p38 = scmp.eq.s32.totalorder %s16, 3
    %p39 = por %p37, %p38
    %p41 = scmp.ne.s32.totalorder %s24, %s40
    %p42 = scmp.eq.s32.totalorder %s16, 0
    %p43 = por %p41, %p42
    %s45 = sadd.s32 %s44, 1
    %p48 = scmp.eq.s32.totalorder %s10, 3
    %p49 = scmp.ne.s32.totalorder %s44, %s46
    %p50 = scmp.eq.s32.totalorder %s10, 0
    %p51 = por %p49, %p50
    %p52 = scmp.ne.s32.totalorder %s44, %s46
    %p53 = scmp.eq.s32.totalorder %s15, 3
    %p54 = por %p52, %p53
    %p55 = scmp.ne.s32.totalorder %s46, %s47
    %p56 = scmp.eq.s32.totalorder %s15, 0
    %p57 = por %p55, %p56
    %p58 = scmp.ne.s32.totalorder %s46, %s47
    %p59 = scmp.eq.s32.totalorder %s16, 3
    %p60 = por %p58, %p59
    %p62 = scmp.ne.s32.totalorder %s47, %s61
    %p63 = scmp.eq.s32.totalorder %s16, 0
    %p64 = por %p62, %p63
    %s66 = sadd.s32 %s65, 1
    %p69 = scmp.eq.s32.totalorder %s10, 3
    %p70 = scmp.ne.s32.totalorder %s65, %s67
    %p71 = scmp.eq.s32.totalorder %s10, 0
    %p72 = por %p70, %p71
    %p73 = scmp.ne.s32.totalorder %s65, %s67
    %p74 = scmp.eq.s32.totalorder %s15, 3
    %p75 = por %p73, %p74
    %p76 = scmp.ne.s32.totalorder %s67, %s68
    %p77 = scmp.eq.s32.totalorder %s15, 0
    %p78 = por %p76, %p77
    %p79 = scmp.ne.s32.totalorder %s67, %s68
    %p80 = scmp.eq.s32.totalorder %s16, 3
    %p81 = por %p79, %p80
    %p83 = scmp.ne.s32.totalorder %s68, %s82
    %p84 = scmp.eq.s32.totalorder %s16, 0
    %p85 = por %p83, %p84
    %s87 = sadd.s32 %s86, 1
    %p90 = scmp.eq.s32.totalorder %s10, 3
    %p91 = scmp.ne.s32.totalorder %s86, %s88
    %p92 = scmp.eq.s32.totalorder %s10, 0
    %p93 = por %p91, %p92
    %p94 = scmp.ne.s32.totalorder %s86, %s88
    %p95 = scmp.eq.s32.totalorder %s15, 3
    %p96 = por %p94, %p95
    %p97 = scmp.ne.s32.totalorder %s88, %s89
    %p98 = scmp.eq.s32.totalorder %s15, 0
    %p99 = por %p97, %p98
    %p100 = scmp.ne.s32.totalorder %s88, %s89
    %p101 = scmp.eq.s32.totalorder %s16, 3
    %p102 = por %p100, %p101
    %p104 = scmp.ne.s32.totalorder %s89, %s103
    %p105 = scmp.eq.s32.totalorder %s16, 0
    %p106 = por %p104, %p105
    %s107 = ssub.s32 %s10, %s17
    %p108 = scmp.eq.s32.totalorder %s107, 0
    %s110 = sadd.s32 %s109, 1
    %s111 = scalar_select %p108, %s109, %s110
    %p114 = pneg %p108
    %p115 = scmp.eq.s32.totalorder %s10, 3
    %p116 = por %p114, %p115
    %p117 = scmp.ne.s32.totalorder %s109, %s112
    %p118 = scmp.eq.s32.totalorder %s10, 0
    %p119 = por %p117, %p118
    %p120 = scmp.ne.s32.totalorder %s109, %s112
    %p121 = scmp.eq.s32.totalorder %s15, 3
    %p122 = por %p120, %p121
    %p123 = scmp.ne.s32.totalorder %s112, %s113
    %p124 = scmp.eq.s32.totalorder %s15, 0
    %p125 = por %p123, %p124
    %p126 = scmp.ne.s32.totalorder %s112, %s113
    %p127 = scmp.eq.s32.totalorder %s16, 3
    %p128 = por %p126, %p127
    %p130 = scmp.ne.s32.totalorder %s113, %s129
    %p131 = scmp.eq.s32.totalorder %s16, 0
    %p132 = por %p130, %p131
    %p133 = scmp.le.s32.totalorder 1, %s10
    %p134 = scmp.lt.s32.totalorder %s10, 5
    %p135 = pnand %p133, %p134
    %p136 = pneg %p135
    // Predicated region
    $region9: #{mfe_backbone_forward.13} parent=5 // pred_check
      _
    $region10: #{mfe_backbone_forward.13} parent=5 // pred_check_branch
      %138 = sbr.rel (%p135) target = $region12
    $region11: #{mfe_backbone_forward.13} parent=5 // pred_region
      %s139 = ssub.s32 %s10, 1
      // Predicated region
      $region13: #{mfe_backbone_forward.13} parent=11 // pred_check
        %p140 = pneg %p57
      $region14: #{mfe_backbone_forward.13} parent=11 // pred_check_branch
        %142 = sbr.rel (%p140) target = $region16
      $region15: #{mfe_backbone_forward.13} parent=11 // pred_region
        _
      $region16: #{mfe_backbone_forward.13} parent=11 // pred_fallthru
        _
      // Predicated region
      $region17: #{mfe_backbone_forward.13} parent=11 // pred_check
        %p143 = pneg %p78
      $region18: #{mfe_backbone_forward.13} parent=11 // pred_check_branch
        %145 = sbr.rel (%p143) target = $region20
      $region19: #{mfe_backbone_forward.13} parent=11 // pred_region
        _
      $region20: #{mfe_backbone_forward.13} parent=11 // pred_fallthru
        _
      // Predicated region
      $region21: #{mfe_backbone_forward.13} parent=11 // pred_check
        %p146 = pneg %p99
      $region22: #{mfe_backbone_forward.13} parent=11 // pred_check_branch
        %148 = sbr.rel (%p146) target = $region24
      $region23: #{mfe_backbone_forward.13} parent=11 // pred_region
        _
      $region24: #{mfe_backbone_forward.13} parent=11 // pred_fallthru
        _
    $region12: #{mfe_backbone_forward.13} parent=5 // pred_fallthru
      _
    %p149 = scmp.lt.s32.totalorder %s10, 4
    // Predicated region
    $region25: #{mfe_backbone_forward.13} parent=5 // pred_check
      %p150 = pneg %p149
    $region26: #{mfe_backbone_forward.13} parent=5 // pred_check_branch
      %152 = sbr.rel (%p150) target = $region28
    $region27: #{mfe_backbone_forward.13} parent=5 // pred_region
      // Predicated region
      $region29: #{mfe_backbone_forward.13} parent=27 // pred_check
        %p153 = pneg %p30
      $region30: #{mfe_backbone_forward.13} parent=27 // pred_check_branch
        %155 = sbr.rel (%p153) target = $region32
      $region31: #{mfe_backbone_forward.13} parent=27 // pred_region
        %p156 = scmp.lt.s32.totalorder %s10, 3
        %s157 = scalar_select %p156, %s10, 3
        %s158 = smul.addr %s157, 4
        %s159 = smul.addr %s158, 4
        %s160 = scalar_lea.vmem %s0, %s159
      $region32: #{mfe_backbone_forward.13} parent=27 // pred_fallthru
        _
    $region28: #{mfe_backbone_forward.13} parent=5 // pred_fallthru
      _
    %p161 = scmp.le.s32.totalorder 1, %s10
    %p162 = scmp.lt.s32.totalorder %s10, 5
    %p163 = pnand %p161, %p162
    %p164 = pneg %p163
    // Predicated region
    $region33: #{mfe_backbone_forward.13} parent=5 // pred_check
      _
    $region34: #{mfe_backbone_forward.13} parent=5 // pred_check_branch
      %166 = sbr.rel (%p163) target = $region36
    $region35: #{mfe_backbone_forward.13} parent=5 // pred_region
      %s167 = ssub.s32 %s10, 1
      %p168 = scmp.lt.s32.totalorder %s15, 3
      %s169 = scalar_select %p168, %s15, 3
      %s170 = smul.addr %s169, 4
      %s171 = smul.addr %s170, 4
      %s172 = scalar_lea.vmem %s0, %s171
      %p173 = pneg %p36
      %p174 = pneg %p33
      %p175 = pneg %p57
      %p176 = pneg %p54
      %p177 = pneg %p78
      %p178 = pneg %p75
      %p179 = pneg %p99
      %p180 = pneg %p96
      %p181 = pneg %p125
      %p182 = pneg %p122
      %p183 = scmp.lt.s32.totalorder %s15, 3
      %s184 = scalar_select %p183, %s15, 3
      %s185 = smul.addr %s184, 2
      %s186 = smul.addr %s185, 4
      %s187 = scalar_lea.vmem %s4, %s186
      %p188 = scmp.lt.s32.totalorder %s15, 3
      %s189 = scalar_select %p188, %s15, 3
      %s190 = smul.addr %s189, 4
      %s191 = smul.addr %s190, 4
      %s192 = scalar_lea.vmem %s0, %s191
      %p193 = scmp.lt.s32.totalorder %s15, 3
      %s194 = scalar_select %p193, %s15, 3
      %s195 = smul.addr %s194, 2
      %s196 = smul.addr %s195, 4
      %s197 = scalar_lea.vmem %s4, %s196
      %v199 = vld [vmem:[%s3] sm:$0x1]
      %v200 = vld [vmem:[%s1] sm:$0xf]
      %v201 = vld [vmem:[%s1 + $0x4] sm:$0xf]
      %v202 = vld [vmem:[%s192 + $0xc] sm:$0xf]
      %v203 = vld [vmem:[%s192 + $0x8] sm:$0xf]
      %v204 = vld [vmem:[%s192 + $0x4] sm:$0xf]
      %v205 = vld [vmem:[%s192] sm:$0xf]
      %v207 = vunpack.c.l.b16 %v203
      %v208 = vpack.c.b16 %v207, %v207
      %209 = vrot.lane.b32.xlu0 %v208, 127
      %v210 = vpop.permute.xlu0 %209
      %v212 = vunpack.c.l.b16 %v202
      %v213 = vpack.c.b16 %v212, %v212
      %214 = vrot.lane.b32.xlu0 %v213, 127
      %v215 = vpop.permute.xlu0 %214
      %v217 = vunpack.c.l.b16 %v204
      %v218 = vpack.c.b16 %v217, %v217
      %219 = vrot.lane.b32.xlu0 %v218, 118
      %v220 = vpop.permute.xlu0 %219
      %v222 = vunpack.c.l.b16 %v205
      %v223 = vpack.c.b16 %v222, %v222
      %224 = vrot.lane.b32.xlu0 %v223, 117
      %v225 = vpop.permute.xlu0 %224
      %226 = vrot.lane.b32.xlu0 %v218, 117
      %v227 = vpop.permute.xlu0 %226
      %228 = vrot.lane.b32.xlu0 %v213, 118
      %v229 = vpop.permute.xlu0 %228
      %230 = vrot.lane.b32.xlu0 %v208, 117
      %v231 = vpop.permute.xlu0 %230
      %232 = vrot.lane.b32.xlu0 %v213, 117
      %v233 = vpop.permute.xlu0 %232
      %vm234 = vcmask 1043456
      %v237 = vsel %vm234, %v202, %v210
      %v240 = vsel %vm234, %v215, %v220
      %v243 = vsel %vm234, %v225, %v227
      %v246 = vsel %vm234, %v229, %v231
      %v247 = vld [vmem:[%s2] sm:$0xff]
      %v248 = vld [vmem:[%s2 + $0x8] sm:$0xff]
      %250 = vset.pattern.permute.xlu0 0
      %251 = vperm.xlu0 %250, %v247
      %v252 = vpop.permute.xlu0 %251
      %255 = vset.pattern.permute.xlu0 0
      %256 = vperm.xlu0 %255, %v248
      %v257 = vpop.permute.xlu0 %256
      %v261 = vunpack.c.l.b16 %v200
      %v262 = vunpack.c.l.b16 %v201
      %v263 = vpack.c.b16 %v262, %v261
      %268 = vrot.lane.b32.xlu0 %v237, 119
      %v269 = vpop.permute.xlu0 %268
      %270 = vrot.lane.b32.xlu0 %v240, 119
      %v271 = vpop.permute.xlu0 %270
      %272 = vrot.lane.b32.xlu0 %v243, 119
      %v273 = vpop.permute.xlu0 %272
      %274 = vrot.lane.b32.xlu0 %v246, 119
      %v275 = vpop.permute.xlu0 %274
      %276 = vrot.lane.b32.xlu0 %v233, 119
      %v277 = vpop.permute.xlu0 %276
      %vm282 = vcmask 588800
      %v284 = vsel %vm282, %v263, 0
      %v287 = vsel %vm234, %v277, 0
      %289 = vmatprep.subr.bf16.mxu0 0
      %290 = vmatpush1.bf16.msra.mxu0 %v269
      %291 = vmatprep.subr.bf16.mxu0 0
      %292 = vmatpush1.bf16.msra.mxu0 %v271
      %293 = vmatprep.subr.bf16.mxu0 0
      %294 = vmatpush1.bf16.msra.mxu0 %v273
      %295 = vmatprep.subr.bf16.mxu0 0
      %296 = vmatpush1.bf16.msra.mxu0 %v275
      %297 = vmatprep.subr.bf16.mxu0 0
      %298 = vmatpush1.bf16.msra.mxu0 %v287
      %299 = vmatprep.subr.bf16.mxu0 0
      %300 = vmatpush1.bf16.msra.mxu0 0
      %301 = vmatprep.subr.bf16.mxu0 0
      %302 = vmatpush1.bf16.msra.mxu0 0
      %303 = vmatprep.subr.bf16.mxu0 0
      %304 = vmatpush1.bf16.msra.mxu0 0
      %305 = vmatprep.subr.bf16.mxu0 0
      %306 = vmatpush1.bf16.msra.mxu0 0
      %307 = vmatprep.subr.bf16.mxu0 0
      %308 = vmatpush1.bf16.msra.mxu0 0
      %309 = vmatprep.subr.bf16.mxu0 0
      %310 = vmatpush1.bf16.msra.mxu0 0
      %311 = vmatprep.subr.bf16.mxu0 0
      %312 = vmatpush1.bf16.msra.mxu0 0
      %313 = vmatprep.subr.bf16.mxu0 0
      %314 = vmatpush1.bf16.msra.mxu0 0
      %315 = vmatprep.subr.bf16.mxu0 0
      %316 = vmatpush1.bf16.msra.mxu0 0
      %317 = vmatprep.subr.bf16.mxu0 0
      %318 = vmatpush1.bf16.msra.mxu0 0
      %319 = vmatprep.subr.bf16.mxu0 0
      %320 = vmatpush1.bf16.msra.mxu0 0
      %321 = vmatprep.mubr.bf16.mxu0 0
      %322 = vmatmul.mubr.bf16.gmra.mrb[0].mxu0 %v284
      %v323 = vpop.f32.mrb[0].mxu0
      %v324 = vadd.f32 %v252, %v323
      %v325 = vpop.f32.mrb[0].mxu0
      %v326 = vpop.f32.mrb[0].mxu0
      %v327 = vadd.f32 %v257, %v326
      %v328 = vpop.f32.mrb[0].mxu0
      %329 = vdwg.mxu0
      %v330 = vmax.f32 %v324, 0.0
      %v331 = vmax.f32 %v327, 0.0
      %v333 = vlaneseq
      %v334 = vshrl.u32 %v333, 7
      %v335 = vsub.s32 0, %v334
      %v336 = vrot.slane %v199, %v335
      %337 = vrot.lane.b32.xlu0 %v336, 108
      %v338 = vpop.permute.xlu0 %337
      %v340 = vmul.f32 %v330, %v338
      %v341 = vmul.f32 %v331, %v338
      %v342 = vpack.c.bf16 %v341, %v340
      %344 = vrot.lane.b32.xlu0 %v342, 20
      %v345 = vpop.permute.xlu0 %344
      %vm346 = vcmask 162816
      %v349 = vsel %vm346, 0, %v345
      %vm350 = vcmask 818176
      %v351 = vsel %vm350, %v349, 0
      %v353 = vunpack.c.l.b16 %v351
      %v354 = vunpack.c.h.b16 %v351
      %v355 = vpack.c.b16 %v353, %v353
      %v356 = vpack.c.b16 %v354, %v354
      %359 = vst [vmem:[%s197] sm:$0xf] %v355
      %360 = vst [vmem:[%s197 + $0x4] sm:$0xf] %v356
      %p361 = scmp.lt.s32.totalorder %s15, 3
      %s362 = scalar_select %p361, %s15, 3
      %s363 = smul.addr %s362, 2
      %s364 = smul.addr %s363, 4
      %s365 = scalar_lea.vmem %s4, %s364
      // Predicated region
      $region37: #{mfe_backbone_forward.13} parent=35 // pred_check
        %p366 = pneg %p122
      $region38: #{mfe_backbone_forward.13} parent=35 // pred_check_branch
        %368 = sbr.rel (%p366) target = $region40
      $region39: #{mfe_backbone_forward.13} parent=35 // pred_region
        _
      $region40: #{mfe_backbone_forward.13} parent=35 // pred_fallthru
        _
    $region36: #{mfe_backbone_forward.13} parent=5 // pred_fallthru
      _
    %p369 = scmp.le.s32.totalorder 2, %s10
    // Predicated region
    $region41: #{mfe_backbone_forward.13} parent=5 // pred_check
      %p370 = pneg %p369
    $region42: #{mfe_backbone_forward.13} parent=5 // pred_check_branch
      %372 = sbr.rel (%p370) target = $region44
    $region43: #{mfe_backbone_forward.13} parent=5 // pred_region
      %s373 = ssub.s32 %s10, 2
      // Predicated region
      $region45: #{mfe_backbone_forward.13} parent=43 // pred_check
        %p374 = pneg %p128
      $region46: #{mfe_backbone_forward.13} parent=43 // pred_check_branch
        %376 = sbr.rel (%p374) target = $region48
      $region47: #{mfe_backbone_forward.13} parent=43 // pred_region
        %p377 = scmp.lt.s32.totalorder %s16, 3
        %s378 = scalar_select %p377, %s16, 3
        %s379 = smul.addr %s378, 2
        %s380 = smul.addr %s379, 4
        %s381 = scalar_lea.vmem %s4, %s380
      $region48: #{mfe_backbone_forward.13} parent=43 // pred_fallthru
        _
    $region44: #{mfe_backbone_forward.13} parent=5 // pred_fallthru
      _
  $region6: #{mfe_backbone_forward.13} parent=0 // loop_footer
    %s14 = sadd.s32 1, %s10
  $region7: #{mfe_backbone_forward.13} parent=0 // loop_footer_branch
    %9 = sbr.rel target = $region3
  $region8: #{mfe_backbone_forward.13} parent=0 // loop_exit
    _

// kernel: mfe_backbone_forward.14
$region0: #{mfe_backbone_forward.14}
  #allocation0 [shape = 'u32[]', space=smem, size = 0x4, offset = 0x4, fixed_abs, tag = 'smem constant byte address 0x4 - core index']
  #allocation1 [shape = 'u32[144,128]{1,0:T(1,128)}', space=vmem, size = 0x12000, scoped, tag = 'internal scratch']
  #allocation2 [shape = 'bf16[16,128]{1,0:T(16,128)(2,1)}', space=vmem, size = 0x1000, scoped, tag = 'scratch operand']
  %s0 = inlined_call_operand.vmem [shape: bf16[4,16,128], index: 0, kind: input, shape index: {}]
  %s1 = inlined_call_operand.vmem [shape: bf16[16,144], index: 1, kind: input, shape index: {}]
  %s2 = inlined_call_operand.vmem [shape: f32[16,1], index: 2, kind: input, shape index: {}]
  %s3 = inlined_call_operand.vmem [shape: bf16[16,144], index: 3, kind: input, shape index: {}]
  %s4 = inlined_call_operand.vmem [shape: f32[16,1], index: 4, kind: input, shape index: {}]
  %s5 = inlined_call_operand.vmem [shape: f32[1,128], index: 5, kind: input, shape index: {}]
  %s6 = inlined_call_operand.vmem [shape: bf16[4,16,128], index: 6, kind: output, shape index: {}]
  %s7 = sld [smem:[#allocation0]]
  $region57: #{mfe_backbone_forward.14} parent=0
    _
  %s9 = ssub.s32 1, %s7
  %s10 = scalar_select 0, %s9, %s7
  loop: start=0, step=1, limit=6
  $region2: #{mfe_backbone_forward.14} parent=0 // loop_pre_header
    _
  $region3: #{mfe_backbone_forward.14} parent=0 // loop_header
    %s12 = sphi 0, %s16
    %p13 = scmp.ge.s32.totalorder %s12, 6
    %s22 = sphi 0, %s24
    %s25 = sphi 0, %s22
    %s26 = sphi 0, %s25
    %s42 = sphi 0, %s26
    %s46 = sphi 0, %s46
    %s48 = sphi 0, %s46
    %s49 = sphi 0, %s48
    %s63 = sphi 0, %s49
    %s67 = sphi 0, %s67
    %s69 = sphi 0, %s67
    %s70 = sphi 0, %s69
    %s84 = sphi 0, %s70
    %s88 = sphi 0, %s88
    %s90 = sphi 0, %s88
    %s91 = sphi 0, %s90
    %s105 = sphi 0, %s91
    %s109 = sphi 0, %s109
    %s111 = sphi 0, %s109
    %s112 = sphi 0, %s111
    %s126 = sphi 0, %s112
    %s130 = sphi 0, %s130
    %s132 = sphi 0, %s130
    %s133 = sphi 0, %s132
    %s147 = sphi 0, %s133
    %s153 = sphi 0, %s155
    %s156 = sphi 0, %s153
    %s157 = sphi 0, %s156
    %s173 = sphi 0, %s157
  $region4: #{mfe_backbone_forward.14} parent=0 // loop_header_branch
    %15 = sbr.rel (%p13) target = $region8
  $region5: #{mfe_backbone_forward.14} parent=0 // loop_body
    %s17 = ssub.s32 %s12, 1
    %s18 = ssub.s32 %s12, 2
    %s19 = sadd.s32 %s12, 1
    %s20 = ssub.s32 %s12, %s19
    %p21 = scmp.eq.s32.totalorder %s20, 0
    %s23 = sadd.s32 %s22, 1
    %s24 = scalar_select %p21, %s22, %s23
    %p27 = pneg %p21
    %p28 = scmp.eq.s32.totalorder %s12, 3
    %p29 = por %p27, %p28
    %p30 = scmp.ne.s32.totalorder %s22, %s25
    %p31 = scmp.eq.s32.totalorder %s12, 0
    %p32 = por %p30, %p31
    %p33 = scmp.ne.s32.totalorder %s22, %s25
    %p34 = scmp.eq.s32.totalorder %s17, 3
    %p35 = por %p33, %p34
    %p36 = scmp.ne.s32.totalorder %s25, %s26
    %p37 = scmp.eq.s32.totalorder %s17, 0
    %p38 = por %p36, %p37
    %p39 = scmp.ne.s32.totalorder %s25, %s26
    %p40 = scmp.eq.s32.totalorder %s18, 3
    %p41 = por %p39, %p40
    %p43 = scmp.ne.s32.totalorder %s26, %s42
    %p44 = scmp.eq.s32.totalorder %s18, 0
    %p45 = por %p43, %p44
    %s47 = sadd.s32 %s46, 1
    %p50 = scmp.eq.s32.totalorder %s12, 3
    %p51 = scmp.ne.s32.totalorder %s46, %s48
    %p52 = scmp.eq.s32.totalorder %s12, 0
    %p53 = por %p51, %p52
    %p54 = scmp.ne.s32.totalorder %s46, %s48
    %p55 = scmp.eq.s32.totalorder %s17, 3
    %p56 = por %p54, %p55
    %p57 = scmp.ne.s32.totalorder %s48, %s49
    %p58 = scmp.eq.s32.totalorder %s17, 0
    %p59 = por %p57, %p58
    %p60 = scmp.ne.s32.totalorder %s48, %s49
    %p61 = scmp.eq.s32.totalorder %s18, 3
    %p62 = por %p60, %p61
    %p64 = scmp.ne.s32.totalorder %s49, %s63
    %p65 = scmp.eq.s32.totalorder %s18, 0
    %p66 = por %p64, %p65
    %s68 = sadd.s32 %s67, 1
    %p71 = scmp.eq.s32.totalorder %s12, 3
    %p72 = scmp.ne.s32.totalorder %s67, %s69
    %p73 = scmp.eq.s32.totalorder %s12, 0
    %p74 = por %p72, %p73
    %p75 = scmp.ne.s32.totalorder %s67, %s69
    %p76 = scmp.eq.s32.totalorder %s17, 3
    %p77 = por %p75, %p76
    %p78 = scmp.ne.s32.totalorder %s69, %s70
    %p79 = scmp.eq.s32.totalorder %s17, 0
    %p80 = por %p78, %p79
    %p81 = scmp.ne.s32.totalorder %s69, %s70
    %p82 = scmp.eq.s32.totalorder %s18, 3
    %p83 = por %p81, %p82
    %p85 = scmp.ne.s32.totalorder %s70, %s84
    %p86 = scmp.eq.s32.totalorder %s18, 0
    %p87 = por %p85, %p86
    %s89 = sadd.s32 %s88, 1
    %p92 = scmp.eq.s32.totalorder %s12, 3
    %p93 = scmp.ne.s32.totalorder %s88, %s90
    %p94 = scmp.eq.s32.totalorder %s12, 0
    %p95 = por %p93, %p94
    %p96 = scmp.ne.s32.totalorder %s88, %s90
    %p97 = scmp.eq.s32.totalorder %s17, 3
    %p98 = por %p96, %p97
    %p99 = scmp.ne.s32.totalorder %s90, %s91
    %p100 = scmp.eq.s32.totalorder %s17, 0
    %p101 = por %p99, %p100
    %p102 = scmp.ne.s32.totalorder %s90, %s91
    %p103 = scmp.eq.s32.totalorder %s18, 3
    %p104 = por %p102, %p103
    %p106 = scmp.ne.s32.totalorder %s91, %s105
    %p107 = scmp.eq.s32.totalorder %s18, 0
    %p108 = por %p106, %p107
    %s110 = sadd.s32 %s109, 1
    %p113 = scmp.eq.s32.totalorder %s12, 3
    %p114 = scmp.ne.s32.totalorder %s109, %s111
    %p115 = scmp.eq.s32.totalorder %s12, 0
    %p116 = por %p114, %p115
    %p117 = scmp.ne.s32.totalorder %s109, %s111
    %p118 = scmp.eq.s32.totalorder %s17, 3
    %p119 = por %p117, %p118
    %p120 = scmp.ne.s32.totalorder %s111, %s112
    %p121 = scmp.eq.s32.totalorder %s17, 0
    %p122 = por %p120, %p121
    %p123 = scmp.ne.s32.totalorder %s111, %s112
    %p124 = scmp.eq.s32.totalorder %s18, 3
    %p125 = por %p123, %p124
    %p127 = scmp.ne.s32.totalorder %s112, %s126
    %p128 = scmp.eq.s32.totalorder %s18, 0
    %p129 = por %p127, %p128
    %s131 = sadd.s32 %s130, 1
    %p134 = scmp.eq.s32.totalorder %s12, 3
    %p135 = scmp.ne.s32.totalorder %s130, %s132
    %p136 = scmp.eq.s32.totalorder %s12, 0
    %p137 = por %p135, %p136
    %p138 = scmp.ne.s32.totalorder %s130, %s132
    %p139 = scmp.eq.s32.totalorder %s17, 3
    %p140 = por %p138, %p139
    %p141 = scmp.ne.s32.totalorder %s132, %s133
    %p142 = scmp.eq.s32.totalorder %s17, 0
    %p143 = por %p141, %p142
    %p144 = scmp.ne.s32.totalorder %s132, %s133
    %p145 = scmp.eq.s32.totalorder %s18, 3
    %p146 = por %p144, %p145
    %p148 = scmp.ne.s32.totalorder %s133, %s147
    %p149 = scmp.eq.s32.totalorder %s18, 0
    %p150 = por %p148, %p149
    %s151 = ssub.s32 %s12, %s19
    %p152 = scmp.eq.s32.totalorder %s151, 0
    %s154 = sadd.s32 %s153, 1
    %s155 = scalar_select %p152, %s153, %s154
    %p158 = pneg %p152
    %p159 = scmp.eq.s32.totalorder %s12, 3
    %p160 = por %p158, %p159
    %p161 = scmp.ne.s32.totalorder %s153, %s156
    %p162 = scmp.eq.s32.totalorder %s12, 0
    %p163 = por %p161, %p162
    %p164 = scmp.ne.s32.totalorder %s153, %s156
    %p165 = scmp.eq.s32.totalorder %s17, 3
    %p166 = por %p164, %p165
    %p167 = scmp.ne.s32.totalorder %s156, %s157
    %p168 = scmp.eq.s32.totalorder %s17, 0
    %p169 = por %p167, %p168
    %p170 = scmp.ne.s32.totalorder %s156, %s157
    %p171 = scmp.eq.s32.totalorder %s18, 3
    %p172 = por %p170, %p171
    %p174 = scmp.ne.s32.totalorder %s157, %s173
    %p175 = scmp.eq.s32.totalorder %s18, 0
    %p176 = por %p174, %p175
    %p177 = scmp.le.s32.totalorder 1, %s12
    %p178 = scmp.lt.s32.totalorder %s12, 5
    %p179 = pnand %p177, %p178
    %p180 = pneg %p179
    // Predicated region
    $region9: #{mfe_backbone_forward.14} parent=5 // pred_check
      _
    $region10: #{mfe_backbone_forward.14} parent=5 // pred_check_branch
      %182 = sbr.rel (%p179) target = $region12
    $region11: #{mfe_backbone_forward.14} parent=5 // pred_region
      %s183 = ssub.s32 %s12, 1
      // Predicated region
      $region13: #{mfe_backbone_forward.14} parent=11 // pred_check
        %p184 = pneg %p59
      $region14: #{mfe_backbone_forward.14} parent=11 // pred_check_branch
        %186 = sbr.rel (%p184) target = $region16
      $region15: #{mfe_backbone_forward.14} parent=11 // pred_region
        _
      $region16: #{mfe_backbone_forward.14} parent=11 // pred_fallthru
        _
      // Predicated region
      $region17: #{mfe_backbone_forward.14} parent=11 // pred_check
        %p187 = pneg %p80
      $region18: #{mfe_backbone_forward.14} parent=11 // pred_check_branch
        %189 = sbr.rel (%p187) target = $region20
      $region19: #{mfe_backbone_forward.14} parent=11 // pred_region
        _
      $region20: #{mfe_backbone_forward.14} parent=11 // pred_fallthru
        _
      // Predicated region
      $region21: #{mfe_backbone_forward.14} parent=11 // pred_check
        %p190 = pneg %p101
      $region22: #{mfe_backbone_forward.14} parent=11 // pred_check_branch
        %192 = sbr.rel (%p190) target = $region24
      $region23: #{mfe_backbone_forward.14} parent=11 // pred_region
        _
      $region24: #{mfe_backbone_forward.14} parent=11 // pred_fallthru
        _
      // Predicated region
      $region25: #{mfe_backbone_forward.14} parent=11 // pred_check
        %p193 = pneg %p122
      $region26: #{mfe_backbone_forward.14} parent=11 // pred_check_branch
        %195 = sbr.rel (%p193) target = $region28
      $region27: #{mfe_backbone_forward.14} parent=11 // pred_region
        _
      $region28: #{mfe_backbone_forward.14} parent=11 // pred_fallthru
        _
      // Predicated region
      $region29: #{mfe_backbone_forward.14} parent=11 // pred_check
        %p196 = pneg %p143
      $region30: #{mfe_backbone_forward.14} parent=11 // pred_check_branch
        %198 = sbr.rel (%p196) target = $region32
      $region31: #{mfe_backbone_forward.14} parent=11 // pred_region
        _
      $region32: #{mfe_backbone_forward.14} parent=11 // pred_fallthru
        _
    $region12: #{mfe_backbone_forward.14} parent=5 // pred_fallthru
      _
    %p199 = scmp.lt.s32.totalorder %s12, 4
    // Predicated region
    $region33: #{mfe_backbone_forward.14} parent=5 // pred_check
      %p200 = pneg %p199
    $region34: #{mfe_backbone_forward.14} parent=5 // pred_check_branch
      %202 = sbr.rel (%p200) target = $region36
    $region35: #{mfe_backbone_forward.14} parent=5 // pred_region
      // Predicated region
      $region37: #{mfe_backbone_forward.14} parent=35 // pred_check
        %p203 = pneg %p32
      $region38: #{mfe_backbone_forward.14} parent=35 // pred_check_branch
        %205 = sbr.rel (%p203) target = $region40
      $region39: #{mfe_backbone_forward.14} parent=35 // pred_region
        %p206 = scmp.lt.s32.totalorder %s12, 3
        %s207 = scalar_select %p206, %s12, 3
        %s208 = smul.addr %s207, 2
        %s209 = smul.addr %s208, 4
        %s210 = scalar_lea.vmem %s0, %s209
      $region40: #{mfe_backbone_forward.14} parent=35 // pred_fallthru
        _
    $region36: #{mfe_backbone_forward.14} parent=5 // pred_fallthru
      _
    %p211 = scmp.le.s32.totalorder 1, %s12
    %p212 = scmp.lt.s32.totalorder %s12, 5
    %p213 = pnand %p211, %p212
    %p214 = pneg %p213
    // Predicated region
    $region41: #{mfe_backbone_forward.14} parent=5 // pred_check
      _
    $region42: #{mfe_backbone_forward.14} parent=5 // pred_check_branch
      %216 = sbr.rel (%p213) target = $region44
    $region43: #{mfe_backbone_forward.14} parent=5 // pred_region
      %s217 = ssub.s32 %s12, 1
      %p218 = scmp.lt.s32.totalorder %s17, 3
      %s219 = scalar_select %p218, %s17, 3
      %s220 = smul.addr %s219, 2
      %s221 = smul.addr %s220, 4
      %s222 = scalar_lea.vmem %s0, %s221
      %p223 = pneg %p38
      %p224 = pneg %p35
      %p225 = pneg %p59
      %p226 = pneg %p56
      %p227 = pneg %p80
      %p228 = pneg %p77
      %p229 = pneg %p101
      %p230 = pneg %p98
      %p231 = pneg %p122
      %p232 = pneg %p119
      %p233 = pneg %p143
      %p234 = pneg %p140
      %p235 = pneg %p169
      %p236 = pneg %p166
      %p237 = scmp.lt.s32.totalorder %s17, 3
      %s238 = scalar_select %p237, %s17, 3
      %s239 = smul.addr %s238, 2
      %s240 = smul.addr %s239, 4
      %s241 = scalar_lea.vmem %s6, %s240
      %p242 = scmp.lt.s32.totalorder %s17, 3
      %s243 = scalar_select %p242, %s17, 3
      %s244 = smul.addr %s243, 2
      %s245 = smul.addr %s244, 4
      %s246 = scalar_lea.vmem %s0, %s245
      %p247 = scmp.lt.s32.totalorder %s17, 3
      %s248 = scalar_select %p247, %s17, 3
      %s249 = smul.addr %s248, 2
      %s250 = smul.addr %s249, 4
      %s251 = scalar_lea.vmem %s6, %s250
      %v253 = vld [vmem:[%s5] sm:$0x1]
      %v254 = vld [vmem:[%s1] sm:$0xff]
      %v255 = vld [vmem:[%s1 + $0x8] sm:$0xff]
      %v256 = vld [vmem:[%s246] sm:$0xf]
      %v257 = vld [vmem:[%s246 + $0x4] sm:$0xf]
      %v260 = vunpack.c.l.b16 %v256
      %v261 = vunpack.c.l.b16 %v257
      %v262 = vpack.c.b16 %v261, %v260
      %263 = vrot.lane.b32.xlu0 %v262, 127
      %v264 = vpop.permute.xlu0 %263
      %265 = vrot.lane.b32.xlu0 %v262, 126
      %v266 = vpop.permute.xlu0 %265
      %267 = vrot.lane.b32.xlu0 %v262, 118
      %v268 = vpop.permute.xlu0 %267
      %269 = vrot.lane.b32.xlu0 %v262, 117
      %v270 = vpop.permute.xlu0 %269
      %271 = vrot.lane.b32.xlu0 %v262, 116
      %v272 = vpop.permute.xlu0 %271
      %273 = vrot.lane.b32.xlu0 %v262, 108
      %v274 = vpop.permute.xlu0 %273
      %275 = vrot.lane.b32.xlu0 %v262, 107
      %v276 = vpop.permute.xlu0 %275
      %277 = vrot.lane.b32.xlu0 %v262, 106
      %v278 = vpop.permute.xlu0 %277
      %v279 = vld [vmem:[%s2] sm:$0xff]
      %v280 = vld [vmem:[%s2 + $0x8] sm:$0xff]
      %282 = vset.pattern.permute.xlu0 0
      %283 = vperm.xlu0 %282, %v279
      %v284 = vpop.permute.xlu0 %283
      %287 = vset.pattern.permute.xlu0 0
      %288 = vperm.xlu0 %287, %v280
      %v289 = vpop.permute.xlu0 %288
      %v293 = vunpack.c.l.b16 %v254
      %v294 = vunpack.c.h.b16 %v254
      %v295 = vunpack.c.l.b16 %v255
      %v296 = vunpack.c.h.b16 %v255
      %v297 = vpack.c.b16 %v295, %v293
      %v298 = vpack.c.b16 %v296, %v294
      %300 = vrot.lane.b32.xlu0 %v262, 119
      %v301 = vpop.permute.xlu0 %300
      %302 = vrot.lane.b32.xlu0 %v264, 119
      %v303 = vpop.permute.xlu0 %302
      %304 = vrot.lane.b32.xlu0 %v266, 119
      %v305 = vpop.permute.xlu0 %304
      %306 = vrot.lane.b32.xlu0 %v268, 119
      %v307 = vpop.permute.xlu0 %306
      %308 = vrot.lane.b32.xlu0 %v270, 119
      %v309 = vpop.permute.xlu0 %308
      %310 = vrot.lane.b32.xlu0 %v272, 119
      %v311 = vpop.permute.xlu0 %310
      %312 = vrot.lane.b32.xlu0 %v274, 119
      %v313 = vpop.permute.xlu0 %312
      %314 = vrot.lane.b32.xlu0 %v276, 119
      %v315 = vpop.permute.xlu0 %314
      %316 = vrot.lane.b32.xlu0 %v278, 119
      %v317 = vpop.permute.xlu0 %316
      %vm327 = vcmask 130048
      %v329 = vsel %vm327, %v298, 0
      %331 = vmatprep.subr.bf16.mxu0 0
      %332 = vmatpush1.bf16.msra.mxu0 %v301
      %333 = vmatprep.subr.bf16.mxu0 0
      %334 = vmatpush1.bf16.msra.mxu0 %v303
      %335 = vmatprep.subr.bf16.mxu0 0
      %336 = vmatpush1.bf16.msra.mxu0 %v305
      %337 = vmatprep.subr.bf16.mxu0 0
      %338 = vmatpush1.bf16.msra.mxu0 %v307
      %339 = vmatprep.subr.bf16.mxu0 0
      %340 = vmatpush1.bf16.msra.mxu0 %v309
      %341 = vmatprep.subr.bf16.mxu0 0
      %342 = vmatpush1.bf16.msra.mxu0 %v311
      %343 = vmatprep.subr.bf16.mxu0 0
      %344 = vmatpush1.bf16.msra.mxu0 %v313
      %345 = vmatprep.subr.bf16.mxu0 0
      %346 = vmatpush1.bf16.msra.mxu0 %v315
      %347 = vmatprep.subr.bf16.mxu0 0
      %348 = vmatpush1.bf16.msra.mxu0 %v317
      %349 = vmatprep.subr.bf16.mxu0 0
      %350 = vmatpush1.bf16.msra.mxu0 0
      %351 = vmatprep.subr.bf16.mxu0 0
      %352 = vmatpush1.bf16.msra.mxu0 0
      %353 = vmatprep.subr.bf16.mxu0 0
      %354 = vmatpush1.bf16.msra.mxu0 0
      %355 = vmatprep.subr.bf16.mxu0 0
      %356 = vmatpush1.bf16.msra.mxu0 0
      %357 = vmatprep.subr.bf16.mxu0 0
      %358 = vmatpush1.bf16.msra.mxu0 0
      %359 = vmatprep.subr.bf16.mxu0 0
      %360 = vmatpush1.bf16.msra.mxu0 0
      %361 = vmatprep.subr.bf16.mxu0 0
      %362 = vmatpush1.bf16.msra.mxu0 0
      %363 = vmatprep.mubr.bf16.mxu0 %v329
      %364 = vmatmul.mubr.bf16.gmra.mrb[0].mxu0 %v297
      %v365 = vpop.f32.mrb[0].mxu0
      %v366 = vadd.f32 %v284, %v365
      %v367 = vpop.f32.mrb[0].mxu0
      %v368 = vpop.f32.mrb[0].mxu0
      %v369 = vadd.f32 %v289, %v368
      %v370 = vpop.f32.mrb[0].mxu0
      %371 = vdwg.mxu0
      %v372 = vmax.f32 %v366, 0.0
      %v373 = vmax.f32 %v369, 0.0
      %v375 = vlaneseq
      %v376 = vshrl.u32 %v375, 7
      %v377 = vsub.s32 0, %v376
      %v378 = vrot.slane %v253, %v377
      %379 = vrot.lane.b32.xlu0 %v378, 108
      %v380 = vpop.permute.xlu0 %379
      %v382 = vmul.f32 %v372, %v380
      %v383 = vmul.f32 %v373, %v380
      %v384 = vpack.c.bf16 %v383, %v382
      %386 = vrot.lane.b32.xlu0 %v384, 20
      %v387 = vpop.permute.xlu0 %386
      %vm388 = vcmask 162816
      %v391 = vsel %vm388, 0, %v387
      %vm392 = vcmask 818176
      %v393 = vsel %vm392, %v391, 0
      %395 = vst [vmem:[#allocation2] sm:$0xff] %v393
      %v396 = vld [vmem:[%s3] sm:$0xff]
      %v397 = vld [vmem:[%s3 + $0x8] sm:$0xff]
      %v398 = vld [vmem:[#allocation2] sm:$0xff]
      %400 = vrot.lane.b32.xlu0 %v398, 127
      %v401 = vpop.permute.xlu0 %400
      %402 = vrot.lane.b32.xlu0 %v398, 126
      %v403 = vpop.permute.xlu0 %402
      %404 = vrot.lane.b32.xlu0 %v398, 118
      %v405 = vpop.permute.xlu0 %404
      %406 = vrot.lane.b32.xlu0 %v398, 117
      %v407 = vpop.permute.xlu0 %406
      %408 = vrot.lane.b32.xlu0 %v398, 116
      %v409 = vpop.permute.xlu0 %408
      %410 = vrot.lane.b32.xlu0 %v398, 108
      %v411 = vpop.permute.xlu0 %410
      %412 = vrot.lane.b32.xlu0 %v398, 107
      %v413 = vpop.permute.xlu0 %412
      %414 = vrot.lane.b32.xlu0 %v398, 106
      %v415 = vpop.permute.xlu0 %414
      %v416 = vld [vmem:[%s4] sm:$0xff]
      %v417 = vld [vmem:[%s4 + $0x8] sm:$0xff]
      %419 = vset.pattern.permute.xlu0 0
      %420 = vperm.xlu0 %419, %v416
      %v421 = vpop.permute.xlu0 %420
      %424 = vset.pattern.permute.xlu0 0
      %425 = vperm.xlu0 %424, %v417
      %v426 = vpop.permute.xlu0 %425
      %v430 = vunpack.c.l.b16 %v396
      %v431 = vunpack.c.h.b16 %v396
      %v432 = vunpack.c.l.b16 %v397
      %v433 = vunpack.c.h.b16 %v397
      %v434 = vpack.c.b16 %v432, %v430
      %v435 = vpack.c.b16 %v433, %v431
      %437 = vrot.lane.b32.xlu0 %v398, 119
      %v438 = vpop.permute.xlu0 %437
      %439 = vrot.lane.b32.xlu0 %v401, 119
      %v440 = vpop.permute.xlu0 %439
      %441 = vrot.lane.b32.xlu0 %v403, 119
      %v442 = vpop.permute.xlu0 %441
      %443 = vrot.lane.b32.xlu0 %v405, 119
      %v444 = vpop.permute.xlu0 %443
      %445 = vrot.lane.b32.xlu0 %v407, 119
      %v446 = vpop.permute.xlu0 %445
      %447 = vrot.lane.b32.xlu0 %v409, 119
      %v448 = vpop.permute.xlu0 %447
      %449 = vrot.lane.b32.xlu0 %v411, 119
      %v450 = vpop.permute.xlu0 %449
      %451 = vrot.lane.b32.xlu0 %v413, 119
      %v452 = vpop.permute.xlu0 %451
      %453 = vrot.lane.b32.xlu0 %v415, 119
      %v454 = vpop.permute.xlu0 %453
      %v465 = vsel %vm327, %v435, 0
      %467 = vmatprep.subr.bf16.mxu0 0
      %468 = vmatpush1.bf16.msra.mxu0 %v438
      %469 = vmatprep.subr.bf16.mxu0 0
      %470 = vmatpush1.bf16.msra.mxu0 %v440
      %471 = vmatprep.subr.bf16.mxu0 0
      %472 = vmatpush1.bf16.msra.mxu0 %v442
      %473 = vmatprep.subr.bf16.mxu0 0
      %474 = vmatpush1.bf16.msra.mxu0 %v444
      %475 = vmatprep.subr.bf16.mxu0 0
      %476 = vmatpush1.bf16.msra.mxu0 %v446
      %477 = vmatprep.subr.bf16.mxu0 0
      %478 = vmatpush1.bf16.msra.mxu0 %v448
      %479 = vmatprep.subr.bf16.mxu0 0
      %480 = vmatpush1.bf16.msra.mxu0 %v450
      %481 = vmatprep.subr.bf16.mxu0 0
      %482 = vmatpush1.bf16.msra.mxu0 %v452
      %483 = vmatprep.subr.bf16.mxu0 0
      %484 = vmatpush1.bf16.msra.mxu0 %v454
      %485 = vmatprep.subr.bf16.mxu0 0
      %486 = vmatpush1.bf16.msra.mxu0 0
      %487 = vmatprep.subr.bf16.mxu0 0
      %488 = vmatpush1.bf16.msra.mxu0 0
      %489 = vmatprep.subr.bf16.mxu0 0
      %490 = vmatpush1.bf16.msra.mxu0 0
      %491 = vmatprep.subr.bf16.mxu0 0
      %492 = vmatpush1.bf16.msra.mxu0 0
      %493 = vmatprep.subr.bf16.mxu0 0
      %494 = vmatpush1.bf16.msra.mxu0 0
      %495 = vmatprep.subr.bf16.mxu0 0
      %496 = vmatpush1.bf16.msra.mxu0 0
      %497 = vmatprep.subr.bf16.mxu0 0
      %498 = vmatpush1.bf16.msra.mxu0 0
      %499 = vmatprep.mubr.bf16.mxu0 %v465
      %500 = vmatmul.mubr.bf16.gmra.mrb[0].mxu0 %v434
      %v501 = vpop.f32.mrb[0].mxu0
      %v502 = vadd.f32 %v421, %v501
      %v503 = vpop.f32.mrb[0].mxu0
      %v504 = vpop.f32.mrb[0].mxu0
      %v505 = vadd.f32 %v426, %v504
      %v506 = vpop.f32.mrb[0].mxu0
      %507 = vdwg.mxu0
      %v508 = vld [vmem:[%s246] sm:$0xf]
      %v509 = vld [vmem:[%s246 + $0x4] sm:$0xf]
      %v510 = vunpack.c.l.bf16 %v508
      %v511 = vunpack.c.l.bf16 %v509
      %514 = vrot.lane.b32.xlu0 %v510, 108
      %v515 = vpop.permute.xlu0 %514
      %516 = vrot.lane.b32.xlu0 %v511, 108
      %v517 = vpop.permute.xlu0 %516
      %v520 = vadd.f32 %v502, %v515
      %v521 = vadd.f32 %v505, %v517
      %v522 = vmax.f32 %v520, 0.0
      %v523 = vmax.f32 %v521, 0.0
      %v524 = vmul.f32 %v522, %v380
      %v525 = vmul.f32 %v523, %v380
      %v526 = vpack.c.bf16 %v525, %v524
      %528 = vrot.lane.b32.xlu0 %v526, 20
      %v529 = vpop.permute.xlu0 %528
      %v531 = vsel %vm388, 0, %v529
      %v532 = vsel %vm392, %v531, 0
      %v534 = vunpack.c.l.b16 %v532
      %v535 = vunpack.c.h.b16 %v532
      %v536 = vpack.c.b16 %v534, %v534
      %v537 = vpack.c.b16 %v535, %v535
      %540 = vst [vmem:[%s251] sm:$0xf] %v536
      %541 = vst [vmem:[%s251 + $0x4] sm:$0xf] %v537
      %p542 = scmp.lt.s32.totalorder %s17, 3
      %s543 = scalar_select %p542, %s17, 3
      %s544 = smul.addr %s543, 2
      %s545 = smul.addr %s544, 4
      %s546 = scalar_lea.vmem %s6, %s545
      // Predicated region
      $region45: #{mfe_backbone_forward.14} parent=43 // pred_check
        %p547 = pneg %p166
      $region46: #{mfe_backbone_forward.14} parent=43 // pred_check_branch
        %549 = sbr.rel (%p547) target = $region48
      $region47: #{mfe_backbone_forward.14} parent=43 // pred_region
        _
      $region48: #{mfe_backbone_forward.14} parent=43 // pred_fallthru
        _
    $region44: #{mfe_backbone_forward.14} parent=5 // pred_fallthru
      _
    %p550 = scmp.le.s32.totalorder 2, %s12
    // Predicated region
    $region49: #{mfe_backbone_forward.14} parent=5 // pred_check
      %p551 = pneg %p550
    $region50: #{mfe_backbone_forward.14} parent=5 // pred_check_branch
      %553 = sbr.rel (%p551) target = $region52
    $region51: #{mfe_backbone_forward.14} parent=5 // pred_region
      %s554 = ssub.s32 %s12, 2
      // Predicated region
      $region53: #{mfe_backbone_forward.14} parent=51 // pred_check
        %p555 = pneg %p172
      $region54: #{mfe_backbone_forward.14} parent=51 // pred_check_branch
        %557 = sbr.rel (%p555) target = $region56
      $region55: #{mfe_backbone_forward.14} parent=51 // pred_region
        %p558 = scmp.lt.s32.totalorder %s18, 3
        %s559 = scalar_select %p558, %s18, 3
        %s560 = smul.addr %s559, 2
        %s561 = smul.addr %s560, 4
        %s562 = scalar_lea.vmem %s6, %s561
      $region56: #{mfe_backbone_forward.14} parent=51 // pred_fallthru
        _
    $region52: #{mfe_backbone_forward.14} parent=5 // pred_fallthru
      _
  $region6: #{mfe_backbone_forward.14} parent=0 // loop_footer
    %s16 = sadd.s32 1, %s12
  $region7: #{mfe_backbone_forward.14} parent=0 // loop_footer_branch
    %11 = sbr.rel target = $region3
  $region8: #{mfe_backbone_forward.14} parent=0 // loop_exit
    _

// kernel: mfe_backbone_forward.15
$region0: #{mfe_backbone_forward.15}
  #allocation0 [shape = 'u32[]', space=smem, size = 0x4, offset = 0x4, fixed_abs, tag = 'smem constant byte address 0x4 - core index']
  #allocation1 [shape = 'u32[144,128]{1,0:T(1,128)}', space=vmem, size = 0x12000, scoped, tag = 'internal scratch']
  %s0 = inlined_call_operand.vmem [shape: bf16[4,64,128], index: 0, kind: input, shape index: {}]
  %s1 = inlined_call_operand.vmem [shape: bf16[32,144], index: 1, kind: input, shape index: {}]
  %s2 = inlined_call_operand.vmem [shape: f32[32,1], index: 2, kind: input, shape index: {}]
  %s3 = inlined_call_operand.vmem [shape: f32[1,128], index: 3, kind: input, shape index: {}]
  %s4 = inlined_call_operand.vmem [shape: bf16[4,32,128], index: 4, kind: output, shape index: {}]
  %s5 = sld [smem:[#allocation0]]
  $region49: #{mfe_backbone_forward.15} parent=0
    _
  %s7 = ssub.s32 1, %s5
  %s8 = scalar_select 0, %s7, %s5
  loop: start=0, step=1, limit=6
  $region2: #{mfe_backbone_forward.15} parent=0 // loop_pre_header
    _
  $region3: #{mfe_backbone_forward.15} parent=0 // loop_header
    %s10 = sphi 0, %s14
    %p11 = scmp.ge.s32.totalorder %s10, 6
    %s20 = sphi 0, %s22
    %s23 = sphi 0, %s20
    %s24 = sphi 0, %s23
    %s40 = sphi 0, %s24
    %s44 = sphi 0, %s44
    %s46 = sphi 0, %s44
    %s47 = sphi 0, %s46
    %s61 = sphi 0, %s47
    %s65 = sphi 0, %s65
    %s67 = sphi 0, %s65
    %s68 = sphi 0, %s67
    %s82 = sphi 0, %s68
    %s86 = sphi 0, %s86
    %s88 = sphi 0, %s86
    %s89 = sphi 0, %s88
    %s103 = sphi 0, %s89
    %s109 = sphi 0, %s111
    %s112 = sphi 0, %s109
    %s113 = sphi 0, %s112
    %s129 = sphi 0, %s113
  $region4: #{mfe_backbone_forward.15} parent=0 // loop_header_branch
    %13 = sbr.rel (%p11) target = $region8
  $region5: #{mfe_backbone_forward.15} parent=0 // loop_body
    %s15 = ssub.s32 %s10, 1
    %s16 = ssub.s32 %s10, 2
    %s17 = sadd.s32 %s10, 1
    %s18 = ssub.s32 %s10, %s17
    %p19 = scmp.eq.s32.totalorder %s18, 0
    %s21 = sadd.s32 %s20, 1
    %s22 = scalar_select %p19, %s20, %s21
    %p25 = pneg %p19
    %p26 = scmp.eq.s32.totalorder %s10, 3
    %p27 = por %p25, %p26
    %p28 = scmp.ne.s32.totalorder %s20, %s23
    %p29 = scmp.eq.s32.totalorder %s10, 0
    %p30 = por %p28, %p29
    %p31 = scmp.ne.s32.totalorder %s20, %s23
    %p32 = scmp.eq.s32.totalorder %s15, 3
    %p33 = por %p31, %p32
    %p34 = scmp.ne.s32.totalorder %s23, %s24
    %p35 = scmp.eq.s32.totalorder %s15, 0
    %p36 = por %p34, %p35
    %p37 = scmp.ne.s32.totalorder %s23, %s24
    %p38 = scmp.eq.s32.totalorder %s16, 3
    %p39 = por %p37, %p38
    %p41 = scmp.ne.s32.totalorder %s24, %s40
    %p42 = scmp.eq.s32.totalorder %s16, 0
    %p43 = por %p41, %p42
    %s45 = sadd.s32 %s44, 1
    %p48 = scmp.eq.s32.totalorder %s10, 3
    %p49 = scmp.ne.s32.totalorder %s44, %s46
    %p50 = scmp.eq.s32.totalorder %s10, 0
    %p51 = por %p49, %p50
    %p52 = scmp.ne.s32.totalorder %s44, %s46
    %p53 = scmp.eq.s32.totalorder %s15, 3
    %p54 = por %p52, %p53
    %p55 = scmp.ne.s32.totalorder %s46, %s47
    %p56 = scmp.eq.s32.totalorder %s15, 0
    %p57 = por %p55, %p56
    %p58 = scmp.ne.s32.totalorder %s46, %s47
    %p59 = scmp.eq.s32.totalorder %s16, 3
    %p60 = por %p58, %p59
    %p62 = scmp.ne.s32.totalorder %s47, %s61
    %p63 = scmp.eq.s32.totalorder %s16, 0
    %p64 = por %p62, %p63
    %s66 = sadd.s32 %s65, 1
    %p69 = scmp.eq.s32.totalorder %s10, 3
    %p70 = scmp.ne.s32.totalorder %s65, %s67
    %p71 = scmp.eq.s32.totalorder %s10, 0
    %p72 = por %p70, %p71
    %p73 = scmp.ne.s32.totalorder %s65, %s67
    %p74 = scmp.eq.s32.totalorder %s15, 3
    %p75 = por %p73, %p74
    %p76 = scmp.ne.s32.totalorder %s67, %s68
    %p77 = scmp.eq.s32.totalorder %s15, 0
    %p78 = por %p76, %p77
    %p79 = scmp.ne.s32.totalorder %s67, %s68
    %p80 = scmp.eq.s32.totalorder %s16, 3
    %p81 = por %p79, %p80
    %p83 = scmp.ne.s32.totalorder %s68, %s82
    %p84 = scmp.eq.s32.totalorder %s16, 0
    %p85 = por %p83, %p84
    %s87 = sadd.s32 %s86, 1
    %p90 = scmp.eq.s32.totalorder %s10, 3
    %p91 = scmp.ne.s32.totalorder %s86, %s88
    %p92 = scmp.eq.s32.totalorder %s10, 0
    %p93 = por %p91, %p92
    %p94 = scmp.ne.s32.totalorder %s86, %s88
    %p95 = scmp.eq.s32.totalorder %s15, 3
    %p96 = por %p94, %p95
    %p97 = scmp.ne.s32.totalorder %s88, %s89
    %p98 = scmp.eq.s32.totalorder %s15, 0
    %p99 = por %p97, %p98
    %p100 = scmp.ne.s32.totalorder %s88, %s89
    %p101 = scmp.eq.s32.totalorder %s16, 3
    %p102 = por %p100, %p101
    %p104 = scmp.ne.s32.totalorder %s89, %s103
    %p105 = scmp.eq.s32.totalorder %s16, 0
    %p106 = por %p104, %p105
    %s107 = ssub.s32 %s10, %s17
    %p108 = scmp.eq.s32.totalorder %s107, 0
    %s110 = sadd.s32 %s109, 1
    %s111 = scalar_select %p108, %s109, %s110
    %p114 = pneg %p108
    %p115 = scmp.eq.s32.totalorder %s10, 3
    %p116 = por %p114, %p115
    %p117 = scmp.ne.s32.totalorder %s109, %s112
    %p118 = scmp.eq.s32.totalorder %s10, 0
    %p119 = por %p117, %p118
    %p120 = scmp.ne.s32.totalorder %s109, %s112
    %p121 = scmp.eq.s32.totalorder %s15, 3
    %p122 = por %p120, %p121
    %p123 = scmp.ne.s32.totalorder %s112, %s113
    %p124 = scmp.eq.s32.totalorder %s15, 0
    %p125 = por %p123, %p124
    %p126 = scmp.ne.s32.totalorder %s112, %s113
    %p127 = scmp.eq.s32.totalorder %s16, 3
    %p128 = por %p126, %p127
    %p130 = scmp.ne.s32.totalorder %s113, %s129
    %p131 = scmp.eq.s32.totalorder %s16, 0
    %p132 = por %p130, %p131
    %p133 = scmp.le.s32.totalorder 1, %s10
    %p134 = scmp.lt.s32.totalorder %s10, 5
    %p135 = pnand %p133, %p134
    %p136 = pneg %p135
    // Predicated region
    $region9: #{mfe_backbone_forward.15} parent=5 // pred_check
      _
    $region10: #{mfe_backbone_forward.15} parent=5 // pred_check_branch
      %138 = sbr.rel (%p135) target = $region12
    $region11: #{mfe_backbone_forward.15} parent=5 // pred_region
      %s139 = ssub.s32 %s10, 1
      // Predicated region
      $region13: #{mfe_backbone_forward.15} parent=11 // pred_check
        %p140 = pneg %p57
      $region14: #{mfe_backbone_forward.15} parent=11 // pred_check_branch
        %142 = sbr.rel (%p140) target = $region16
      $region15: #{mfe_backbone_forward.15} parent=11 // pred_region
        _
      $region16: #{mfe_backbone_forward.15} parent=11 // pred_fallthru
        _
      // Predicated region
      $region17: #{mfe_backbone_forward.15} parent=11 // pred_check
        %p143 = pneg %p78
      $region18: #{mfe_backbone_forward.15} parent=11 // pred_check_branch
        %145 = sbr.rel (%p143) target = $region20
      $region19: #{mfe_backbone_forward.15} parent=11 // pred_region
        _
      $region20: #{mfe_backbone_forward.15} parent=11 // pred_fallthru
        _
      // Predicated region
      $region21: #{mfe_backbone_forward.15} parent=11 // pred_check
        %p146 = pneg %p99
      $region22: #{mfe_backbone_forward.15} parent=11 // pred_check_branch
        %148 = sbr.rel (%p146) target = $region24
      $region23: #{mfe_backbone_forward.15} parent=11 // pred_region
        _
      $region24: #{mfe_backbone_forward.15} parent=11 // pred_fallthru
        _
    $region12: #{mfe_backbone_forward.15} parent=5 // pred_fallthru
      _
    %p149 = scmp.lt.s32.totalorder %s10, 4
    // Predicated region
    $region25: #{mfe_backbone_forward.15} parent=5 // pred_check
      %p150 = pneg %p149
    $region26: #{mfe_backbone_forward.15} parent=5 // pred_check_branch
      %152 = sbr.rel (%p150) target = $region28
    $region27: #{mfe_backbone_forward.15} parent=5 // pred_region
      // Predicated region
      $region29: #{mfe_backbone_forward.15} parent=27 // pred_check
        %p153 = pneg %p30
      $region30: #{mfe_backbone_forward.15} parent=27 // pred_check_branch
        %155 = sbr.rel (%p153) target = $region32
      $region31: #{mfe_backbone_forward.15} parent=27 // pred_region
        %p156 = scmp.lt.s32.totalorder %s10, 3
        %s157 = scalar_select %p156, %s10, 3
        %s158 = smul.addr %s157, 8
        %s159 = smul.addr %s158, 4
        %s160 = scalar_lea.vmem %s0, %s159
      $region32: #{mfe_backbone_forward.15} parent=27 // pred_fallthru
        _
    $region28: #{mfe_backbone_forward.15} parent=5 // pred_fallthru
      _
    %p161 = scmp.le.s32.totalorder 1, %s10
    %p162 = scmp.lt.s32.totalorder %s10, 5
    %p163 = pnand %p161, %p162
    %p164 = pneg %p163
    // Predicated region
    $region33: #{mfe_backbone_forward.15} parent=5 // pred_check
      _
    $region34: #{mfe_backbone_forward.15} parent=5 // pred_check_branch
      %166 = sbr.rel (%p163) target = $region36
    $region35: #{mfe_backbone_forward.15} parent=5 // pred_region
      %s167 = ssub.s32 %s10, 1
      %p168 = scmp.lt.s32.totalorder %s15, 3
      %s169 = scalar_select %p168, %s15, 3
      %s170 = smul.addr %s169, 8
      %s171 = smul.addr %s170, 4
      %s172 = scalar_lea.vmem %s0, %s171
      %p173 = pneg %p36
      %p174 = pneg %p33
      %p175 = pneg %p57
      %p176 = pneg %p54
      %p177 = pneg %p78
      %p178 = pneg %p75
      %p179 = pneg %p99
      %p180 = pneg %p96
      %p181 = pneg %p125
      %p182 = pneg %p122
      %p183 = scmp.lt.s32.totalorder %s15, 3
      %s184 = scalar_select %p183, %s15, 3
      %s185 = smul.addr %s184, 4
      %s186 = smul.addr %s185, 4
      %s187 = scalar_lea.vmem %s4, %s186
      %p188 = scmp.lt.s32.totalorder %s15, 3
      %s189 = scalar_select %p188, %s15, 3
      %s190 = smul.addr %s189, 8
      %s191 = smul.addr %s190, 4
      %s192 = scalar_lea.vmem %s0, %s191
      %p193 = scmp.lt.s32.totalorder %s15, 3
      %s194 = scalar_select %p193, %s15, 3
      %s195 = smul.addr %s194, 4
      %s196 = smul.addr %s195, 4
      %s197 = scalar_lea.vmem %s4, %s196
      %v199 = vld [vmem:[%s3] sm:$0x1]
      %v200 = vld [vmem:[%s1] sm:$0xff]
      %v201 = vld [vmem:[%s1 + $0x8] sm:$0xff]
      %v202 = vld [vmem:[%s1 + $0x10] sm:$0xff]
      %v203 = vld [vmem:[%s1 + $0x18] sm:$0xff]
      %v204 = vld [vmem:[%s192 + $0x18] sm:$0xf]
      %v205 = vld [vmem:[%s192 + $0x1c] sm:$0xf]
      %v206 = vld [vmem:[%s192 + $0x10] sm:$0xf]
      %v207 = vld [vmem:[%s192 + $0x14] sm:$0xf]
      %v208 = vld [vmem:[%s192 + $0x8] sm:$0xf]
      %v209 = vld [vmem:[%s192 + $0xc] sm:$0xf]
      %v210 = vld [vmem:[%s192] sm:$0xf]
      %v211 = vld [vmem:[%s192 + $0x4] sm:$0xf]
      %v214 = vunpack.c.l.b16 %v204
      %v215 = vunpack.c.l.b16 %v205
      %v216 = vpack.c.b16 %v215, %v214
      %v219 = vunpack.c.l.b16 %v206
      %v220 = vunpack.c.l.b16 %v207
      %v221 = vpack.c.b16 %v220, %v219
      %222 = vrot.lane.b32.xlu0 %v221, 127
      %v223 = vpop.permute.xlu0 %222
      %224 = vrot.lane.b32.xlu0 %v216, 127
      %v225 = vpop.permute.xlu0 %224
      %v228 = vunpack.c.l.b16 %v208
      %v229 = vunpack.c.l.b16 %v209
      %v230 = vpack.c.b16 %v229, %v228
      %231 = vrot.lane.b32.xlu0 %v230, 122
      %v232 = vpop.permute.xlu0 %231
      %v235 = vunpack.c.l.b16 %v210
      %v236 = vunpack.c.l.b16 %v211
      %v237 = vpack.c.b16 %v236, %v235
      %238 = vrot.lane.b32.xlu0 %v237, 121
      %v239 = vpop.permute.xlu0 %238
      %240 = vrot.lane.b32.xlu0 %v230, 121
      %v241 = vpop.permute.xlu0 %240
      %242 = vrot.lane.b32.xlu0 %v216, 122
      %v243 = vpop.permute.xlu0 %242
      %244 = vrot.lane.b32.xlu0 %v221, 121
      %v245 = vpop.permute.xlu0 %244
      %246 = vrot.lane.b32.xlu0 %v216, 121
      %v247 = vpop.permute.xlu0 %246
      %v248 = vld [vmem:[%s2] sm:$0xff]
      %v249 = vld [vmem:[%s2 + $0x8] sm:$0xff]
      %v250 = vld [vmem:[%s2 + $0x10] sm:$0xff]
      %v251 = vld [vmem:[%s2 + $0x18] sm:$0xff]
      %253 = vset.pattern.permute.xlu0 0
      %254 = vperm.xlu0 %253, %v248
      %v255 = vpop.permute.xlu0 %254
      %258 = vset.pattern.permute.xlu0 0
      %259 = vperm.xlu0 %258, %v249
      %v260 = vpop.permute.xlu0 %259
      %263 = vset.pattern.permute.xlu0 0
      %264 = vperm.xlu0 %263, %v250
      %v265 = vpop.permute.xlu0 %264
      %268 = vset.pattern.permute.xlu0 0
      %269 = vperm.xlu0 %268, %v251
      %v270 = vpop.permute.xlu0 %269
      %v276 = vunpack.c.l.b16 %v200
      %v277 = vunpack.c.h.b16 %v200
      %v278 = vunpack.c.l.b16 %v201
      %v279 = vunpack.c.h.b16 %v201
      %v280 = vunpack.c.l.b16 %v202
      %v281 = vunpack.c.h.b16 %v202
      %v282 = vunpack.c.l.b16 %v203
      %v283 = vunpack.c.h.b16 %v203
      %v284 = vpack.c.b16 %v278, %v276
      %v285 = vpack.c.b16 %v279, %v277
      %v286 = vpack.c.b16 %v282, %v280
      %v287 = vpack.c.b16 %v283, %v281
      %290 = vrot.lane.b32.xlu0 %v216, 123
      %v291 = vpop.permute.xlu0 %290
      %292 = vrot.lane.b32.xlu0 %v223, 123
      %v293 = vpop.permute.xlu0 %292
      %294 = vrot.lane.b32.xlu0 %v225, 123
      %v295 = vpop.permute.xlu0 %294
      %296 = vrot.lane.b32.xlu0 %v232, 123
      %v297 = vpop.permute.xlu0 %296
      %298 = vrot.lane.b32.xlu0 %v239, 123
      %v299 = vpop.permute.xlu0 %298
      %300 = vrot.lane.b32.xlu0 %v241, 123
      %v301 = vpop.permute.xlu0 %300
      %302 = vrot.lane.b32.xlu0 %v243, 123
      %v303 = vpop.permute.xlu0 %302
      %304 = vrot.lane.b32.xlu0 %v245, 123
      %v305 = vpop.permute.xlu0 %304
      %306 = vrot.lane.b32.xlu0 %v247, 123
      %v307 = vpop.permute.xlu0 %306
      %vm317 = vcmask 130048
      %v319 = vsel %vm317, %v285, 0
      %v322 = vsel %vm317, %v287, 0
      %324 = vmatprep.subr.bf16.mxu0 0
      %325 = vmatpush1.bf16.msra.mxu0 %v291
      %326 = vmatprep.subr.bf16.mxu0 0
      %327 = vmatpush1.bf16.msra.mxu0 %v293
      %328 = vmatprep.subr.bf16.mxu0 0
      %329 = vmatpush1.bf16.msra.mxu0 %v295
      %330 = vmatprep.subr.bf16.mxu0 0
      %331 = vmatpush1.bf16.msra.mxu0 %v297
      %332 = vmatprep.subr.bf16.mxu0 0
      %333 = vmatpush1.bf16.msra.mxu0 %v299
      %334 = vmatprep.subr.bf16.mxu0 0
      %335 = vmatpush1.bf16.msra.mxu0 %v301
      %336 = vmatprep.subr.bf16.mxu0 0
      %337 = vmatpush1.bf16.msra.mxu0 %v303
      %338 = vmatprep.subr.bf16.mxu0 0
      %339 = vmatpush1.bf16.msra.mxu0 %v305
      %340 = vmatprep.subr.bf16.mxu0 0
      %341 = vmatpush1.bf16.msra.mxu0 %v307
      %342 = vmatprep.subr.bf16.mxu0 0
      %343 = vmatpush1.bf16.msra.mxu0 0
      %344 = vmatprep.subr.bf16.mxu0 0
      %345 = vmatpush1.bf16.msra.mxu0 0
      %346 = vmatprep.subr.bf16.mxu0 0
      %347 = vmatpush1.bf16.msra.mxu0 0
      %348 = vmatprep.subr.bf16.mxu0 0
      %349 = vmatpush1.bf16.msra.mxu0 0
      %350 = vmatprep.subr.bf16.mxu0 0
      %351 = vmatpush1.bf16.msra.mxu0 0
      %352 = vmatprep.subr.bf16.mxu0 0
      %353 = vmatpush1.bf16.msra.mxu0 0
      %354 = vmatprep.subr.bf16.mxu0 0
      %355 = vmatpush1.bf16.msra.mxu0 0
      %356 = vmatprep.mubr.bf16.mxu0 %v319
      %357 = vmatmul.mubr.bf16.gmra.mrb[0].mxu0 %v284
      %v358 = vpop.f32.mrb[0].mxu0
      %v359 = vadd.f32 %v255, %v358
      %v360 = vpop.f32.mrb[0].mxu0
      %v361 = vpop.f32.mrb[0].mxu0
      %v362 = vadd.f32 %v260, %v361
      %v363 = vpop.f32.mrb[0].mxu0
      %364 = vmatprep.mubr.bf16.mxu0 %v322
      %365 = vmatmul.mubr.bf16.gmra.mrb[0].mxu0 %v286
      %v366 = vpop.f32.mrb[0].mxu0
      %v367 = vadd.f32 %v265, %v366
      %v368 = vpop.f32.mrb[0].mxu0
      %v369 = vpop.f32.mrb[0].mxu0
      %v370 = vadd.f32 %v270, %v369
      %v371 = vpop.f32.mrb[0].mxu0
      %372 = vdwg.mxu0
      %v373 = vmax.f32 %v359, 0.0
      %v374 = vmax.f32 %v362, 0.0
      %v375 = vmax.f32 %v367, 0.0
      %v376 = vmax.f32 %v370, 0.0
      %v378 = vlaneseq
      %v379 = vshrl.u32 %v378, 7
      %v380 = vsub.s32 0, %v379
      %v381 = vrot.slane %v199, %v380
      %382 = vrot.lane.b32.xlu0 %v381, 116
      %v383 = vpop.permute.xlu0 %382
      %v385 = vmul.f32 %v373, %v383
      %v386 = vmul.f32 %v374, %v383
      %v387 = vmul.f32 %v375, %v383
      %v388 = vmul.f32 %v376, %v383
      %v389 = vpack.c.bf16 %v386, %v385
      %v390 = vpack.c.bf16 %v388, %v387
      %393 = vrot.lane.b32.xlu0 %v389, 12
      %v394 = vpop.permute.xlu0 %393
      %395 = vrot.lane.b32.xlu0 %v390, 12
      %v396 = vpop.permute.xlu0 %395
      %vm397 = vcmask 97280
      %v400 = vsel %vm397, 0, %v394
      %v402 = vsel %vm397, 0, %v396
      %vm403 = vcmask 293888
      %v404 = vsel %vm403, %v400, 0
      %v405 = vsel %vm403, %v402, 0
      %v408 = vunpack.c.l.b16 %v404
      %v409 = vunpack.c.h.b16 %v404
      %v410 = vunpack.c.l.b16 %v405
      %v411 = vunpack.c.h.b16 %v405
      %v412 = vpack.c.b16 %v408, %v408
      %v413 = vpack.c.b16 %v409, %v409
      %v414 = vpack.c.b16 %v410, %v410
      %v415 = vpack.c.b16 %v411, %v411
      %420 = vst [vmem:[%s197] sm:$0xf] %v412
      %421 = vst [vmem:[%s197 + $0x4] sm:$0xf] %v413
      %422 = vst [vmem:[%s197 + $0x8] sm:$0xf] %v414
      %423 = vst [vmem:[%s197 + $0xc] sm:$0xf] %v415
      %p424 = scmp.lt.s32.totalorder %s15, 3
      %s425 = scalar_select %p424, %s15, 3
      %s426 = smul.addr %s425, 4
      %s427 = smul.addr %s426, 4
      %s428 = scalar_lea.vmem %s4, %s427
      // Predicated region
      $region37: #{mfe_backbone_forward.15} parent=35 // pred_check
        %p429 = pneg %p122
      $region38: #{mfe_backbone_forward.15} parent=35 // pred_check_branch
        %431 = sbr.rel (%p429) target = $region40
      $region39: #{mfe_backbone_forward.15} parent=35 // pred_region
        _
      $region40: #{mfe_backbone_forward.15} parent=35 // pred_fallthru
        _
    $region36: #{mfe_backbone_forward.15} parent=5 // pred_fallthru
      _
    %p432 = scmp.le.s32.totalorder 2, %s10
    // Predicated region
    $region41: #{mfe_backbone_forward.15} parent=5 // pred_check
      %p433 = pneg %p432
    $region42: #{mfe_backbone_forward.15} parent=5 // pred_check_branch
      %435 = sbr.rel (%p433) target = $region44
    $region43: #{mfe_backbone_forward.15} parent=5 // pred_region
      %s436 = ssub.s32 %s10, 2
      // Predicated region
      $region45: #{mfe_backbone_forward.15} parent=43 // pred_check
        %p437 = pneg %p128
      $region46: #{mfe_backbone_forward.15} parent=43 // pred_check_branch
        %439 = sbr.rel (%p437) target = $region48
      $region47: #{mfe_backbone_forward.15} parent=43 // pred_region
        %p440 = scmp.lt.s32.totalorder %s16, 3
        %s441 = scalar_select %p440, %s16, 3
        %s442 = smul.addr %s441, 4
        %s443 = smul.addr %s442, 4
        %s444 = scalar_lea.vmem %s4, %s443
      $region48: #{mfe_backbone_forward.15} parent=43 // pred_fallthru
        _
    $region44: #{mfe_backbone_forward.15} parent=5 // pred_fallthru
      _
  $region6: #{mfe_backbone_forward.15} parent=0 // loop_footer
    %s14 = sadd.s32 1, %s10
  $region7: #{mfe_backbone_forward.15} parent=0 // loop_footer_branch
    %9 = sbr.rel target = $region3
  $region8: #{mfe_backbone_forward.15} parent=0 // loop_exit
    _

// kernel: mfe_backbone_forward.17
$region0: #{mfe_backbone_forward.17}
  #allocation0 [shape = 'u32[]', space=smem, size = 0x4, offset = 0x4, fixed_abs, tag = 'smem constant byte address 0x4 - core index']
  #allocation1 [shape = 'u32[144,128]{1,0:T(1,128)}', space=vmem, size = 0x12000, scoped, tag = 'internal scratch']
  %s0 = inlined_call_operand.vmem [shape: bf16[4,32,128], index: 0, kind: input, shape index: {}]
  %s1 = inlined_call_operand.vmem [shape: bf16[32,32], index: 1, kind: input, shape index: {}]
  %s2 = inlined_call_operand.vmem [shape: f32[32,1], index: 2, kind: input, shape index: {}]
  %s3 = inlined_call_operand.vmem [shape: f32[1,128], index: 3, kind: input, shape index: {}]
  %s4 = inlined_call_operand.vmem [shape: bf16[4,32,128], index: 4, kind: output, shape index: {}]
  %s5 = sld [smem:[#allocation0]]
  $region49: #{mfe_backbone_forward.17} parent=0
    _
  %s7 = ssub.s32 1, %s5
  %s8 = scalar_select 0, %s7, %s5
  loop: start=0, step=1, limit=6
  $region2: #{mfe_backbone_forward.17} parent=0 // loop_pre_header
    _
  $region3: #{mfe_backbone_forward.17} parent=0 // loop_header
    %s10 = sphi 0, %s14
    %p11 = scmp.ge.s32.totalorder %s10, 6
    %s20 = sphi 0, %s22
    %s23 = sphi 0, %s20
    %s24 = sphi 0, %s23
    %s40 = sphi 0, %s24
    %s44 = sphi 0, %s44
    %s46 = sphi 0, %s44
    %s47 = sphi 0, %s46
    %s61 = sphi 0, %s47
    %s65 = sphi 0, %s65
    %s67 = sphi 0, %s65
    %s68 = sphi 0, %s67
    %s82 = sphi 0, %s68
    %s86 = sphi 0, %s86
    %s88 = sphi 0, %s86
    %s89 = sphi 0, %s88
    %s103 = sphi 0, %s89
    %s109 = sphi 0, %s111
    %s112 = sphi 0, %s109
    %s113 = sphi 0, %s112
    %s129 = sphi 0, %s113
  $region4: #{mfe_backbone_forward.17} parent=0 // loop_header_branch
    %13 = sbr.rel (%p11) target = $region8
  $region5: #{mfe_backbone_forward.17} parent=0 // loop_body
    %s15 = ssub.s32 %s10, 1
    %s16 = ssub.s32 %s10, 2
    %s17 = sadd.s32 %s10, 1
    %s18 = ssub.s32 %s10, %s17
    %p19 = scmp.eq.s32.totalorder %s18, 0
    %s21 = sadd.s32 %s20, 1
    %s22 = scalar_select %p19, %s20, %s21
    %p25 = pneg %p19
    %p26 = scmp.eq.s32.totalorder %s10, 3
    %p27 = por %p25, %p26
    %p28 = scmp.ne.s32.totalorder %s20, %s23
    %p29 = scmp.eq.s32.totalorder %s10, 0
    %p30 = por %p28, %p29
    %p31 = scmp.ne.s32.totalorder %s20, %s23
    %p32 = scmp.eq.s32.totalorder %s15, 3
    %p33 = por %p31, %p32
    %p34 = scmp.ne.s32.totalorder %s23, %s24
    %p35 = scmp.eq.s32.totalorder %s15, 0
    %p36 = por %p34, %p35
    %p37 = scmp.ne.s32.totalorder %s23, %s24
    %p38 = scmp.eq.s32.totalorder %s16, 3
    %p39 = por %p37, %p38
    %p41 = scmp.ne.s32.totalorder %s24, %s40
    %p42 = scmp.eq.s32.totalorder %s16, 0
    %p43 = por %p41, %p42
    %s45 = sadd.s32 %s44, 1
    %p48 = scmp.eq.s32.totalorder %s10, 3
    %p49 = scmp.ne.s32.totalorder %s44, %s46
    %p50 = scmp.eq.s32.totalorder %s10, 0
    %p51 = por %p49, %p50
    %p52 = scmp.ne.s32.totalorder %s44, %s46
    %p53 = scmp.eq.s32.totalorder %s15, 3
    %p54 = por %p52, %p53
    %p55 = scmp.ne.s32.totalorder %s46, %s47
    %p56 = scmp.eq.s32.totalorder %s15, 0
    %p57 = por %p55, %p56
    %p58 = scmp.ne.s32.totalorder %s46, %s47
    %p59 = scmp.eq.s32.totalorder %s16, 3
    %p60 = por %p58, %p59
    %p62 = scmp.ne.s32.totalorder %s47, %s61
    %p63 = scmp.eq.s32.totalorder %s16, 0
    %p64 = por %p62, %p63
    %s66 = sadd.s32 %s65, 1
    %p69 = scmp.eq.s32.totalorder %s10, 3
    %p70 = scmp.ne.s32.totalorder %s65, %s67
    %p71 = scmp.eq.s32.totalorder %s10, 0
    %p72 = por %p70, %p71
    %p73 = scmp.ne.s32.totalorder %s65, %s67
    %p74 = scmp.eq.s32.totalorder %s15, 3
    %p75 = por %p73, %p74
    %p76 = scmp.ne.s32.totalorder %s67, %s68
    %p77 = scmp.eq.s32.totalorder %s15, 0
    %p78 = por %p76, %p77
    %p79 = scmp.ne.s32.totalorder %s67, %s68
    %p80 = scmp.eq.s32.totalorder %s16, 3
    %p81 = por %p79, %p80
    %p83 = scmp.ne.s32.totalorder %s68, %s82
    %p84 = scmp.eq.s32.totalorder %s16, 0
    %p85 = por %p83, %p84
    %s87 = sadd.s32 %s86, 1
    %p90 = scmp.eq.s32.totalorder %s10, 3
    %p91 = scmp.ne.s32.totalorder %s86, %s88
    %p92 = scmp.eq.s32.totalorder %s10, 0
    %p93 = por %p91, %p92
    %p94 = scmp.ne.s32.totalorder %s86, %s88
    %p95 = scmp.eq.s32.totalorder %s15, 3
    %p96 = por %p94, %p95
    %p97 = scmp.ne.s32.totalorder %s88, %s89
    %p98 = scmp.eq.s32.totalorder %s15, 0
    %p99 = por %p97, %p98
    %p100 = scmp.ne.s32.totalorder %s88, %s89
    %p101 = scmp.eq.s32.totalorder %s16, 3
    %p102 = por %p100, %p101
    %p104 = scmp.ne.s32.totalorder %s89, %s103
    %p105 = scmp.eq.s32.totalorder %s16, 0
    %p106 = por %p104, %p105
    %s107 = ssub.s32 %s10, %s17
    %p108 = scmp.eq.s32.totalorder %s107, 0
    %s110 = sadd.s32 %s109, 1
    %s111 = scalar_select %p108, %s109, %s110
    %p114 = pneg %p108
    %p115 = scmp.eq.s32.totalorder %s10, 3
    %p116 = por %p114, %p115
    %p117 = scmp.ne.s32.totalorder %s109, %s112
    %p118 = scmp.eq.s32.totalorder %s10, 0
    %p119 = por %p117, %p118
    %p120 = scmp.ne.s32.totalorder %s109, %s112
    %p121 = scmp.eq.s32.totalorder %s15, 3
    %p122 = por %p120, %p121
    %p123 = scmp.ne.s32.totalorder %s112, %s113
    %p124 = scmp.eq.s32.totalorder %s15, 0
    %p125 = por %p123, %p124
    %p126 = scmp.ne.s32.totalorder %s112, %s113
    %p127 = scmp.eq.s32.totalorder %s16, 3
    %p128 = por %p126, %p127
    %p130 = scmp.ne.s32.totalorder %s113, %s129
    %p131 = scmp.eq.s32.totalorder %s16, 0
    %p132 = por %p130, %p131
    %p133 = scmp.le.s32.totalorder 1, %s10
    %p134 = scmp.lt.s32.totalorder %s10, 5
    %p135 = pnand %p133, %p134
    %p136 = pneg %p135
    // Predicated region
    $region9: #{mfe_backbone_forward.17} parent=5 // pred_check
      _
    $region10: #{mfe_backbone_forward.17} parent=5 // pred_check_branch
      %138 = sbr.rel (%p135) target = $region12
    $region11: #{mfe_backbone_forward.17} parent=5 // pred_region
      %s139 = ssub.s32 %s10, 1
      // Predicated region
      $region13: #{mfe_backbone_forward.17} parent=11 // pred_check
        %p140 = pneg %p57
      $region14: #{mfe_backbone_forward.17} parent=11 // pred_check_branch
        %142 = sbr.rel (%p140) target = $region16
      $region15: #{mfe_backbone_forward.17} parent=11 // pred_region
        _
      $region16: #{mfe_backbone_forward.17} parent=11 // pred_fallthru
        _
      // Predicated region
      $region17: #{mfe_backbone_forward.17} parent=11 // pred_check
        %p143 = pneg %p78
      $region18: #{mfe_backbone_forward.17} parent=11 // pred_check_branch
        %145 = sbr.rel (%p143) target = $region20
      $region19: #{mfe_backbone_forward.17} parent=11 // pred_region
        _
      $region20: #{mfe_backbone_forward.17} parent=11 // pred_fallthru
        _
      // Predicated region
      $region21: #{mfe_backbone_forward.17} parent=11 // pred_check
        %p146 = pneg %p99
      $region22: #{mfe_backbone_forward.17} parent=11 // pred_check_branch
        %148 = sbr.rel (%p146) target = $region24
      $region23: #{mfe_backbone_forward.17} parent=11 // pred_region
        _
      $region24: #{mfe_backbone_forward.17} parent=11 // pred_fallthru
        _
    $region12: #{mfe_backbone_forward.17} parent=5 // pred_fallthru
      _
    %p149 = scmp.lt.s32.totalorder %s10, 4
    // Predicated region
    $region25: #{mfe_backbone_forward.17} parent=5 // pred_check
      %p150 = pneg %p149
    $region26: #{mfe_backbone_forward.17} parent=5 // pred_check_branch
      %152 = sbr.rel (%p150) target = $region28
    $region27: #{mfe_backbone_forward.17} parent=5 // pred_region
      // Predicated region
      $region29: #{mfe_backbone_forward.17} parent=27 // pred_check
        %p153 = pneg %p30
      $region30: #{mfe_backbone_forward.17} parent=27 // pred_check_branch
        %155 = sbr.rel (%p153) target = $region32
      $region31: #{mfe_backbone_forward.17} parent=27 // pred_region
        %p156 = scmp.lt.s32.totalorder %s10, 3
        %s157 = scalar_select %p156, %s10, 3
        %s158 = smul.addr %s157, 4
        %s159 = smul.addr %s158, 4
        %s160 = scalar_lea.vmem %s0, %s159
      $region32: #{mfe_backbone_forward.17} parent=27 // pred_fallthru
        _
    $region28: #{mfe_backbone_forward.17} parent=5 // pred_fallthru
      _
    %p161 = scmp.le.s32.totalorder 1, %s10
    %p162 = scmp.lt.s32.totalorder %s10, 5
    %p163 = pnand %p161, %p162
    %p164 = pneg %p163
    // Predicated region
    $region33: #{mfe_backbone_forward.17} parent=5 // pred_check
      _
    $region34: #{mfe_backbone_forward.17} parent=5 // pred_check_branch
      %166 = sbr.rel (%p163) target = $region36
    $region35: #{mfe_backbone_forward.17} parent=5 // pred_region
      %s167 = ssub.s32 %s10, 1
      %p168 = scmp.lt.s32.totalorder %s15, 3
      %s169 = scalar_select %p168, %s15, 3
      %s170 = smul.addr %s169, 4
      %s171 = smul.addr %s170, 4
      %s172 = scalar_lea.vmem %s0, %s171
      %p173 = pneg %p36
      %p174 = pneg %p33
      %p175 = pneg %p57
      %p176 = pneg %p54
      %p177 = pneg %p78
      %p178 = pneg %p75
      %p179 = pneg %p99
      %p180 = pneg %p96
      %p181 = pneg %p125
      %p182 = pneg %p122
      %p183 = scmp.lt.s32.totalorder %s15, 3
      %s184 = scalar_select %p183, %s15, 3
      %s185 = smul.addr %s184, 4
      %s186 = smul.addr %s185, 4
      %s187 = scalar_lea.vmem %s4, %s186
      %p188 = scmp.lt.s32.totalorder %s15, 3
      %s189 = scalar_select %p188, %s15, 3
      %s190 = smul.addr %s189, 4
      %s191 = smul.addr %s190, 4
      %s192 = scalar_lea.vmem %s0, %s191
      %p193 = scmp.lt.s32.totalorder %s15, 3
      %s194 = scalar_select %p193, %s15, 3
      %s195 = smul.addr %s194, 4
      %s196 = smul.addr %s195, 4
      %s197 = scalar_lea.vmem %s4, %s196
      %v199 = vld [vmem:[%s3] sm:$0x1]
      %v200 = vld [vmem:[%s1] sm:$0xf]
      %v201 = vld [vmem:[%s1 + $0x4] sm:$0xf]
      %v202 = vld [vmem:[%s1 + $0x8] sm:$0xf]
      %v203 = vld [vmem:[%s1 + $0xc] sm:$0xf]
      %v204 = vld [vmem:[%s192] sm:$0xf]
      %v205 = vld [vmem:[%s192 + $0x4] sm:$0xf]
      %v206 = vld [vmem:[%s192 + $0x8] sm:$0xf]
      %v207 = vld [vmem:[%s192 + $0xc] sm:$0xf]
      %v208 = vld [vmem:[%s2] sm:$0xff]
      %v209 = vld [vmem:[%s2 + $0x8] sm:$0xff]
      %v210 = vld [vmem:[%s2 + $0x10] sm:$0xff]
      %v211 = vld [vmem:[%s2 + $0x18] sm:$0xff]
      %213 = vset.pattern.permute.xlu0 0
      %214 = vperm.xlu0 %213, %v208
      %v215 = vpop.permute.xlu0 %214
      %218 = vset.pattern.permute.xlu0 0
      %219 = vperm.xlu0 %218, %v209
      %v220 = vpop.permute.xlu0 %219
      %223 = vset.pattern.permute.xlu0 0
      %224 = vperm.xlu0 %223, %v210
      %v225 = vpop.permute.xlu0 %224
      %228 = vset.pattern.permute.xlu0 0
      %229 = vperm.xlu0 %228, %v211
      %v230 = vpop.permute.xlu0 %229
      %v236 = vunpack.c.l.b16 %v200
      %v237 = vunpack.c.l.b16 %v201
      %v238 = vunpack.c.l.b16 %v202
      %v239 = vunpack.c.l.b16 %v203
      %v240 = vpack.c.b16 %v237, %v236
      %v241 = vpack.c.b16 %v239, %v238
      %v246 = vunpack.c.l.b16 %v204
      %v247 = vunpack.c.l.b16 %v205
      %v248 = vunpack.c.l.b16 %v206
      %v249 = vunpack.c.l.b16 %v207
      %v250 = vpack.c.b16 %v247, %v246
      %v251 = vpack.c.b16 %v249, %v248
      %252 = vrot.lane.b32.xlu0 %v250, 116
      %v253 = vpop.permute.xlu0 %252
      %254 = vrot.lane.b32.xlu0 %v251, 116
      %v255 = vpop.permute.xlu0 %254
      %vm258 = vcmask 261120
      %v260 = vsel %vm258, %v240, 0
      %v263 = vsel %vm258, %v241, 0
      %265 = vmatprep.subr.bf16.mxu0 0
      %266 = vmatpush1.bf16.msra.mxu0 %v253
      %267 = vmatprep.subr.bf16.mxu0 0
      %268 = vmatpush1.bf16.msra.mxu0 %v255
      %269 = vmatprep.subr.bf16.mxu0 0
      %270 = vmatpush1.bf16.msra.mxu0 0
      %271 = vmatprep.subr.bf16.mxu0 0
      %272 = vmatpush1.bf16.msra.mxu0 0
      %273 = vmatprep.subr.bf16.mxu0 0
      %274 = vmatpush1.bf16.msra.mxu0 0
      %275 = vmatprep.subr.bf16.mxu0 0
      %276 = vmatpush1.bf16.msra.mxu0 0
      %277 = vmatprep.subr.bf16.mxu0 0
      %278 = vmatpush1.bf16.msra.mxu0 0
      %279 = vmatprep.subr.bf16.mxu0 0
      %280 = vmatpush1.bf16.msra.mxu0 0
      %281 = vmatprep.subr.bf16.mxu0 0
      %282 = vmatpush1.bf16.msra.mxu0 0
      %283 = vmatprep.subr.bf16.mxu0 0
      %284 = vmatpush1.bf16.msra.mxu0 0
      %285 = vmatprep.subr.bf16.mxu0 0
      %286 = vmatpush1.bf16.msra.mxu0 0
      %287 = vmatprep.subr.bf16.mxu0 0
      %288 = vmatpush1.bf16.msra.mxu0 0
      %289 = vmatprep.subr.bf16.mxu0 0
      %290 = vmatpush1.bf16.msra.mxu0 0
      %291 = vmatprep.subr.bf16.mxu0 0
      %292 = vmatpush1.bf16.msra.mxu0 0
      %293 = vmatprep.subr.bf16.mxu0 0
      %294 = vmatpush1.bf16.msra.mxu0 0
      %295 = vmatprep.subr.bf16.mxu0 0
      %296 = vmatpush1.bf16.msra.mxu0 0
      %297 = vmatprep.mubr.bf16.mxu0 0
      %298 = vmatmul.mubr.bf16.gmra.mrb[0].mxu0 %v260
      %v299 = vpop.f32.mrb[0].mxu0
      %v300 = vadd.f32 %v215, %v299
      %v301 = vpop.f32.mrb[0].mxu0
      %v302 = vpop.f32.mrb[0].mxu0
      %v303 = vadd.f32 %v220, %v302
      %v304 = vpop.f32.mrb[0].mxu0
      %305 = vmatprep.mubr.bf16.mxu0 0
      %306 = vmatmul.mubr.bf16.gmra.mrb[0].mxu0 %v263
      %v307 = vpop.f32.mrb[0].mxu0
      %v308 = vadd.f32 %v225, %v307
      %v309 = vpop.f32.mrb[0].mxu0
      %v310 = vpop.f32.mrb[0].mxu0
      %v311 = vadd.f32 %v230, %v310
      %v312 = vpop.f32.mrb[0].mxu0
      %313 = vdwg.mxu0
      %v315 = vlaneseq
      %v316 = vshrl.u32 %v315, 7
      %v317 = vsub.s32 0, %v316
      %v318 = vrot.slane %v199, %v317
      %319 = vrot.lane.b32.xlu0 %v318, 116
      %v320 = vpop.permute.xlu0 %319
      %v322 = vmul.f32 %v300, %v320
      %v323 = vmul.f32 %v303, %v320
      %v324 = vmul.f32 %v308, %v320
      %v325 = vmul.f32 %v311, %v320
      %v326 = vpack.c.bf16 %v323, %v322
      %v327 = vpack.c.bf16 %v325, %v324
      %330 = vrot.lane.b32.xlu0 %v326, 12
      %v331 = vpop.permute.xlu0 %330
      %332 = vrot.lane.b32.xlu0 %v327, 12
      %v333 = vpop.permute.xlu0 %332
      %vm334 = vcmask 97280
      %v337 = vsel %vm334, 0, %v331
      %v339 = vsel %vm334, 0, %v333
      %vm340 = vcmask 293888
      %v341 = vsel %vm340, %v337, 0
      %v342 = vsel %vm340, %v339, 0
      %v345 = vunpack.c.l.b16 %v341
      %v346 = vunpack.c.h.b16 %v341
      %v347 = vunpack.c.l.b16 %v342
      %v348 = vunpack.c.h.b16 %v342
      %v349 = vpack.c.b16 %v345, %v345
      %v350 = vpack.c.b16 %v346, %v346
      %v351 = vpack.c.b16 %v347, %v347
      %v352 = vpack.c.b16 %v348, %v348
      %357 = vst [vmem:[%s197] sm:$0xf] %v349
      %358 = vst [vmem:[%s197 + $0x4] sm:$0xf] %v350
      %359 = vst [vmem:[%s197 + $0x8] sm:$0xf] %v351
      %360 = vst [vmem:[%s197 + $0xc] sm:$0xf] %v352
      %p361 = scmp.lt.s32.totalorder %s15, 3
      %s362 = scalar_select %p361, %s15, 3
      %s363 = smul.addr %s362, 4
      %s364 = smul.addr %s363, 4
      %s365 = scalar_lea.vmem %s4, %s364
      // Predicated region
      $region37: #{mfe_backbone_forward.17} parent=35 // pred_check
        %p366 = pneg %p122
      $region38: #{mfe_backbone_forward.17} parent=35 // pred_check_branch
        %368 = sbr.rel (%p366) target = $region40
      $region39: #{mfe_backbone_forward.17} parent=35 // pred_region
        _
      $region40: #{mfe_backbone_forward.17} parent=35 // pred_fallthru
        _
    $region36: #{mfe_backbone_forward.17} parent=5 // pred_fallthru
      _
    %p369 = scmp.le.s32.totalorder 2, %s10
    // Predicated region
    $region41: #{mfe_backbone_forward.17} parent=5 // pred_check
      %p370 = pneg %p369
    $region42: #{mfe_backbone_forward.17} parent=5 // pred_check_branch
      %372 = sbr.rel (%p370) target = $region44
    $region43: #{mfe_backbone_forward.17} parent=5 // pred_region
      %s373 = ssub.s32 %s10, 2
      // Predicated region
      $region45: #{mfe_backbone_forward.17} parent=43 // pred_check
        %p374 = pneg %p128
      $region46: #{mfe_backbone_forward.17} parent=43 // pred_check_branch
        %376 = sbr.rel (%p374) target = $region48
      $region47: #{mfe_backbone_forward.17} parent=43 // pred_region
        %p377 = scmp.lt.s32.totalorder %s16, 3
        %s378 = scalar_select %p377, %s16, 3
        %s379 = smul.addr %s378, 4
        %s380 = smul.addr %s379, 4
        %s381 = scalar_lea.vmem %s4, %s380
      $region48: #{mfe_backbone_forward.17} parent=43 // pred_fallthru
        _
    $region44: #{mfe_backbone_forward.17} parent=5 // pred_fallthru
      _
  $region6: #{mfe_backbone_forward.17} parent=0 // loop_footer
    %s14 = sadd.s32 1, %s10
  $region7: #{mfe_backbone_forward.17} parent=0 // loop_footer_branch
    %9 = sbr.rel target = $region3
  $region8: #{mfe_backbone_forward.17} parent=0 // loop_exit
    _

// kernel: mfe_backbone_forward.16
$region0: #{mfe_backbone_forward.16}
  #allocation0 [shape = 'u32[]', space=smem, size = 0x4, offset = 0x4, fixed_abs, tag = 'smem constant byte address 0x4 - core index']
  #allocation1 [shape = 'u32[144,128]{1,0:T(1,128)}', space=vmem, size = 0x12000, scoped, tag = 'internal scratch']
  #allocation2 [shape = 'bf16[32,128]{1,0:T(16,128)(2,1)}', space=vmem, size = 0x2000, scoped, tag = 'scratch operand']
  %s0 = inlined_call_operand.vmem [shape: bf16[4,32,128], index: 0, kind: input, shape index: {}]
  %s1 = inlined_call_operand.vmem [shape: bf16[32,288], index: 1, kind: input, shape index: {}]
  %s2 = inlined_call_operand.vmem [shape: f32[32,1], index: 2, kind: input, shape index: {}]
  %s3 = inlined_call_operand.vmem [shape: bf16[32,288], index: 3, kind: input, shape index: {}]
  %s4 = inlined_call_operand.vmem [shape: f32[32,1], index: 4, kind: input, shape index: {}]
  %s5 = inlined_call_operand.vmem [shape: f32[1,128], index: 5, kind: input, shape index: {}]
  %s6 = inlined_call_operand.vmem [shape: bf16[4,32,128], index: 6, kind: output, shape index: {}]
  %s7 = sld [smem:[#allocation0]]
  $region57: #{mfe_backbone_forward.16} parent=0
    _
  %s9 = ssub.s32 1, %s7
  %s10 = scalar_select 0, %s9, %s7
  loop: start=0, step=1, limit=6
  $region2: #{mfe_backbone_forward.16} parent=0 // loop_pre_header
    _
  $region3: #{mfe_backbone_forward.16} parent=0 // loop_header
    %s12 = sphi 0, %s16
    %p13 = scmp.ge.s32.totalorder %s12, 6
    %s22 = sphi 0, %s24
    %s25 = sphi 0, %s22
    %s26 = sphi 0, %s25
    %s42 = sphi 0, %s26
    %s46 = sphi 0, %s46
    %s48 = sphi 0, %s46
    %s49 = sphi 0, %s48
    %s63 = sphi 0, %s49
    %s67 = sphi 0, %s67
    %s69 = sphi 0, %s67
    %s70 = sphi 0, %s69
    %s84 = sphi 0, %s70
    %s88 = sphi 0, %s88
    %s90 = sphi 0, %s88
    %s91 = sphi 0, %s90
    %s105 = sphi 0, %s91
    %s109 = sphi 0, %s109
    %s111 = sphi 0, %s109
    %s112 = sphi 0, %s111
    %s126 = sphi 0, %s112
    %s130 = sphi 0, %s130
    %s132 = sphi 0, %s130
    %s133 = sphi 0, %s132
    %s147 = sphi 0, %s133
    %s153 = sphi 0, %s155
    %s156 = sphi 0, %s153
    %s157 = sphi 0, %s156
    %s173 = sphi 0, %s157
  $region4: #{mfe_backbone_forward.16} parent=0 // loop_header_branch
    %15 = sbr.rel (%p13) target = $region8
  $region5: #{mfe_backbone_forward.16} parent=0 // loop_body
    %s17 = ssub.s32 %s12, 1
    %s18 = ssub.s32 %s12, 2
    %s19 = sadd.s32 %s12, 1
    %s20 = ssub.s32 %s12, %s19
    %p21 = scmp.eq.s32.totalorder %s20, 0
    %s23 = sadd.s32 %s22, 1
    %s24 = scalar_select %p21, %s22, %s23
    %p27 = pneg %p21
    %p28 = scmp.eq.s32.totalorder %s12, 3
    %p29 = por %p27, %p28
    %p30 = scmp.ne.s32.totalorder %s22, %s25
    %p31 = scmp.eq.s32.totalorder %s12, 0
    %p32 = por %p30, %p31
    %p33 = scmp.ne.s32.totalorder %s22, %s25
    %p34 = scmp.eq.s32.totalorder %s17, 3
    %p35 = por %p33, %p34
    %p36 = scmp.ne.s32.totalorder %s25, %s26
    %p37 = scmp.eq.s32.totalorder %s17, 0
    %p38 = por %p36, %p37
    %p39 = scmp.ne.s32.totalorder %s25, %s26
    %p40 = scmp.eq.s32.totalorder %s18, 3
    %p41 = por %p39, %p40
    %p43 = scmp.ne.s32.totalorder %s26, %s42
    %p44 = scmp.eq.s32.totalorder %s18, 0
    %p45 = por %p43, %p44
    %s47 = sadd.s32 %s46, 1
    %p50 = scmp.eq.s32.totalorder %s12, 3
    %p51 = scmp.ne.s32.totalorder %s46, %s48
    %p52 = scmp.eq.s32.totalorder %s12, 0
    %p53 = por %p51, %p52
    %p54 = scmp.ne.s32.totalorder %s46, %s48
    %p55 = scmp.eq.s32.totalorder %s17, 3
    %p56 = por %p54, %p55
    %p57 = scmp.ne.s32.totalorder %s48, %s49
    %p58 = scmp.eq.s32.totalorder %s17, 0
    %p59 = por %p57, %p58
    %p60 = scmp.ne.s32.totalorder %s48, %s49
    %p61 = scmp.eq.s32.totalorder %s18, 3
    %p62 = por %p60, %p61
    %p64 = scmp.ne.s32.totalorder %s49, %s63
    %p65 = scmp.eq.s32.totalorder %s18, 0
    %p66 = por %p64, %p65
    %s68 = sadd.s32 %s67, 1
    %p71 = scmp.eq.s32.totalorder %s12, 3
    %p72 = scmp.ne.s32.totalorder %s67, %s69
    %p73 = scmp.eq.s32.totalorder %s12, 0
    %p74 = por %p72, %p73
    %p75 = scmp.ne.s32.totalorder %s67, %s69
    %p76 = scmp.eq.s32.totalorder %s17, 3
    %p77 = por %p75, %p76
    %p78 = scmp.ne.s32.totalorder %s69, %s70
    %p79 = scmp.eq.s32.totalorder %s17, 0
    %p80 = por %p78, %p79
    %p81 = scmp.ne.s32.totalorder %s69, %s70
    %p82 = scmp.eq.s32.totalorder %s18, 3
    %p83 = por %p81, %p82
    %p85 = scmp.ne.s32.totalorder %s70, %s84
    %p86 = scmp.eq.s32.totalorder %s18, 0
    %p87 = por %p85, %p86
    %s89 = sadd.s32 %s88, 1
    %p92 = scmp.eq.s32.totalorder %s12, 3
    %p93 = scmp.ne.s32.totalorder %s88, %s90
    %p94 = scmp.eq.s32.totalorder %s12, 0
    %p95 = por %p93, %p94
    %p96 = scmp.ne.s32.totalorder %s88, %s90
    %p97 = scmp.eq.s32.totalorder %s17, 3
    %p98 = por %p96, %p97
    %p99 = scmp.ne.s32.totalorder %s90, %s91
    %p100 = scmp.eq.s32.totalorder %s17, 0
    %p101 = por %p99, %p100
    %p102 = scmp.ne.s32.totalorder %s90, %s91
    %p103 = scmp.eq.s32.totalorder %s18, 3
    %p104 = por %p102, %p103
    %p106 = scmp.ne.s32.totalorder %s91, %s105
    %p107 = scmp.eq.s32.totalorder %s18, 0
    %p108 = por %p106, %p107
    %s110 = sadd.s32 %s109, 1
    %p113 = scmp.eq.s32.totalorder %s12, 3
    %p114 = scmp.ne.s32.totalorder %s109, %s111
    %p115 = scmp.eq.s32.totalorder %s12, 0
    %p116 = por %p114, %p115
    %p117 = scmp.ne.s32.totalorder %s109, %s111
    %p118 = scmp.eq.s32.totalorder %s17, 3
    %p119 = por %p117, %p118
    %p120 = scmp.ne.s32.totalorder %s111, %s112
    %p121 = scmp.eq.s32.totalorder %s17, 0
    %p122 = por %p120, %p121
    %p123 = scmp.ne.s32.totalorder %s111, %s112
    %p124 = scmp.eq.s32.totalorder %s18, 3
    %p125 = por %p123, %p124
    %p127 = scmp.ne.s32.totalorder %s112, %s126
    %p128 = scmp.eq.s32.totalorder %s18, 0
    %p129 = por %p127, %p128
    %s131 = sadd.s32 %s130, 1
    %p134 = scmp.eq.s32.totalorder %s12, 3
    %p135 = scmp.ne.s32.totalorder %s130, %s132
    %p136 = scmp.eq.s32.totalorder %s12, 0
    %p137 = por %p135, %p136
    %p138 = scmp.ne.s32.totalorder %s130, %s132
    %p139 = scmp.eq.s32.totalorder %s17, 3
    %p140 = por %p138, %p139
    %p141 = scmp.ne.s32.totalorder %s132, %s133
    %p142 = scmp.eq.s32.totalorder %s17, 0
    %p143 = por %p141, %p142
    %p144 = scmp.ne.s32.totalorder %s132, %s133
    %p145 = scmp.eq.s32.totalorder %s18, 3
    %p146 = por %p144, %p145
    %p148 = scmp.ne.s32.totalorder %s133, %s147
    %p149 = scmp.eq.s32.totalorder %s18, 0
    %p150 = por %p148, %p149
    %s151 = ssub.s32 %s12, %s19
    %p152 = scmp.eq.s32.totalorder %s151, 0
    %s154 = sadd.s32 %s153, 1
    %s155 = scalar_select %p152, %s153, %s154
    %p158 = pneg %p152
    %p159 = scmp.eq.s32.totalorder %s12, 3
    %p160 = por %p158, %p159
    %p161 = scmp.ne.s32.totalorder %s153, %s156
    %p162 = scmp.eq.s32.totalorder %s12, 0
    %p163 = por %p161, %p162
    %p164 = scmp.ne.s32.totalorder %s153, %s156
    %p165 = scmp.eq.s32.totalorder %s17, 3
    %p166 = por %p164, %p165
    %p167 = scmp.ne.s32.totalorder %s156, %s157
    %p168 = scmp.eq.s32.totalorder %s17, 0
    %p169 = por %p167, %p168
    %p170 = scmp.ne.s32.totalorder %s156, %s157
    %p171 = scmp.eq.s32.totalorder %s18, 3
    %p172 = por %p170, %p171
    %p174 = scmp.ne.s32.totalorder %s157, %s173
    %p175 = scmp.eq.s32.totalorder %s18, 0
    %p176 = por %p174, %p175
    %p177 = scmp.le.s32.totalorder 1, %s12
    %p178 = scmp.lt.s32.totalorder %s12, 5
    %p179 = pnand %p177, %p178
    %p180 = pneg %p179
    // Predicated region
    $region9: #{mfe_backbone_forward.16} parent=5 // pred_check
      _
    $region10: #{mfe_backbone_forward.16} parent=5 // pred_check_branch
      %182 = sbr.rel (%p179) target = $region12
    $region11: #{mfe_backbone_forward.16} parent=5 // pred_region
      %s183 = ssub.s32 %s12, 1
      // Predicated region
      $region13: #{mfe_backbone_forward.16} parent=11 // pred_check
        %p184 = pneg %p59
      $region14: #{mfe_backbone_forward.16} parent=11 // pred_check_branch
        %186 = sbr.rel (%p184) target = $region16
      $region15: #{mfe_backbone_forward.16} parent=11 // pred_region
        _
      $region16: #{mfe_backbone_forward.16} parent=11 // pred_fallthru
        _
      // Predicated region
      $region17: #{mfe_backbone_forward.16} parent=11 // pred_check
        %p187 = pneg %p80
      $region18: #{mfe_backbone_forward.16} parent=11 // pred_check_branch
        %189 = sbr.rel (%p187) target = $region20
      $region19: #{mfe_backbone_forward.16} parent=11 // pred_region
        _
      $region20: #{mfe_backbone_forward.16} parent=11 // pred_fallthru
        _
      // Predicated region
      $region21: #{mfe_backbone_forward.16} parent=11 // pred_check
        %p190 = pneg %p101
      $region22: #{mfe_backbone_forward.16} parent=11 // pred_check_branch
        %192 = sbr.rel (%p190) target = $region24
      $region23: #{mfe_backbone_forward.16} parent=11 // pred_region
        _
      $region24: #{mfe_backbone_forward.16} parent=11 // pred_fallthru
        _
      // Predicated region
      $region25: #{mfe_backbone_forward.16} parent=11 // pred_check
        %p193 = pneg %p122
      $region26: #{mfe_backbone_forward.16} parent=11 // pred_check_branch
        %195 = sbr.rel (%p193) target = $region28
      $region27: #{mfe_backbone_forward.16} parent=11 // pred_region
        _
      $region28: #{mfe_backbone_forward.16} parent=11 // pred_fallthru
        _
      // Predicated region
      $region29: #{mfe_backbone_forward.16} parent=11 // pred_check
        %p196 = pneg %p143
      $region30: #{mfe_backbone_forward.16} parent=11 // pred_check_branch
        %198 = sbr.rel (%p196) target = $region32
      $region31: #{mfe_backbone_forward.16} parent=11 // pred_region
        _
      $region32: #{mfe_backbone_forward.16} parent=11 // pred_fallthru
        _
    $region12: #{mfe_backbone_forward.16} parent=5 // pred_fallthru
      _
    %p199 = scmp.lt.s32.totalorder %s12, 4
    // Predicated region
    $region33: #{mfe_backbone_forward.16} parent=5 // pred_check
      %p200 = pneg %p199
    $region34: #{mfe_backbone_forward.16} parent=5 // pred_check_branch
      %202 = sbr.rel (%p200) target = $region36
    $region35: #{mfe_backbone_forward.16} parent=5 // pred_region
      // Predicated region
      $region37: #{mfe_backbone_forward.16} parent=35 // pred_check
        %p203 = pneg %p32
      $region38: #{mfe_backbone_forward.16} parent=35 // pred_check_branch
        %205 = sbr.rel (%p203) target = $region40
      $region39: #{mfe_backbone_forward.16} parent=35 // pred_region
        %p206 = scmp.lt.s32.totalorder %s12, 3
        %s207 = scalar_select %p206, %s12, 3
        %s208 = smul.addr %s207, 4
        %s209 = smul.addr %s208, 4
        %s210 = scalar_lea.vmem %s0, %s209
      $region40: #{mfe_backbone_forward.16} parent=35 // pred_fallthru
        _
    $region36: #{mfe_backbone_forward.16} parent=5 // pred_fallthru
      _
    %p211 = scmp.le.s32.totalorder 1, %s12
    %p212 = scmp.lt.s32.totalorder %s12, 5
    %p213 = pnand %p211, %p212
    %p214 = pneg %p213
    // Predicated region
    $region41: #{mfe_backbone_forward.16} parent=5 // pred_check
      _
    $region42: #{mfe_backbone_forward.16} parent=5 // pred_check_branch
      %216 = sbr.rel (%p213) target = $region44
    $region43: #{mfe_backbone_forward.16} parent=5 // pred_region
      %s217 = ssub.s32 %s12, 1
      %p218 = scmp.lt.s32.totalorder %s17, 3
      %s219 = scalar_select %p218, %s17, 3
      %s220 = smul.addr %s219, 4
      %s221 = smul.addr %s220, 4
      %s222 = scalar_lea.vmem %s0, %s221
      %p223 = pneg %p38
      %p224 = pneg %p35
      %p225 = pneg %p59
      %p226 = pneg %p56
      %p227 = pneg %p80
      %p228 = pneg %p77
      %p229 = pneg %p101
      %p230 = pneg %p98
      %p231 = pneg %p122
      %p232 = pneg %p119
      %p233 = pneg %p143
      %p234 = pneg %p140
      %p235 = pneg %p169
      %p236 = pneg %p166
      %p237 = scmp.lt.s32.totalorder %s17, 3
      %s238 = scalar_select %p237, %s17, 3
      %s239 = smul.addr %s238, 4
      %s240 = smul.addr %s239, 4
      %s241 = scalar_lea.vmem %s6, %s240
      %p242 = scmp.lt.s32.totalorder %s17, 3
      %s243 = scalar_select %p242, %s17, 3
      %s244 = smul.addr %s243, 4
      %s245 = smul.addr %s244, 4
      %s246 = scalar_lea.vmem %s0, %s245
      %p247 = scmp.lt.s32.totalorder %s17, 3
      %s248 = scalar_select %p247, %s17, 3
      %s249 = smul.addr %s248, 4
      %s250 = smul.addr %s249, 4
      %s251 = scalar_lea.vmem %s6, %s250
      %v253 = vld [vmem:[%s5] sm:$0x1]
      %v254 = vld [vmem:[%s1] sm:$0xff]
      %v255 = vld [vmem:[%s1 + $0x8] sm:$0xf]
      %v256 = vld [vmem:[%s1 + $0xc] sm:$0xff]
      %v257 = vld [vmem:[%s1 + $0x14] sm:$0xf]
      %v258 = vld [vmem:[%s1 + $0x18] sm:$0xff]
      %v259 = vld [vmem:[%s1 + $0x20] sm:$0xf]
      %v260 = vld [vmem:[%s1 + $0x24] sm:$0xff]
      %v261 = vld [vmem:[%s1 + $0x2c] sm:$0xf]
      %v262 = vld [vmem:[%s246] sm:$0xf]
      %v263 = vld [vmem:[%s246 + $0x4] sm:$0xf]
      %v264 = vld [vmem:[%s246 + $0x8] sm:$0xf]
      %v265 = vld [vmem:[%s246 + $0xc] sm:$0xf]
      %v270 = vunpack.c.l.b16 %v262
      %v271 = vunpack.c.l.b16 %v263
      %v272 = vunpack.c.l.b16 %v264
      %v273 = vunpack.c.l.b16 %v265
      %v274 = vpack.c.b16 %v271, %v270
      %v275 = vpack.c.b16 %v273, %v272
      %276 = vrot.lane.b32.xlu0 %v274, 127
      %v277 = vpop.permute.xlu0 %276
      %278 = vrot.lane.b32.xlu0 %v275, 127
      %v279 = vpop.permute.xlu0 %278
      %280 = vrot.lane.b32.xlu0 %v274, 126
      %v281 = vpop.permute.xlu0 %280
      %282 = vrot.lane.b32.xlu0 %v275, 126
      %v283 = vpop.permute.xlu0 %282
      %284 = vrot.lane.b32.xlu0 %v274, 122
      %v285 = vpop.permute.xlu0 %284
      %286 = vrot.lane.b32.xlu0 %v275, 122
      %v287 = vpop.permute.xlu0 %286
      %288 = vrot.lane.b32.xlu0 %v274, 121
      %v289 = vpop.permute.xlu0 %288
      %290 = vrot.lane.b32.xlu0 %v275, 121
      %v291 = vpop.permute.xlu0 %290
      %292 = vrot.lane.b32.xlu0 %v274, 120
      %v293 = vpop.permute.xlu0 %292
      %294 = vrot.lane.b32.xlu0 %v275, 120
      %v295 = vpop.permute.xlu0 %294
      %296 = vrot.lane.b32.xlu0 %v274, 116
      %v297 = vpop.permute.xlu0 %296
      %298 = vrot.lane.b32.xlu0 %v275, 116
      %v299 = vpop.permute.xlu0 %298
      %300 = vrot.lane.b32.xlu0 %v274, 115
      %v301 = vpop.permute.xlu0 %300
      %302 = vrot.lane.b32.xlu0 %v275, 115
      %v303 = vpop.permute.xlu0 %302
      %304 = vrot.lane.b32.xlu0 %v274, 114
      %v305 = vpop.permute.xlu0 %304
      %306 = vrot.lane.b32.xlu0 %v275, 114
      %v307 = vpop.permute.xlu0 %306
      %v308 = vld [vmem:[%s2] sm:$0xff]
      %v309 = vld [vmem:[%s2 + $0x8] sm:$0xff]
      %v310 = vld [vmem:[%s2 + $0x10] sm:$0xff]
      %v311 = vld [vmem:[%s2 + $0x18] sm:$0xff]
      %313 = vset.pattern.permute.xlu0 0
      %314 = vperm.xlu0 %313, %v308
      %v315 = vpop.permute.xlu0 %314
      %318 = vset.pattern.permute.xlu0 0
      %319 = vperm.xlu0 %318, %v309
      %v320 = vpop.permute.xlu0 %319
      %323 = vset.pattern.permute.xlu0 0
      %324 = vperm.xlu0 %323, %v310
      %v325 = vpop.permute.xlu0 %324
      %328 = vset.pattern.permute.xlu0 0
      %329 = vperm.xlu0 %328, %v311
      %v330 = vpop.permute.xlu0 %329
      %v340 = vunpack.c.l.b16 %v254
      %v341 = vunpack.c.h.b16 %v254
      %v342 = vunpack.c.l.b16 %v255
      %v343 = vunpack.c.l.b16 %v256
      %v344 = vunpack.c.h.b16 %v256
      %v345 = vunpack.c.l.b16 %v257
      %v346 = vunpack.c.l.b16 %v258
      %v347 = vunpack.c.h.b16 %v258
      %v348 = vunpack.c.l.b16 %v259
      %v349 = vunpack.c.l.b16 %v260
      %v350 = vunpack.c.h.b16 %v260
      %v351 = vunpack.c.l.b16 %v261
      %v352 = vpack.c.b16 %v343, %v340
      %v353 = vpack.c.b16 %v344, %v341
      %v354 = vpack.c.b16 %v345, %v342
      %v355 = vpack.c.b16 %v349, %v346
      %v356 = vpack.c.b16 %v350, %v347
      %v357 = vpack.c.b16 %v351, %v348
      %362 = vrot.lane.b32.xlu0 %v274, 123
      %v363 = vpop.permute.xlu0 %362
      %364 = vrot.lane.b32.xlu0 %v275, 123
      %v365 = vpop.permute.xlu0 %364
      %366 = vrot.lane.b32.xlu0 %v277, 123
      %v367 = vpop.permute.xlu0 %366
      %368 = vrot.lane.b32.xlu0 %v279, 123
      %v369 = vpop.permute.xlu0 %368
      %370 = vrot.lane.b32.xlu0 %v281, 123
      %v371 = vpop.permute.xlu0 %370
      %372 = vrot.lane.b32.xlu0 %v283, 123
      %v373 = vpop.permute.xlu0 %372
      %374 = vrot.lane.b32.xlu0 %v285, 123
      %v375 = vpop.permute.xlu0 %374
      %376 = vrot.lane.b32.xlu0 %v287, 123
      %v377 = vpop.permute.xlu0 %376
      %378 = vrot.lane.b32.xlu0 %v289, 123
      %v379 = vpop.permute.xlu0 %378
      %380 = vrot.lane.b32.xlu0 %v291, 123
      %v381 = vpop.permute.xlu0 %380
      %382 = vrot.lane.b32.xlu0 %v293, 123
      %v383 = vpop.permute.xlu0 %382
      %384 = vrot.lane.b32.xlu0 %v295, 123
      %v385 = vpop.permute.xlu0 %384
      %386 = vrot.lane.b32.xlu0 %v297, 123
      %v387 = vpop.permute.xlu0 %386
      %388 = vrot.lane.b32.xlu0 %v299, 123
      %v389 = vpop.permute.xlu0 %388
      %390 = vrot.lane.b32.xlu0 %v301, 123
      %v391 = vpop.permute.xlu0 %390
      %392 = vrot.lane.b32.xlu0 %v303, 123
      %v393 = vpop.permute.xlu0 %392
      %394 = vrot.lane.b32.xlu0 %v305, 123
      %v395 = vpop.permute.xlu0 %394
      %396 = vrot.lane.b32.xlu0 %v307, 123
      %v397 = vpop.permute.xlu0 %396
      %vm416 = vcmask 261120
      %v418 = vsel %vm416, %v354, 0
      %v421 = vsel %vm416, %v357, 0
      %423 = vmatprep.subr.bf16.mxu0 0
      %424 = vmatpush1.bf16.msra.mxu0 %v363
      %425 = vmatprep.subr.bf16.mxu0 0
      %426 = vmatpush1.bf16.msra.mxu0 %v365
      %427 = vmatprep.subr.bf16.mxu0 0
      %428 = vmatpush1.bf16.msra.mxu0 %v367
      %429 = vmatprep.subr.bf16.mxu0 0
      %430 = vmatpush1.bf16.msra.mxu0 %v369
      %431 = vmatprep.subr.bf16.mxu0 0
      %432 = vmatpush1.bf16.msra.mxu0 %v371
      %433 = vmatprep.subr.bf16.mxu0 0
      %434 = vmatpush1.bf16.msra.mxu0 %v373
      %435 = vmatprep.subr.bf16.mxu0 0
      %436 = vmatpush1.bf16.msra.mxu0 %v375
      %437 = vmatprep.subr.bf16.mxu0 0
      %438 = vmatpush1.bf16.msra.mxu0 %v377
      %439 = vmatprep.subr.bf16.mxu0 0
      %440 = vmatpush1.bf16.msra.mxu0 %v379
      %441 = vmatprep.subr.bf16.mxu0 0
      %442 = vmatpush1.bf16.msra.mxu0 %v381
      %443 = vmatprep.subr.bf16.mxu0 0
      %444 = vmatpush1.bf16.msra.mxu0 %v383
      %445 = vmatprep.subr.bf16.mxu0 0
      %446 = vmatpush1.bf16.msra.mxu0 %v385
      %447 = vmatprep.subr.bf16.mxu0 0
      %448 = vmatpush1.bf16.msra.mxu0 %v387
      %449 = vmatprep.subr.bf16.mxu0 0
      %450 = vmatpush1.bf16.msra.mxu0 %v389
      %451 = vmatprep.subr.bf16.mxu0 0
      %452 = vmatpush1.bf16.msra.mxu0 %v391
      %453 = vmatprep.subr.bf16.mxu0 0
      %454 = vmatpush1.bf16.msra.mxu0 %v393
      %455 = vmatprep.mubr.bf16.mxu0 %v353
      %456 = vmatmul.mubr.bf16.gmra.mrb[0].mxu0 %v352
      %v457 = vpop.f32.mrb[0].mxu0
      %v458 = vadd.f32 %v315, %v457
      %v459 = vpop.f32.mrb[0].mxu0
      %v460 = vpop.f32.mrb[0].mxu0
      %v461 = vadd.f32 %v320, %v460
      %v462 = vpop.f32.mrb[0].mxu0
      %463 = vmatprep.mubr.bf16.mxu0 %v356
      %464 = vmatmul.mubr.bf16.gmra.mrb[0].mxu0 %v355
      %v465 = vpop.f32.mrb[0].mxu0
      %v466 = vadd.f32 %v325, %v465
      %v467 = vpop.f32.mrb[0].mxu0
      %v468 = vpop.f32.mrb[0].mxu0
      %v469 = vadd.f32 %v330, %v468
      %v470 = vpop.f32.mrb[0].mxu0
      %471 = vdwg.mxu0
      %472 = vmatprep.subr.bf16.mxu0 0
      %473 = vmatpush1.bf16.msra.mxu0 %v395
      %474 = vmatprep.subr.bf16.mxu0 0
      %475 = vmatpush1.bf16.msra.mxu0 %v397
      %476 = vmatprep.subr.bf16.mxu0 0
      %477 = vmatpush1.bf16.msra.mxu0 0
      %478 = vmatprep.subr.bf16.mxu0 0
      %479 = vmatpush1.bf16.msra.mxu0 0
      %480 = vmatprep.subr.bf16.mxu0 0
      %481 = vmatpush1.bf16.msra.mxu0 0
      %482 = vmatprep.subr.bf16.mxu0 0
      %483 = vmatpush1.bf16.msra.mxu0 0
      %484 = vmatprep.subr.bf16.mxu0 0
      %485 = vmatpush1.bf16.msra.mxu0 0
      %486 = vmatprep.subr.bf16.mxu0 0
      %487 = vmatpush1.bf16.msra.mxu0 0
      %488 = vmatprep.subr.bf16.mxu0 0
      %489 = vmatpush1.bf16.msra.mxu0 0
      %490 = vmatprep.subr.bf16.mxu0 0
      %491 = vmatpush1.bf16.msra.mxu0 0
      %492 = vmatprep.subr.bf16.mxu0 0
      %493 = vmatpush1.bf16.msra.mxu0 0
      %494 = vmatprep.subr.bf16.mxu0 0
      %495 = vmatpush1.bf16.msra.mxu0 0
      %496 = vmatprep.subr.bf16.mxu0 0
      %497 = vmatpush1.bf16.msra.mxu0 0
      %498 = vmatprep.subr.bf16.mxu0 0
      %499 = vmatpush1.bf16.msra.mxu0 0
      %500 = vmatprep.subr.bf16.mxu0 0
      %501 = vmatpush1.bf16.msra.mxu0 0
      %502 = vmatprep.subr.bf16.mxu0 0
      %503 = vmatpush1.bf16.msra.mxu0 0
      %504 = vmatprep.mubr.bf16.mxu0 0
      %505 = vmatmul.mubr.bf16.gmra.mrb[0].mxu0 %v418
      %v506 = vpop.f32.mrb[0].mxu0
      %v507 = vadd.f32 %v458, %v506
      %v508 = vpop.f32.mrb[0].mxu0
      %v509 = vpop.f32.mrb[0].mxu0
      %v510 = vadd.f32 %v461, %v509
      %v511 = vpop.f32.mrb[0].mxu0
      %512 = vmatprep.mubr.bf16.mxu0 0
      %513 = vmatmul.mubr.bf16.gmra.mrb[0].mxu0 %v421
      %v514 = vpop.f32.mrb[0].mxu0
      %v515 = vadd.f32 %v466, %v514
      %v516 = vpop.f32.mrb[0].mxu0
      %v517 = vpop.f32.mrb[0].mxu0
      %v518 = vadd.f32 %v469, %v517
      %v519 = vpop.f32.mrb[0].mxu0
      %520 = vdwg.mxu0
      %v521 = vmax.f32 %v507, 0.0
      %v522 = vmax.f32 %v510, 0.0
      %v523 = vmax.f32 %v515, 0.0
      %v524 = vmax.f32 %v518, 0.0
      %v526 = vlaneseq
      %v527 = vshrl.u32 %v526, 7
      %v528 = vsub.s32 0, %v527
      %v529 = vrot.slane %v253, %v528
      %530 = vrot.lane.b32.xlu0 %v529, 116
      %v531 = vpop.permute.xlu0 %530
      %v533 = vmul.f32 %v521, %v531
      %v534 = vmul.f32 %v522, %v531
      %v535 = vmul.f32 %v523, %v531
      %v536 = vmul.f32 %v524, %v531
      %v537 = vpack.c.bf16 %v534, %v533
      %v538 = vpack.c.bf16 %v536, %v535
      %541 = vrot.lane.b32.xlu0 %v537, 12
      %v542 = vpop.permute.xlu0 %541
      %543 = vrot.lane.b32.xlu0 %v538, 12
      %v544 = vpop.permute.xlu0 %543
      %vm545 = vcmask 97280
      %v548 = vsel %vm545, 0, %v542
      %v550 = vsel %vm545, 0, %v544
      %vm551 = vcmask 293888
      %v552 = vsel %vm551, %v548, 0
      %v554 = vsel %vm551, %v550, 0
      %556 = vst [vmem:[#allocation2] sm:$0xff] %v552
      %557 = vst [vmem:[#allocation2 + $0x8] sm:$0xff] %v554
      %v558 = vld [vmem:[%s3] sm:$0xff]
      %v559 = vld [vmem:[%s3 + $0x8] sm:$0xf]
      %v560 = vld [vmem:[%s3 + $0xc] sm:$0xff]
      %v561 = vld [vmem:[%s3 + $0x14] sm:$0xf]
      %v562 = vld [vmem:[%s3 + $0x18] sm:$0xff]
      %v563 = vld [vmem:[%s3 + $0x20] sm:$0xf]
      %v564 = vld [vmem:[%s3 + $0x24] sm:$0xff]
      %v565 = vld [vmem:[%s3 + $0x2c] sm:$0xf]
      %v566 = vld [vmem:[#allocation2] sm:$0xff]
      %v567 = vld [vmem:[#allocation2 + $0x8] sm:$0xff]
      %570 = vrot.lane.b32.xlu0 %v566, 127
      %v571 = vpop.permute.xlu0 %570
      %572 = vrot.lane.b32.xlu0 %v567, 127
      %v573 = vpop.permute.xlu0 %572
      %574 = vrot.lane.b32.xlu0 %v566, 126
      %v575 = vpop.permute.xlu0 %574
      %576 = vrot.lane.b32.xlu0 %v567, 126
      %v577 = vpop.permute.xlu0 %576
      %578 = vrot.lane.b32.xlu0 %v566, 122
      %v579 = vpop.permute.xlu0 %578
      %580 = vrot.lane.b32.xlu0 %v567, 122
      %v581 = vpop.permute.xlu0 %580
      %582 = vrot.lane.b32.xlu0 %v566, 121
      %v583 = vpop.permute.xlu0 %582
      %584 = vrot.lane.b32.xlu0 %v567, 121
      %v585 = vpop.permute.xlu0 %584
      %586 = vrot.lane.b32.xlu0 %v566, 120
      %v587 = vpop.permute.xlu0 %586
      %588 = vrot.lane.b32.xlu0 %v567, 120
      %v589 = vpop.permute.xlu0 %588
      %590 = vrot.lane.b32.xlu0 %v566, 116
      %v591 = vpop.permute.xlu0 %590
      %592 = vrot.lane.b32.xlu0 %v567, 116
      %v593 = vpop.permute.xlu0 %592
      %594 = vrot.lane.b32.xlu0 %v566, 115
      %v595 = vpop.permute.xlu0 %594
      %596 = vrot.lane.b32.xlu0 %v567, 115
      %v597 = vpop.permute.xlu0 %596
      %598 = vrot.lane.b32.xlu0 %v566, 114
      %v599 = vpop.permute.xlu0 %598
      %600 = vrot.lane.b32.xlu0 %v567, 114
      %v601 = vpop.permute.xlu0 %600
      %v602 = vld [vmem:[%s4] sm:$0xff]
      %v603 = vld [vmem:[%s4 + $0x8] sm:$0xff]
      %v604 = vld [vmem:[%s4 + $0x10] sm:$0xff]
      %v605 = vld [vmem:[%s4 + $0x18] sm:$0xff]
      %607 = vset.pattern.permute.xlu0 0
      %608 = vperm.xlu0 %607, %v602
      %v609 = vpop.permute.xlu0 %608
      %612 = vset.pattern.permute.xlu0 0
      %613 = vperm.xlu0 %612, %v603
      %v614 = vpop.permute.xlu0 %613
      %617 = vset.pattern.permute.xlu0 0
      %618 = vperm.xlu0 %617, %v604
      %v619 = vpop.permute.xlu0 %618
      %622 = vset.pattern.permute.xlu0 0
      %623 = vperm.xlu0 %622, %v605
      %v624 = vpop.permute.xlu0 %623
      %v634 = vunpack.c.l.b16 %v558
      %v635 = vunpack.c.h.b16 %v558
      %v636 = vunpack.c.l.b16 %v559
      %v637 = vunpack.c.l.b16 %v560
      %v638 = vunpack.c.h.b16 %v560
      %v639 = vunpack.c.l.b16 %v561
      %v640 = vunpack.c.l.b16 %v562
      %v641 = vunpack.c.h.b16 %v562
      %v642 = vunpack.c.l.b16 %v563
      %v643 = vunpack.c.l.b16 %v564
      %v644 = vunpack.c.h.b16 %v564
      %v645 = vunpack.c.l.b16 %v565
      %v646 = vpack.c.b16 %v637, %v634
      %v647 = vpack.c.b16 %v638, %v635
      %v648 = vpack.c.b16 %v639, %v636
      %v649 = vpack.c.b16 %v643, %v640
      %v650 = vpack.c.b16 %v644, %v641
      %v651 = vpack.c.b16 %v645, %v642
      %656 = vrot.lane.b32.xlu0 %v566, 123
      %v657 = vpop.permute.xlu0 %656
      %658 = vrot.lane.b32.xlu0 %v567, 123
      %v659 = vpop.permute.xlu0 %658
      %660 = vrot.lane.b32.xlu0 %v571, 123
      %v661 = vpop.permute.xlu0 %660
      %662 = vrot.lane.b32.xlu0 %v573, 123
      %v663 = vpop.permute.xlu0 %662
      %664 = vrot.lane.b32.xlu0 %v575, 123
      %v665 = vpop.permute.xlu0 %664
      %666 = vrot.lane.b32.xlu0 %v577, 123
      %v667 = vpop.permute.xlu0 %666
      %668 = vrot.lane.b32.xlu0 %v579, 123
      %v669 = vpop.permute.xlu0 %668
      %670 = vrot.lane.b32.xlu0 %v581, 123
      %v671 = vpop.permute.xlu0 %670
      %672 = vrot.lane.b32.xlu0 %v583, 123
      %v673 = vpop.permute.xlu0 %672
      %674 = vrot.lane.b32.xlu0 %v585, 123
      %v675 = vpop.permute.xlu0 %674
      %676 = vrot.lane.b32.xlu0 %v587, 123
      %v677 = vpop.permute.xlu0 %676
      %678 = vrot.lane.b32.xlu0 %v589, 123
      %v679 = vpop.permute.xlu0 %678
      %680 = vrot.lane.b32.xlu0 %v591, 123
      %v681 = vpop.permute.xlu0 %680
      %682 = vrot.lane.b32.xlu0 %v593, 123
      %v683 = vpop.permute.xlu0 %682
      %684 = vrot.lane.b32.xlu0 %v595, 123
      %v685 = vpop.permute.xlu0 %684
      %686 = vrot.lane.b32.xlu0 %v597, 123
      %v687 = vpop.permute.xlu0 %686
      %688 = vrot.lane.b32.xlu0 %v599, 123
      %v689 = vpop.permute.xlu0 %688
      %690 = vrot.lane.b32.xlu0 %v601, 123
      %v691 = vpop.permute.xlu0 %690
      %v711 = vsel %vm416, %v648, 0
      %v714 = vsel %vm416, %v651, 0
      %716 = vmatprep.subr.bf16.mxu0 0
      %717 = vmatpush1.bf16.msra.mxu0 %v657
      %718 = vmatprep.subr.bf16.mxu0 0
      %719 = vmatpush1.bf16.msra.mxu0 %v659
      %720 = vmatprep.subr.bf16.mxu0 0
      %721 = vmatpush1.bf16.msra.mxu0 %v661
      %722 = vmatprep.subr.bf16.mxu0 0
      %723 = vmatpush1.bf16.msra.mxu0 %v663
      %724 = vmatprep.subr.bf16.mxu0 0
      %725 = vmatpush1.bf16.msra.mxu0 %v665
      %726 = vmatprep.subr.bf16.mxu0 0
      %727 = vmatpush1.bf16.msra.mxu0 %v667
      %728 = vmatprep.subr.bf16.mxu0 0
      %729 = vmatpush1.bf16.msra.mxu0 %v669
      %730 = vmatprep.subr.bf16.mxu0 0
      %731 = vmatpush1.bf16.msra.mxu0 %v671
      %732 = vmatprep.subr.bf16.mxu0 0
      %733 = vmatpush1.bf16.msra.mxu0 %v673
      %734 = vmatprep.subr.bf16.mxu0 0
      %735 = vmatpush1.bf16.msra.mxu0 %v675
      %736 = vmatprep.subr.bf16.mxu0 0
      %737 = vmatpush1.bf16.msra.mxu0 %v677
      %738 = vmatprep.subr.bf16.mxu0 0
      %739 = vmatpush1.bf16.msra.mxu0 %v679
      %740 = vmatprep.subr.bf16.mxu0 0
      %741 = vmatpush1.bf16.msra.mxu0 %v681
      %742 = vmatprep.subr.bf16.mxu0 0
      %743 = vmatpush1.bf16.msra.mxu0 %v683
      %744 = vmatprep.subr.bf16.mxu0 0
      %745 = vmatpush1.bf16.msra.mxu0 %v685
      %746 = vmatprep.subr.bf16.mxu0 0
      %747 = vmatpush1.bf16.msra.mxu0 %v687
      %748 = vmatprep.mubr.bf16.mxu0 %v647
      %749 = vmatmul.mubr.bf16.gmra.mrb[0].mxu0 %v646
      %v750 = vpop.f32.mrb[0].mxu0
      %v751 = vadd.f32 %v609, %v750
      %v752 = vpop.f32.mrb[0].mxu0
      %v753 = vpop.f32.mrb[0].mxu0
      %v754 = vadd.f32 %v614, %v753
      %v755 = vpop.f32.mrb[0].mxu0
      %756 = vmatprep.mubr.bf16.mxu0 %v650
      %757 = vmatmul.mubr.bf16.gmra.mrb[0].mxu0 %v649
      %v758 = vpop.f32.mrb[0].mxu0
      %v759 = vadd.f32 %v619, %v758
      %v760 = vpop.f32.mrb[0].mxu0
      %v761 = vpop.f32.mrb[0].mxu0
      %v762 = vadd.f32 %v624, %v761
      %v763 = vpop.f32.mrb[0].mxu0
      %764 = vdwg.mxu0
      %765 = vmatprep.subr.bf16.mxu0 0
      %766 = vmatpush1.bf16.msra.mxu0 %v689
      %767 = vmatprep.subr.bf16.mxu0 0
      %768 = vmatpush1.bf16.msra.mxu0 %v691
      %769 = vmatprep.subr.bf16.mxu0 0
      %770 = vmatpush1.bf16.msra.mxu0 0
      %771 = vmatprep.subr.bf16.mxu0 0
      %772 = vmatpush1.bf16.msra.mxu0 0
      %773 = vmatprep.subr.bf16.mxu0 0
      %774 = vmatpush1.bf16.msra.mxu0 0
      %775 = vmatprep.subr.bf16.mxu0 0
      %776 = vmatpush1.bf16.msra.mxu0 0
      %777 = vmatprep.subr.bf16.mxu0 0
      %778 = vmatpush1.bf16.msra.mxu0 0
      %779 = vmatprep.subr.bf16.mxu0 0
      %780 = vmatpush1.bf16.msra.mxu0 0
      %781 = vmatprep.subr.bf16.mxu0 0
      %782 = vmatpush1.bf16.msra.mxu0 0
      %783 = vmatprep.subr.bf16.mxu0 0
      %784 = vmatpush1.bf16.msra.mxu0 0
      %785 = vmatprep.subr.bf16.mxu0 0
      %786 = vmatpush1.bf16.msra.mxu0 0
      %787 = vmatprep.subr.bf16.mxu0 0
      %788 = vmatpush1.bf16.msra.mxu0 0
      %789 = vmatprep.subr.bf16.mxu0 0
      %790 = vmatpush1.bf16.msra.mxu0 0
      %791 = vmatprep.subr.bf16.mxu0 0
      %792 = vmatpush1.bf16.msra.mxu0 0
      %793 = vmatprep.subr.bf16.mxu0 0
      %794 = vmatpush1.bf16.msra.mxu0 0
      %795 = vmatprep.subr.bf16.mxu0 0
      %796 = vmatpush1.bf16.msra.mxu0 0
      %797 = vmatprep.mubr.bf16.mxu0 0
      %798 = vmatmul.mubr.bf16.gmra.mrb[0].mxu0 %v711
      %v799 = vpop.f32.mrb[0].mxu0
      %v800 = vadd.f32 %v751, %v799
      %v801 = vpop.f32.mrb[0].mxu0
      %v802 = vpop.f32.mrb[0].mxu0
      %v803 = vadd.f32 %v754, %v802
      %v804 = vpop.f32.mrb[0].mxu0
      %805 = vmatprep.mubr.bf16.mxu0 0
      %806 = vmatmul.mubr.bf16.gmra.mrb[0].mxu0 %v714
      %v807 = vpop.f32.mrb[0].mxu0
      %v808 = vadd.f32 %v759, %v807
      %v809 = vpop.f32.mrb[0].mxu0
      %v810 = vpop.f32.mrb[0].mxu0
      %v811 = vadd.f32 %v762, %v810
      %v812 = vpop.f32.mrb[0].mxu0
      %813 = vdwg.mxu0
      %v814 = vld [vmem:[%s246] sm:$0xf]
      %v815 = vld [vmem:[%s246 + $0x4] sm:$0xf]
      %v816 = vld [vmem:[%s246 + $0x8] sm:$0xf]
      %v817 = vld [vmem:[%s246 + $0xc] sm:$0xf]
      %v818 = vunpack.c.l.bf16 %v814
      %v819 = vunpack.c.l.bf16 %v815
      %v820 = vunpack.c.l.bf16 %v816
      %v821 = vunpack.c.l.bf16 %v817
      %826 = vrot.lane.b32.xlu0 %v818, 116
      %v827 = vpop.permute.xlu0 %826
      %828 = vrot.lane.b32.xlu0 %v819, 116
      %v829 = vpop.permute.xlu0 %828
      %830 = vrot.lane.b32.xlu0 %v820, 116
      %v831 = vpop.permute.xlu0 %830
      %832 = vrot.lane.b32.xlu0 %v821, 116
      %v833 = vpop.permute.xlu0 %832
      %v838 = vadd.f32 %v800, %v827
      %v839 = vadd.f32 %v803, %v829
      %v840 = vadd.f32 %v808, %v831
      %v841 = vadd.f32 %v811, %v833
      %v842 = vmax.f32 %v838, 0.0
      %v843 = vmax.f32 %v839, 0.0
      %v844 = vmax.f32 %v840, 0.0
      %v845 = vmax.f32 %v841, 0.0
      %v846 = vmul.f32 %v842, %v531
      %v847 = vmul.f32 %v843, %v531
      %v848 = vmul.f32 %v844, %v531
      %v849 = vmul.f32 %v845, %v531
      %v850 = vpack.c.bf16 %v847, %v846
      %v851 = vpack.c.bf16 %v849, %v848
      %854 = vrot.lane.b32.xlu0 %v850, 12
      %v855 = vpop.permute.xlu0 %854
      %856 = vrot.lane.b32.xlu0 %v851, 12
      %v857 = vpop.permute.xlu0 %856
      %v859 = vsel %vm545, 0, %v855
      %v861 = vsel %vm545, 0, %v857
      %v862 = vsel %vm551, %v859, 0
      %v863 = vsel %vm551, %v861, 0
      %v866 = vunpack.c.l.b16 %v862
      %v867 = vunpack.c.h.b16 %v862
      %v868 = vunpack.c.l.b16 %v863
      %v869 = vunpack.c.h.b16 %v863
      %v870 = vpack.c.b16 %v866, %v866
      %v871 = vpack.c.b16 %v867, %v867
      %v872 = vpack.c.b16 %v868, %v868
      %v873 = vpack.c.b16 %v869, %v869
      %878 = vst [vmem:[%s251] sm:$0xf] %v870
      %879 = vst [vmem:[%s251 + $0x4] sm:$0xf] %v871
      %880 = vst [vmem:[%s251 + $0x8] sm:$0xf] %v872
      %881 = vst [vmem:[%s251 + $0xc] sm:$0xf] %v873
      %p882 = scmp.lt.s32.totalorder %s17, 3
      %s883 = scalar_select %p882, %s17, 3
      %s884 = smul.addr %s883, 4
      %s885 = smul.addr %s884, 4
      %s886 = scalar_lea.vmem %s6, %s885
      // Predicated region
      $region45: #{mfe_backbone_forward.16} parent=43 // pred_check
        %p887 = pneg %p166
      $region46: #{mfe_backbone_forward.16} parent=43 // pred_check_branch
        %889 = sbr.rel (%p887) target = $region48
      $region47: #{mfe_backbone_forward.16} parent=43 // pred_region
        _
      $region48: #{mfe_backbone_forward.16} parent=43 // pred_fallthru
        _
    $region44: #{mfe_backbone_forward.16} parent=5 // pred_fallthru
      _
    %p890 = scmp.le.s32.totalorder 2, %s12
    // Predicated region
    $region49: #{mfe_backbone_forward.16} parent=5 // pred_check
      %p891 = pneg %p890
    $region50: #{mfe_backbone_forward.16} parent=5 // pred_check_branch
      %893 = sbr.rel (%p891) target = $region52
    $region51: #{mfe_backbone_forward.16} parent=5 // pred_region
      %s894 = ssub.s32 %s12, 2
      // Predicated region
      $region53: #{mfe_backbone_forward.16} parent=51 // pred_check
        %p895 = pneg %p172
      $region54: #{mfe_backbone_forward.16} parent=51 // pred_check_branch
        %897 = sbr.rel (%p895) target = $region56
      $region55: #{mfe_backbone_forward.16} parent=51 // pred_region
        %p898 = scmp.lt.s32.totalorder %s18, 3
        %s899 = scalar_select %p898, %s18, 3
        %s900 = smul.addr %s899, 4
        %s901 = smul.addr %s900, 4
        %s902 = scalar_lea.vmem %s6, %s901
      $region56: #{mfe_backbone_forward.16} parent=51 // pred_fallthru
        _
    $region52: #{mfe_backbone_forward.16} parent=5 // pred_fallthru
      _
  $region6: #{mfe_backbone_forward.16} parent=0 // loop_footer
    %s16 = sadd.s32 1, %s12
  $region7: #{mfe_backbone_forward.16} parent=0 // loop_footer_branch
    %11 = sbr.rel target = $region3
  $region8: #{mfe_backbone_forward.16} parent=0 // loop_exit
    _

// kernel: mfe_backbone_forward.18
$region0: #{mfe_backbone_forward.18}
  #allocation0 [shape = 'u32[]', space=smem, size = 0x4, offset = 0x4, fixed_abs, tag = 'smem constant byte address 0x4 - core index']
  #allocation1 [shape = 'u32[144,128]{1,0:T(1,128)}', space=vmem, size = 0x12000, scoped, tag = 'internal scratch']
  %s0 = inlined_call_operand.vmem [shape: bf16[4,16,128], index: 0, kind: input, shape index: {}]
  %s1 = inlined_call_operand.vmem [shape: bf16[32,16], index: 1, kind: input, shape index: {}]
  %s2 = inlined_call_operand.vmem [shape: f32[32,1], index: 2, kind: input, shape index: {}]
  %s3 = inlined_call_operand.vmem [shape: f32[1,128], index: 3, kind: input, shape index: {}]
  %s4 = inlined_call_operand.vmem [shape: bf16[4,32,128], index: 4, kind: input, shape index: {}]
  %s5 = inlined_call_operand.vmem [shape: bf16[4,32,128], index: 5, kind: output, shape index: {}]
  %s6 = sld [smem:[#allocation0]]
  $region53: #{mfe_backbone_forward.18} parent=0
    _
  %s8 = ssub.s32 1, %s6
  %s9 = scalar_select 0, %s8, %s6
  loop: start=0, step=1, limit=6
  $region2: #{mfe_backbone_forward.18} parent=0 // loop_pre_header
    _
  $region3: #{mfe_backbone_forward.18} parent=0 // loop_header
    %s11 = sphi 0, %s15
    %p12 = scmp.ge.s32.totalorder %s11, 6
    %s21 = sphi 0, %s23
    %s24 = sphi 0, %s21
    %s25 = sphi 0, %s24
    %s41 = sphi 0, %s25
    %s45 = sphi 0, %s45
    %s47 = sphi 0, %s45
    %s48 = sphi 0, %s47
    %s62 = sphi 0, %s48
    %s66 = sphi 0, %s66
    %s68 = sphi 0, %s66
    %s69 = sphi 0, %s68
    %s83 = sphi 0, %s69
    %s87 = sphi 0, %s87
    %s89 = sphi 0, %s87
    %s90 = sphi 0, %s89
    %s104 = sphi 0, %s90
    %s110 = sphi 0, %s112
    %s113 = sphi 0, %s110
    %s114 = sphi 0, %s113
    %s130 = sphi 0, %s114
    %s136 = sphi 0, %s138
    %s139 = sphi 0, %s136
    %s140 = sphi 0, %s139
    %s156 = sphi 0, %s140
  $region4: #{mfe_backbone_forward.18} parent=0 // loop_header_branch
    %14 = sbr.rel (%p12) target = $region8
  $region5: #{mfe_backbone_forward.18} parent=0 // loop_body
    %s16 = ssub.s32 %s11, 1
    %s17 = ssub.s32 %s11, 2
    %s18 = sadd.s32 %s11, 1
    %s19 = ssub.s32 %s11, %s18
    %p20 = scmp.eq.s32.totalorder %s19, 0
    %s22 = sadd.s32 %s21, 1
    %s23 = scalar_select %p20, %s21, %s22
    %p26 = pneg %p20
    %p27 = scmp.eq.s32.totalorder %s11, 3
    %p28 = por %p26, %p27
    %p29 = scmp.ne.s32.totalorder %s21, %s24
    %p30 = scmp.eq.s32.totalorder %s11, 0
    %p31 = por %p29, %p30
    %p32 = scmp.ne.s32.totalorder %s21, %s24
    %p33 = scmp.eq.s32.totalorder %s16, 3
    %p34 = por %p32, %p33
    %p35 = scmp.ne.s32.totalorder %s24, %s25
    %p36 = scmp.eq.s32.totalorder %s16, 0
    %p37 = por %p35, %p36
    %p38 = scmp.ne.s32.totalorder %s24, %s25
    %p39 = scmp.eq.s32.totalorder %s17, 3
    %p40 = por %p38, %p39
    %p42 = scmp.ne.s32.totalorder %s25, %s41
    %p43 = scmp.eq.s32.totalorder %s17, 0
    %p44 = por %p42, %p43
    %s46 = sadd.s32 %s45, 1
    %p49 = scmp.eq.s32.totalorder %s11, 3
    %p50 = scmp.ne.s32.totalorder %s45, %s47
    %p51 = scmp.eq.s32.totalorder %s11, 0
    %p52 = por %p50, %p51
    %p53 = scmp.ne.s32.totalorder %s45, %s47
    %p54 = scmp.eq.s32.totalorder %s16, 3
    %p55 = por %p53, %p54
    %p56 = scmp.ne.s32.totalorder %s47, %s48
    %p57 = scmp.eq.s32.totalorder %s16, 0
    %p58 = por %p56, %p57
    %p59 = scmp.ne.s32.totalorder %s47, %s48
    %p60 = scmp.eq.s32.totalorder %s17, 3
    %p61 = por %p59, %p60
    %p63 = scmp.ne.s32.totalorder %s48, %s62
    %p64 = scmp.eq.s32.totalorder %s17, 0
    %p65 = por %p63, %p64
    %s67 = sadd.s32 %s66, 1
    %p70 = scmp.eq.s32.totalorder %s11, 3
    %p71 = scmp.ne.s32.totalorder %s66, %s68
    %p72 = scmp.eq.s32.totalorder %s11, 0
    %p73 = por %p71, %p72
    %p74 = scmp.ne.s32.totalorder %s66, %s68
    %p75 = scmp.eq.s32.totalorder %s16, 3
    %p76 = por %p74, %p75
    %p77 = scmp.ne.s32.totalorder %s68, %s69
    %p78 = scmp.eq.s32.totalorder %s16, 0
    %p79 = por %p77, %p78
    %p80 = scmp.ne.s32.totalorder %s68, %s69
    %p81 = scmp.eq.s32.totalorder %s17, 3
    %p82 = por %p80, %p81
    %p84 = scmp.ne.s32.totalorder %s69, %s83
    %p85 = scmp.eq.s32.totalorder %s17, 0
    %p86 = por %p84, %p85
    %s88 = sadd.s32 %s87, 1
    %p91 = scmp.eq.s32.totalorder %s11, 3
    %p92 = scmp.ne.s32.totalorder %s87, %s89
    %p93 = scmp.eq.s32.totalorder %s11, 0
    %p94 = por %p92, %p93
    %p95 = scmp.ne.s32.totalorder %s87, %s89
    %p96 = scmp.eq.s32.totalorder %s16, 3
    %p97 = por %p95, %p96
    %p98 = scmp.ne.s32.totalorder %s89, %s90
    %p99 = scmp.eq.s32.totalorder %s16, 0
    %p100 = por %p98, %p99
    %p101 = scmp.ne.s32.totalorder %s89, %s90
    %p102 = scmp.eq.s32.totalorder %s17, 3
    %p103 = por %p101, %p102
    %p105 = scmp.ne.s32.totalorder %s90, %s104
    %p106 = scmp.eq.s32.totalorder %s17, 0
    %p107 = por %p105, %p106
    %s108 = ssub.s32 %s11, %s18
    %p109 = scmp.eq.s32.totalorder %s108, 0
    %s111 = sadd.s32 %s110, 1
    %s112 = scalar_select %p109, %s110, %s111
    %p115 = pneg %p109
    %p116 = scmp.eq.s32.totalorder %s11, 3
    %p117 = por %p115, %p116
    %p118 = scmp.ne.s32.totalorder %s110, %s113
    %p119 = scmp.eq.s32.totalorder %s11, 0
    %p120 = por %p118, %p119
    %p121 = scmp.ne.s32.totalorder %s110, %s113
    %p122 = scmp.eq.s32.totalorder %s16, 3
    %p123 = por %p121, %p122
    %p124 = scmp.ne.s32.totalorder %s113, %s114
    %p125 = scmp.eq.s32.totalorder %s16, 0
    %p126 = por %p124, %p125
    %p127 = scmp.ne.s32.totalorder %s113, %s114
    %p128 = scmp.eq.s32.totalorder %s17, 3
    %p129 = por %p127, %p128
    %p131 = scmp.ne.s32.totalorder %s114, %s130
    %p132 = scmp.eq.s32.totalorder %s17, 0
    %p133 = por %p131, %p132
    %s134 = ssub.s32 %s11, %s18
    %p135 = scmp.eq.s32.totalorder %s134, 0
    %s137 = sadd.s32 %s136, 1
    %s138 = scalar_select %p135, %s136, %s137
    %p141 = pneg %p135
    %p142 = scmp.eq.s32.totalorder %s11, 3
    %p143 = por %p141, %p142
    %p144 = scmp.ne.s32.totalorder %s136, %s139
    %p145 = scmp.eq.s32.totalorder %s11, 0
    %p146 = por %p144, %p145
    %p147 = scmp.ne.s32.totalorder %s136, %s139
    %p148 = scmp.eq.s32.totalorder %s16, 3
    %p149 = por %p147, %p148
    %p150 = scmp.ne.s32.totalorder %s139, %s140
    %p151 = scmp.eq.s32.totalorder %s16, 0
    %p152 = por %p150, %p151
    %p153 = scmp.ne.s32.totalorder %s139, %s140
    %p154 = scmp.eq.s32.totalorder %s17, 3
    %p155 = por %p153, %p154
    %p157 = scmp.ne.s32.totalorder %s140, %s156
    %p158 = scmp.eq.s32.totalorder %s17, 0
    %p159 = por %p157, %p158
    %p160 = scmp.le.s32.totalorder 1, %s11
    %p161 = scmp.lt.s32.totalorder %s11, 5
    %p162 = pnand %p160, %p161
    %p163 = pneg %p162
    // Predicated region
    $region9: #{mfe_backbone_forward.18} parent=5 // pred_check
      _
    $region10: #{mfe_backbone_forward.18} parent=5 // pred_check_branch
      %165 = sbr.rel (%p162) target = $region12
    $region11: #{mfe_backbone_forward.18} parent=5 // pred_region
      %s166 = ssub.s32 %s11, 1
      // Predicated region
      $region13: #{mfe_backbone_forward.18} parent=11 // pred_check
        %p167 = pneg %p58
      $region14: #{mfe_backbone_forward.18} parent=11 // pred_check_branch
        %169 = sbr.rel (%p167) target = $region16
      $region15: #{mfe_backbone_forward.18} parent=11 // pred_region
        _
      $region16: #{mfe_backbone_forward.18} parent=11 // pred_fallthru
        _
      // Predicated region
      $region17: #{mfe_backbone_forward.18} parent=11 // pred_check
        %p170 = pneg %p79
      $region18: #{mfe_backbone_forward.18} parent=11 // pred_check_branch
        %172 = sbr.rel (%p170) target = $region20
      $region19: #{mfe_backbone_forward.18} parent=11 // pred_region
        _
      $region20: #{mfe_backbone_forward.18} parent=11 // pred_fallthru
        _
      // Predicated region
      $region21: #{mfe_backbone_forward.18} parent=11 // pred_check
        %p173 = pneg %p100
      $region22: #{mfe_backbone_forward.18} parent=11 // pred_check_branch
        %175 = sbr.rel (%p173) target = $region24
      $region23: #{mfe_backbone_forward.18} parent=11 // pred_region
        _
      $region24: #{mfe_backbone_forward.18} parent=11 // pred_fallthru
        _
    $region12: #{mfe_backbone_forward.18} parent=5 // pred_fallthru
      _
    %p176 = scmp.lt.s32.totalorder %s11, 4
    // Predicated region
    $region25: #{mfe_backbone_forward.18} parent=5 // pred_check
      %p177 = pneg %p176
    $region26: #{mfe_backbone_forward.18} parent=5 // pred_check_branch
      %179 = sbr.rel (%p177) target = $region28
    $region27: #{mfe_backbone_forward.18} parent=5 // pred_region
      // Predicated region
      $region29: #{mfe_backbone_forward.18} parent=27 // pred_check
        %p180 = pneg %p31
      $region30: #{mfe_backbone_forward.18} parent=27 // pred_check_branch
        %182 = sbr.rel (%p180) target = $region32
      $region31: #{mfe_backbone_forward.18} parent=27 // pred_region
        %p183 = scmp.lt.s32.totalorder %s11, 3
        %s184 = scalar_select %p183, %s11, 3
        %s185 = smul.addr %s184, 2
        %s186 = smul.addr %s185, 4
        %s187 = scalar_lea.vmem %s0, %s186
      $region32: #{mfe_backbone_forward.18} parent=27 // pred_fallthru
        _
      // Predicated region
      $region33: #{mfe_backbone_forward.18} parent=27 // pred_check
        %p188 = pneg %p120
      $region34: #{mfe_backbone_forward.18} parent=27 // pred_check_branch
        %190 = sbr.rel (%p188) target = $region36
      $region35: #{mfe_backbone_forward.18} parent=27 // pred_region
        %p191 = scmp.lt.s32.totalorder %s11, 3
        %s192 = scalar_select %p191, %s11, 3
        %s193 = smul.addr %s192, 4
        %s194 = smul.addr %s193, 4
        %s195 = scalar_lea.vmem %s4, %s194
      $region36: #{mfe_backbone_forward.18} parent=27 // pred_fallthru
        _
    $region28: #{mfe_backbone_forward.18} parent=5 // pred_fallthru
      _
    %p196 = scmp.le.s32.totalorder 1, %s11
    %p197 = scmp.lt.s32.totalorder %s11, 5
    %p198 = pnand %p196, %p197
    %p199 = pneg %p198
    // Predicated region
    $region37: #{mfe_backbone_forward.18} parent=5 // pred_check
      _
    $region38: #{mfe_backbone_forward.18} parent=5 // pred_check_branch
      %201 = sbr.rel (%p198) target = $region40
    $region39: #{mfe_backbone_forward.18} parent=5 // pred_region
      %s202 = ssub.s32 %s11, 1
      %p203 = scmp.lt.s32.totalorder %s16, 3
      %s204 = scalar_select %p203, %s16, 3
      %s205 = smul.addr %s204, 2
      %s206 = smul.addr %s205, 4
      %s207 = scalar_lea.vmem %s0, %s206
      %p208 = pneg %p37
      %p209 = pneg %p34
      %p210 = pneg %p58
      %p211 = pneg %p55
      %p212 = pneg %p79
      %p213 = pneg %p76
      %p214 = pneg %p100
      %p215 = pneg %p97
      %p216 = scmp.lt.s32.totalorder %s16, 3
      %s217 = scalar_select %p216, %s16, 3
      %s218 = smul.addr %s217, 4
      %s219 = smul.addr %s218, 4
      %s220 = scalar_lea.vmem %s4, %s219
      %p221 = pneg %p126
      %p222 = pneg %p123
      %p223 = pneg %p152
      %p224 = pneg %p149
      %p225 = scmp.lt.s32.totalorder %s16, 3
      %s226 = scalar_select %p225, %s16, 3
      %s227 = smul.addr %s226, 4
      %s228 = smul.addr %s227, 4
      %s229 = scalar_lea.vmem %s5, %s228
      %p230 = scmp.lt.s32.totalorder %s16, 3
      %s231 = scalar_select %p230, %s16, 3
      %s232 = smul.addr %s231, 2
      %s233 = smul.addr %s232, 4
      %s234 = scalar_lea.vmem %s0, %s233
      %p235 = scmp.lt.s32.totalorder %s16, 3
      %s236 = scalar_select %p235, %s16, 3
      %s237 = smul.addr %s236, 4
      %s238 = smul.addr %s237, 4
      %s239 = scalar_lea.vmem %s4, %s238
      %p240 = scmp.lt.s32.totalorder %s16, 3
      %s241 = scalar_select %p240, %s16, 3
      %s242 = smul.addr %s241, 4
      %s243 = smul.addr %s242, 4
      %s244 = scalar_lea.vmem %s5, %s243
      %v246 = vld [vmem:[%s3] sm:$0x1]
      %v247 = vld [vmem:[%s1] sm:$0xf]
      %v248 = vld [vmem:[%s1 + $0x4] sm:$0xf]
      %v249 = vld [vmem:[%s1 + $0x8] sm:$0xf]
      %v250 = vld [vmem:[%s1 + $0xc] sm:$0xf]
      %v251 = vld [vmem:[%s234] sm:$0xf]
      %v252 = vld [vmem:[%s234 + $0x4] sm:$0xf]
      %v253 = vld [vmem:[%s2] sm:$0xff]
      %v254 = vld [vmem:[%s2 + $0x8] sm:$0xff]
      %v255 = vld [vmem:[%s2 + $0x10] sm:$0xff]
      %v256 = vld [vmem:[%s2 + $0x18] sm:$0xff]
      %258 = vset.pattern.permute.xlu0 0
      %259 = vperm.xlu0 %258, %v253
      %v260 = vpop.permute.xlu0 %259
      %263 = vset.pattern.permute.xlu0 0
      %264 = vperm.xlu0 %263, %v254
      %v265 = vpop.permute.xlu0 %264
      %268 = vset.pattern.permute.xlu0 0
      %269 = vperm.xlu0 %268, %v255
      %v270 = vpop.permute.xlu0 %269
      %273 = vset.pattern.permute.xlu0 0
      %274 = vperm.xlu0 %273, %v256
      %v275 = vpop.permute.xlu0 %274
      %v281 = vunpack.c.l.b16 %v247
      %v282 = vunpack.c.l.b16 %v248
      %v283 = vunpack.c.l.b16 %v249
      %v284 = vunpack.c.l.b16 %v250
      %v285 = vpack.c.b16 %v282, %v281
      %v286 = vpack.c.b16 %v284, %v283
      %v289 = vunpack.c.l.b16 %v251
      %v290 = vunpack.c.l.b16 %v252
      %v291 = vpack.c.b16 %v290, %v289
      %292 = vrot.lane.b32.xlu0 %v291, 108
      %v293 = vpop.permute.xlu0 %292
      %vm295 = vcmask 130048
      %v297 = vsel %vm295, %v285, 0
      %v300 = vsel %vm295, %v286, 0
      %302 = vmatprep.subr.bf16.mxu0 0
      %303 = vmatpush1.bf16.msra.mxu0 %v293
      %304 = vmatprep.subr.bf16.mxu0 0
      %305 = vmatpush1.bf16.msra.mxu0 0
      %306 = vmatprep.subr.bf16.mxu0 0
      %307 = vmatpush1.bf16.msra.mxu0 0
      %308 = vmatprep.subr.bf16.mxu0 0
      %309 = vmatpush1.bf16.msra.mxu0 0
      %310 = vmatprep.subr.bf16.mxu0 0
      %311 = vmatpush1.bf16.msra.mxu0 0
      %312 = vmatprep.subr.bf16.mxu0 0
      %313 = vmatpush1.bf16.msra.mxu0 0
      %314 = vmatprep.subr.bf16.mxu0 0
      %315 = vmatpush1.bf16.msra.mxu0 0
      %316 = vmatprep.subr.bf16.mxu0 0
      %317 = vmatpush1.bf16.msra.mxu0 0
      %318 = vmatprep.subr.bf16.mxu0 0
      %319 = vmatpush1.bf16.msra.mxu0 0
      %320 = vmatprep.subr.bf16.mxu0 0
      %321 = vmatpush1.bf16.msra.mxu0 0
      %322 = vmatprep.subr.bf16.mxu0 0
      %323 = vmatpush1.bf16.msra.mxu0 0
      %324 = vmatprep.subr.bf16.mxu0 0
      %325 = vmatpush1.bf16.msra.mxu0 0
      %326 = vmatprep.subr.bf16.mxu0 0
      %327 = vmatpush1.bf16.msra.mxu0 0
      %328 = vmatprep.subr.bf16.mxu0 0
      %329 = vmatpush1.bf16.msra.mxu0 0
      %330 = vmatprep.subr.bf16.mxu0 0
      %331 = vmatpush1.bf16.msra.mxu0 0
      %332 = vmatprep.subr.bf16.mxu0 0
      %333 = vmatpush1.bf16.msra.mxu0 0
      %334 = vmatprep.mubr.bf16.mxu0 0
      %335 = vmatmul.mubr.bf16.gmra.mrb[0].mxu0 %v297
      %v336 = vpop.f32.mrb[0].mxu0
      %v337 = vadd.f32 %v260, %v336
      %v338 = vpop.f32.mrb[0].mxu0
      %v339 = vpop.f32.mrb[0].mxu0
      %v340 = vadd.f32 %v265, %v339
      %v341 = vpop.f32.mrb[0].mxu0
      %342 = vmatprep.mubr.bf16.mxu0 0
      %343 = vmatmul.mubr.bf16.gmra.mrb[0].mxu0 %v300
      %v344 = vpop.f32.mrb[0].mxu0
      %v345 = vadd.f32 %v270, %v344
      %v346 = vpop.f32.mrb[0].mxu0
      %v347 = vpop.f32.mrb[0].mxu0
      %v348 = vadd.f32 %v275, %v347
      %v349 = vpop.f32.mrb[0].mxu0
      %350 = vdwg.mxu0
      %v351 = vld [vmem:[%s239] sm:$0xf]
      %v352 = vld [vmem:[%s239 + $0x4] sm:$0xf]
      %v353 = vld [vmem:[%s239 + $0x8] sm:$0xf]
      %v354 = vld [vmem:[%s239 + $0xc] sm:$0xf]
      %v355 = vunpack.c.l.bf16 %v351
      %v356 = vunpack.c.l.bf16 %v352
      %v357 = vunpack.c.l.bf16 %v353
      %v358 = vunpack.c.l.bf16 %v354
      %363 = vrot.lane.b32.xlu0 %v355, 108
      %v364 = vpop.permute.xlu0 %363
      %365 = vrot.lane.b32.xlu0 %v356, 108
      %v366 = vpop.permute.xlu0 %365
      %367 = vrot.lane.b32.xlu0 %v357, 108
      %v368 = vpop.permute.xlu0 %367
      %369 = vrot.lane.b32.xlu0 %v358, 108
      %v370 = vpop.permute.xlu0 %369
      %v375 = vadd.f32 %v337, %v364
      %v376 = vadd.f32 %v340, %v366
      %v377 = vadd.f32 %v345, %v368
      %v378 = vadd.f32 %v348, %v370
      %v380 = vlaneseq
      %v381 = vshrl.u32 %v380, 7
      %v382 = vsub.s32 0, %v381
      %v383 = vrot.slane %v246, %v382
      %384 = vrot.lane.b32.xlu0 %v383, 108
      %v385 = vpop.permute.xlu0 %384
      %v387 = vmul.f32 %v375, %v385
      %v388 = vmul.f32 %v376, %v385
      %v389 = vmul.f32 %v377, %v385
      %v390 = vmul.f32 %v378, %v385
      %v391 = vpack.c.bf16 %v388, %v387
      %v392 = vpack.c.bf16 %v390, %v389
      %395 = vrot.lane.b32.xlu0 %v391, 20
      %v396 = vpop.permute.xlu0 %395
      %397 = vrot.lane.b32.xlu0 %v392, 20
      %v398 = vpop.permute.xlu0 %397
      %vm399 = vcmask 162816
      %v402 = vsel %vm399, 0, %v396
      %v404 = vsel %vm399, 0, %v398
      %vm405 = vcmask 818176
      %v406 = vsel %vm405, %v402, 0
      %v407 = vsel %vm405, %v404, 0
      %v410 = vunpack.c.l.b16 %v406
      %v411 = vunpack.c.h.b16 %v406
      %v412 = vunpack.c.l.b16 %v407
      %v413 = vunpack.c.h.b16 %v407
      %v414 = vpack.c.b16 %v410, %v410
      %v415 = vpack.c.b16 %v411, %v411
      %v416 = vpack.c.b16 %v412, %v412
      %v417 = vpack.c.b16 %v413, %v413
      %422 = vst [vmem:[%s244] sm:$0xf] %v414
      %423 = vst [vmem:[%s244 + $0x4] sm:$0xf] %v415
      %424 = vst [vmem:[%s244 + $0x8] sm:$0xf] %v416
      %425 = vst [vmem:[%s244 + $0xc] sm:$0xf] %v417
      %p426 = scmp.lt.s32.totalorder %s16, 3
      %s427 = scalar_select %p426, %s16, 3
      %s428 = smul.addr %s427, 4
      %s429 = smul.addr %s428, 4
      %s430 = scalar_lea.vmem %s5, %s429
      // Predicated region
      $region41: #{mfe_backbone_forward.18} parent=39 // pred_check
        %p431 = pneg %p149
      $region42: #{mfe_backbone_forward.18} parent=39 // pred_check_branch
        %433 = sbr.rel (%p431) target = $region44
      $region43: #{mfe_backbone_forward.18} parent=39 // pred_region
        _
      $region44: #{mfe_backbone_forward.18} parent=39 // pred_fallthru
        _
    $region40: #{mfe_backbone_forward.18} parent=5 // pred_fallthru
      _
    %p434 = scmp.le.s32.totalorder 2, %s11
    // Predicated region
    $region45: #{mfe_backbone_forward.18} parent=5 // pred_check
      %p435 = pneg %p434
    $region46: #{mfe_backbone_forward.18} parent=5 // pred_check_branch
      %437 = sbr.rel (%p435) target = $region48
    $region47: #{mfe_backbone_forward.18} parent=5 // pred_region
      %s438 = ssub.s32 %s11, 2
      // Predicated region
      $region49: #{mfe_backbone_forward.18} parent=47 // pred_check
        %p439 = pneg %p155
      $region50: #{mfe_backbone_forward.18} parent=47 // pred_check_branch
        %441 = sbr.rel (%p439) target = $region52
      $region51: #{mfe_backbone_forward.18} parent=47 // pred_region
        %p442 = scmp.lt.s32.totalorder %s17, 3
        %s443 = scalar_select %p442, %s17, 3
        %s444 = smul.addr %s443, 4
        %s445 = smul.addr %s444, 4
        %s446 = scalar_lea.vmem %s5, %s445
      $region52: #{mfe_backbone_forward.18} parent=47 // pred_fallthru
        _
    $region48: #{mfe_backbone_forward.18} parent=5 // pred_fallthru
      _
  $region6: #{mfe_backbone_forward.18} parent=0 // loop_footer
    %s15 = sadd.s32 1, %s11
  $region7: #{mfe_backbone_forward.18} parent=0 // loop_footer_branch
    %10 = sbr.rel target = $region3
  $region8: #{mfe_backbone_forward.18} parent=0 // loop_exit
    _

// kernel: mfe_backbone_forward.19
$region0: #{mfe_backbone_forward.19}
  #allocation0 [shape = 'u32[]', space=smem, size = 0x4, offset = 0x4, fixed_abs, tag = 'smem constant byte address 0x4 - core index']
  #allocation1 [shape = 'u32[144,128]{1,0:T(1,128)}', space=vmem, size = 0x12000, scoped, tag = 'internal scratch']
  #allocation2 [shape = 'bf16[32,128]{1,0:T(16,128)(2,1)}', space=vmem, size = 0x2000, scoped, tag = 'scratch operand']
  %s0 = inlined_call_operand.vmem [shape: bf16[4,32,128], index: 0, kind: input, shape index: {}]
  %s1 = inlined_call_operand.vmem [shape: bf16[32,288], index: 1, kind: input, shape index: {}]
  %s2 = inlined_call_operand.vmem [shape: f32[32,1], index: 2, kind: input, shape index: {}]
  %s3 = inlined_call_operand.vmem [shape: bf16[16,288], index: 3, kind: input, shape index: {}]
  %s4 = inlined_call_operand.vmem [shape: f32[16,1], index: 4, kind: input, shape index: {}]
  %s5 = inlined_call_operand.vmem [shape: f32[1,128], index: 5, kind: input, shape index: {}]
  %s6 = inlined_call_operand.vmem [shape: bf16[4,16,128], index: 6, kind: output, shape index: {}]
  %s7 = sld [smem:[#allocation0]]
  $region57: #{mfe_backbone_forward.19} parent=0
    _
  %s9 = ssub.s32 1, %s7
  %s10 = scalar_select 0, %s9, %s7
  loop: start=0, step=1, limit=6
  $region2: #{mfe_backbone_forward.19} parent=0 // loop_pre_header
    _
  $region3: #{mfe_backbone_forward.19} parent=0 // loop_header
    %s12 = sphi 0, %s16
    %p13 = scmp.ge.s32.totalorder %s12, 6
    %s22 = sphi 0, %s24
    %s25 = sphi 0, %s22
    %s26 = sphi 0, %s25
    %s42 = sphi 0, %s26
    %s46 = sphi 0, %s46
    %s48 = sphi 0, %s46
    %s49 = sphi 0, %s48
    %s63 = sphi 0, %s49
    %s67 = sphi 0, %s67
    %s69 = sphi 0, %s67
    %s70 = sphi 0, %s69
    %s84 = sphi 0, %s70
    %s88 = sphi 0, %s88
    %s90 = sphi 0, %s88
    %s91 = sphi 0, %s90
    %s105 = sphi 0, %s91
    %s109 = sphi 0, %s109
    %s111 = sphi 0, %s109
    %s112 = sphi 0, %s111
    %s126 = sphi 0, %s112
    %s130 = sphi 0, %s130
    %s132 = sphi 0, %s130
    %s133 = sphi 0, %s132
    %s147 = sphi 0, %s133
    %s153 = sphi 0, %s155
    %s156 = sphi 0, %s153
    %s157 = sphi 0, %s156
    %s173 = sphi 0, %s157
  $region4: #{mfe_backbone_forward.19} parent=0 // loop_header_branch
    %15 = sbr.rel (%p13) target = $region8
  $region5: #{mfe_backbone_forward.19} parent=0 // loop_body
    %s17 = ssub.s32 %s12, 1
    %s18 = ssub.s32 %s12, 2
    %s19 = sadd.s32 %s12, 1
    %s20 = ssub.s32 %s12, %s19
    %p21 = scmp.eq.s32.totalorder %s20, 0
    %s23 = sadd.s32 %s22, 1
    %s24 = scalar_select %p21, %s22, %s23
    %p27 = pneg %p21
    %p28 = scmp.eq.s32.totalorder %s12, 3
    %p29 = por %p27, %p28
    %p30 = scmp.ne.s32.totalorder %s22, %s25
    %p31 = scmp.eq.s32.totalorder %s12, 0
    %p32 = por %p30, %p31
    %p33 = scmp.ne.s32.totalorder %s22, %s25
    %p34 = scmp.eq.s32.totalorder %s17, 3
    %p35 = por %p33, %p34
    %p36 = scmp.ne.s32.totalorder %s25, %s26
    %p37 = scmp.eq.s32.totalorder %s17, 0
    %p38 = por %p36, %p37
    %p39 = scmp.ne.s32.totalorder %s25, %s26
    %p40 = scmp.eq.s32.totalorder %s18, 3
    %p41 = por %p39, %p40
    %p43 = scmp.ne.s32.totalorder %s26, %s42
    %p44 = scmp.eq.s32.totalorder %s18, 0
    %p45 = por %p43, %p44
    %s47 = sadd.s32 %s46, 1
    %p50 = scmp.eq.s32.totalorder %s12, 3
    %p51 = scmp.ne.s32.totalorder %s46, %s48
    %p52 = scmp.eq.s32.totalorder %s12, 0
    %p53 = por %p51, %p52
    %p54 = scmp.ne.s32.totalorder %s46, %s48
    %p55 = scmp.eq.s32.totalorder %s17, 3
    %p56 = por %p54, %p55
    %p57 = scmp.ne.s32.totalorder %s48, %s49
    %p58 = scmp.eq.s32.totalorder %s17, 0
    %p59 = por %p57, %p58
    %p60 = scmp.ne.s32.totalorder %s48, %s49
    %p61 = scmp.eq.s32.totalorder %s18, 3
    %p62 = por %p60, %p61
    %p64 = scmp.ne.s32.totalorder %s49, %s63
    %p65 = scmp.eq.s32.totalorder %s18, 0
    %p66 = por %p64, %p65
    %s68 = sadd.s32 %s67, 1
    %p71 = scmp.eq.s32.totalorder %s12, 3
    %p72 = scmp.ne.s32.totalorder %s67, %s69
    %p73 = scmp.eq.s32.totalorder %s12, 0
    %p74 = por %p72, %p73
    %p75 = scmp.ne.s32.totalorder %s67, %s69
    %p76 = scmp.eq.s32.totalorder %s17, 3
    %p77 = por %p75, %p76
    %p78 = scmp.ne.s32.totalorder %s69, %s70
    %p79 = scmp.eq.s32.totalorder %s17, 0
    %p80 = por %p78, %p79
    %p81 = scmp.ne.s32.totalorder %s69, %s70
    %p82 = scmp.eq.s32.totalorder %s18, 3
    %p83 = por %p81, %p82
    %p85 = scmp.ne.s32.totalorder %s70, %s84
    %p86 = scmp.eq.s32.totalorder %s18, 0
    %p87 = por %p85, %p86
    %s89 = sadd.s32 %s88, 1
    %p92 = scmp.eq.s32.totalorder %s12, 3
    %p93 = scmp.ne.s32.totalorder %s88, %s90
    %p94 = scmp.eq.s32.totalorder %s12, 0
    %p95 = por %p93, %p94
    %p96 = scmp.ne.s32.totalorder %s88, %s90
    %p97 = scmp.eq.s32.totalorder %s17, 3
    %p98 = por %p96, %p97
    %p99 = scmp.ne.s32.totalorder %s90, %s91
    %p100 = scmp.eq.s32.totalorder %s17, 0
    %p101 = por %p99, %p100
    %p102 = scmp.ne.s32.totalorder %s90, %s91
    %p103 = scmp.eq.s32.totalorder %s18, 3
    %p104 = por %p102, %p103
    %p106 = scmp.ne.s32.totalorder %s91, %s105
    %p107 = scmp.eq.s32.totalorder %s18, 0
    %p108 = por %p106, %p107
    %s110 = sadd.s32 %s109, 1
    %p113 = scmp.eq.s32.totalorder %s12, 3
    %p114 = scmp.ne.s32.totalorder %s109, %s111
    %p115 = scmp.eq.s32.totalorder %s12, 0
    %p116 = por %p114, %p115
    %p117 = scmp.ne.s32.totalorder %s109, %s111
    %p118 = scmp.eq.s32.totalorder %s17, 3
    %p119 = por %p117, %p118
    %p120 = scmp.ne.s32.totalorder %s111, %s112
    %p121 = scmp.eq.s32.totalorder %s17, 0
    %p122 = por %p120, %p121
    %p123 = scmp.ne.s32.totalorder %s111, %s112
    %p124 = scmp.eq.s32.totalorder %s18, 3
    %p125 = por %p123, %p124
    %p127 = scmp.ne.s32.totalorder %s112, %s126
    %p128 = scmp.eq.s32.totalorder %s18, 0
    %p129 = por %p127, %p128
    %s131 = sadd.s32 %s130, 1
    %p134 = scmp.eq.s32.totalorder %s12, 3
    %p135 = scmp.ne.s32.totalorder %s130, %s132
    %p136 = scmp.eq.s32.totalorder %s12, 0
    %p137 = por %p135, %p136
    %p138 = scmp.ne.s32.totalorder %s130, %s132
    %p139 = scmp.eq.s32.totalorder %s17, 3
    %p140 = por %p138, %p139
    %p141 = scmp.ne.s32.totalorder %s132, %s133
    %p142 = scmp.eq.s32.totalorder %s17, 0
    %p143 = por %p141, %p142
    %p144 = scmp.ne.s32.totalorder %s132, %s133
    %p145 = scmp.eq.s32.totalorder %s18, 3
    %p146 = por %p144, %p145
    %p148 = scmp.ne.s32.totalorder %s133, %s147
    %p149 = scmp.eq.s32.totalorder %s18, 0
    %p150 = por %p148, %p149
    %s151 = ssub.s32 %s12, %s19
    %p152 = scmp.eq.s32.totalorder %s151, 0
    %s154 = sadd.s32 %s153, 1
    %s155 = scalar_select %p152, %s153, %s154
    %p158 = pneg %p152
    %p159 = scmp.eq.s32.totalorder %s12, 3
    %p160 = por %p158, %p159
    %p161 = scmp.ne.s32.totalorder %s153, %s156
    %p162 = scmp.eq.s32.totalorder %s12, 0
    %p163 = por %p161, %p162
    %p164 = scmp.ne.s32.totalorder %s153, %s156
    %p165 = scmp.eq.s32.totalorder %s17, 3
    %p166 = por %p164, %p165
    %p167 = scmp.ne.s32.totalorder %s156, %s157
    %p168 = scmp.eq.s32.totalorder %s17, 0
    %p169 = por %p167, %p168
    %p170 = scmp.ne.s32.totalorder %s156, %s157
    %p171 = scmp.eq.s32.totalorder %s18, 3
    %p172 = por %p170, %p171
    %p174 = scmp.ne.s32.totalorder %s157, %s173
    %p175 = scmp.eq.s32.totalorder %s18, 0
    %p176 = por %p174, %p175
    %p177 = scmp.le.s32.totalorder 1, %s12
    %p178 = scmp.lt.s32.totalorder %s12, 5
    %p179 = pnand %p177, %p178
    %p180 = pneg %p179
    // Predicated region
    $region9: #{mfe_backbone_forward.19} parent=5 // pred_check
      _
    $region10: #{mfe_backbone_forward.19} parent=5 // pred_check_branch
      %182 = sbr.rel (%p179) target = $region12
    $region11: #{mfe_backbone_forward.19} parent=5 // pred_region
      %s183 = ssub.s32 %s12, 1
      // Predicated region
      $region13: #{mfe_backbone_forward.19} parent=11 // pred_check
        %p184 = pneg %p59
      $region14: #{mfe_backbone_forward.19} parent=11 // pred_check_branch
        %186 = sbr.rel (%p184) target = $region16
      $region15: #{mfe_backbone_forward.19} parent=11 // pred_region
        _
      $region16: #{mfe_backbone_forward.19} parent=11 // pred_fallthru
        _
      // Predicated region
      $region17: #{mfe_backbone_forward.19} parent=11 // pred_check
        %p187 = pneg %p80
      $region18: #{mfe_backbone_forward.19} parent=11 // pred_check_branch
        %189 = sbr.rel (%p187) target = $region20
      $region19: #{mfe_backbone_forward.19} parent=11 // pred_region
        _
      $region20: #{mfe_backbone_forward.19} parent=11 // pred_fallthru
        _
      // Predicated region
      $region21: #{mfe_backbone_forward.19} parent=11 // pred_check
        %p190 = pneg %p101
      $region22: #{mfe_backbone_forward.19} parent=11 // pred_check_branch
        %192 = sbr.rel (%p190) target = $region24
      $region23: #{mfe_backbone_forward.19} parent=11 // pred_region
        _
      $region24: #{mfe_backbone_forward.19} parent=11 // pred_fallthru
        _
      // Predicated region
      $region25: #{mfe_backbone_forward.19} parent=11 // pred_check
        %p193 = pneg %p122
      $region26: #{mfe_backbone_forward.19} parent=11 // pred_check_branch
        %195 = sbr.rel (%p193) target = $region28
      $region27: #{mfe_backbone_forward.19} parent=11 // pred_region
        _
      $region28: #{mfe_backbone_forward.19} parent=11 // pred_fallthru
        _
      // Predicated region
      $region29: #{mfe_backbone_forward.19} parent=11 // pred_check
        %p196 = pneg %p143
      $region30: #{mfe_backbone_forward.19} parent=11 // pred_check_branch
        %198 = sbr.rel (%p196) target = $region32
      $region31: #{mfe_backbone_forward.19} parent=11 // pred_region
        _
      $region32: #{mfe_backbone_forward.19} parent=11 // pred_fallthru
        _
    $region12: #{mfe_backbone_forward.19} parent=5 // pred_fallthru
      _
    %p199 = scmp.lt.s32.totalorder %s12, 4
    // Predicated region
    $region33: #{mfe_backbone_forward.19} parent=5 // pred_check
      %p200 = pneg %p199
    $region34: #{mfe_backbone_forward.19} parent=5 // pred_check_branch
      %202 = sbr.rel (%p200) target = $region36
    $region35: #{mfe_backbone_forward.19} parent=5 // pred_region
      // Predicated region
      $region37: #{mfe_backbone_forward.19} parent=35 // pred_check
        %p203 = pneg %p32
      $region38: #{mfe_backbone_forward.19} parent=35 // pred_check_branch
        %205 = sbr.rel (%p203) target = $region40
      $region39: #{mfe_backbone_forward.19} parent=35 // pred_region
        %p206 = scmp.lt.s32.totalorder %s12, 3
        %s207 = scalar_select %p206, %s12, 3
        %s208 = smul.addr %s207, 4
        %s209 = smul.addr %s208, 4
        %s210 = scalar_lea.vmem %s0, %s209
      $region40: #{mfe_backbone_forward.19} parent=35 // pred_fallthru
        _
    $region36: #{mfe_backbone_forward.19} parent=5 // pred_fallthru
      _
    %p211 = scmp.le.s32.totalorder 1, %s12
    %p212 = scmp.lt.s32.totalorder %s12, 5
    %p213 = pnand %p211, %p212
    %p214 = pneg %p213
    // Predicated region
    $region41: #{mfe_backbone_forward.19} parent=5 // pred_check
      _
    $region42: #{mfe_backbone_forward.19} parent=5 // pred_check_branch
      %216 = sbr.rel (%p213) target = $region44
    $region43: #{mfe_backbone_forward.19} parent=5 // pred_region
      %s217 = ssub.s32 %s12, 1
      %p218 = scmp.lt.s32.totalorder %s17, 3
      %s219 = scalar_select %p218, %s17, 3
      %s220 = smul.addr %s219, 4
      %s221 = smul.addr %s220, 4
      %s222 = scalar_lea.vmem %s0, %s221
      %p223 = pneg %p38
      %p224 = pneg %p35
      %p225 = pneg %p59
      %p226 = pneg %p56
      %p227 = pneg %p80
      %p228 = pneg %p77
      %p229 = pneg %p101
      %p230 = pneg %p98
      %p231 = pneg %p122
      %p232 = pneg %p119
      %p233 = pneg %p143
      %p234 = pneg %p140
      %p235 = pneg %p169
      %p236 = pneg %p166
      %p237 = scmp.lt.s32.totalorder %s17, 3
      %s238 = scalar_select %p237, %s17, 3
      %s239 = smul.addr %s238, 2
      %s240 = smul.addr %s239, 4
      %s241 = scalar_lea.vmem %s6, %s240
      %p242 = scmp.lt.s32.totalorder %s17, 3
      %s243 = scalar_select %p242, %s17, 3
      %s244 = smul.addr %s243, 4
      %s245 = smul.addr %s244, 4
      %s246 = scalar_lea.vmem %s0, %s245
      %p247 = scmp.lt.s32.totalorder %s17, 3
      %s248 = scalar_select %p247, %s17, 3
      %s249 = smul.addr %s248, 2
      %s250 = smul.addr %s249, 4
      %s251 = scalar_lea.vmem %s6, %s250
      %v253 = vld [vmem:[%s5] sm:$0x1]
      %v254 = vld [vmem:[%s1] sm:$0xff]
      %v255 = vld [vmem:[%s1 + $0x8] sm:$0xf]
      %v256 = vld [vmem:[%s1 + $0xc] sm:$0xff]
      %v257 = vld [vmem:[%s1 + $0x14] sm:$0xf]
      %v258 = vld [vmem:[%s1 + $0x18] sm:$0xff]
      %v259 = vld [vmem:[%s1 + $0x20] sm:$0xf]
      %v260 = vld [vmem:[%s1 + $0x24] sm:$0xff]
      %v261 = vld [vmem:[%s1 + $0x2c] sm:$0xf]
      %v262 = vld [vmem:[%s246] sm:$0xf]
      %v263 = vld [vmem:[%s246 + $0x4] sm:$0xf]
      %v264 = vld [vmem:[%s246 + $0x8] sm:$0xf]
      %v265 = vld [vmem:[%s246 + $0xc] sm:$0xf]
      %v270 = vunpack.c.l.b16 %v262
      %v271 = vunpack.c.l.b16 %v263
      %v272 = vunpack.c.l.b16 %v264
      %v273 = vunpack.c.l.b16 %v265
      %v274 = vpack.c.b16 %v271, %v270
      %v275 = vpack.c.b16 %v273, %v272
      %276 = vrot.lane.b32.xlu0 %v274, 127
      %v277 = vpop.permute.xlu0 %276
      %278 = vrot.lane.b32.xlu0 %v275, 127
      %v279 = vpop.permute.xlu0 %278
      %280 = vrot.lane.b32.xlu0 %v274, 126
      %v281 = vpop.permute.xlu0 %280
      %282 = vrot.lane.b32.xlu0 %v275, 126
      %v283 = vpop.permute.xlu0 %282
      %284 = vrot.lane.b32.xlu0 %v274, 118
      %v285 = vpop.permute.xlu0 %284
      %286 = vrot.lane.b32.xlu0 %v275, 118
      %v287 = vpop.permute.xlu0 %286
      %288 = vrot.lane.b32.xlu0 %v274, 117
      %v289 = vpop.permute.xlu0 %288
      %290 = vrot.lane.b32.xlu0 %v275, 117
      %v291 = vpop.permute.xlu0 %290
      %292 = vrot.lane.b32.xlu0 %v274, 116
      %v293 = vpop.permute.xlu0 %292
      %294 = vrot.lane.b32.xlu0 %v275, 116
      %v295 = vpop.permute.xlu0 %294
      %296 = vrot.lane.b32.xlu0 %v274, 108
      %v297 = vpop.permute.xlu0 %296
      %298 = vrot.lane.b32.xlu0 %v275, 108
      %v299 = vpop.permute.xlu0 %298
      %300 = vrot.lane.b32.xlu0 %v274, 107
      %v301 = vpop.permute.xlu0 %300
      %302 = vrot.lane.b32.xlu0 %v275, 107
      %v303 = vpop.permute.xlu0 %302
      %304 = vrot.lane.b32.xlu0 %v274, 106
      %v305 = vpop.permute.xlu0 %304
      %306 = vrot.lane.b32.xlu0 %v275, 106
      %v307 = vpop.permute.xlu0 %306
      %v308 = vld [vmem:[%s2] sm:$0xff]
      %v309 = vld [vmem:[%s2 + $0x8] sm:$0xff]
      %v310 = vld [vmem:[%s2 + $0x10] sm:$0xff]
      %v311 = vld [vmem:[%s2 + $0x18] sm:$0xff]
      %313 = vset.pattern.permute.xlu0 0
      %314 = vperm.xlu0 %313, %v308
      %v315 = vpop.permute.xlu0 %314
      %318 = vset.pattern.permute.xlu0 0
      %319 = vperm.xlu0 %318, %v309
      %v320 = vpop.permute.xlu0 %319
      %323 = vset.pattern.permute.xlu0 0
      %324 = vperm.xlu0 %323, %v310
      %v325 = vpop.permute.xlu0 %324
      %328 = vset.pattern.permute.xlu0 0
      %329 = vperm.xlu0 %328, %v311
      %v330 = vpop.permute.xlu0 %329
      %v340 = vunpack.c.l.b16 %v254
      %v341 = vunpack.c.h.b16 %v254
      %v342 = vunpack.c.l.b16 %v255
      %v343 = vunpack.c.l.b16 %v256
      %v344 = vunpack.c.h.b16 %v256
      %v345 = vunpack.c.l.b16 %v257
      %v346 = vunpack.c.l.b16 %v258
      %v347 = vunpack.c.h.b16 %v258
      %v348 = vunpack.c.l.b16 %v259
      %v349 = vunpack.c.l.b16 %v260
      %v350 = vunpack.c.h.b16 %v260
      %v351 = vunpack.c.l.b16 %v261
      %v352 = vpack.c.b16 %v343, %v340
      %v353 = vpack.c.b16 %v344, %v341
      %v354 = vpack.c.b16 %v345, %v342
      %v355 = vpack.c.b16 %v349, %v346
      %v356 = vpack.c.b16 %v350, %v347
      %v357 = vpack.c.b16 %v351, %v348
      %362 = vrot.lane.b32.xlu0 %v274, 119
      %v363 = vpop.permute.xlu0 %362
      %364 = vrot.lane.b32.xlu0 %v275, 119
      %v365 = vpop.permute.xlu0 %364
      %366 = vrot.lane.b32.xlu0 %v277, 119
      %v367 = vpop.permute.xlu0 %366
      %368 = vrot.lane.b32.xlu0 %v279, 119
      %v369 = vpop.permute.xlu0 %368
      %370 = vrot.lane.b32.xlu0 %v281, 119
      %v371 = vpop.permute.xlu0 %370
      %372 = vrot.lane.b32.xlu0 %v283, 119
      %v373 = vpop.permute.xlu0 %372
      %374 = vrot.lane.b32.xlu0 %v285, 119
      %v375 = vpop.permute.xlu0 %374
      %376 = vrot.lane.b32.xlu0 %v287, 119
      %v377 = vpop.permute.xlu0 %376
      %378 = vrot.lane.b32.xlu0 %v289, 119
      %v379 = vpop.permute.xlu0 %378
      %380 = vrot.lane.b32.xlu0 %v291, 119
      %v381 = vpop.permute.xlu0 %380
      %382 = vrot.lane.b32.xlu0 %v293, 119
      %v383 = vpop.permute.xlu0 %382
      %384 = vrot.lane.b32.xlu0 %v295, 119
      %v385 = vpop.permute.xlu0 %384
      %386 = vrot.lane.b32.xlu0 %v297, 119
      %v387 = vpop.permute.xlu0 %386
      %388 = vrot.lane.b32.xlu0 %v299, 119
      %v389 = vpop.permute.xlu0 %388
      %390 = vrot.lane.b32.xlu0 %v301, 119
      %v391 = vpop.permute.xlu0 %390
      %392 = vrot.lane.b32.xlu0 %v303, 119
      %v393 = vpop.permute.xlu0 %392
      %394 = vrot.lane.b32.xlu0 %v305, 119
      %v395 = vpop.permute.xlu0 %394
      %396 = vrot.lane.b32.xlu0 %v307, 119
      %v397 = vpop.permute.xlu0 %396
      %vm416 = vcmask 261120
      %v418 = vsel %vm416, %v354, 0
      %v421 = vsel %vm416, %v357, 0
      %423 = vmatprep.subr.bf16.mxu0 0
      %424 = vmatpush1.bf16.msra.mxu0 %v363
      %425 = vmatprep.subr.bf16.mxu0 0
      %426 = vmatpush1.bf16.msra.mxu0 %v365
      %427 = vmatprep.subr.bf16.mxu0 0
      %428 = vmatpush1.bf16.msra.mxu0 %v367
      %429 = vmatprep.subr.bf16.mxu0 0
      %430 = vmatpush1.bf16.msra.mxu0 %v369
      %431 = vmatprep.subr.bf16.mxu0 0
      %432 = vmatpush1.bf16.msra.mxu0 %v371
      %433 = vmatprep.subr.bf16.mxu0 0
      %434 = vmatpush1.bf16.msra.mxu0 %v373
      %435 = vmatprep.subr.bf16.mxu0 0
      %436 = vmatpush1.bf16.msra.mxu0 %v375
      %437 = vmatprep.subr.bf16.mxu0 0
      %438 = vmatpush1.bf16.msra.mxu0 %v377
      %439 = vmatprep.subr.bf16.mxu0 0
      %440 = vmatpush1.bf16.msra.mxu0 %v379
      %441 = vmatprep.subr.bf16.mxu0 0
      %442 = vmatpush1.bf16.msra.mxu0 %v381
      %443 = vmatprep.subr.bf16.mxu0 0
      %444 = vmatpush1.bf16.msra.mxu0 %v383
      %445 = vmatprep.subr.bf16.mxu0 0
      %446 = vmatpush1.bf16.msra.mxu0 %v385
      %447 = vmatprep.subr.bf16.mxu0 0
      %448 = vmatpush1.bf16.msra.mxu0 %v387
      %449 = vmatprep.subr.bf16.mxu0 0
      %450 = vmatpush1.bf16.msra.mxu0 %v389
      %451 = vmatprep.subr.bf16.mxu0 0
      %452 = vmatpush1.bf16.msra.mxu0 %v391
      %453 = vmatprep.subr.bf16.mxu0 0
      %454 = vmatpush1.bf16.msra.mxu0 %v393
      %455 = vmatprep.mubr.bf16.mxu0 %v353
      %456 = vmatmul.mubr.bf16.gmra.mrb[0].mxu0 %v352
      %v457 = vpop.f32.mrb[0].mxu0
      %v458 = vadd.f32 %v315, %v457
      %v459 = vpop.f32.mrb[0].mxu0
      %v460 = vpop.f32.mrb[0].mxu0
      %v461 = vadd.f32 %v320, %v460
      %v462 = vpop.f32.mrb[0].mxu0
      %463 = vmatprep.mubr.bf16.mxu0 %v356
      %464 = vmatmul.mubr.bf16.gmra.mrb[0].mxu0 %v355
      %v465 = vpop.f32.mrb[0].mxu0
      %v466 = vadd.f32 %v325, %v465
      %v467 = vpop.f32.mrb[0].mxu0
      %v468 = vpop.f32.mrb[0].mxu0
      %v469 = vadd.f32 %v330, %v468
      %v470 = vpop.f32.mrb[0].mxu0
      %471 = vdwg.mxu0
      %472 = vmatprep.subr.bf16.mxu0 0
      %473 = vmatpush1.bf16.msra.mxu0 %v395
      %474 = vmatprep.subr.bf16.mxu0 0
      %475 = vmatpush1.bf16.msra.mxu0 %v397
      %476 = vmatprep.subr.bf16.mxu0 0
      %477 = vmatpush1.bf16.msra.mxu0 0
      %478 = vmatprep.subr.bf16.mxu0 0
      %479 = vmatpush1.bf16.msra.mxu0 0
      %480 = vmatprep.subr.bf16.mxu0 0
      %481 = vmatpush1.bf16.msra.mxu0 0
      %482 = vmatprep.subr.bf16.mxu0 0
      %483 = vmatpush1.bf16.msra.mxu0 0
      %484 = vmatprep.subr.bf16.mxu0 0
      %485 = vmatpush1.bf16.msra.mxu0 0
      %486 = vmatprep.subr.bf16.mxu0 0
      %487 = vmatpush1.bf16.msra.mxu0 0
      %488 = vmatprep.subr.bf16.mxu0 0
      %489 = vmatpush1.bf16.msra.mxu0 0
      %490 = vmatprep.subr.bf16.mxu0 0
      %491 = vmatpush1.bf16.msra.mxu0 0
      %492 = vmatprep.subr.bf16.mxu0 0
      %493 = vmatpush1.bf16.msra.mxu0 0
      %494 = vmatprep.subr.bf16.mxu0 0
      %495 = vmatpush1.bf16.msra.mxu0 0
      %496 = vmatprep.subr.bf16.mxu0 0
      %497 = vmatpush1.bf16.msra.mxu0 0
      %498 = vmatprep.subr.bf16.mxu0 0
      %499 = vmatpush1.bf16.msra.mxu0 0
      %500 = vmatprep.subr.bf16.mxu0 0
      %501 = vmatpush1.bf16.msra.mxu0 0
      %502 = vmatprep.subr.bf16.mxu0 0
      %503 = vmatpush1.bf16.msra.mxu0 0
      %504 = vmatprep.mubr.bf16.mxu0 0
      %505 = vmatmul.mubr.bf16.gmra.mrb[0].mxu0 %v418
      %v506 = vpop.f32.mrb[0].mxu0
      %v507 = vadd.f32 %v458, %v506
      %v508 = vpop.f32.mrb[0].mxu0
      %v509 = vpop.f32.mrb[0].mxu0
      %v510 = vadd.f32 %v461, %v509
      %v511 = vpop.f32.mrb[0].mxu0
      %512 = vmatprep.mubr.bf16.mxu0 0
      %513 = vmatmul.mubr.bf16.gmra.mrb[0].mxu0 %v421
      %v514 = vpop.f32.mrb[0].mxu0
      %v515 = vadd.f32 %v466, %v514
      %v516 = vpop.f32.mrb[0].mxu0
      %v517 = vpop.f32.mrb[0].mxu0
      %v518 = vadd.f32 %v469, %v517
      %v519 = vpop.f32.mrb[0].mxu0
      %520 = vdwg.mxu0
      %vm521 = vcmp.gt.f32.partialorder %v507, 0.0
      %vm522 = vcmp.gt.f32.partialorder %v510, 0.0
      %vm523 = vcmp.gt.f32.partialorder %v515, 0.0
      %vm524 = vcmp.gt.f32.partialorder %v518, 0.0
      %v525 = vmul.f32 %v507, 0.01
      %v526 = vmul.f32 %v510, 0.01
      %v527 = vmul.f32 %v515, 0.01
      %v528 = vmul.f32 %v518, 0.01
      %v529 = vsel %vm521, %v507, %v525
      %v530 = vsel %vm522, %v510, %v526
      %v531 = vsel %vm523, %v515, %v527
      %v532 = vsel %vm524, %v518, %v528
      %v534 = vlaneseq
      %v535 = vshrl.u32 %v534, 7
      %v536 = vsub.s32 0, %v535
      %v537 = vrot.slane %v253, %v536
      %538 = vrot.lane.b32.xlu0 %v537, 108
      %v539 = vpop.permute.xlu0 %538
      %v541 = vmul.f32 %v529, %v539
      %v542 = vmul.f32 %v530, %v539
      %v543 = vmul.f32 %v531, %v539
      %v544 = vmul.f32 %v532, %v539
      %v545 = vpack.c.bf16 %v542, %v541
      %v546 = vpack.c.bf16 %v544, %v543
      %549 = vrot.lane.b32.xlu0 %v545, 20
      %v550 = vpop.permute.xlu0 %549
      %551 = vrot.lane.b32.xlu0 %v546, 20
      %v552 = vpop.permute.xlu0 %551
      %vm553 = vcmask 162816
      %v556 = vsel %vm553, 0, %v550
      %v558 = vsel %vm553, 0, %v552
      %vm559 = vcmask 818176
      %v560 = vsel %vm559, %v556, 0
      %v562 = vsel %vm559, %v558, 0
      %564 = vst [vmem:[#allocation2] sm:$0xff] %v560
      %565 = vst [vmem:[#allocation2 + $0x8] sm:$0xff] %v562
      %v566 = vld [vmem:[%s3] sm:$0xff]
      %v567 = vld [vmem:[%s3 + $0x8] sm:$0xf]
      %v568 = vld [vmem:[%s3 + $0xc] sm:$0xff]
      %v569 = vld [vmem:[%s3 + $0x14] sm:$0xf]
      %v570 = vld [vmem:[#allocation2] sm:$0xff]
      %v571 = vld [vmem:[#allocation2 + $0x8] sm:$0xff]
      %574 = vrot.lane.b32.xlu0 %v570, 127
      %v575 = vpop.permute.xlu0 %574
      %576 = vrot.lane.b32.xlu0 %v571, 127
      %v577 = vpop.permute.xlu0 %576
      %578 = vrot.lane.b32.xlu0 %v570, 126
      %v579 = vpop.permute.xlu0 %578
      %580 = vrot.lane.b32.xlu0 %v571, 126
      %v581 = vpop.permute.xlu0 %580
      %582 = vrot.lane.b32.xlu0 %v570, 118
      %v583 = vpop.permute.xlu0 %582
      %584 = vrot.lane.b32.xlu0 %v571, 118
      %v585 = vpop.permute.xlu0 %584
      %586 = vrot.lane.b32.xlu0 %v570, 117
      %v587 = vpop.permute.xlu0 %586
      %588 = vrot.lane.b32.xlu0 %v571, 117
      %v589 = vpop.permute.xlu0 %588
      %590 = vrot.lane.b32.xlu0 %v570, 116
      %v591 = vpop.permute.xlu0 %590
      %592 = vrot.lane.b32.xlu0 %v571, 116
      %v593 = vpop.permute.xlu0 %592
      %594 = vrot.lane.b32.xlu0 %v570, 108
      %v595 = vpop.permute.xlu0 %594
      %596 = vrot.lane.b32.xlu0 %v571, 108
      %v597 = vpop.permute.xlu0 %596
      %598 = vrot.lane.b32.xlu0 %v570, 107
      %v599 = vpop.permute.xlu0 %598
      %600 = vrot.lane.b32.xlu0 %v571, 107
      %v601 = vpop.permute.xlu0 %600
      %602 = vrot.lane.b32.xlu0 %v570, 106
      %v603 = vpop.permute.xlu0 %602
      %604 = vrot.lane.b32.xlu0 %v571, 106
      %v605 = vpop.permute.xlu0 %604
      %v606 = vld [vmem:[%s4] sm:$0xff]
      %v607 = vld [vmem:[%s4 + $0x8] sm:$0xff]
      %609 = vset.pattern.permute.xlu0 0
      %610 = vperm.xlu0 %609, %v606
      %v611 = vpop.permute.xlu0 %610
      %614 = vset.pattern.permute.xlu0 0
      %615 = vperm.xlu0 %614, %v607
      %v616 = vpop.permute.xlu0 %615
      %v622 = vunpack.c.l.b16 %v566
      %v623 = vunpack.c.h.b16 %v566
      %v624 = vunpack.c.l.b16 %v567
      %v625 = vunpack.c.l.b16 %v568
      %v626 = vunpack.c.h.b16 %v568
      %v627 = vunpack.c.l.b16 %v569
      %v628 = vpack.c.b16 %v625, %v622
      %v629 = vpack.c.b16 %v626, %v623
      %v630 = vpack.c.b16 %v627, %v624
      %633 = vrot.lane.b32.xlu0 %v570, 119
      %v634 = vpop.permute.xlu0 %633
      %635 = vrot.lane.b32.xlu0 %v571, 119
      %v636 = vpop.permute.xlu0 %635
      %637 = vrot.lane.b32.xlu0 %v575, 119
      %v638 = vpop.permute.xlu0 %637
      %639 = vrot.lane.b32.xlu0 %v577, 119
      %v640 = vpop.permute.xlu0 %639
      %641 = vrot.lane.b32.xlu0 %v579, 119
      %v642 = vpop.permute.xlu0 %641
      %643 = vrot.lane.b32.xlu0 %v581, 119
      %v644 = vpop.permute.xlu0 %643
      %645 = vrot.lane.b32.xlu0 %v583, 119
      %v646 = vpop.permute.xlu0 %645
      %647 = vrot.lane.b32.xlu0 %v585, 119
      %v648 = vpop.permute.xlu0 %647
      %649 = vrot.lane.b32.xlu0 %v587, 119
      %v650 = vpop.permute.xlu0 %649
      %651 = vrot.lane.b32.xlu0 %v589, 119
      %v652 = vpop.permute.xlu0 %651
      %653 = vrot.lane.b32.xlu0 %v591, 119
      %v654 = vpop.permute.xlu0 %653
      %655 = vrot.lane.b32.xlu0 %v593, 119
      %v656 = vpop.permute.xlu0 %655
      %657 = vrot.lane.b32.xlu0 %v595, 119
      %v658 = vpop.permute.xlu0 %657
      %659 = vrot.lane.b32.xlu0 %v597, 119
      %v660 = vpop.permute.xlu0 %659
      %661 = vrot.lane.b32.xlu0 %v599, 119
      %v662 = vpop.permute.xlu0 %661
      %663 = vrot.lane.b32.xlu0 %v601, 119
      %v664 = vpop.permute.xlu0 %663
      %665 = vrot.lane.b32.xlu0 %v603, 119
      %v666 = vpop.permute.xlu0 %665
      %667 = vrot.lane.b32.xlu0 %v605, 119
      %v668 = vpop.permute.xlu0 %667
      %v688 = vsel %vm416, %v630, 0
      %690 = vmatprep.subr.bf16.mxu0 0
      %691 = vmatpush1.bf16.msra.mxu0 %v634
      %692 = vmatprep.subr.bf16.mxu0 0
      %693 = vmatpush1.bf16.msra.mxu0 %v636
      %694 = vmatprep.subr.bf16.mxu0 0
      %695 = vmatpush1.bf16.msra.mxu0 %v638
      %696 = vmatprep.subr.bf16.mxu0 0
      %697 = vmatpush1.bf16.msra.mxu0 %v640
      %698 = vmatprep.subr.bf16.mxu0 0
      %699 = vmatpush1.bf16.msra.mxu0 %v642
      %700 = vmatprep.subr.bf16.mxu0 0
      %701 = vmatpush1.bf16.msra.mxu0 %v644
      %702 = vmatprep.subr.bf16.mxu0 0
      %703 = vmatpush1.bf16.msra.mxu0 %v646
      %704 = vmatprep.subr.bf16.mxu0 0
      %705 = vmatpush1.bf16.msra.mxu0 %v648
      %706 = vmatprep.subr.bf16.mxu0 0
      %707 = vmatpush1.bf16.msra.mxu0 %v650
      %708 = vmatprep.subr.bf16.mxu0 0
      %709 = vmatpush1.bf16.msra.mxu0 %v652
      %710 = vmatprep.subr.bf16.mxu0 0
      %711 = vmatpush1.bf16.msra.mxu0 %v654
      %712 = vmatprep.subr.bf16.mxu0 0
      %713 = vmatpush1.bf16.msra.mxu0 %v656
      %714 = vmatprep.subr.bf16.mxu0 0
      %715 = vmatpush1.bf16.msra.mxu0 %v658
      %716 = vmatprep.subr.bf16.mxu0 0
      %717 = vmatpush1.bf16.msra.mxu0 %v660
      %718 = vmatprep.subr.bf16.mxu0 0
      %719 = vmatpush1.bf16.msra.mxu0 %v662
      %720 = vmatprep.subr.bf16.mxu0 0
      %721 = vmatpush1.bf16.msra.mxu0 %v664
      %722 = vmatprep.mubr.bf16.mxu0 %v629
      %723 = vmatmul.mubr.bf16.gmra.mrb[0].mxu0 %v628
      %v724 = vpop.f32.mrb[0].mxu0
      %v725 = vadd.f32 %v611, %v724
      %v726 = vpop.f32.mrb[0].mxu0
      %v727 = vpop.f32.mrb[0].mxu0
      %v728 = vadd.f32 %v616, %v727
      %v729 = vpop.f32.mrb[0].mxu0
      %730 = vdwg.mxu0
      %731 = vmatprep.subr.bf16.mxu0 0
      %732 = vmatpush1.bf16.msra.mxu0 %v666
      %733 = vmatprep.subr.bf16.mxu0 0
      %734 = vmatpush1.bf16.msra.mxu0 %v668
      %735 = vmatprep.subr.bf16.mxu0 0
      %736 = vmatpush1.bf16.msra.mxu0 0
      %737 = vmatprep.subr.bf16.mxu0 0
      %738 = vmatpush1.bf16.msra.mxu0 0
      %739 = vmatprep.subr.bf16.mxu0 0
      %740 = vmatpush1.bf16.msra.mxu0 0
      %741 = vmatprep.subr.bf16.mxu0 0
      %742 = vmatpush1.bf16.msra.mxu0 0
      %743 = vmatprep.subr.bf16.mxu0 0
      %744 = vmatpush1.bf16.msra.mxu0 0
      %745 = vmatprep.subr.bf16.mxu0 0
      %746 = vmatpush1.bf16.msra.mxu0 0
      %747 = vmatprep.subr.bf16.mxu0 0
      %748 = vmatpush1.bf16.msra.mxu0 0
      %749 = vmatprep.subr.bf16.mxu0 0
      %750 = vmatpush1.bf16.msra.mxu0 0
      %751 = vmatprep.subr.bf16.mxu0 0
      %752 = vmatpush1.bf16.msra.mxu0 0
      %753 = vmatprep.subr.bf16.mxu0 0
      %754 = vmatpush1.bf16.msra.mxu0 0
      %755 = vmatprep.subr.bf16.mxu0 0
      %756 = vmatpush1.bf16.msra.mxu0 0
      %757 = vmatprep.subr.bf16.mxu0 0
      %758 = vmatpush1.bf16.msra.mxu0 0
      %759 = vmatprep.subr.bf16.mxu0 0
      %760 = vmatpush1.bf16.msra.mxu0 0
      %761 = vmatprep.subr.bf16.mxu0 0
      %762 = vmatpush1.bf16.msra.mxu0 0
      %763 = vmatprep.mubr.bf16.mxu0 0
      %764 = vmatmul.mubr.bf16.gmra.mrb[0].mxu0 %v688
      %v765 = vpop.f32.mrb[0].mxu0
      %v766 = vadd.f32 %v725, %v765
      %v767 = vpop.f32.mrb[0].mxu0
      %v768 = vpop.f32.mrb[0].mxu0
      %v769 = vadd.f32 %v728, %v768
      %v770 = vpop.f32.mrb[0].mxu0
      %771 = vdwg.mxu0
      %v772 = vmul.f32 %v766, %v539
      %v773 = vmul.f32 %v769, %v539
      %v774 = vpack.c.bf16 %v773, %v772
      %776 = vrot.lane.b32.xlu0 %v774, 20
      %v777 = vpop.permute.xlu0 %776
      %v779 = vsel %vm553, 0, %v777
      %v780 = vsel %vm559, %v779, 0
      %v782 = vunpack.c.l.b16 %v780
      %v783 = vunpack.c.h.b16 %v780
      %v784 = vpack.c.b16 %v782, %v782
      %v785 = vpack.c.b16 %v783, %v783
      %788 = vst [vmem:[%s251] sm:$0xf] %v784
      %789 = vst [vmem:[%s251 + $0x4] sm:$0xf] %v785
      %p790 = scmp.lt.s32.totalorder %s17, 3
      %s791 = scalar_select %p790, %s17, 3
      %s792 = smul.addr %s791, 2
      %s793 = smul.addr %s792, 4
      %s794 = scalar_lea.vmem %s6, %s793
      // Predicated region
      $region45: #{mfe_backbone_forward.19} parent=43 // pred_check
        %p795 = pneg %p166
      $region46: #{mfe_backbone_forward.19} parent=43 // pred_check_branch
        %797 = sbr.rel (%p795) target = $region48
      $region47: #{mfe_backbone_forward.19} parent=43 // pred_region
        _
      $region48: #{mfe_backbone_forward.19} parent=43 // pred_fallthru
        _
    $region44: #{mfe_backbone_forward.19} parent=5 // pred_fallthru
      _
    %p798 = scmp.le.s32.totalorder 2, %s12
    // Predicated region
    $region49: #{mfe_backbone_forward.19} parent=5 // pred_check
      %p799 = pneg %p798
    $region50: #{mfe_backbone_forward.19} parent=5 // pred_check_branch
      %801 = sbr.rel (%p799) target = $region52
    $region51: #{mfe_backbone_forward.19} parent=5 // pred_region
      %s802 = ssub.s32 %s12, 2
      // Predicated region
      $region53: #{mfe_backbone_forward.19} parent=51 // pred_check
        %p803 = pneg %p172
      $region54: #{mfe_backbone_forward.19} parent=51 // pred_check_branch
        %805 = sbr.rel (%p803) target = $region56
      $region55: #{mfe_backbone_forward.19} parent=51 // pred_region
        %p806 = scmp.lt.s32.totalorder %s18, 3
        %s807 = scalar_select %p806, %s18, 3
        %s808 = smul.addr %s807, 2
        %s809 = smul.addr %s808, 4
        %s810 = scalar_lea.vmem %s6, %s809
      $region56: #{mfe_backbone_forward.19} parent=51 // pred_fallthru
        _
    $region52: #{mfe_backbone_forward.19} parent=5 // pred_fallthru
      _
  $region6: #{mfe_backbone_forward.19} parent=0 // loop_footer
    %s16 = sadd.s32 1, %s12
  $region7: #{mfe_backbone_forward.19} parent=0 // loop_footer_branch
    %11 = sbr.rel target = $region3
  $region8: #{mfe_backbone_forward.19} parent=0 // loop_exit
    _

// kernel: mfe_backbone_forward.20
$region0: #{mfe_backbone_forward.20}
  #allocation0 [shape = 'u32[]', space=smem, size = 0x4, offset = 0x4, fixed_abs, tag = 'smem constant byte address 0x4 - core index']
  #allocation1 [shape = 'u32[144,128]{1,0:T(1,128)}', space=vmem, size = 0x12000, scoped, tag = 'internal scratch']
  %s0 = inlined_call_operand.vmem [shape: bf16[4,8,384], index: 0, kind: input, shape index: {}]
  %s1 = inlined_call_operand.vmem [shape: bf16[16,8], index: 1, kind: input, shape index: {}]
  %s2 = inlined_call_operand.vmem [shape: f32[16,1], index: 2, kind: input, shape index: {}]
  %s3 = inlined_call_operand.vmem [shape: f32[1,384], index: 3, kind: input, shape index: {}]
  %s4 = inlined_call_operand.vmem [shape: bf16[4,16,384], index: 4, kind: input, shape index: {}]
  %s5 = inlined_call_operand.vmem [shape: bf16[4,16,384], index: 5, kind: output, shape index: {}]
  %s6 = sld [smem:[#allocation0]]
  $region53: #{mfe_backbone_forward.20} parent=0
    _
  %s8 = ssub.s32 1, %s6
  %s9 = scalar_select 0, %s8, %s6
  loop: start=0, step=1, limit=6
  $region2: #{mfe_backbone_forward.20} parent=0 // loop_pre_header
    _
  $region3: #{mfe_backbone_forward.20} parent=0 // loop_header
    %s11 = sphi 0, %s15
    %p12 = scmp.ge.s32.totalorder %s11, 6
    %s21 = sphi 0, %s23
    %s24 = sphi 0, %s21
    %s25 = sphi 0, %s24
    %s41 = sphi 0, %s25
    %s45 = sphi 0, %s45
    %s47 = sphi 0, %s45
    %s48 = sphi 0, %s47
    %s62 = sphi 0, %s48
    %s66 = sphi 0, %s66
    %s68 = sphi 0, %s66
    %s69 = sphi 0, %s68
    %s83 = sphi 0, %s69
    %s87 = sphi 0, %s87
    %s89 = sphi 0, %s87
    %s90 = sphi 0, %s89
    %s104 = sphi 0, %s90
    %s110 = sphi 0, %s112
    %s113 = sphi 0, %s110
    %s114 = sphi 0, %s113
    %s130 = sphi 0, %s114
    %s136 = sphi 0, %s138
    %s139 = sphi 0, %s136
    %s140 = sphi 0, %s139
    %s156 = sphi 0, %s140
  $region4: #{mfe_backbone_forward.20} parent=0 // loop_header_branch
    %14 = sbr.rel (%p12) target = $region8
  $region5: #{mfe_backbone_forward.20} parent=0 // loop_body
    %s16 = ssub.s32 %s11, 1
    %s17 = ssub.s32 %s11, 2
    %s18 = sadd.s32 %s11, 1
    %s19 = ssub.s32 %s11, %s18
    %p20 = scmp.eq.s32.totalorder %s19, 0
    %s22 = sadd.s32 %s21, 1
    %s23 = scalar_select %p20, %s21, %s22
    %p26 = pneg %p20
    %p27 = scmp.eq.s32.totalorder %s11, 3
    %p28 = por %p26, %p27
    %p29 = scmp.ne.s32.totalorder %s21, %s24
    %p30 = scmp.eq.s32.totalorder %s11, 0
    %p31 = por %p29, %p30
    %p32 = scmp.ne.s32.totalorder %s21, %s24
    %p33 = scmp.eq.s32.totalorder %s16, 3
    %p34 = por %p32, %p33
    %p35 = scmp.ne.s32.totalorder %s24, %s25
    %p36 = scmp.eq.s32.totalorder %s16, 0
    %p37 = por %p35, %p36
    %p38 = scmp.ne.s32.totalorder %s24, %s25
    %p39 = scmp.eq.s32.totalorder %s17, 3
    %p40 = por %p38, %p39
    %p42 = scmp.ne.s32.totalorder %s25, %s41
    %p43 = scmp.eq.s32.totalorder %s17, 0
    %p44 = por %p42, %p43
    %s46 = sadd.s32 %s45, 1
    %p49 = scmp.eq.s32.totalorder %s11, 3
    %p50 = scmp.ne.s32.totalorder %s45, %s47
    %p51 = scmp.eq.s32.totalorder %s11, 0
    %p52 = por %p50, %p51
    %p53 = scmp.ne.s32.totalorder %s45, %s47
    %p54 = scmp.eq.s32.totalorder %s16, 3
    %p55 = por %p53, %p54
    %p56 = scmp.ne.s32.totalorder %s47, %s48
    %p57 = scmp.eq.s32.totalorder %s16, 0
    %p58 = por %p56, %p57
    %p59 = scmp.ne.s32.totalorder %s47, %s48
    %p60 = scmp.eq.s32.totalorder %s17, 3
    %p61 = por %p59, %p60
    %p63 = scmp.ne.s32.totalorder %s48, %s62
    %p64 = scmp.eq.s32.totalorder %s17, 0
    %p65 = por %p63, %p64
    %s67 = sadd.s32 %s66, 1
    %p70 = scmp.eq.s32.totalorder %s11, 3
    %p71 = scmp.ne.s32.totalorder %s66, %s68
    %p72 = scmp.eq.s32.totalorder %s11, 0
    %p73 = por %p71, %p72
    %p74 = scmp.ne.s32.totalorder %s66, %s68
    %p75 = scmp.eq.s32.totalorder %s16, 3
    %p76 = por %p74, %p75
    %p77 = scmp.ne.s32.totalorder %s68, %s69
    %p78 = scmp.eq.s32.totalorder %s16, 0
    %p79 = por %p77, %p78
    %p80 = scmp.ne.s32.totalorder %s68, %s69
    %p81 = scmp.eq.s32.totalorder %s17, 3
    %p82 = por %p80, %p81
    %p84 = scmp.ne.s32.totalorder %s69, %s83
    %p85 = scmp.eq.s32.totalorder %s17, 0
    %p86 = por %p84, %p85
    %s88 = sadd.s32 %s87, 1
    %p91 = scmp.eq.s32.totalorder %s11, 3
    %p92 = scmp.ne.s32.totalorder %s87, %s89
    %p93 = scmp.eq.s32.totalorder %s11, 0
    %p94 = por %p92, %p93
    %p95 = scmp.ne.s32.totalorder %s87, %s89
    %p96 = scmp.eq.s32.totalorder %s16, 3
    %p97 = por %p95, %p96
    %p98 = scmp.ne.s32.totalorder %s89, %s90
    %p99 = scmp.eq.s32.totalorder %s16, 0
    %p100 = por %p98, %p99
    %p101 = scmp.ne.s32.totalorder %s89, %s90
    %p102 = scmp.eq.s32.totalorder %s17, 3
    %p103 = por %p101, %p102
    %p105 = scmp.ne.s32.totalorder %s90, %s104
    %p106 = scmp.eq.s32.totalorder %s17, 0
    %p107 = por %p105, %p106
    %s108 = ssub.s32 %s11, %s18
    %p109 = scmp.eq.s32.totalorder %s108, 0
    %s111 = sadd.s32 %s110, 1
    %s112 = scalar_select %p109, %s110, %s111
    %p115 = pneg %p109
    %p116 = scmp.eq.s32.totalorder %s11, 3
    %p117 = por %p115, %p116
    %p118 = scmp.ne.s32.totalorder %s110, %s113
    %p119 = scmp.eq.s32.totalorder %s11, 0
    %p120 = por %p118, %p119
    %p121 = scmp.ne.s32.totalorder %s110, %s113
    %p122 = scmp.eq.s32.totalorder %s16, 3
    %p123 = por %p121, %p122
    %p124 = scmp.ne.s32.totalorder %s113, %s114
    %p125 = scmp.eq.s32.totalorder %s16, 0
    %p126 = por %p124, %p125
    %p127 = scmp.ne.s32.totalorder %s113, %s114
    %p128 = scmp.eq.s32.totalorder %s17, 3
    %p129 = por %p127, %p128
    %p131 = scmp.ne.s32.totalorder %s114, %s130
    %p132 = scmp.eq.s32.totalorder %s17, 0
    %p133 = por %p131, %p132
    %s134 = ssub.s32 %s11, %s18
    %p135 = scmp.eq.s32.totalorder %s134, 0
    %s137 = sadd.s32 %s136, 1
    %s138 = scalar_select %p135, %s136, %s137
    %p141 = pneg %p135
    %p142 = scmp.eq.s32.totalorder %s11, 3
    %p143 = por %p141, %p142
    %p144 = scmp.ne.s32.totalorder %s136, %s139
    %p145 = scmp.eq.s32.totalorder %s11, 0
    %p146 = por %p144, %p145
    %p147 = scmp.ne.s32.totalorder %s136, %s139
    %p148 = scmp.eq.s32.totalorder %s16, 3
    %p149 = por %p147, %p148
    %p150 = scmp.ne.s32.totalorder %s139, %s140
    %p151 = scmp.eq.s32.totalorder %s16, 0
    %p152 = por %p150, %p151
    %p153 = scmp.ne.s32.totalorder %s139, %s140
    %p154 = scmp.eq.s32.totalorder %s17, 3
    %p155 = por %p153, %p154
    %p157 = scmp.ne.s32.totalorder %s140, %s156
    %p158 = scmp.eq.s32.totalorder %s17, 0
    %p159 = por %p157, %p158
    %p160 = scmp.le.s32.totalorder 1, %s11
    %p161 = scmp.lt.s32.totalorder %s11, 5
    %p162 = pnand %p160, %p161
    %p163 = pneg %p162
    // Predicated region
    $region9: #{mfe_backbone_forward.20} parent=5 // pred_check
      _
    $region10: #{mfe_backbone_forward.20} parent=5 // pred_check_branch
      %165 = sbr.rel (%p162) target = $region12
    $region11: #{mfe_backbone_forward.20} parent=5 // pred_region
      %s166 = ssub.s32 %s11, 1
      // Predicated region
      $region13: #{mfe_backbone_forward.20} parent=11 // pred_check
        %p167 = pneg %p58
      $region14: #{mfe_backbone_forward.20} parent=11 // pred_check_branch
        %169 = sbr.rel (%p167) target = $region16
      $region15: #{mfe_backbone_forward.20} parent=11 // pred_region
        _
      $region16: #{mfe_backbone_forward.20} parent=11 // pred_fallthru
        _
      // Predicated region
      $region17: #{mfe_backbone_forward.20} parent=11 // pred_check
        %p170 = pneg %p79
      $region18: #{mfe_backbone_forward.20} parent=11 // pred_check_branch
        %172 = sbr.rel (%p170) target = $region20
      $region19: #{mfe_backbone_forward.20} parent=11 // pred_region
        _
      $region20: #{mfe_backbone_forward.20} parent=11 // pred_fallthru
        _
      // Predicated region
      $region21: #{mfe_backbone_forward.20} parent=11 // pred_check
        %p173 = pneg %p100
      $region22: #{mfe_backbone_forward.20} parent=11 // pred_check_branch
        %175 = sbr.rel (%p173) target = $region24
      $region23: #{mfe_backbone_forward.20} parent=11 // pred_region
        _
      $region24: #{mfe_backbone_forward.20} parent=11 // pred_fallthru
        _
    $region12: #{mfe_backbone_forward.20} parent=5 // pred_fallthru
      _
    %p176 = scmp.lt.s32.totalorder %s11, 4
    // Predicated region
    $region25: #{mfe_backbone_forward.20} parent=5 // pred_check
      %p177 = pneg %p176
    $region26: #{mfe_backbone_forward.20} parent=5 // pred_check_branch
      %179 = sbr.rel (%p177) target = $region28
    $region27: #{mfe_backbone_forward.20} parent=5 // pred_region
      // Predicated region
      $region29: #{mfe_backbone_forward.20} parent=27 // pred_check
        %p180 = pneg %p31
      $region30: #{mfe_backbone_forward.20} parent=27 // pred_check_branch
        %182 = sbr.rel (%p180) target = $region32
      $region31: #{mfe_backbone_forward.20} parent=27 // pred_region
        %p183 = scmp.lt.s32.totalorder %s11, 3
        %s184 = scalar_select %p183, %s11, 3
        %s185 = smul.addr %s184, 3
        %s186 = smul.addr %s185, 4
        %s187 = scalar_lea.vmem %s0, %s186
      $region32: #{mfe_backbone_forward.20} parent=27 // pred_fallthru
        _
      // Predicated region
      $region33: #{mfe_backbone_forward.20} parent=27 // pred_check
        %p188 = pneg %p120
      $region34: #{mfe_backbone_forward.20} parent=27 // pred_check_branch
        %190 = sbr.rel (%p188) target = $region36
      $region35: #{mfe_backbone_forward.20} parent=27 // pred_region
        %p191 = scmp.lt.s32.totalorder %s11, 3
        %s192 = scalar_select %p191, %s11, 3
        %s193 = smul.addr %s192, 6
        %s194 = smul.addr %s193, 4
        %s195 = scalar_lea.vmem %s4, %s194
      $region36: #{mfe_backbone_forward.20} parent=27 // pred_fallthru
        _
    $region28: #{mfe_backbone_forward.20} parent=5 // pred_fallthru
      _
    %p196 = scmp.le.s32.totalorder 1, %s11
    %p197 = scmp.lt.s32.totalorder %s11, 5
    %p198 = pnand %p196, %p197
    %p199 = pneg %p198
    // Predicated region
    $region37: #{mfe_backbone_forward.20} parent=5 // pred_check
      _
    $region38: #{mfe_backbone_forward.20} parent=5 // pred_check_branch
      %201 = sbr.rel (%p198) target = $region40
    $region39: #{mfe_backbone_forward.20} parent=5 // pred_region
      %s202 = ssub.s32 %s11, 1
      %p203 = scmp.lt.s32.totalorder %s16, 3
      %s204 = scalar_select %p203, %s16, 3
      %s205 = smul.addr %s204, 3
      %s206 = smul.addr %s205, 4
      %s207 = scalar_lea.vmem %s0, %s206
      %p208 = pneg %p37
      %p209 = pneg %p34
      %p210 = pneg %p58
      %p211 = pneg %p55
      %p212 = pneg %p79
      %p213 = pneg %p76
      %p214 = pneg %p100
      %p215 = pneg %p97
      %p216 = scmp.lt.s32.totalorder %s16, 3
      %s217 = scalar_select %p216, %s16, 3
      %s218 = smul.addr %s217, 6
      %s219 = smul.addr %s218, 4
      %s220 = scalar_lea.vmem %s4, %s219
      %p221 = pneg %p126
      %p222 = pneg %p123
      %p223 = pneg %p152
      %p224 = pneg %p149
      %p225 = scmp.lt.s32.totalorder %s16, 3
      %s226 = scalar_select %p225, %s16, 3
      %s227 = smul.addr %s226, 6
      %s228 = smul.addr %s227, 4
      %s229 = scalar_lea.vmem %s5, %s228
      %p230 = scmp.lt.s32.totalorder %s16, 3
      %s231 = scalar_select %p230, %s16, 3
      %s232 = smul.addr %s231, 3
      %s233 = smul.addr %s232, 4
      %s234 = scalar_lea.vmem %s0, %s233
      %p235 = scmp.lt.s32.totalorder %s16, 3
      %s236 = scalar_select %p235, %s16, 3
      %s237 = smul.addr %s236, 6
      %s238 = smul.addr %s237, 4
      %s239 = scalar_lea.vmem %s4, %s238
      %p240 = scmp.lt.s32.totalorder %s16, 3
      %s241 = scalar_select %p240, %s16, 3
      %s242 = smul.addr %s241, 6
      %s243 = smul.addr %s242, 4
      %s244 = scalar_lea.vmem %s5, %s243
      %v246 = vld [vmem:[%s3] sm:$0x7]
      %v247 = vld [vmem:[%s1] sm:$0xf]
      %v248 = vld [vmem:[%s1 + $0x4] sm:$0xf]
      %v249 = vld [vmem:[%s234] sm:$0xff]
      %v250 = vld [vmem:[%s234 + $0x8] sm:$0xf]
      %v251 = vld [vmem:[%s2] sm:$0xff]
      %v252 = vld [vmem:[%s2 + $0x8] sm:$0xff]
      %254 = vset.pattern.permute.xlu0 0
      %255 = vperm.xlu0 %254, %v251
      %v256 = vpop.permute.xlu0 %255
      %259 = vset.pattern.permute.xlu0 0
      %260 = vperm.xlu0 %259, %v252
      %v261 = vpop.permute.xlu0 %260
      %v265 = vunpack.c.l.b16 %v247
      %v266 = vunpack.c.l.b16 %v248
      %v267 = vpack.c.b16 %v266, %v265
      %v270 = vunpack.c.l.b16 %v249
      %v271 = vunpack.c.h.b16 %v249
      %v272 = vunpack.c.l.b16 %v250
      %v273 = vpack.c.b16 %v270, %v270
      %v274 = vpack.c.b16 %v271, %v271
      %v275 = vpack.c.b16 %v272, %v272
      %276 = vrot.lane.b32.xlu0 %v273, 92
      %v277 = vpop.permute.xlu0 %276
      %278 = vrot.lane.b32.xlu0 %v274, 92
      %v279 = vpop.permute.xlu0 %278
      %280 = vrot.lane.b32.xlu0 %v275, 92
      %v281 = vpop.permute.xlu0 %280
      %vm282 = vcmask 752640
      %v283 = vsel %vm282, %v277, %v279
      %v284 = vsel %vm282, %v279, %v281
      %vm285 = vcmask 64512
      %v287 = vsel %vm285, %v267, 0
      %vm289 = vcmask 1043456
      %v291 = vsel %vm289, %v283, 0
      %v294 = vsel %vm289, %v284, 0
      %v297 = vsel %vm289, %v281, 0
      %299 = vmatprep.subr.bf16.mxu0 %v294
      %300 = vmatpush1.bf16.msra.mxu0 %v291
      %301 = vmatprep.subr.bf16.mxu0 0
      %302 = vmatpush1.bf16.msra.mxu0 0
      %303 = vmatprep.subr.bf16.mxu0 0
      %304 = vmatpush1.bf16.msra.mxu0 0
      %305 = vmatprep.subr.bf16.mxu0 0
      %306 = vmatpush1.bf16.msra.mxu0 0
      %307 = vmatprep.subr.bf16.mxu0 0
      %308 = vmatpush1.bf16.msra.mxu0 0
      %309 = vmatprep.subr.bf16.mxu0 0
      %310 = vmatpush1.bf16.msra.mxu0 0
      %311 = vmatprep.subr.bf16.mxu0 0
      %312 = vmatpush1.bf16.msra.mxu0 0
      %313 = vmatprep.subr.bf16.mxu0 0
      %314 = vmatpush1.bf16.msra.mxu0 0
      %315 = vmatprep.subr.bf16.mxu0 0
      %316 = vmatpush1.bf16.msra.mxu0 0
      %317 = vmatprep.subr.bf16.mxu0 0
      %318 = vmatpush1.bf16.msra.mxu0 0
      %319 = vmatprep.subr.bf16.mxu0 0
      %320 = vmatpush1.bf16.msra.mxu0 0
      %321 = vmatprep.subr.bf16.mxu0 0
      %322 = vmatpush1.bf16.msra.mxu0 0
      %323 = vmatprep.subr.bf16.mxu0 0
      %324 = vmatpush1.bf16.msra.mxu0 0
      %325 = vmatprep.subr.bf16.mxu0 0
      %326 = vmatpush1.bf16.msra.mxu0 0
      %327 = vmatprep.subr.bf16.mxu0 0
      %328 = vmatpush1.bf16.msra.mxu0 0
      %329 = vmatprep.subr.bf16.mxu0 0
      %330 = vmatpush1.bf16.msra.mxu0 0
      %331 = vmatprep.mubr.bf16.mxu0 0
      %332 = vmatmul.mubr.bf16.gmra.mrb[0].mxu0 %v287
      %v333 = vpop.f32.mrb[0].mxu0
      %v334 = vadd.f32 %v256, %v333
      %v335 = vpop.f32.mrb[0].mxu0
      %v336 = vadd.f32 %v256, %v335
      %v337 = vpop.f32.mrb[0].mxu0
      %v338 = vadd.f32 %v261, %v337
      %v339 = vpop.f32.mrb[0].mxu0
      %v340 = vadd.f32 %v261, %v339
      %341 = vdwg.mxu0
      %342 = vmatprep.subr.bf16.mxu0 0
      %343 = vmatpush1.bf16.msra.mxu0 %v297
      %344 = vmatprep.subr.bf16.mxu0 0
      %345 = vmatpush1.bf16.msra.mxu0 0
      %346 = vmatprep.subr.bf16.mxu0 0
      %347 = vmatpush1.bf16.msra.mxu0 0
      %348 = vmatprep.subr.bf16.mxu0 0
      %349 = vmatpush1.bf16.msra.mxu0 0
      %350 = vmatprep.subr.bf16.mxu0 0
      %351 = vmatpush1.bf16.msra.mxu0 0
      %352 = vmatprep.subr.bf16.mxu0 0
      %353 = vmatpush1.bf16.msra.mxu0 0
      %354 = vmatprep.subr.bf16.mxu0 0
      %355 = vmatpush1.bf16.msra.mxu0 0
      %356 = vmatprep.subr.bf16.mxu0 0
      %357 = vmatpush1.bf16.msra.mxu0 0
      %358 = vmatprep.subr.bf16.mxu0 0
      %359 = vmatpush1.bf16.msra.mxu0 0
      %360 = vmatprep.subr.bf16.mxu0 0
      %361 = vmatpush1.bf16.msra.mxu0 0
      %362 = vmatprep.subr.bf16.mxu0 0
      %363 = vmatpush1.bf16.msra.mxu0 0
      %364 = vmatprep.subr.bf16.mxu0 0
      %365 = vmatpush1.bf16.msra.mxu0 0
      %366 = vmatprep.subr.bf16.mxu0 0
      %367 = vmatpush1.bf16.msra.mxu0 0
      %368 = vmatprep.subr.bf16.mxu0 0
      %369 = vmatpush1.bf16.msra.mxu0 0
      %370 = vmatprep.subr.bf16.mxu0 0
      %371 = vmatpush1.bf16.msra.mxu0 0
      %372 = vmatprep.subr.bf16.mxu0 0
      %373 = vmatpush1.bf16.msra.mxu0 0
      %374 = vmatprep.mubr.bf16.mxu0 0
      %375 = vmatmul.mubr.bf16.gmra.mrb[0].mxu0 %v287
      %v376 = vpop.f32.mrb[0].mxu0
      %v377 = vadd.f32 %v256, %v376
      %v378 = vpop.f32.mrb[0].mxu0
      %v379 = vpop.f32.mrb[0].mxu0
      %v380 = vadd.f32 %v261, %v379
      %v381 = vpop.f32.mrb[0].mxu0
      %382 = vdwg.mxu0
      %v383 = vld [vmem:[%s239] sm:$0xff]
      %v384 = vld [vmem:[%s239 + $0x8] sm:$0xf]
      %v385 = vld [vmem:[%s239 + $0xc] sm:$0xff]
      %v386 = vld [vmem:[%s239 + $0x14] sm:$0xf]
      %v387 = vunpack.c.l.bf16 %v383
      %v388 = vunpack.c.h.bf16 %v383
      %v389 = vunpack.c.l.bf16 %v384
      %v390 = vunpack.c.l.bf16 %v385
      %v391 = vunpack.c.h.bf16 %v385
      %v392 = vunpack.c.l.bf16 %v386
      %399 = vrot.lane.b32.xlu0 %v387, 92
      %v400 = vpop.permute.xlu0 %399
      %401 = vrot.lane.b32.xlu0 %v388, 92
      %v402 = vpop.permute.xlu0 %401
      %403 = vrot.lane.b32.xlu0 %v389, 92
      %v404 = vpop.permute.xlu0 %403
      %405 = vrot.lane.b32.xlu0 %v390, 92
      %v406 = vpop.permute.xlu0 %405
      %407 = vrot.lane.b32.xlu0 %v391, 92
      %v408 = vpop.permute.xlu0 %407
      %409 = vrot.lane.b32.xlu0 %v392, 92
      %v410 = vpop.permute.xlu0 %409
      %vm411 = vcmask 752640
      %v412 = vsel %vm411, %v400, %v402
      %v413 = vsel %vm411, %v402, %v404
      %v414 = vsel %vm411, %v406, %v408
      %v415 = vsel %vm411, %v408, %v410
      %v422 = vadd.f32 %v334, %v412
      %v423 = vadd.f32 %v336, %v413
      %v424 = vadd.f32 %v377, %v404
      %v425 = vadd.f32 %v338, %v414
      %v426 = vadd.f32 %v340, %v415
      %v427 = vadd.f32 %v380, %v410
      %v429 = vlaneseq
      %v430 = vshrl.u32 %v429, 7
      %v431 = vsub.s32 0, %v430
      %v432 = vrot.slane %v246, %v431
      %v433 = vlaneseq
      %v434 = vshrl.u32 %v433, 7
      %v435 = vsub.s32 1, %v434
      %v436 = vrot.slane %v246, %v435
      %v437 = vlaneseq
      %v438 = vshrl.u32 %v437, 7
      %v439 = vsub.s32 2, %v438
      %v440 = vrot.slane %v246, %v439
      %441 = vrot.lane.b32.xlu0 %v432, 92
      %v442 = vpop.permute.xlu0 %441
      %443 = vrot.lane.b32.xlu0 %v436, 92
      %v444 = vpop.permute.xlu0 %443
      %445 = vrot.lane.b32.xlu0 %v440, 92
      %v446 = vpop.permute.xlu0 %445
      %v447 = vsel %vm411, %v442, %v444
      %v448 = vsel %vm411, %v444, %v446
      %v452 = vmul.f32 %v422, %v447
      %v453 = vmul.f32 %v423, %v448
      %v454 = vmul.f32 %v424, %v446
      %v455 = vmul.f32 %v425, %v447
      %v456 = vmul.f32 %v426, %v448
      %v457 = vmul.f32 %v427, %v446
      %v458 = vpack.c.bf16 %v455, %v452
      %v459 = vpack.c.bf16 %v456, %v453
      %v460 = vpack.c.bf16 %v457, %v454
      %464 = vrot.lane.b32.xlu0 %v458, 36
      %v465 = vpop.permute.xlu0 %464
      %466 = vrot.lane.b32.xlu0 %v459, 36
      %v467 = vpop.permute.xlu0 %466
      %468 = vrot.lane.b32.xlu0 %v460, 36
      %v469 = vpop.permute.xlu0 %468
      %vm470 = vcmask 293888
      %v471 = vsel %vm470, %v465, %v467
      %v472 = vsel %vm470, %v467, %v469
      %vm473 = vcmask 293888
      %v476 = vsel %vm473, 0, %v465
      %vm477 = vcmask 556032
      %v479 = vsel %vm477, %v472, 0
      %v482 = vunpack.c.l.b16 %v476
      %v483 = vunpack.c.l.b16 %v471
      %v484 = vunpack.c.l.b16 %v479
      %v485 = vunpack.c.h.b16 %v476
      %v486 = vunpack.c.h.b16 %v471
      %v487 = vunpack.c.h.b16 %v479
      %v488 = vpack.c.b16 %v483, %v482
      %v489 = vpack.c.b16 %v484, %v484
      %v490 = vpack.c.b16 %v486, %v485
      %v491 = vpack.c.b16 %v487, %v487
      %496 = vst [vmem:[%s244] sm:$0xff] %v488
      %497 = vst [vmem:[%s244 + $0x8] sm:$0xf] %v489
      %498 = vst [vmem:[%s244 + $0xc] sm:$0xff] %v490
      %499 = vst [vmem:[%s244 + $0x14] sm:$0xf] %v491
      %p500 = scmp.lt.s32.totalorder %s16, 3
      %s501 = scalar_select %p500, %s16, 3
      %s502 = smul.addr %s501, 6
      %s503 = smul.addr %s502, 4
      %s504 = scalar_lea.vmem %s5, %s503
      // Predicated region
      $region41: #{mfe_backbone_forward.20} parent=39 // pred_check
        %p505 = pneg %p149
      $region42: #{mfe_backbone_forward.20} parent=39 // pred_check_branch
        %507 = sbr.rel (%p505) target = $region44
      $region43: #{mfe_backbone_forward.20} parent=39 // pred_region
        _
      $region44: #{mfe_backbone_forward.20} parent=39 // pred_fallthru
        _
    $region40: #{mfe_backbone_forward.20} parent=5 // pred_fallthru
      _
    %p508 = scmp.le.s32.totalorder 2, %s11
    // Predicated region
    $region45: #{mfe_backbone_forward.20} parent=5 // pred_check
      %p509 = pneg %p508
    $region46: #{mfe_backbone_forward.20} parent=5 // pred_check_branch
      %511 = sbr.rel (%p509) target = $region48
    $region47: #{mfe_backbone_forward.20} parent=5 // pred_region
      %s512 = ssub.s32 %s11, 2
      // Predicated region
      $region49: #{mfe_backbone_forward.20} parent=47 // pred_check
        %p513 = pneg %p155
      $region50: #{mfe_backbone_forward.20} parent=47 // pred_check_branch
        %515 = sbr.rel (%p513) target = $region52
      $region51: #{mfe_backbone_forward.20} parent=47 // pred_region
        %p516 = scmp.lt.s32.totalorder %s17, 3
        %s517 = scalar_select %p516, %s17, 3
        %s518 = smul.addr %s517, 6
        %s519 = smul.addr %s518, 4
        %s520 = scalar_lea.vmem %s5, %s519
      $region52: #{mfe_backbone_forward.20} parent=47 // pred_fallthru
        _
    $region48: #{mfe_backbone_forward.20} parent=5 // pred_fallthru
      _
  $region6: #{mfe_backbone_forward.20} parent=0 // loop_footer
    %s15 = sadd.s32 1, %s11
  $region7: #{mfe_backbone_forward.20} parent=0 // loop_footer_branch
    %10 = sbr.rel target = $region3
  $region8: #{mfe_backbone_forward.20} parent=0 // loop_exit
    _

// kernel: mfe_backbone_forward.21
$region0: #{mfe_backbone_forward.21}
  #allocation0 [shape = 'u32[]', space=smem, size = 0x4, offset = 0x4, fixed_abs, tag = 'smem constant byte address 0x4 - core index']
  #allocation1 [shape = 'u32[144,128]{1,0:T(1,128)}', space=vmem, size = 0x12000, scoped, tag = 'internal scratch']
  #allocation2 [shape = 'bf16[16,384]{1,0:T(16,128)(2,1)}', space=vmem, size = 0x3000, scoped, tag = 'scratch operand']
  %s0 = inlined_call_operand.vmem [shape: bf16[4,16,384], index: 0, kind: input, shape index: {}]
  %s1 = inlined_call_operand.vmem [shape: bf16[16,144], index: 1, kind: input, shape index: {}]
  %s2 = inlined_call_operand.vmem [shape: f32[16,1], index: 2, kind: input, shape index: {}]
  %s3 = inlined_call_operand.vmem [shape: bf16[8,144], index: 3, kind: input, shape index: {}]
  %s4 = inlined_call_operand.vmem [shape: f32[8,1], index: 4, kind: input, shape index: {}]
  %s5 = inlined_call_operand.vmem [shape: f32[1,384], index: 5, kind: input, shape index: {}]
  %s6 = inlined_call_operand.vmem [shape: bf16[4,8,384], index: 6, kind: output, shape index: {}]
  %s7 = sld [smem:[#allocation0]]
  $region57: #{mfe_backbone_forward.21} parent=0
    _
  %s9 = ssub.s32 1, %s7
  %s10 = scalar_select 0, %s9, %s7
  loop: start=0, step=1, limit=6
  $region2: #{mfe_backbone_forward.21} parent=0 // loop_pre_header
    _
  $region3: #{mfe_backbone_forward.21} parent=0 // loop_header
    %s12 = sphi 0, %s16
    %p13 = scmp.ge.s32.totalorder %s12, 6
    %s22 = sphi 0, %s24
    %s25 = sphi 0, %s22
    %s26 = sphi 0, %s25
    %s42 = sphi 0, %s26
    %s46 = sphi 0, %s46
    %s48 = sphi 0, %s46
    %s49 = sphi 0, %s48
    %s63 = sphi 0, %s49
    %s67 = sphi 0, %s67
    %s69 = sphi 0, %s67
    %s70 = sphi 0, %s69
    %s84 = sphi 0, %s70
    %s88 = sphi 0, %s88
    %s90 = sphi 0, %s88
    %s91 = sphi 0, %s90
    %s105 = sphi 0, %s91
    %s109 = sphi 0, %s109
    %s111 = sphi 0, %s109
    %s112 = sphi 0, %s111
    %s126 = sphi 0, %s112
    %s130 = sphi 0, %s130
    %s132 = sphi 0, %s130
    %s133 = sphi 0, %s132
    %s147 = sphi 0, %s133
    %s153 = sphi 0, %s155
    %s156 = sphi 0, %s153
    %s157 = sphi 0, %s156
    %s173 = sphi 0, %s157
  $region4: #{mfe_backbone_forward.21} parent=0 // loop_header_branch
    %15 = sbr.rel (%p13) target = $region8
  $region5: #{mfe_backbone_forward.21} parent=0 // loop_body
    %s17 = ssub.s32 %s12, 1
    %s18 = ssub.s32 %s12, 2
    %s19 = sadd.s32 %s12, 1
    %s20 = ssub.s32 %s12, %s19
    %p21 = scmp.eq.s32.totalorder %s20, 0
    %s23 = sadd.s32 %s22, 1
    %s24 = scalar_select %p21, %s22, %s23
    %p27 = pneg %p21
    %p28 = scmp.eq.s32.totalorder %s12, 3
    %p29 = por %p27, %p28
    %p30 = scmp.ne.s32.totalorder %s22, %s25
    %p31 = scmp.eq.s32.totalorder %s12, 0
    %p32 = por %p30, %p31
    %p33 = scmp.ne.s32.totalorder %s22, %s25
    %p34 = scmp.eq.s32.totalorder %s17, 3
    %p35 = por %p33, %p34
    %p36 = scmp.ne.s32.totalorder %s25, %s26
    %p37 = scmp.eq.s32.totalorder %s17, 0
    %p38 = por %p36, %p37
    %p39 = scmp.ne.s32.totalorder %s25, %s26
    %p40 = scmp.eq.s32.totalorder %s18, 3
    %p41 = por %p39, %p40
    %p43 = scmp.ne.s32.totalorder %s26, %s42
    %p44 = scmp.eq.s32.totalorder %s18, 0
    %p45 = por %p43, %p44
    %s47 = sadd.s32 %s46, 1
    %p50 = scmp.eq.s32.totalorder %s12, 3
    %p51 = scmp.ne.s32.totalorder %s46, %s48
    %p52 = scmp.eq.s32.totalorder %s12, 0
    %p53 = por %p51, %p52
    %p54 = scmp.ne.s32.totalorder %s46, %s48
    %p55 = scmp.eq.s32.totalorder %s17, 3
    %p56 = por %p54, %p55
    %p57 = scmp.ne.s32.totalorder %s48, %s49
    %p58 = scmp.eq.s32.totalorder %s17, 0
    %p59 = por %p57, %p58
    %p60 = scmp.ne.s32.totalorder %s48, %s49
    %p61 = scmp.eq.s32.totalorder %s18, 3
    %p62 = por %p60, %p61
    %p64 = scmp.ne.s32.totalorder %s49, %s63
    %p65 = scmp.eq.s32.totalorder %s18, 0
    %p66 = por %p64, %p65
    %s68 = sadd.s32 %s67, 1
    %p71 = scmp.eq.s32.totalorder %s12, 3
    %p72 = scmp.ne.s32.totalorder %s67, %s69
    %p73 = scmp.eq.s32.totalorder %s12, 0
    %p74 = por %p72, %p73
    %p75 = scmp.ne.s32.totalorder %s67, %s69
    %p76 = scmp.eq.s32.totalorder %s17, 3
    %p77 = por %p75, %p76
    %p78 = scmp.ne.s32.totalorder %s69, %s70
    %p79 = scmp.eq.s32.totalorder %s17, 0
    %p80 = por %p78, %p79
    %p81 = scmp.ne.s32.totalorder %s69, %s70
    %p82 = scmp.eq.s32.totalorder %s18, 3
    %p83 = por %p81, %p82
    %p85 = scmp.ne.s32.totalorder %s70, %s84
    %p86 = scmp.eq.s32.totalorder %s18, 0
    %p87 = por %p85, %p86
    %s89 = sadd.s32 %s88, 1
    %p92 = scmp.eq.s32.totalorder %s12, 3
    %p93 = scmp.ne.s32.totalorder %s88, %s90
    %p94 = scmp.eq.s32.totalorder %s12, 0
    %p95 = por %p93, %p94
    %p96 = scmp.ne.s32.totalorder %s88, %s90
    %p97 = scmp.eq.s32.totalorder %s17, 3
    %p98 = por %p96, %p97
    %p99 = scmp.ne.s32.totalorder %s90, %s91
    %p100 = scmp.eq.s32.totalorder %s17, 0
    %p101 = por %p99, %p100
    %p102 = scmp.ne.s32.totalorder %s90, %s91
    %p103 = scmp.eq.s32.totalorder %s18, 3
    %p104 = por %p102, %p103
    %p106 = scmp.ne.s32.totalorder %s91, %s105
    %p107 = scmp.eq.s32.totalorder %s18, 0
    %p108 = por %p106, %p107
    %s110 = sadd.s32 %s109, 1
    %p113 = scmp.eq.s32.totalorder %s12, 3
    %p114 = scmp.ne.s32.totalorder %s109, %s111
    %p115 = scmp.eq.s32.totalorder %s12, 0
    %p116 = por %p114, %p115
    %p117 = scmp.ne.s32.totalorder %s109, %s111
    %p118 = scmp.eq.s32.totalorder %s17, 3
    %p119 = por %p117, %p118
    %p120 = scmp.ne.s32.totalorder %s111, %s112
    %p121 = scmp.eq.s32.totalorder %s17, 0
    %p122 = por %p120, %p121
    %p123 = scmp.ne.s32.totalorder %s111, %s112
    %p124 = scmp.eq.s32.totalorder %s18, 3
    %p125 = por %p123, %p124
    %p127 = scmp.ne.s32.totalorder %s112, %s126
    %p128 = scmp.eq.s32.totalorder %s18, 0
    %p129 = por %p127, %p128
    %s131 = sadd.s32 %s130, 1
    %p134 = scmp.eq.s32.totalorder %s12, 3
    %p135 = scmp.ne.s32.totalorder %s130, %s132
    %p136 = scmp.eq.s32.totalorder %s12, 0
    %p137 = por %p135, %p136
    %p138 = scmp.ne.s32.totalorder %s130, %s132
    %p139 = scmp.eq.s32.totalorder %s17, 3
    %p140 = por %p138, %p139
    %p141 = scmp.ne.s32.totalorder %s132, %s133
    %p142 = scmp.eq.s32.totalorder %s17, 0
    %p143 = por %p141, %p142
    %p144 = scmp.ne.s32.totalorder %s132, %s133
    %p145 = scmp.eq.s32.totalorder %s18, 3
    %p146 = por %p144, %p145
    %p148 = scmp.ne.s32.totalorder %s133, %s147
    %p149 = scmp.eq.s32.totalorder %s18, 0
    %p150 = por %p148, %p149
    %s151 = ssub.s32 %s12, %s19
    %p152 = scmp.eq.s32.totalorder %s151, 0
    %s154 = sadd.s32 %s153, 1
    %s155 = scalar_select %p152, %s153, %s154
    %p158 = pneg %p152
    %p159 = scmp.eq.s32.totalorder %s12, 3
    %p160 = por %p158, %p159
    %p161 = scmp.ne.s32.totalorder %s153, %s156
    %p162 = scmp.eq.s32.totalorder %s12, 0
    %p163 = por %p161, %p162
    %p164 = scmp.ne.s32.totalorder %s153, %s156
    %p165 = scmp.eq.s32.totalorder %s17, 3
    %p166 = por %p164, %p165
    %p167 = scmp.ne.s32.totalorder %s156, %s157
    %p168 = scmp.eq.s32.totalorder %s17, 0
    %p169 = por %p167, %p168
    %p170 = scmp.ne.s32.totalorder %s156, %s157
    %p171 = scmp.eq.s32.totalorder %s18, 3
    %p172 = por %p170, %p171
    %p174 = scmp.ne.s32.totalorder %s157, %s173
    %p175 = scmp.eq.s32.totalorder %s18, 0
    %p176 = por %p174, %p175
    %p177 = scmp.le.s32.totalorder 1, %s12
    %p178 = scmp.lt.s32.totalorder %s12, 5
    %p179 = pnand %p177, %p178
    %p180 = pneg %p179
    // Predicated region
    $region9: #{mfe_backbone_forward.21} parent=5 // pred_check
      _
    $region10: #{mfe_backbone_forward.21} parent=5 // pred_check_branch
      %182 = sbr.rel (%p179) target = $region12
    $region11: #{mfe_backbone_forward.21} parent=5 // pred_region
      %s183 = ssub.s32 %s12, 1
      // Predicated region
      $region13: #{mfe_backbone_forward.21} parent=11 // pred_check
        %p184 = pneg %p59
      $region14: #{mfe_backbone_forward.21} parent=11 // pred_check_branch
        %186 = sbr.rel (%p184) target = $region16
      $region15: #{mfe_backbone_forward.21} parent=11 // pred_region
        _
      $region16: #{mfe_backbone_forward.21} parent=11 // pred_fallthru
        _
      // Predicated region
      $region17: #{mfe_backbone_forward.21} parent=11 // pred_check
        %p187 = pneg %p80
      $region18: #{mfe_backbone_forward.21} parent=11 // pred_check_branch
        %189 = sbr.rel (%p187) target = $region20
      $region19: #{mfe_backbone_forward.21} parent=11 // pred_region
        _
      $region20: #{mfe_backbone_forward.21} parent=11 // pred_fallthru
        _
      // Predicated region
      $region21: #{mfe_backbone_forward.21} parent=11 // pred_check
        %p190 = pneg %p101
      $region22: #{mfe_backbone_forward.21} parent=11 // pred_check_branch
        %192 = sbr.rel (%p190) target = $region24
      $region23: #{mfe_backbone_forward.21} parent=11 // pred_region
        _
      $region24: #{mfe_backbone_forward.21} parent=11 // pred_fallthru
        _
      // Predicated region
      $region25: #{mfe_backbone_forward.21} parent=11 // pred_check
        %p193 = pneg %p122
      $region26: #{mfe_backbone_forward.21} parent=11 // pred_check_branch
        %195 = sbr.rel (%p193) target = $region28
      $region27: #{mfe_backbone_forward.21} parent=11 // pred_region
        _
      $region28: #{mfe_backbone_forward.21} parent=11 // pred_fallthru
        _
      // Predicated region
      $region29: #{mfe_backbone_forward.21} parent=11 // pred_check
        %p196 = pneg %p143
      $region30: #{mfe_backbone_forward.21} parent=11 // pred_check_branch
        %198 = sbr.rel (%p196) target = $region32
      $region31: #{mfe_backbone_forward.21} parent=11 // pred_region
        _
      $region32: #{mfe_backbone_forward.21} parent=11 // pred_fallthru
        _
    $region12: #{mfe_backbone_forward.21} parent=5 // pred_fallthru
      _
    %p199 = scmp.lt.s32.totalorder %s12, 4
    // Predicated region
    $region33: #{mfe_backbone_forward.21} parent=5 // pred_check
      %p200 = pneg %p199
    $region34: #{mfe_backbone_forward.21} parent=5 // pred_check_branch
      %202 = sbr.rel (%p200) target = $region36
    $region35: #{mfe_backbone_forward.21} parent=5 // pred_region
      // Predicated region
      $region37: #{mfe_backbone_forward.21} parent=35 // pred_check
        %p203 = pneg %p32
      $region38: #{mfe_backbone_forward.21} parent=35 // pred_check_branch
        %205 = sbr.rel (%p203) target = $region40
      $region39: #{mfe_backbone_forward.21} parent=35 // pred_region
        %p206 = scmp.lt.s32.totalorder %s12, 3
        %s207 = scalar_select %p206, %s12, 3
        %s208 = smul.addr %s207, 6
        %s209 = smul.addr %s208, 4
        %s210 = scalar_lea.vmem %s0, %s209
      $region40: #{mfe_backbone_forward.21} parent=35 // pred_fallthru
        _
    $region36: #{mfe_backbone_forward.21} parent=5 // pred_fallthru
      _
    %p211 = scmp.le.s32.totalorder 1, %s12
    %p212 = scmp.lt.s32.totalorder %s12, 5
    %p213 = pnand %p211, %p212
    %p214 = pneg %p213
    // Predicated region
    $region41: #{mfe_backbone_forward.21} parent=5 // pred_check
      _
    $region42: #{mfe_backbone_forward.21} parent=5 // pred_check_branch
      %216 = sbr.rel (%p213) target = $region44
    $region43: #{mfe_backbone_forward.21} parent=5 // pred_region
      %s217 = ssub.s32 %s12, 1
      %p218 = scmp.lt.s32.totalorder %s17, 3
      %s219 = scalar_select %p218, %s17, 3
      %s220 = smul.addr %s219, 6
      %s221 = smul.addr %s220, 4
      %s222 = scalar_lea.vmem %s0, %s221
      %p223 = pneg %p38
      %p224 = pneg %p35
      %p225 = pneg %p59
      %p226 = pneg %p56
      %p227 = pneg %p80
      %p228 = pneg %p77
      %p229 = pneg %p101
      %p230 = pneg %p98
      %p231 = pneg %p122
      %p232 = pneg %p119
      %p233 = pneg %p143
      %p234 = pneg %p140
      %p235 = pneg %p169
      %p236 = pneg %p166
      %p237 = scmp.lt.s32.totalorder %s17, 3
      %s238 = scalar_select %p237, %s17, 3
      %s239 = smul.addr %s238, 3
      %s240 = smul.addr %s239, 4
      %s241 = scalar_lea.vmem %s6, %s240
      %p242 = scmp.lt.s32.totalorder %s17, 3
      %s243 = scalar_select %p242, %s17, 3
      %s244 = smul.addr %s243, 6
      %s245 = smul.addr %s244, 4
      %s246 = scalar_lea.vmem %s0, %s245
      %p247 = scmp.lt.s32.totalorder %s17, 3
      %s248 = scalar_select %p247, %s17, 3
      %s249 = smul.addr %s248, 3
      %s250 = smul.addr %s249, 4
      %s251 = scalar_lea.vmem %s6, %s250
      %v253 = vld [vmem:[%s5] sm:$0x7]
      %v254 = vld [vmem:[%s1] sm:$0xff]
      %v255 = vld [vmem:[%s1 + $0x8] sm:$0xff]
      %v256 = vld [vmem:[%s246] sm:$0xff]
      %v257 = vld [vmem:[%s246 + $0x8] sm:$0xf]
      %v258 = vld [vmem:[%s246 + $0xc] sm:$0xff]
      %v259 = vld [vmem:[%s246 + $0x14] sm:$0xf]
      %v264 = vunpack.c.l.b16 %v256
      %v265 = vunpack.c.h.b16 %v256
      %v266 = vunpack.c.l.b16 %v257
      %v267 = vunpack.c.l.b16 %v258
      %v268 = vunpack.c.h.b16 %v258
      %v269 = vunpack.c.l.b16 %v259
      %v270 = vpack.c.b16 %v267, %v264
      %v271 = vpack.c.b16 %v268, %v265
      %v272 = vpack.c.b16 %v269, %v266
      %273 = vrot.lane.b32.xlu0 %v270, 127
      %v274 = vpop.permute.xlu0 %273
      %275 = vrot.lane.b32.xlu0 %v271, 127
      %v276 = vpop.permute.xlu0 %275
      %277 = vrot.lane.b32.xlu0 %v272, 127
      %v278 = vpop.permute.xlu0 %277
      %vm279 = vcmask 1039360
      %v280 = vsel %vm279, %v274, %v276
      %v281 = vsel %vm279, %v276, %v278
      %282 = vrot.lane.b32.xlu0 %v270, 126
      %v283 = vpop.permute.xlu0 %282
      %284 = vrot.lane.b32.xlu0 %v271, 126
      %v285 = vpop.permute.xlu0 %284
      %286 = vrot.lane.b32.xlu0 %v272, 126
      %v287 = vpop.permute.xlu0 %286
      %vm288 = vcmask 1031168
      %v289 = vsel %vm288, %v283, %v285
      %v290 = vsel %vm288, %v285, %v287
      %291 = vrot.lane.b32.xlu0 %v270, 110
      %v292 = vpop.permute.xlu0 %291
      %293 = vrot.lane.b32.xlu0 %v271, 110
      %v294 = vpop.permute.xlu0 %293
      %295 = vrot.lane.b32.xlu0 %v272, 110
      %v296 = vpop.permute.xlu0 %295
      %vm297 = vcmask 900096
      %v298 = vsel %vm297, %v292, %v294
      %v299 = vsel %vm297, %v294, %v296
      %300 = vrot.lane.b32.xlu0 %v270, 109
      %v301 = vpop.permute.xlu0 %300
      %302 = vrot.lane.b32.xlu0 %v271, 109
      %v303 = vpop.permute.xlu0 %302
      %304 = vrot.lane.b32.xlu0 %v272, 109
      %v305 = vpop.permute.xlu0 %304
      %vm306 = vcmask 891904
      %v307 = vsel %vm306, %v301, %v303
      %v308 = vsel %vm306, %v303, %v305
      %309 = vrot.lane.b32.xlu0 %v270, 108
      %v310 = vpop.permute.xlu0 %309
      %311 = vrot.lane.b32.xlu0 %v271, 108
      %v312 = vpop.permute.xlu0 %311
      %313 = vrot.lane.b32.xlu0 %v272, 108
      %v314 = vpop.permute.xlu0 %313
      %vm315 = vcmask 883712
      %v316 = vsel %vm315, %v310, %v312
      %v317 = vsel %vm315, %v312, %v314
      %318 = vrot.lane.b32.xlu0 %v270, 92
      %v319 = vpop.permute.xlu0 %318
      %320 = vrot.lane.b32.xlu0 %v271, 92
      %v321 = vpop.permute.xlu0 %320
      %322 = vrot.lane.b32.xlu0 %v272, 92
      %v323 = vpop.permute.xlu0 %322
      %vm324 = vcmask 752640
      %v325 = vsel %vm324, %v319, %v321
      %v326 = vsel %vm324, %v321, %v323
      %327 = vrot.lane.b32.xlu0 %v270, 91
      %v328 = vpop.permute.xlu0 %327
      %329 = vrot.lane.b32.xlu0 %v271, 91
      %v330 = vpop.permute.xlu0 %329
      %331 = vrot.lane.b32.xlu0 %v272, 91
      %v332 = vpop.permute.xlu0 %331
      %vm333 = vcmask 744448
      %v334 = vsel %vm333, %v328, %v330
      %v335 = vsel %vm333, %v330, %v332
      %336 = vrot.lane.b32.xlu0 %v270, 90
      %v337 = vpop.permute.xlu0 %336
      %338 = vrot.lane.b32.xlu0 %v271, 90
      %v339 = vpop.permute.xlu0 %338
      %340 = vrot.lane.b32.xlu0 %v272, 90
      %v341 = vpop.permute.xlu0 %340
      %vm342 = vcmask 736256
      %v343 = vsel %vm342, %v337, %v339
      %v344 = vsel %vm342, %v339, %v341
      %v345 = vld [vmem:[%s2] sm:$0xff]
      %v346 = vld [vmem:[%s2 + $0x8] sm:$0xff]
      %348 = vset.pattern.permute.xlu0 0
      %349 = vperm.xlu0 %348, %v345
      %v350 = vpop.permute.xlu0 %349
      %353 = vset.pattern.permute.xlu0 0
      %354 = vperm.xlu0 %353, %v346
      %v355 = vpop.permute.xlu0 %354
      %v359 = vunpack.c.l.b16 %v254
      %v360 = vunpack.c.h.b16 %v254
      %v361 = vunpack.c.l.b16 %v255
      %v362 = vunpack.c.h.b16 %v255
      %v363 = vpack.c.b16 %v361, %v359
      %v364 = vpack.c.b16 %v362, %v360
      %366 = vrot.lane.b32.xlu0 %v270, 111
      %v367 = vpop.permute.xlu0 %366
      %368 = vrot.lane.b32.xlu0 %v271, 111
      %v369 = vpop.permute.xlu0 %368
      %370 = vrot.lane.b32.xlu0 %v272, 111
      %v371 = vpop.permute.xlu0 %370
      %372 = vrot.lane.b32.xlu0 %v280, 111
      %v373 = vpop.permute.xlu0 %372
      %374 = vrot.lane.b32.xlu0 %v281, 111
      %v375 = vpop.permute.xlu0 %374
      %376 = vrot.lane.b32.xlu0 %v278, 111
      %v377 = vpop.permute.xlu0 %376
      %378 = vrot.lane.b32.xlu0 %v289, 111
      %v379 = vpop.permute.xlu0 %378
      %380 = vrot.lane.b32.xlu0 %v290, 111
      %v381 = vpop.permute.xlu0 %380
      %382 = vrot.lane.b32.xlu0 %v287, 111
      %v383 = vpop.permute.xlu0 %382
      %384 = vrot.lane.b32.xlu0 %v298, 111
      %v385 = vpop.permute.xlu0 %384
      %386 = vrot.lane.b32.xlu0 %v299, 111
      %v387 = vpop.permute.xlu0 %386
      %388 = vrot.lane.b32.xlu0 %v296, 111
      %v389 = vpop.permute.xlu0 %388
      %390 = vrot.lane.b32.xlu0 %v307, 111
      %v391 = vpop.permute.xlu0 %390
      %392 = vrot.lane.b32.xlu0 %v308, 111
      %v393 = vpop.permute.xlu0 %392
      %394 = vrot.lane.b32.xlu0 %v305, 111
      %v395 = vpop.permute.xlu0 %394
      %396 = vrot.lane.b32.xlu0 %v316, 111
      %v397 = vpop.permute.xlu0 %396
      %398 = vrot.lane.b32.xlu0 %v317, 111
      %v399 = vpop.permute.xlu0 %398
      %400 = vrot.lane.b32.xlu0 %v314, 111
      %v401 = vpop.permute.xlu0 %400
      %402 = vrot.lane.b32.xlu0 %v325, 111
      %v403 = vpop.permute.xlu0 %402
      %404 = vrot.lane.b32.xlu0 %v326, 111
      %v405 = vpop.permute.xlu0 %404
      %406 = vrot.lane.b32.xlu0 %v323, 111
      %v407 = vpop.permute.xlu0 %406
      %408 = vrot.lane.b32.xlu0 %v334, 111
      %v409 = vpop.permute.xlu0 %408
      %410 = vrot.lane.b32.xlu0 %v335, 111
      %v411 = vpop.permute.xlu0 %410
      %412 = vrot.lane.b32.xlu0 %v332, 111
      %v413 = vpop.permute.xlu0 %412
      %414 = vrot.lane.b32.xlu0 %v343, 111
      %v415 = vpop.permute.xlu0 %414
      %416 = vrot.lane.b32.xlu0 %v344, 111
      %v417 = vpop.permute.xlu0 %416
      %418 = vrot.lane.b32.xlu0 %v341, 111
      %v419 = vpop.permute.xlu0 %418
      %vm420 = vcmask 908288
      %v421 = vsel %vm420, %v367, %v369
      %v422 = vsel %vm420, %v369, %v371
      %v423 = vsel %vm420, %v373, %v375
      %v424 = vsel %vm420, %v375, %v377
      %v425 = vsel %vm420, %v379, %v381
      %v426 = vsel %vm420, %v381, %v383
      %v427 = vsel %vm420, %v385, %v387
      %v428 = vsel %vm420, %v387, %v389
      %v429 = vsel %vm420, %v391, %v393
      %v430 = vsel %vm420, %v393, %v395
      %v431 = vsel %vm420, %v397, %v399
      %v432 = vsel %vm420, %v399, %v401
      %v433 = vsel %vm420, %v403, %v405
      %v434 = vsel %vm420, %v405, %v407
      %v435 = vsel %vm420, %v409, %v411
      %v436 = vsel %vm420, %v411, %v413
      %v437 = vsel %vm420, %v415, %v417
      %v438 = vsel %vm420, %v417, %v419
      %vm466 = vcmask 130048
      %v468 = vsel %vm466, %v364, 0
      %470 = vmatprep.subr.bf16.mxu0 %v422
      %471 = vmatpush1.bf16.msra.mxu0 %v421
      %472 = vmatprep.subr.bf16.mxu0 %v424
      %473 = vmatpush1.bf16.msra.mxu0 %v423
      %474 = vmatprep.subr.bf16.mxu0 %v426
      %475 = vmatpush1.bf16.msra.mxu0 %v425
      %476 = vmatprep.subr.bf16.mxu0 %v428
      %477 = vmatpush1.bf16.msra.mxu0 %v427
      %478 = vmatprep.subr.bf16.mxu0 %v430
      %479 = vmatpush1.bf16.msra.mxu0 %v429
      %480 = vmatprep.subr.bf16.mxu0 %v432
      %481 = vmatpush1.bf16.msra.mxu0 %v431
      %482 = vmatprep.subr.bf16.mxu0 %v434
      %483 = vmatpush1.bf16.msra.mxu0 %v433
      %484 = vmatprep.subr.bf16.mxu0 %v436
      %485 = vmatpush1.bf16.msra.mxu0 %v435
      %486 = vmatprep.subr.bf16.mxu0 %v438
      %487 = vmatpush1.bf16.msra.mxu0 %v437
      %488 = vmatprep.subr.bf16.mxu0 0
      %489 = vmatpush1.bf16.msra.mxu0 0
      %490 = vmatprep.subr.bf16.mxu0 0
      %491 = vmatpush1.bf16.msra.mxu0 0
      %492 = vmatprep.subr.bf16.mxu0 0
      %493 = vmatpush1.bf16.msra.mxu0 0
      %494 = vmatprep.subr.bf16.mxu0 0
      %495 = vmatpush1.bf16.msra.mxu0 0
      %496 = vmatprep.subr.bf16.mxu0 0
      %497 = vmatpush1.bf16.msra.mxu0 0
      %498 = vmatprep.subr.bf16.mxu0 0
      %499 = vmatpush1.bf16.msra.mxu0 0
      %500 = vmatprep.subr.bf16.mxu0 0
      %501 = vmatpush1.bf16.msra.mxu0 0
      %502 = vmatprep.mubr.bf16.mxu0 %v468
      %503 = vmatmul.mubr.bf16.gmra.mrb[0].mxu0 %v363
      %v504 = vpop.f32.mrb[0].mxu0
      %v505 = vadd.f32 %v350, %v504
      %v506 = vpop.f32.mrb[0].mxu0
      %v507 = vadd.f32 %v350, %v506
      %v508 = vpop.f32.mrb[0].mxu0
      %v509 = vadd.f32 %v355, %v508
      %v510 = vpop.f32.mrb[0].mxu0
      %v511 = vadd.f32 %v355, %v510
      %512 = vdwg.mxu0
      %513 = vmatprep.subr.bf16.mxu0 0
      %514 = vmatpush1.bf16.msra.mxu0 %v371
      %515 = vmatprep.subr.bf16.mxu0 0
      %516 = vmatpush1.bf16.msra.mxu0 %v377
      %517 = vmatprep.subr.bf16.mxu0 0
      %518 = vmatpush1.bf16.msra.mxu0 %v383
      %519 = vmatprep.subr.bf16.mxu0 0
      %520 = vmatpush1.bf16.msra.mxu0 %v389
      %521 = vmatprep.subr.bf16.mxu0 0
      %522 = vmatpush1.bf16.msra.mxu0 %v395
      %523 = vmatprep.subr.bf16.mxu0 0
      %524 = vmatpush1.bf16.msra.mxu0 %v401
      %525 = vmatprep.subr.bf16.mxu0 0
      %526 = vmatpush1.bf16.msra.mxu0 %v407
      %527 = vmatprep.subr.bf16.mxu0 0
      %528 = vmatpush1.bf16.msra.mxu0 %v413
      %529 = vmatprep.subr.bf16.mxu0 0
      %530 = vmatpush1.bf16.msra.mxu0 %v419
      %531 = vmatprep.subr.bf16.mxu0 0
      %532 = vmatpush1.bf16.msra.mxu0 0
      %533 = vmatprep.subr.bf16.mxu0 0
      %534 = vmatpush1.bf16.msra.mxu0 0
      %535 = vmatprep.subr.bf16.mxu0 0
      %536 = vmatpush1.bf16.msra.mxu0 0
      %537 = vmatprep.subr.bf16.mxu0 0
      %538 = vmatpush1.bf16.msra.mxu0 0
      %539 = vmatprep.subr.bf16.mxu0 0
      %540 = vmatpush1.bf16.msra.mxu0 0
      %541 = vmatprep.subr.bf16.mxu0 0
      %542 = vmatpush1.bf16.msra.mxu0 0
      %543 = vmatprep.subr.bf16.mxu0 0
      %544 = vmatpush1.bf16.msra.mxu0 0
      %545 = vmatprep.mubr.bf16.mxu0 %v468
      %546 = vmatmul.mubr.bf16.gmra.mrb[0].mxu0 %v363
      %v547 = vpop.f32.mrb[0].mxu0
      %v548 = vadd.f32 %v350, %v547
      %v549 = vpop.f32.mrb[0].mxu0
      %v550 = vpop.f32.mrb[0].mxu0
      %v551 = vadd.f32 %v355, %v550
      %v552 = vpop.f32.mrb[0].mxu0
      %553 = vdwg.mxu0
      %vm554 = vcmp.gt.f32.partialorder %v505, 0.0
      %vm555 = vcmp.gt.f32.partialorder %v507, 0.0
      %vm556 = vcmp.gt.f32.partialorder %v548, 0.0
      %vm557 = vcmp.gt.f32.partialorder %v509, 0.0
      %vm558 = vcmp.gt.f32.partialorder %v511, 0.0
      %vm559 = vcmp.gt.f32.partialorder %v551, 0.0
      %v560 = vmul.f32 %v505, 0.01
      %v561 = vmul.f32 %v507, 0.01
      %v562 = vmul.f32 %v548, 0.01
      %v563 = vmul.f32 %v509, 0.01
      %v564 = vmul.f32 %v511, 0.01
      %v565 = vmul.f32 %v551, 0.01
      %v566 = vsel %vm554, %v505, %v560
      %v567 = vsel %vm555, %v507, %v561
      %v568 = vsel %vm556, %v548, %v562
      %v569 = vsel %vm557, %v509, %v563
      %v570 = vsel %vm558, %v511, %v564
      %v571 = vsel %vm559, %v551, %v565
      %v573 = vlaneseq
      %v574 = vshrl.u32 %v573, 7
      %v575 = vsub.s32 0, %v574
      %v576 = vrot.slane %v253, %v575
      %v577 = vlaneseq
      %v578 = vshrl.u32 %v577, 7
      %v579 = vsub.s32 1, %v578
      %v580 = vrot.slane %v253, %v579
      %v581 = vlaneseq
      %v582 = vshrl.u32 %v581, 7
      %v583 = vsub.s32 2, %v582
      %v584 = vrot.slane %v253, %v583
      %585 = vrot.lane.b32.xlu0 %v576, 92
      %v586 = vpop.permute.xlu0 %585
      %587 = vrot.lane.b32.xlu0 %v580, 92
      %v588 = vpop.permute.xlu0 %587
      %589 = vrot.lane.b32.xlu0 %v584, 92
      %v590 = vpop.permute.xlu0 %589
      %vm591 = vcmask 752640
      %v592 = vsel %vm591, %v586, %v588
      %v593 = vsel %vm591, %v588, %v590
      %v597 = vmul.f32 %v566, %v592
      %v598 = vmul.f32 %v567, %v593
      %v599 = vmul.f32 %v568, %v590
      %v600 = vmul.f32 %v569, %v592
      %v601 = vmul.f32 %v570, %v593
      %v602 = vmul.f32 %v571, %v590
      %v603 = vpack.c.bf16 %v600, %v597
      %v604 = vpack.c.bf16 %v601, %v598
      %v605 = vpack.c.bf16 %v602, %v599
      %609 = vrot.lane.b32.xlu0 %v603, 36
      %v610 = vpop.permute.xlu0 %609
      %611 = vrot.lane.b32.xlu0 %v604, 36
      %v612 = vpop.permute.xlu0 %611
      %613 = vrot.lane.b32.xlu0 %v605, 36
      %v614 = vpop.permute.xlu0 %613
      %vm615 = vcmask 293888
      %v616 = vsel %vm615, %v610, %v612
      %v617 = vsel %vm615, %v612, %v614
      %vm619 = vcmask 293888
      %v622 = vsel %vm619, 0, %v610
      %vm624 = vcmask 556032
      %v626 = vsel %vm624, %v617, 0
      %628 = vst [vmem:[#allocation2] sm:$0xff] %v622
      %629 = vst [vmem:[#allocation2 + $0x8] sm:$0xff] %v616
      %630 = vst [vmem:[#allocation2 + $0x10] sm:$0xff] %v626
      %v631 = vld [vmem:[%s3] sm:$0xff]
      %v632 = vld [vmem:[#allocation2] sm:$0xff]
      %v633 = vld [vmem:[#allocation2 + $0x8] sm:$0xff]
      %v634 = vld [vmem:[#allocation2 + $0x10] sm:$0xff]
      %638 = vrot.lane.b32.xlu0 %v632, 127
      %v639 = vpop.permute.xlu0 %638
      %640 = vrot.lane.b32.xlu0 %v633, 127
      %v641 = vpop.permute.xlu0 %640
      %642 = vrot.lane.b32.xlu0 %v634, 127
      %v643 = vpop.permute.xlu0 %642
      %v644 = vsel %vm279, %v639, %v641
      %v645 = vsel %vm279, %v641, %v643
      %646 = vrot.lane.b32.xlu0 %v632, 126
      %v647 = vpop.permute.xlu0 %646
      %648 = vrot.lane.b32.xlu0 %v633, 126
      %v649 = vpop.permute.xlu0 %648
      %650 = vrot.lane.b32.xlu0 %v634, 126
      %v651 = vpop.permute.xlu0 %650
      %v652 = vsel %vm288, %v647, %v649
      %v653 = vsel %vm288, %v649, %v651
      %654 = vrot.lane.b32.xlu0 %v632, 110
      %v655 = vpop.permute.xlu0 %654
      %656 = vrot.lane.b32.xlu0 %v633, 110
      %v657 = vpop.permute.xlu0 %656
      %658 = vrot.lane.b32.xlu0 %v634, 110
      %v659 = vpop.permute.xlu0 %658
      %v660 = vsel %vm297, %v655, %v657
      %v661 = vsel %vm297, %v657, %v659
      %662 = vrot.lane.b32.xlu0 %v632, 109
      %v663 = vpop.permute.xlu0 %662
      %664 = vrot.lane.b32.xlu0 %v633, 109
      %v665 = vpop.permute.xlu0 %664
      %666 = vrot.lane.b32.xlu0 %v634, 109
      %v667 = vpop.permute.xlu0 %666
      %v668 = vsel %vm306, %v663, %v665
      %v669 = vsel %vm306, %v665, %v667
      %670 = vrot.lane.b32.xlu0 %v632, 108
      %v671 = vpop.permute.xlu0 %670
      %672 = vrot.lane.b32.xlu0 %v633, 108
      %v673 = vpop.permute.xlu0 %672
      %674 = vrot.lane.b32.xlu0 %v634, 108
      %v675 = vpop.permute.xlu0 %674
      %v676 = vsel %vm315, %v671, %v673
      %v677 = vsel %vm315, %v673, %v675
      %678 = vrot.lane.b32.xlu0 %v632, 92
      %v679 = vpop.permute.xlu0 %678
      %680 = vrot.lane.b32.xlu0 %v633, 92
      %v681 = vpop.permute.xlu0 %680
      %682 = vrot.lane.b32.xlu0 %v634, 92
      %v683 = vpop.permute.xlu0 %682
      %v684 = vsel %vm324, %v679, %v681
      %v685 = vsel %vm324, %v681, %v683
      %686 = vrot.lane.b32.xlu0 %v632, 91
      %v687 = vpop.permute.xlu0 %686
      %688 = vrot.lane.b32.xlu0 %v633, 91
      %v689 = vpop.permute.xlu0 %688
      %690 = vrot.lane.b32.xlu0 %v634, 91
      %v691 = vpop.permute.xlu0 %690
      %v692 = vsel %vm333, %v687, %v689
      %v693 = vsel %vm333, %v689, %v691
      %694 = vrot.lane.b32.xlu0 %v632, 90
      %v695 = vpop.permute.xlu0 %694
      %696 = vrot.lane.b32.xlu0 %v633, 90
      %v697 = vpop.permute.xlu0 %696
      %698 = vrot.lane.b32.xlu0 %v634, 90
      %v699 = vpop.permute.xlu0 %698
      %v700 = vsel %vm342, %v695, %v697
      %v701 = vsel %vm342, %v697, %v699
      %v702 = vld [vmem:[%s4] sm:$0xff]
      %704 = vset.pattern.permute.xlu0 0
      %705 = vperm.xlu0 %704, %v702
      %v706 = vpop.permute.xlu0 %705
      %v709 = vunpack.c.l.b16 %v631
      %v710 = vunpack.c.h.b16 %v631
      %v711 = vpack.c.b16 %v709, %v709
      %v712 = vpack.c.b16 %v710, %v710
      %714 = vrot.lane.b32.xlu0 %v632, 111
      %v715 = vpop.permute.xlu0 %714
      %716 = vrot.lane.b32.xlu0 %v633, 111
      %v717 = vpop.permute.xlu0 %716
      %718 = vrot.lane.b32.xlu0 %v634, 111
      %v719 = vpop.permute.xlu0 %718
      %720 = vrot.lane.b32.xlu0 %v644, 111
      %v721 = vpop.permute.xlu0 %720
      %722 = vrot.lane.b32.xlu0 %v645, 111
      %v723 = vpop.permute.xlu0 %722
      %724 = vrot.lane.b32.xlu0 %v643, 111
      %v725 = vpop.permute.xlu0 %724
      %726 = vrot.lane.b32.xlu0 %v652, 111
      %v727 = vpop.permute.xlu0 %726
      %728 = vrot.lane.b32.xlu0 %v653, 111
      %v729 = vpop.permute.xlu0 %728
      %730 = vrot.lane.b32.xlu0 %v651, 111
      %v731 = vpop.permute.xlu0 %730
      %732 = vrot.lane.b32.xlu0 %v660, 111
      %v733 = vpop.permute.xlu0 %732
      %734 = vrot.lane.b32.xlu0 %v661, 111
      %v735 = vpop.permute.xlu0 %734
      %736 = vrot.lane.b32.xlu0 %v659, 111
      %v737 = vpop.permute.xlu0 %736
      %738 = vrot.lane.b32.xlu0 %v668, 111
      %v739 = vpop.permute.xlu0 %738
      %740 = vrot.lane.b32.xlu0 %v669, 111
      %v741 = vpop.permute.xlu0 %740
      %742 = vrot.lane.b32.xlu0 %v667, 111
      %v743 = vpop.permute.xlu0 %742
      %744 = vrot.lane.b32.xlu0 %v676, 111
      %v745 = vpop.permute.xlu0 %744
      %746 = vrot.lane.b32.xlu0 %v677, 111
      %v747 = vpop.permute.xlu0 %746
      %748 = vrot.lane.b32.xlu0 %v675, 111
      %v749 = vpop.permute.xlu0 %748
      %750 = vrot.lane.b32.xlu0 %v684, 111
      %v751 = vpop.permute.xlu0 %750
      %752 = vrot.lane.b32.xlu0 %v685, 111
      %v753 = vpop.permute.xlu0 %752
      %754 = vrot.lane.b32.xlu0 %v683, 111
      %v755 = vpop.permute.xlu0 %754
      %756 = vrot.lane.b32.xlu0 %v692, 111
      %v757 = vpop.permute.xlu0 %756
      %758 = vrot.lane.b32.xlu0 %v693, 111
      %v759 = vpop.permute.xlu0 %758
      %760 = vrot.lane.b32.xlu0 %v691, 111
      %v761 = vpop.permute.xlu0 %760
      %762 = vrot.lane.b32.xlu0 %v700, 111
      %v763 = vpop.permute.xlu0 %762
      %764 = vrot.lane.b32.xlu0 %v701, 111
      %v765 = vpop.permute.xlu0 %764
      %766 = vrot.lane.b32.xlu0 %v699, 111
      %v767 = vpop.permute.xlu0 %766
      %v768 = vsel %vm420, %v715, %v717
      %v769 = vsel %vm420, %v717, %v719
      %v770 = vsel %vm420, %v721, %v723
      %v771 = vsel %vm420, %v723, %v725
      %v772 = vsel %vm420, %v727, %v729
      %v773 = vsel %vm420, %v729, %v731
      %v774 = vsel %vm420, %v733, %v735
      %v775 = vsel %vm420, %v735, %v737
      %v776 = vsel %vm420, %v739, %v741
      %v777 = vsel %vm420, %v741, %v743
      %v778 = vsel %vm420, %v745, %v747
      %v779 = vsel %vm420, %v747, %v749
      %v780 = vsel %vm420, %v751, %v753
      %v781 = vsel %vm420, %v753, %v755
      %v782 = vsel %vm420, %v757, %v759
      %v783 = vsel %vm420, %v759, %v761
      %v784 = vsel %vm420, %v763, %v765
      %v785 = vsel %vm420, %v765, %v767
      %v814 = vsel %vm466, %v712, 0
      %816 = vmatprep.subr.bf16.mxu0 %v769
      %817 = vmatpush1.bf16.msra.mxu0 %v768
      %818 = vmatprep.subr.bf16.mxu0 %v771
      %819 = vmatpush1.bf16.msra.mxu0 %v770
      %820 = vmatprep.subr.bf16.mxu0 %v773
      %821 = vmatpush1.bf16.msra.mxu0 %v772
      %822 = vmatprep.subr.bf16.mxu0 %v775
      %823 = vmatpush1.bf16.msra.mxu0 %v774
      %824 = vmatprep.subr.bf16.mxu0 %v777
      %825 = vmatpush1.bf16.msra.mxu0 %v776
      %826 = vmatprep.subr.bf16.mxu0 %v779
      %827 = vmatpush1.bf16.msra.mxu0 %v778
      %828 = vmatprep.subr.bf16.mxu0 %v781
      %829 = vmatpush1.bf16.msra.mxu0 %v780
      %830 = vmatprep.subr.bf16.mxu0 %v783
      %831 = vmatpush1.bf16.msra.mxu0 %v782
      %832 = vmatprep.subr.bf16.mxu0 %v785
      %833 = vmatpush1.bf16.msra.mxu0 %v784
      %834 = vmatprep.subr.bf16.mxu0 0
      %835 = vmatpush1.bf16.msra.mxu0 0
      %836 = vmatprep.subr.bf16.mxu0 0
      %837 = vmatpush1.bf16.msra.mxu0 0
      %838 = vmatprep.subr.bf16.mxu0 0
      %839 = vmatpush1.bf16.msra.mxu0 0
      %840 = vmatprep.subr.bf16.mxu0 0
      %841 = vmatpush1.bf16.msra.mxu0 0
      %842 = vmatprep.subr.bf16.mxu0 0
      %843 = vmatpush1.bf16.msra.mxu0 0
      %844 = vmatprep.subr.bf16.mxu0 0
      %845 = vmatpush1.bf16.msra.mxu0 0
      %846 = vmatprep.subr.bf16.mxu0 0
      %847 = vmatpush1.bf16.msra.mxu0 0
      %848 = vmatprep.mubr.bf16.mxu0 %v814
      %849 = vmatmul.mubr.bf16.gmra.mrb[0].mxu0 %v711
      %v850 = vpop.f32.mrb[0].mxu0
      %v851 = vadd.f32 %v706, %v850
      %v852 = vpop.f32.mrb[0].mxu0
      %v853 = vadd.f32 %v706, %v852
      %v854 = vpop.f32.mrb[0].mxu0
      %v855 = vpop.f32.mrb[0].mxu0
      %856 = vdwg.mxu0
      %857 = vmatprep.subr.bf16.mxu0 0
      %858 = vmatpush1.bf16.msra.mxu0 %v719
      %859 = vmatprep.subr.bf16.mxu0 0
      %860 = vmatpush1.bf16.msra.mxu0 %v725
      %861 = vmatprep.subr.bf16.mxu0 0
      %862 = vmatpush1.bf16.msra.mxu0 %v731
      %863 = vmatprep.subr.bf16.mxu0 0
      %864 = vmatpush1.bf16.msra.mxu0 %v737
      %865 = vmatprep.subr.bf16.mxu0 0
      %866 = vmatpush1.bf16.msra.mxu0 %v743
      %867 = vmatprep.subr.bf16.mxu0 0
      %868 = vmatpush1.bf16.msra.mxu0 %v749
      %869 = vmatprep.subr.bf16.mxu0 0
      %870 = vmatpush1.bf16.msra.mxu0 %v755
      %871 = vmatprep.subr.bf16.mxu0 0
      %872 = vmatpush1.bf16.msra.mxu0 %v761
      %873 = vmatprep.subr.bf16.mxu0 0
      %874 = vmatpush1.bf16.msra.mxu0 %v767
      %875 = vmatprep.subr.bf16.mxu0 0
      %876 = vmatpush1.bf16.msra.mxu0 0
      %877 = vmatprep.subr.bf16.mxu0 0
      %878 = vmatpush1.bf16.msra.mxu0 0
      %879 = vmatprep.subr.bf16.mxu0 0
      %880 = vmatpush1.bf16.msra.mxu0 0
      %881 = vmatprep.subr.bf16.mxu0 0
      %882 = vmatpush1.bf16.msra.mxu0 0
      %883 = vmatprep.subr.bf16.mxu0 0
      %884 = vmatpush1.bf16.msra.mxu0 0
      %885 = vmatprep.subr.bf16.mxu0 0
      %886 = vmatpush1.bf16.msra.mxu0 0
      %887 = vmatprep.subr.bf16.mxu0 0
      %888 = vmatpush1.bf16.msra.mxu0 0
      %889 = vmatprep.mubr.bf16.mxu0 %v814
      %890 = vmatmul.mubr.bf16.gmra.mrb[0].mxu0 %v711
      %v891 = vpop.f32.mrb[0].mxu0
      %v892 = vadd.f32 %v706, %v891
      %v893 = vpop.f32.mrb[0].mxu0
      %v894 = vpop.f32.mrb[0].mxu0
      %v895 = vpop.f32.mrb[0].mxu0
      %896 = vdwg.mxu0
      %v897 = vmul.f32 %v851, %v592
      %v898 = vmul.f32 %v853, %v593
      %v899 = vmul.f32 %v892, %v590
      %v900 = vpack.c.bf16 %v897, %v897
      %v901 = vpack.c.bf16 %v898, %v898
      %v902 = vpack.c.bf16 %v899, %v899
      %906 = vrot.lane.b32.xlu0 %v900, 36
      %v907 = vpop.permute.xlu0 %906
      %908 = vrot.lane.b32.xlu0 %v901, 36
      %v909 = vpop.permute.xlu0 %908
      %910 = vrot.lane.b32.xlu0 %v902, 36
      %v911 = vpop.permute.xlu0 %910
      %v912 = vsel %vm615, %v907, %v909
      %v913 = vsel %vm615, %v909, %v911
      %v915 = vsel %vm619, 0, %v907
      %v917 = vsel %vm624, %v913, 0
      %v920 = vunpack.c.l.b16 %v915
      %v921 = vunpack.c.l.b16 %v912
      %v922 = vunpack.c.l.b16 %v917
      %v923 = vpack.c.b16 %v921, %v920
      %v924 = vpack.c.b16 %v922, %v922
      %927 = vst [vmem:[%s251] sm:$0xff] %v923
      %928 = vst [vmem:[%s251 + $0x8] sm:$0xf] %v924
      %p929 = scmp.lt.s32.totalorder %s17, 3
      %s930 = scalar_select %p929, %s17, 3
      %s931 = smul.addr %s930, 3
      %s932 = smul.addr %s931, 4
      %s933 = scalar_lea.vmem %s6, %s932
      // Predicated region
      $region45: #{mfe_backbone_forward.21} parent=43 // pred_check
        %p934 = pneg %p166
      $region46: #{mfe_backbone_forward.21} parent=43 // pred_check_branch
        %936 = sbr.rel (%p934) target = $region48
      $region47: #{mfe_backbone_forward.21} parent=43 // pred_region
        _
      $region48: #{mfe_backbone_forward.21} parent=43 // pred_fallthru
        _
    $region44: #{mfe_backbone_forward.21} parent=5 // pred_fallthru
      _
    %p937 = scmp.le.s32.totalorder 2, %s12
    // Predicated region
    $region49: #{mfe_backbone_forward.21} parent=5 // pred_check
      %p938 = pneg %p937
    $region50: #{mfe_backbone_forward.21} parent=5 // pred_check_branch
      %940 = sbr.rel (%p938) target = $region52
    $region51: #{mfe_backbone_forward.21} parent=5 // pred_region
      %s941 = ssub.s32 %s12, 2
      // Predicated region
      $region53: #{mfe_backbone_forward.21} parent=51 // pred_check
        %p942 = pneg %p172
      $region54: #{mfe_backbone_forward.21} parent=51 // pred_check_branch
        %944 = sbr.rel (%p942) target = $region56
      $region55: #{mfe_backbone_forward.21} parent=51 // pred_region
        %p945 = scmp.lt.s32.totalorder %s18, 3
        %s946 = scalar_select %p945, %s18, 3
        %s947 = smul.addr %s946, 3
        %s948 = smul.addr %s947, 4
        %s949 = scalar_lea.vmem %s6, %s948
      $region56: #{mfe_backbone_forward.21} parent=51 // pred_fallthru
        _
    $region52: #{mfe_backbone_forward.21} parent=5 // pred_fallthru
      _
  $region6: #{mfe_backbone_forward.21} parent=0 // loop_footer
    %s16 = sadd.s32 1, %s12
  $region7: #{mfe_backbone_forward.21} parent=0 // loop_footer_branch
    %11 = sbr.rel target = $region3
  $region8: #{mfe_backbone_forward.21} parent=0 // loop_exit
    _

</llo_original>
